<compile_context>
chip_gen: v7x
topology: tpu7x:2x2x1
jax: 0.10.0
libtpu: 0.0.40
codegen_flags: <defaults>
</compile_context>

<pallas_src>
import functools
import math

import jax
import jax.numpy as jnp
from jax import lax
from jax.experimental import pallas as pl
from jax.experimental.pallas import tpu as pltpu

# ---- model hyper-parameters (hard-coded in the PyTorch __init__) ----
D_MODEL = 64
D_FF = 2048
N_LAYERS = 6
N_HEADS = 8
D_K = D_MODEL // N_HEADS
NOISE_DIM = 16
LN_EPS = 1e-5
N_ENCODERS = 3            # spatial_encoder_1, spatial_encoder_2, temporal_encoder

NEG_MASK = -1e9           # social-adjacency mask (matches masked_fill_(mask, -1e9))
NEG_BLOCK = -1e30         # cross-batch-block / padding -> exactly-zero softmax weight


def _round_up(x, m):
    return ((x + m - 1) // m) * m


# ----------------------------------------------------------------------
# Fused 3-encoder / 6-layer transformer kernel
# ----------------------------------------------------------------------
def _encoder_stack_kernel(xin_ref, mask_ref, wemb_ref, bemb_ref,
                          wqkv_ref, bqkv_ref, wo_ref, bo_ref,
                          w1_ref, b1_ref, w2_ref, b2_ref,
                          g1_ref, be1_ref, g2_ref, be2_ref,
                          out_ref, act_ref, *, scale):
    l = pl.program_id(1)

    # layer 0: apply the (2 -> 64) input embedding (abs_embedding for the two
    # spatial encoders, rel_embedding for the temporal encoder).
    @pl.when(l == 0)
    def _init():
        x2 = xin_ref[...]                                     # (M, 2) raw coords
        w = wemb_ref[...]                                     # (2, D)
        act_ref[...] = (x2[:, 0:1] * w[0:1, :]
                        + x2[:, 1:2] * w[1:2, :]
                        + bemb_ref[...])

    x = act_ref[...]                                          # (M, D) f32
    maskv = mask_ref[...]                                     # (M, M): 0 attend, 1 social, 2 blocked

    # ---- multi-head self-attention (QKV fused into one bf16 matmul) ----
    qkv = jnp.dot(x.astype(jnp.bfloat16), wqkv_ref[...],
                  preferred_element_type=jnp.float32) + bqkv_ref[...]   # (M, 3D)
    q = qkv[:, 0:D_MODEL]
    k = qkv[:, D_MODEL:2 * D_MODEL]
    v = qkv[:, 2 * D_MODEL:3 * D_MODEL]

    lane = lax.broadcasted_iota(jnp.int32, (1, D_MODEL), 1)   # (1, D) lane index
    attn = jnp.zeros_like(x)
    for h in range(N_HEADS):
        lo, hi = h * D_K, (h + 1) * D_K
        mh = ((lane >= lo) & (lane < hi)).astype(jnp.float32)  # head-lane mask
        # per-head scores via full-width contraction with the head-masked K
        s = lax.dot_general(q, k * mh, (((1,), (1,)), ((), ())),
                            preferred_element_type=jnp.float32) * scale  # (M, M)
        s = jnp.where(maskv >= 1.5, NEG_BLOCK,
                      jnp.where(maskv >= 0.5, NEG_MASK, s))
        m = jnp.max(s, axis=-1, keepdims=True)
        e = jnp.exp(s - m)
        p = e / jnp.sum(e, axis=-1, keepdims=True)
        # head-masked V keeps each head's output in its own lane range
        attn = attn + jnp.dot(p, v * mh, preferred_element_type=jnp.float32)

    attn = jnp.dot(attn.astype(jnp.bfloat16), wo_ref[...],
                   preferred_element_type=jnp.float32) + bo_ref[...]

    # ---- residual + LayerNorm 1 (f32 statistics) ----
    z = x + attn
    mu = jnp.mean(z, axis=-1, keepdims=True)
    zc = z - mu
    var = jnp.mean(zc * zc, axis=-1, keepdims=True)
    out1 = zc * lax.rsqrt(var + LN_EPS) * g1_ref[...] + be1_ref[...]

    # ---- feed-forward; the (M, 2048) intermediate stays in VMEM ----
    h1 = jnp.dot(out1.astype(jnp.bfloat16), w1_ref[...],
                 preferred_element_type=jnp.float32) + b1_ref[...]
    h1 = jnp.maximum(h1, 0.0)
    ff = jnp.dot(h1.astype(jnp.bfloat16), w2_ref[...],
                 preferred_element_type=jnp.float32) + b2_ref[...]

    # ---- residual + LayerNorm 2 ----
    z2 = out1 + ff
    mu2 = jnp.mean(z2, axis=-1, keepdims=True)
    zc2 = z2 - mu2
    var2 = jnp.mean(zc2 * zc2, axis=-1, keepdims=True)
    act_ref[...] = zc2 * lax.rsqrt(var2 + LN_EPS) * g2_ref[...] + be2_ref[...]

    @pl.when(l == pl.num_programs(1) - 1)
    def _store():
        out_ref[...] = act_ref[...]


def encoder_stack(params, xin, masks):
    """All 3 encoders x 6 layers in one pallas_call.  xin: (3, M, 2), masks: (3, M, M)."""
    E, M, _ = xin.shape
    D = D_MODEL
    emap = lambda e, l: (e, 0, 0)           # per-encoder constants
    lmap = lambda e, l: (e, l, 0, 0)        # per-encoder, per-layer weights

    in_specs = [
        pl.BlockSpec((None, M, 2), emap),                 # xin
        pl.BlockSpec((None, M, M), emap),                 # mask
        pl.BlockSpec((None, 2, D), emap),                 # w_emb
        pl.BlockSpec((None, 1, D), emap),                 # b_emb
        pl.BlockSpec((None, None, D, 3 * D), lmap),       # w_qkv
        pl.BlockSpec((None, None, 1, 3 * D), lmap),       # b_qkv
        pl.BlockSpec((None, None, D, D), lmap),           # w_o
        pl.BlockSpec((None, None, 1, D), lmap),           # b_o
        pl.BlockSpec((None, None, D, D_FF), lmap),        # ff_w1
        pl.BlockSpec((None, None, 1, D_FF), lmap),        # ff_b1
        pl.BlockSpec((None, None, D_FF, D), lmap),        # ff_w2
        pl.BlockSpec((None, None, 1, D), lmap),           # ff_b2
        pl.BlockSpec((None, None, 1, D), lmap),           # ln1_g
        pl.BlockSpec((None, None, 1, D), lmap),           # ln1_b
        pl.BlockSpec((None, None, 1, D), lmap),           # ln2_g
        pl.BlockSpec((None, None, 1, D), lmap),           # ln2_b
    ]
    out_spec = pl.BlockSpec((None, M, D), emap)

    return pl.pallas_call(
        functools.partial(_encoder_stack_kernel, scale=1.0 / math.sqrt(D_K)),
        grid=(E, N_LAYERS),
        in_specs=in_specs,
        out_specs=out_spec,
        out_shape=jax.ShapeDtypeStruct((E, M, D), jnp.float32),
        scratch_shapes=[pltpu.VMEM((M, D), jnp.float32)],
        compiler_params=pltpu.CompilerParams(
            dimension_semantics=("parallel", "arbitrary")),
    )(xin, masks,
      params["w_emb"], params["b_emb"],
      params["w_qkv"], params["b_qkv"], params["w_o"], params["b_o"],
      params["ff_w1"], params["ff_b1"], params["ff_w2"], params["ff_b2"],
      params["ln1_g"], params["ln1_b"], params["ln2_g"], params["ln2_b"])


# ----------------------------------------------------------------------
# Fused fusion head: spatial_fusion -> fusion_layer -> output_layer (+noise)
# ----------------------------------------------------------------------
def _head_kernel(se1_ref, se2_ref, te_ref, noise_ref,
                 wsa_ref, wsb_ref, bs_ref,
                 wfa_ref, wfb_ref, bf_ref,
                 woa_ref, won_ref, bo_ref, o_ref):
    sp = (jnp.dot(se1_ref[...], wsa_ref[...], preferred_element_type=jnp.float32)
          + jnp.dot(se2_ref[...], wsb_ref[...], preferred_element_type=jnp.float32)
          + bs_ref[...])
    stf = (jnp.dot(sp, wfa_ref[...], preferred_element_type=jnp.float32)
           + jnp.dot(te_ref[...], wfb_ref[...], preferred_element_type=jnp.float32)
           + bf_ref[...])
    # TODO(synk): the reference re-assigns `noise = noise.repeat(N, 1)` every
    # frame (shape bug for N > 1); we broadcast the original (1, 16) noise.
    nz = jnp.dot(noise_ref[...], won_ref[...], preferred_element_type=jnp.float32)  # (1, 2)
    o_ref[...] = (jnp.dot(stf, woa_ref[...], preferred_element_type=jnp.float32)
                  + nz + bo_ref[...])


def fusion_head(params, se1, se2, te, noise):
    R = se1.shape[0]
    Rp = _round_up(R, 8)
    pad = lambda a: jnp.pad(a, ((0, Rp - R), (0, 0)))
    out = pl.pallas_call(
        _head_kernel,
        out_shape=jax.ShapeDtypeStruct((Rp, 2), jnp.float32),
    )(pad(se1), pad(se2), pad(te), noise,
      params["w_sf_a"], params["w_sf_b"], params["b_sf"],
      params["w_fu_a"], params["w_fu_b"], params["b_fu"],
      params["w_out_a"], params["w_out_n"], params["b_out"])
    return out[:R]


# ----------------------------------------------------------------------
# Parameter init (deterministic, synthetic).  MXU weights stored in bf16.
# ----------------------------------------------------------------------
def init_model(key):
    E, L, D = N_ENCODERS, N_LAYERS, D_MODEL
    ks = jax.random.split(key, 10)

    def rnd(k, shape, scale=0.05, dtype=jnp.float32):
        return (scale * jax.random.normal(k, shape, jnp.float32)).astype(dtype)

    w_abs = rnd(ks[0], (2, D))
    w_rel = rnd(ks[1], (2, D))
    w_sf = rnd(ks[2], (2 * D, D))
    w_fu = rnd(ks[3], (2 * D, D))
    w_out = rnd(ks[4], (D + NOISE_DIM, 2))

    return {
        # input embedding applied inside the encoder kernel at layer 0:
        # encoders 0 & 1 share abs_embedding, encoder 2 uses rel_embedding.
        "w_emb": jnp.stack([w_abs, w_abs, w_rel]),                  # (3, 2, D) f32
        "b_emb": jnp.zeros((E, 1, D), jnp.float32),
        # per-encoder, per-layer transformer weights
        "w_qkv": rnd(ks[5], (E, L, D, 3 * D), dtype=jnp.bfloat16),
        "b_qkv": jnp.zeros((E, L, 1, 3 * D), jnp.float32),
        "w_o":   rnd(ks[6], (E, L, D, D), dtype=jnp.bfloat16),
        "b_o":   jnp.zeros((E, L, 1, D), jnp.float32),
        "ff_w1": rnd(ks[7], (E, L, D, D_FF), dtype=jnp.bfloat16),
        "ff_b1": jnp.zeros((E, L, 1, D_FF), jnp.float32),
        "ff_w2": rnd(ks[8], (E, L, D_FF, D), dtype=jnp.bfloat16),
        "ff_b2": jnp.zeros((E, L, 1, D), jnp.float32),
        "ln1_g": jnp.ones((E, L, 1, D), jnp.float32),
        "ln1_b": jnp.zeros((E, L, 1, D), jnp.float32),
        "ln2_g": jnp.ones((E, L, 1, D), jnp.float32),
        "ln2_b": jnp.zeros((E, L, 1, D), jnp.float32),
        # fusion head (concat weights pre-split so no in-kernel concat needed)
        "w_sf_a": w_sf[:D], "w_sf_b": w_sf[D:],
        "b_sf": jnp.zeros((1, D), jnp.float32),
        "w_fu_a": w_fu[:D], "w_fu_b": w_fu[D:],
        "b_fu": jnp.zeros((1, D), jnp.float32),
        "w_out_a": w_out[:D], "w_out_n": w_out[D:],
        "b_out": jnp.zeros((1, 2), jnp.float32),
    }


# ----------------------------------------------------------------------
# TrajectoryModel forward (iftest=False path), all frames batched
# ----------------------------------------------------------------------
def trajectory_model_forward(params, traj, traj_rel, social_adj, noise, seq_len):
    T, N, _ = traj.shape
    F = seq_len - 1               # frames 0 .. seq_len-2 are predicted
    Tp = F                        # longest temporal prefix length

    # ---- per-frame prefix means (normalize_input) ----
    # TODO(synk): the PyTorch reference mutates `traj` in place through the
    # prefix view; we use a fresh normalized copy per frame instead.
    csum = jnp.cumsum(jnp.sum(traj[:F], axis=1), axis=0)              # (F, 2)
    counts = (jnp.arange(F, dtype=jnp.float32) + 1.0) * N
    means = csum / counts[:, None]                                    # (F, 2)

    x1 = traj[:F] - means[:, None, :]                                 # frame f     (F, N, 2)
    prev = jnp.concatenate([traj[0:1], traj[:F - 1]], axis=0)
    x2 = prev - means[:, None, :]                                     # frame f-1   (F, N, 2)

    # temporal raw input: (F, N, Tp, 2), positions tau > f zero-padded
    rel = jnp.transpose(traj_rel[:Tp], (1, 0, 2))                     # (N, Tp, 2)
    valid = (jnp.arange(Tp)[None, :] <= jnp.arange(F)[:, None])       # (F, Tp)
    temporal_raw = (jnp.broadcast_to(rel[None], (F, N, Tp, 2))
                    * valid[:, None, :, None].astype(jnp.float32))

    n_sp = F * N
    n_te = F * N * Tp
    M = _round_up(max(n_sp, n_te), 8)

    xin = jnp.zeros((N_ENCODERS, M, 2), jnp.float32)
    xin = xin.at[0, :n_sp].set(x1.reshape(n_sp, 2))
    xin = xin.at[1, :n_sp].set(x2.reshape(n_sp, 2))
    xin = xin.at[2, :n_te].set(temporal_raw.reshape(n_te, 2))

    # ---- attention masks: 0 = attend, 1 = social mask (-1e9), 2 = blocked ----
    idx = jnp.arange(M)
    # spatial encoders: block-diagonal over frames, N agents per block
    blk_sp = idx // N
    in_sp = idx < n_sp
    same_sp = (blk_sp[:, None] == blk_sp[None, :]) & in_sp[:, None] & in_sp[None, :]
    soc = social_adj[0].astype(jnp.float32)                           # (N, N)  1 == masked
    soc_big = soc[idx[:, None] % N, idx[None, :] % N]
    mask_sp = jnp.where(same_sp, soc_big, 2.0)

    # temporal encoder: block-diagonal over (frame, agent); padded keys blocked
    blk_te = idx // Tp
    tau = idx % Tp
    frame_of = blk_te // N
    in_te = idx < n_te
    same_te = (blk_te[:, None] == blk_te[None, :]) & in_te[:, None] & in_te[None, :]
    key_ok = tau[None, :] <= frame_of[:, None]
    mask_te = jnp.where(same_te & key_ok, 0.0, 2.0)

    masks = jnp.stack([mask_sp, mask_sp, mask_te]).astype(jnp.float32)

    # ---- all 18 encoder layers in a single pallas_call ----
    enc = encoder_stack(params, xin, masks)                           # (3, M, 64)

    se1 = enc[0, :n_sp]                                               # (F*N, 64)
    se2 = enc[1, :n_sp].reshape(F, N, D_MODEL)
    se2 = se2.at[0].set(0.0)                                          # frame 0: zeros_like
    se2 = se2.reshape(n_sp, D_MODEL)
    te = enc[2, :n_te].reshape(F, N, Tp, D_MODEL)
    te = te[jnp.arange(F), :, jnp.arange(F)]                          # last real time step
    te = te.reshape(n_sp, D_MODEL)

    # ---- fused fusion head over all frames ----
    head = fusion_head(params, se1, se2, te, noise)                   # (F*N, 2)

    output = jnp.zeros((T, N, 2), jnp.float32)
    output = output.at[:F].set(head.reshape(F, N, 2))
    return output


# ----------------------------------------------------------------------
if __name__ == "__main__":
    class Args:
        seq_len = 6
        obs_len = 4

    key = jax.random.PRNGKey(0)
    kp, kt, ka, kn = jax.random.split(key, 4)

    params = init_model(kp)

    T, N = Args.seq_len, 3
    traj = jax.random.normal(kt, (T, N, 2), jnp.float32)
    traj_rel = jnp.zeros_like(traj).at[1:].set(traj[1:] - traj[:-1])
    social_adj = jax.random.bernoulli(ka, 0.2, (1, N, N))             # boolean attn mask
    noise = jax.random.normal(kn, (1, NOISE_DIM), jnp.float32)        # get_noise((1,16),'gaussian')

    fwd = jax.jit(trajectory_model_forward, static_argnames=("seq_len",))
    out = fwd(params, traj, traj_rel, social_adj, noise, seq_len=Args.seq_len)
    jax.block_until_ready(out)
    assert out.shape == (T, N, 2)
    print("KERNEL_OK")
</pallas_src>

<mosaic_0001>
module attributes {stable_mosaic.version = 11 : i64} {
  func.func @_encoder_stack_kernel(%arg0: i32, %arg1: i32, %arg2: memref<1x80x2xf32, #tpu.memory_space<vmem>>, %arg3: memref<1x80x80xf32, #tpu.memory_space<vmem>>, %arg4: memref<1x2x64xf32, #tpu.memory_space<vmem>>, %arg5: memref<1x1x64xf32, #tpu.memory_space<vmem>>, %arg6: memref<1x1x64x192xbf16, #tpu.memory_space<vmem>>, %arg7: memref<1x1x1x192xf32, #tpu.memory_space<vmem>>, %arg8: memref<1x1x64x64xbf16, #tpu.memory_space<vmem>>, %arg9: memref<1x1x1x64xf32, #tpu.memory_space<vmem>>, %arg10: memref<1x1x64x2048xbf16, #tpu.memory_space<vmem>>, %arg11: memref<1x1x1x2048xf32, #tpu.memory_space<vmem>>, %arg12: memref<1x1x2048x64xbf16, #tpu.memory_space<vmem>>, %arg13: memref<1x1x1x64xf32, #tpu.memory_space<vmem>>, %arg14: memref<1x1x1x64xf32, #tpu.memory_space<vmem>>, %arg15: memref<1x1x1x64xf32, #tpu.memory_space<vmem>>, %arg16: memref<1x1x1x64xf32, #tpu.memory_space<vmem>>, %arg17: memref<1x1x1x64xf32, #tpu.memory_space<vmem>>, %arg18: memref<1x80x64xf32, #tpu.memory_space<vmem>>, %arg19: memref<80x64xf32, #tpu.memory_space<vmem>>) attributes {dimension_semantics = [#tpu.dimension_semantics<parallel>, #tpu.dimension_semantics<arbitrary>], iteration_bounds = array<i64: 3, 6>, scalar_prefetch = 0 : i64, scratch_operands = 1 : i64, tpu.core_type = #tpu.core_type<tc>, window_params = [{transform_indices = @transform_0, window_bounds = array<i64: 1, 80, 2>}, {transform_indices = @transform_1, window_bounds = array<i64: 1, 80, 80>}, {transform_indices = @transform_2, window_bounds = array<i64: 1, 2, 64>}, {transform_indices = @transform_3, window_bounds = array<i64: 1, 1, 64>}, {transform_indices = @transform_4, window_bounds = array<i64: 1, 1, 64, 192>}, {transform_indices = @transform_5, window_bounds = array<i64: 1, 1, 1, 192>}, {transform_indices = @transform_6, window_bounds = array<i64: 1, 1, 64, 64>}, {transform_indices = @transform_7, window_bounds = array<i64: 1, 1, 1, 64>}, {transform_indices = @transform_8, window_bounds = array<i64: 1, 1, 64, 2048>}, {transform_indices = @transform_9, window_bounds = array<i64: 1, 1, 1, 2048>}, {transform_indices = @transform_10, window_bounds = array<i64: 1, 1, 2048, 64>}, {transform_indices = @transform_11, window_bounds = array<i64: 1, 1, 1, 64>}, {transform_indices = @transform_12, window_bounds = array<i64: 1, 1, 1, 64>}, {transform_indices = @transform_13, window_bounds = array<i64: 1, 1, 1, 64>}, {transform_indices = @transform_14, window_bounds = array<i64: 1, 1, 1, 64>}, {transform_indices = @transform_15, window_bounds = array<i64: 1, 1, 1, 64>}, {transform_indices = @transform_16, window_bounds = array<i64: 1, 80, 64>}]} {
    %c0_i32 = arith.constant 0 : i32
    %0 = arith.cmpi eq, %arg1, %c0_i32 : i32
    %1 = arith.extui %0 : i1 to i32
    %c0_i32_0 = arith.constant 0 : i32
    %2 = arith.cmpi ne, %1, %c0_i32_0 : i32
    scf.if %2 {
      %c0_151 = arith.constant 0 : index
      %c0_152 = arith.constant 0 : index
      %c0_153 = arith.constant 0 : index
      %363 = vector.load %arg2[%c0_151, %c0_152, %c0_153] : memref<1x80x2xf32, #tpu.memory_space<vmem>>, vector<1x80x2xf32>
      %364 = vector.shape_cast %363 : vector<1x80x2xf32> to vector<80x2xf32>
      %c0_154 = arith.constant 0 : index
      %c0_155 = arith.constant 0 : index
      %c0_156 = arith.constant 0 : index
      %365 = vector.load %arg4[%c0_154, %c0_155, %c0_156] : memref<1x2x64xf32, #tpu.memory_space<vmem>>, vector<1x2x64xf32>
      %366 = vector.shape_cast %365 : vector<1x2x64xf32> to vector<2x64xf32>
      %367 = vector.extract_strided_slice %364 {offsets = [0, 0], sizes = [80, 1], strides = [1, 1]} : vector<80x2xf32> to vector<80x1xf32>
      %368 = vector.extract_strided_slice %366 {offsets = [0, 0], sizes = [1, 64], strides = [1, 1]} : vector<2x64xf32> to vector<1x64xf32>
      %369 = vector.broadcast %367 : vector<80x1xf32> to vector<80x64xf32>
      %370 = vector.broadcast %368 : vector<1x64xf32> to vector<80x64xf32>
      %371 = arith.mulf %369, %370 : vector<80x64xf32>
      %372 = vector.extract_strided_slice %364 {offsets = [0, 1], sizes = [80, 1], strides = [1, 1]} : vector<80x2xf32> to vector<80x1xf32>
      %373 = vector.extract_strided_slice %366 {offsets = [1, 0], sizes = [1, 64], strides = [1, 1]} : vector<2x64xf32> to vector<1x64xf32>
      %374 = vector.broadcast %372 : vector<80x1xf32> to vector<80x64xf32>
      %375 = vector.broadcast %373 : vector<1x64xf32> to vector<80x64xf32>
      %376 = arith.mulf %374, %375 : vector<80x64xf32>
      %377 = arith.addf %371, %376 : vector<80x64xf32>
      %c0_157 = arith.constant 0 : index
      %c0_158 = arith.constant 0 : index
      %c0_159 = arith.constant 0 : index
      %378 = vector.load %arg5[%c0_157, %c0_158, %c0_159] : memref<1x1x64xf32, #tpu.memory_space<vmem>>, vector<1x1x64xf32>
      %379 = vector.shape_cast %378 : vector<1x1x64xf32> to vector<1x64xf32>
      %380 = vector.broadcast %379 : vector<1x64xf32> to vector<80x64xf32>
      %381 = arith.addf %377, %380 : vector<80x64xf32>
      %c0_160 = arith.constant 0 : index
      %c0_161 = arith.constant 0 : index
      %382 = vector.load %arg19[%c0_160, %c0_161] : memref<80x64xf32, #tpu.memory_space<vmem>>, vector<80x64xf32>
      tpu.vector_store %arg19[%c0_160, %c0_161], %381 {strides = array<i32>} : memref<80x64xf32, #tpu.memory_space<vmem>>, vector<80x64xf32>,
    } else {
    }
    %c0 = arith.constant 0 : index
    %c0_1 = arith.constant 0 : index
    %3 = vector.load %arg19[%c0, %c0_1] : memref<80x64xf32, #tpu.memory_space<vmem>>, vector<80x64xf32>
    %c0_2 = arith.constant 0 : index
    %c0_3 = arith.constant 0 : index
    %c0_4 = arith.constant 0 : index
    %4 = vector.load %arg3[%c0_2, %c0_3, %c0_4] : memref<1x80x80xf32, #tpu.memory_space<vmem>>, vector<1x80x80xf32>
    %5 = vector.shape_cast %4 : vector<1x80x80xf32> to vector<80x80xf32>
    %6 = arith.truncf %3 : vector<80x64xf32> to vector<80x64xbf16>
    %c0_5 = arith.constant 0 : index
    %c0_6 = arith.constant 0 : index
    %c0_7 = arith.constant 0 : index
    %c0_8 = arith.constant 0 : index
    %7 = vector.load %arg6[%c0_5, %c0_6, %c0_7, %c0_8] : memref<1x1x64x192xbf16, #tpu.memory_space<vmem>>, vector<1x1x64x192xbf16>
    %8 = vector.shape_cast %7 : vector<1x1x64x192xbf16> to vector<64x192xbf16>
    %cst = arith.constant dense<0.000000e+00> : vector<80x192xf32>
    %9 = tpu.matmul %6, %8, %cst {dimension_numbers = #tpu.dot_dimension_numbers<[1], [0], [0], [1], [0, 0, 1, 1], [], []>} : vector<80x64xbf16>, vector<64x192xbf16>, vector<80x192xf32> -> vector<80x192xf32>
    %c0_9 = arith.constant 0 : index
    %c0_10 = arith.constant 0 : index
    %c0_11 = arith.constant 0 : index
    %c0_12 = arith.constant 0 : index
    %10 = vector.load %arg7[%c0_9, %c0_10, %c0_11, %c0_12] : memref<1x1x1x192xf32, #tpu.memory_space<vmem>>, vector<1x1x1x192xf32>
    %11 = vector.shape_cast %10 : vector<1x1x1x192xf32> to vector<1x192xf32>
    %12 = vector.broadcast %11 : vector<1x192xf32> to vector<80x192xf32>
    %13 = arith.addf %9, %12 : vector<80x192xf32>
    %14 = vector.extract_strided_slice %13 {offsets = [0, 0], sizes = [80, 64], strides = [1, 1]} : vector<80x192xf32> to vector<80x64xf32>
    %15 = vector.extract_strided_slice %13 {offsets = [0, 64], sizes = [80, 64], strides = [1, 1]} : vector<80x192xf32> to vector<80x64xf32>
    %16 = vector.extract_strided_slice %13 {offsets = [0, 128], sizes = [80, 64], strides = [1, 1]} : vector<80x192xf32> to vector<80x64xf32>
    %17 = tpu.iota {dimensions = array<i32: 1>} : vector<1x64xi32>
    %cst_13 = arith.constant 0.000000e+00 : f32
    %18 = vector.broadcast %cst_13 : f32 to vector<80x64xf32>
    %c0_i32_14 = arith.constant 0 : i32
    %19 = vector.broadcast %c0_i32_14 : i32 to vector<1x64xi32>
    %20 = arith.cmpi sge, %17, %19 : vector<1x64xi32>
    %c8_i32 = arith.constant 8 : i32
    %21 = vector.broadcast %c8_i32 : i32 to vector<1x64xi32>
    %22 = arith.cmpi slt, %17, %21 : vector<1x64xi32>
    %23 = arith.andi %20, %22 : vector<1x64xi1>
    %24 = arith.extui %23 : vector<1x64xi1> to vector<1x64xi32>
    %25 = arith.sitofp %24 : vector<1x64xi32> to vector<1x64xf32>
    %26 = vector.broadcast %25 : vector<1x64xf32> to vector<80x64xf32>
    %27 = arith.mulf %15, %26 : vector<80x64xf32>
    %cst_15 = arith.constant dense<0.000000e+00> : vector<80x80xf32>
    %28 = tpu.matmul %14, %27, %cst_15 {dimension_numbers = #tpu.dot_dimension_numbers<[1], [1], [0], [0], [0, 0, 1, 0], [], []>} : vector<80x64xf32>, vector<80x64xf32>, vector<80x80xf32> -> vector<80x80xf32>
    %cst_16 = arith.constant 0.353553385 : f32
    %29 = vector.broadcast %cst_16 : f32 to vector<80x80xf32>
    %30 = arith.mulf %28, %29 : vector<80x80xf32>
    %cst_17 = arith.constant 1.500000e+00 : f32
    %31 = vector.broadcast %cst_17 : f32 to vector<80x80xf32>
    %32 = arith.cmpf oge, %5, %31 : vector<80x80xf32>
    %cst_18 = arith.constant 5.000000e-01 : f32
    %33 = vector.broadcast %cst_18 : f32 to vector<80x80xf32>
    %34 = arith.cmpf oge, %5, %33 : vector<80x80xf32>
    %cst_19 = arith.constant -1.000000e+09 : f32
    %35 = vector.broadcast %cst_19 : f32 to vector<80x80xf32>
    %36 = arith.select %34, %35, %30 : vector<80x80xi1>, vector<80x80xf32>
    %cst_20 = arith.constant -1.000000e+30 : f32
    %37 = vector.broadcast %cst_20 : f32 to vector<80x80xf32>
    %38 = arith.select %32, %37, %36 : vector<80x80xi1>, vector<80x80xf32>
    %cst_21 = arith.constant dense<0xFF800000> : vector<80xf32>
    %39 = vector.multi_reduction <maximumf>, %38, %cst_21 [1] : vector<80x80xf32> to vector<80xf32>
    %40 = vector.shape_cast %39 : vector<80xf32> to vector<80x1xf32>
    %41 = vector.broadcast %40 : vector<80x1xf32> to vector<80x80xf32>
    %42 = arith.subf %38, %41 : vector<80x80xf32>
    %43 = math.exp %42 : vector<80x80xf32>
    %cst_22 = arith.constant dense<0.000000e+00> : vector<80xf32>
    %44 = vector.multi_reduction <add>, %43, %cst_22 [1] : vector<80x80xf32> to vector<80xf32>
    %45 = vector.shape_cast %44 : vector<80xf32> to vector<80x1xf32>
    %46 = vector.broadcast %45 : vector<80x1xf32> to vector<80x80xf32>
    %47 = arith.divf %43, %46 : vector<80x80xf32>
    %48 = vector.broadcast %25 : vector<1x64xf32> to vector<80x64xf32>
    %49 = arith.mulf %16, %48 : vector<80x64xf32>
    %cst_23 = arith.constant dense<0.000000e+00> : vector<80x64xf32>
    %50 = tpu.matmul %47, %49, %cst_23 {dimension_numbers = #tpu.dot_dimension_numbers<[1], [0], [0], [1], [0, 0, 1, 1], [], []>} : vector<80x80xf32>, vector<80x64xf32>, vector<80x64xf32> -> vector<80x64xf32>
    %51 = arith.addf %18, %50 : vector<80x64xf32>
    %c8_i32_24 = arith.constant 8 : i32
    %52 = vector.broadcast %c8_i32_24 : i32 to vector<1x64xi32>
    %53 = arith.cmpi sge, %17, %52 : vector<1x64xi32>
    %c16_i32 = arith.constant 16 : i32
    %54 = vector.broadcast %c16_i32 : i32 to vector<1x64xi32>
    %55 = arith.cmpi slt, %17, %54 : vector<1x64xi32>
    %56 = arith.andi %53, %55 : vector<1x64xi1>
    %57 = arith.extui %56 : vector<1x64xi1> to vector<1x64xi32>
    %58 = arith.sitofp %57 : vector<1x64xi32> to vector<1x64xf32>
    %59 = vector.broadcast %58 : vector<1x64xf32> to vector<80x64xf32>
    %60 = arith.mulf %15, %59 : vector<80x64xf32>
    %cst_25 = arith.constant dense<0.000000e+00> : vector<80x80xf32>
    %61 = tpu.matmul %14, %60, %cst_25 {dimension_numbers = #tpu.dot_dimension_numbers<[1], [1], [0], [0], [0, 0, 1, 0], [], []>} : vector<80x64xf32>, vector<80x64xf32>, vector<80x80xf32> -> vector<80x80xf32>
    %cst_26 = arith.constant 0.353553385 : f32
    %62 = vector.broadcast %cst_26 : f32 to vector<80x80xf32>
    %63 = arith.mulf %61, %62 : vector<80x80xf32>
    %cst_27 = arith.constant 1.500000e+00 : f32
    %64 = vector.broadcast %cst_27 : f32 to vector<80x80xf32>
    %65 = arith.cmpf oge, %5, %64 : vector<80x80xf32>
    %cst_28 = arith.constant 5.000000e-01 : f32
    %66 = vector.broadcast %cst_28 : f32 to vector<80x80xf32>
    %67 = arith.cmpf oge, %5, %66 : vector<80x80xf32>
    %cst_29 = arith.constant -1.000000e+09 : f32
    %68 = vector.broadcast %cst_29 : f32 to vector<80x80xf32>
    %69 = arith.select %67, %68, %63 : vector<80x80xi1>, vector<80x80xf32>
    %cst_30 = arith.constant -1.000000e+30 : f32
    %70 = vector.broadcast %cst_30 : f32 to vector<80x80xf32>
    %71 = arith.select %65, %70, %69 : vector<80x80xi1>, vector<80x80xf32>
    %cst_31 = arith.constant dense<0xFF800000> : vector<80xf32>
    %72 = vector.multi_reduction <maximumf>, %71, %cst_31 [1] : vector<80x80xf32> to vector<80xf32>
    %73 = vector.shape_cast %72 : vector<80xf32> to vector<80x1xf32>
    %74 = vector.broadcast %73 : vector<80x1xf32> to vector<80x80xf32>
    %75 = arith.subf %71, %74 : vector<80x80xf32>
    %76 = math.exp %75 : vector<80x80xf32>
    %cst_32 = arith.constant dense<0.000000e+00> : vector<80xf32>
    %77 = vector.multi_reduction <add>, %76, %cst_32 [1] : vector<80x80xf32> to vector<80xf32>
    %78 = vector.shape_cast %77 : vector<80xf32> to vector<80x1xf32>
    %79 = vector.broadcast %78 : vector<80x1xf32> to vector<80x80xf32>
    %80 = arith.divf %76, %79 : vector<80x80xf32>
    %81 = vector.broadcast %58 : vector<1x64xf32> to vector<80x64xf32>
    %82 = arith.mulf %16, %81 : vector<80x64xf32>
    %cst_33 = arith.constant dense<0.000000e+00> : vector<80x64xf32>
    %83 = tpu.matmul %80, %82, %cst_33 {dimension_numbers = #tpu.dot_dimension_numbers<[1], [0], [0], [1], [0, 0, 1, 1], [], []>} : vector<80x80xf32>, vector<80x64xf32>, vector<80x64xf32> -> vector<80x64xf32>
    %84 = arith.addf %51, %83 : vector<80x64xf32>
    %c16_i32_34 = arith.constant 16 : i32
    %85 = vector.broadcast %c16_i32_34 : i32 to vector<1x64xi32>
    %86 = arith.cmpi sge, %17, %85 : vector<1x64xi32>
    %c24_i32 = arith.constant 24 : i32
    %87 = vector.broadcast %c24_i32 : i32 to vector<1x64xi32>
    %88 = arith.cmpi slt, %17, %87 : vector<1x64xi32>
    %89 = arith.andi %86, %88 : vector<1x64xi1>
    %90 = arith.extui %89 : vector<1x64xi1> to vector<1x64xi32>
    %91 = arith.sitofp %90 : vector<1x64xi32> to vector<1x64xf32>
    %92 = vector.broadcast %91 : vector<1x64xf32> to vector<80x64xf32>
    %93 = arith.mulf %15, %92 : vector<80x64xf32>
    %cst_35 = arith.constant dense<0.000000e+00> : vector<80x80xf32>
    %94 = tpu.matmul %14, %93, %cst_35 {dimension_numbers = #tpu.dot_dimension_numbers<[1], [1], [0], [0], [0, 0, 1, 0], [], []>} : vector<80x64xf32>, vector<80x64xf32>, vector<80x80xf32> -> vector<80x80xf32>
    %cst_36 = arith.constant 0.353553385 : f32
    %95 = vector.broadcast %cst_36 : f32 to vector<80x80xf32>
    %96 = arith.mulf %94, %95 : vector<80x80xf32>
    %cst_37 = arith.constant 1.500000e+00 : f32
    %97 = vector.broadcast %cst_37 : f32 to vector<80x80xf32>
    %98 = arith.cmpf oge, %5, %97 : vector<80x80xf32>
    %cst_38 = arith.constant 5.000000e-01 : f32
    %99 = vector.broadcast %cst_38 : f32 to vector<80x80xf32>
    %100 = arith.cmpf oge, %5, %99 : vector<80x80xf32>
    %cst_39 = arith.constant -1.000000e+09 : f32
    %101 = vector.broadcast %cst_39 : f32 to vector<80x80xf32>
    %102 = arith.select %100, %101, %96 : vector<80x80xi1>, vector<80x80xf32>
    %cst_40 = arith.constant -1.000000e+30 : f32
    %103 = vector.broadcast %cst_40 : f32 to vector<80x80xf32>
    %104 = arith.select %98, %103, %102 : vector<80x80xi1>, vector<80x80xf32>
    %cst_41 = arith.constant dense<0xFF800000> : vector<80xf32>
    %105 = vector.multi_reduction <maximumf>, %104, %cst_41 [1] : vector<80x80xf32> to vector<80xf32>
    %106 = vector.shape_cast %105 : vector<80xf32> to vector<80x1xf32>
    %107 = vector.broadcast %106 : vector<80x1xf32> to vector<80x80xf32>
    %108 = arith.subf %104, %107 : vector<80x80xf32>
    %109 = math.exp %108 : vector<80x80xf32>
    %cst_42 = arith.constant dense<0.000000e+00> : vector<80xf32>
    %110 = vector.multi_reduction <add>, %109, %cst_42 [1] : vector<80x80xf32> to vector<80xf32>
    %111 = vector.shape_cast %110 : vector<80xf32> to vector<80x1xf32>
    %112 = vector.broadcast %111 : vector<80x1xf32> to vector<80x80xf32>
    %113 = arith.divf %109, %112 : vector<80x80xf32>
    %114 = vector.broadcast %91 : vector<1x64xf32> to vector<80x64xf32>
    %115 = arith.mulf %16, %114 : vector<80x64xf32>
    %cst_43 = arith.constant dense<0.000000e+00> : vector<80x64xf32>
    %116 = tpu.matmul %113, %115, %cst_43 {dimension_numbers = #tpu.dot_dimension_numbers<[1], [0], [0], [1], [0, 0, 1, 1], [], []>} : vector<80x80xf32>, vector<80x64xf32>, vector<80x64xf32> -> vector<80x64xf32>
    %117 = arith.addf %84, %116 : vector<80x64xf32>
    %c24_i32_44 = arith.constant 24 : i32
    %118 = vector.broadcast %c24_i32_44 : i32 to vector<1x64xi32>
    %119 = arith.cmpi sge, %17, %118 : vector<1x64xi32>
    %c32_i32 = arith.constant 32 : i32
    %120 = vector.broadcast %c32_i32 : i32 to vector<1x64xi32>
    %121 = arith.cmpi slt, %17, %120 : vector<1x64xi32>
    %122 = arith.andi %119, %121 : vector<1x64xi1>
    %123 = arith.extui %122 : vector<1x64xi1> to vector<1x64xi32>
    %124 = arith.sitofp %123 : vector<1x64xi32> to vector<1x64xf32>
    %125 = vector.broadcast %124 : vector<1x64xf32> to vector<80x64xf32>
    %126 = arith.mulf %15, %125 : vector<80x64xf32>
    %cst_45 = arith.constant dense<0.000000e+00> : vector<80x80xf32>
    %127 = tpu.matmul %14, %126, %cst_45 {dimension_numbers = #tpu.dot_dimension_numbers<[1], [1], [0], [0], [0, 0, 1, 0], [], []>} : vector<80x64xf32>, vector<80x64xf32>, vector<80x80xf32> -> vector<80x80xf32>
    %cst_46 = arith.constant 0.353553385 : f32
    %128 = vector.broadcast %cst_46 : f32 to vector<80x80xf32>
    %129 = arith.mulf %127, %128 : vector<80x80xf32>
    %cst_47 = arith.constant 1.500000e+00 : f32
    %130 = vector.broadcast %cst_47 : f32 to vector<80x80xf32>
    %131 = arith.cmpf oge, %5, %130 : vector<80x80xf32>
    %cst_48 = arith.constant 5.000000e-01 : f32
    %132 = vector.broadcast %cst_48 : f32 to vector<80x80xf32>
    %133 = arith.cmpf oge, %5, %132 : vector<80x80xf32>
    %cst_49 = arith.constant -1.000000e+09 : f32
    %134 = vector.broadcast %cst_49 : f32 to vector<80x80xf32>
    %135 = arith.select %133, %134, %129 : vector<80x80xi1>, vector<80x80xf32>
    %cst_50 = arith.constant -1.000000e+30 : f32
    %136 = vector.broadcast %cst_50 : f32 to vector<80x80xf32>
    %137 = arith.select %131, %136, %135 : vector<80x80xi1>, vector<80x80xf32>
    %cst_51 = arith.constant dense<0xFF800000> : vector<80xf32>
    %138 = vector.multi_reduction <maximumf>, %137, %cst_51 [1] : vector<80x80xf32> to vector<80xf32>
    %139 = vector.shape_cast %138 : vector<80xf32> to vector<80x1xf32>
    %140 = vector.broadcast %139 : vector<80x1xf32> to vector<80x80xf32>
    %141 = arith.subf %137, %140 : vector<80x80xf32>
    %142 = math.exp %141 : vector<80x80xf32>
    %cst_52 = arith.constant dense<0.000000e+00> : vector<80xf32>
    %143 = vector.multi_reduction <add>, %142, %cst_52 [1] : vector<80x80xf32> to vector<80xf32>
    %144 = vector.shape_cast %143 : vector<80xf32> to vector<80x1xf32>
    %145 = vector.broadcast %144 : vector<80x1xf32> to vector<80x80xf32>
    %146 = arith.divf %142, %145 : vector<80x80xf32>
    %147 = vector.broadcast %124 : vector<1x64xf32> to vector<80x64xf32>
    %148 = arith.mulf %16, %147 : vector<80x64xf32>
    %cst_53 = arith.constant dense<0.000000e+00> : vector<80x64xf32>
    %149 = tpu.matmul %146, %148, %cst_53 {dimension_numbers = #tpu.dot_dimension_numbers<[1], [0], [0], [1], [0, 0, 1, 1], [], []>} : vector<80x80xf32>, vector<80x64xf32>, vector<80x64xf32> -> vector<80x64xf32>
    %150 = arith.addf %117, %149 : vector<80x64xf32>
    %c32_i32_54 = arith.constant 32 : i32
    %151 = vector.broadcast %c32_i32_54 : i32 to vector<1x64xi32>
    %152 = arith.cmpi sge, %17, %151 : vector<1x64xi32>
    %c40_i32 = arith.constant 40 : i32
    %153 = vector.broadcast %c40_i32 : i32 to vector<1x64xi32>
    %154 = arith.cmpi slt, %17, %153 : vector<1x64xi32>
    %155 = arith.andi %152, %154 : vector<1x64xi1>
    %156 = arith.extui %155 : vector<1x64xi1> to vector<1x64xi32>
    %157 = arith.sitofp %156 : vector<1x64xi32> to vector<1x64xf32>
    %158 = vector.broadcast %157 : vector<1x64xf32> to vector<80x64xf32>
    %159 = arith.mulf %15, %158 : vector<80x64xf32>
    %cst_55 = arith.constant dense<0.000000e+00> : vector<80x80xf32>
    %160 = tpu.matmul %14, %159, %cst_55 {dimension_numbers = #tpu.dot_dimension_numbers<[1], [1], [0], [0], [0, 0, 1, 0], [], []>} : vector<80x64xf32>, vector<80x64xf32>, vector<80x80xf32> -> vector<80x80xf32>
    %cst_56 = arith.constant 0.353553385 : f32
    %161 = vector.broadcast %cst_56 : f32 to vector<80x80xf32>
    %162 = arith.mulf %160, %161 : vector<80x80xf32>
    %cst_57 = arith.constant 1.500000e+00 : f32
    %163 = vector.broadcast %cst_57 : f32 to vector<80x80xf32>
    %164 = arith.cmpf oge, %5, %163 : vector<80x80xf32>
    %cst_58 = arith.constant 5.000000e-01 : f32
    %165 = vector.broadcast %cst_58 : f32 to vector<80x80xf32>
    %166 = arith.cmpf oge, %5, %165 : vector<80x80xf32>
    %cst_59 = arith.constant -1.000000e+09 : f32
    %167 = vector.broadcast %cst_59 : f32 to vector<80x80xf32>
    %168 = arith.select %166, %167, %162 : vector<80x80xi1>, vector<80x80xf32>
    %cst_60 = arith.constant -1.000000e+30 : f32
    %169 = vector.broadcast %cst_60 : f32 to vector<80x80xf32>
    %170 = arith.select %164, %169, %168 : vector<80x80xi1>, vector<80x80xf32>
    %cst_61 = arith.constant dense<0xFF800000> : vector<80xf32>
    %171 = vector.multi_reduction <maximumf>, %170, %cst_61 [1] : vector<80x80xf32> to vector<80xf32>
    %172 = vector.shape_cast %171 : vector<80xf32> to vector<80x1xf32>
    %173 = vector.broadcast %172 : vector<80x1xf32> to vector<80x80xf32>
    %174 = arith.subf %170, %173 : vector<80x80xf32>
    %175 = math.exp %174 : vector<80x80xf32>
    %cst_62 = arith.constant dense<0.000000e+00> : vector<80xf32>
    %176 = vector.multi_reduction <add>, %175, %cst_62 [1] : vector<80x80xf32> to vector<80xf32>
    %177 = vector.shape_cast %176 : vector<80xf32> to vector<80x1xf32>
    %178 = vector.broadcast %177 : vector<80x1xf32> to vector<80x80xf32>
    %179 = arith.divf %175, %178 : vector<80x80xf32>
    %180 = vector.broadcast %157 : vector<1x64xf32> to vector<80x64xf32>
    %181 = arith.mulf %16, %180 : vector<80x64xf32>
    %cst_63 = arith.constant dense<0.000000e+00> : vector<80x64xf32>
    %182 = tpu.matmul %179, %181, %cst_63 {dimension_numbers = #tpu.dot_dimension_numbers<[1], [0], [0], [1], [0, 0, 1, 1], [], []>} : vector<80x80xf32>, vector<80x64xf32>, vector<80x64xf32> -> vector<80x64xf32>
    %183 = arith.addf %150, %182 : vector<80x64xf32>
    %c40_i32_64 = arith.constant 40 : i32
    %184 = vector.broadcast %c40_i32_64 : i32 to vector<1x64xi32>
    %185 = arith.cmpi sge, %17, %184 : vector<1x64xi32>
    %c48_i32 = arith.constant 48 : i32
    %186 = vector.broadcast %c48_i32 : i32 to vector<1x64xi32>
    %187 = arith.cmpi slt, %17, %186 : vector<1x64xi32>
    %188 = arith.andi %185, %187 : vector<1x64xi1>
    %189 = arith.extui %188 : vector<1x64xi1> to vector<1x64xi32>
    %190 = arith.sitofp %189 : vector<1x64xi32> to vector<1x64xf32>
    %191 = vector.broadcast %190 : vector<1x64xf32> to vector<80x64xf32>
    %192 = arith.mulf %15, %191 : vector<80x64xf32>
    %cst_65 = arith.constant dense<0.000000e+00> : vector<80x80xf32>
    %193 = tpu.matmul %14, %192, %cst_65 {dimension_numbers = #tpu.dot_dimension_numbers<[1], [1], [0], [0], [0, 0, 1, 0], [], []>} : vector<80x64xf32>, vector<80x64xf32>, vector<80x80xf32> -> vector<80x80xf32>
    %cst_66 = arith.constant 0.353553385 : f32
    %194 = vector.broadcast %cst_66 : f32 to vector<80x80xf32>
    %195 = arith.mulf %193, %194 : vector<80x80xf32>
    %cst_67 = arith.constant 1.500000e+00 : f32
    %196 = vector.broadcast %cst_67 : f32 to vector<80x80xf32>
    %197 = arith.cmpf oge, %5, %196 : vector<80x80xf32>
    %cst_68 = arith.constant 5.000000e-01 : f32
    %198 = vector.broadcast %cst_68 : f32 to vector<80x80xf32>
    %199 = arith.cmpf oge, %5, %198 : vector<80x80xf32>
    %cst_69 = arith.constant -1.000000e+09 : f32
    %200 = vector.broadcast %cst_69 : f32 to vector<80x80xf32>
    %201 = arith.select %199, %200, %195 : vector<80x80xi1>, vector<80x80xf32>
    %cst_70 = arith.constant -1.000000e+30 : f32
    %202 = vector.broadcast %cst_70 : f32 to vector<80x80xf32>
    %203 = arith.select %197, %202, %201 : vector<80x80xi1>, vector<80x80xf32>
    %cst_71 = arith.constant dense<0xFF800000> : vector<80xf32>
    %204 = vector.multi_reduction <maximumf>, %203, %cst_71 [1] : vector<80x80xf32> to vector<80xf32>
    %205 = vector.shape_cast %204 : vector<80xf32> to vector<80x1xf32>
    %206 = vector.broadcast %205 : vector<80x1xf32> to vector<80x80xf32>
    %207 = arith.subf %203, %206 : vector<80x80xf32>
    %208 = math.exp %207 : vector<80x80xf32>
    %cst_72 = arith.constant dense<0.000000e+00> : vector<80xf32>
    %209 = vector.multi_reduction <add>, %208, %cst_72 [1] : vector<80x80xf32> to vector<80xf32>
    %210 = vector.shape_cast %209 : vector<80xf32> to vector<80x1xf32>
    %211 = vector.broadcast %210 : vector<80x1xf32> to vector<80x80xf32>
    %212 = arith.divf %208, %211 : vector<80x80xf32>
    %213 = vector.broadcast %190 : vector<1x64xf32> to vector<80x64xf32>
    %214 = arith.mulf %16, %213 : vector<80x64xf32>
    %cst_73 = arith.constant dense<0.000000e+00> : vector<80x64xf32>
    %215 = tpu.matmul %212, %214, %cst_73 {dimension_numbers = #tpu.dot_dimension_numbers<[1], [0], [0], [1], [0, 0, 1, 1], [], []>} : vector<80x80xf32>, vector<80x64xf32>, vector<80x64xf32> -> vector<80x64xf32>
    %216 = arith.addf %183, %215 : vector<80x64xf32>
    %c48_i32_74 = arith.constant 48 : i32
    %217 = vector.broadcast %c48_i32_74 : i32 to vector<1x64xi32>
    %218 = arith.cmpi sge, %17, %217 : vector<1x64xi32>
    %c56_i32 = arith.constant 56 : i32
    %219 = vector.broadcast %c56_i32 : i32 to vector<1x64xi32>
    %220 = arith.cmpi slt, %17, %219 : vector<1x64xi32>
    %221 = arith.andi %218, %220 : vector<1x64xi1>
    %222 = arith.extui %221 : vector<1x64xi1> to vector<1x64xi32>
    %223 = arith.sitofp %222 : vector<1x64xi32> to vector<1x64xf32>
    %224 = vector.broadcast %223 : vector<1x64xf32> to vector<80x64xf32>
    %225 = arith.mulf %15, %224 : vector<80x64xf32>
    %cst_75 = arith.constant dense<0.000000e+00> : vector<80x80xf32>
    %226 = tpu.matmul %14, %225, %cst_75 {dimension_numbers = #tpu.dot_dimension_numbers<[1], [1], [0], [0], [0, 0, 1, 0], [], []>} : vector<80x64xf32>, vector<80x64xf32>, vector<80x80xf32> -> vector<80x80xf32>
    %cst_76 = arith.constant 0.353553385 : f32
    %227 = vector.broadcast %cst_76 : f32 to vector<80x80xf32>
    %228 = arith.mulf %226, %227 : vector<80x80xf32>
    %cst_77 = arith.constant 1.500000e+00 : f32
    %229 = vector.broadcast %cst_77 : f32 to vector<80x80xf32>
    %230 = arith.cmpf oge, %5, %229 : vector<80x80xf32>
    %cst_78 = arith.constant 5.000000e-01 : f32
    %231 = vector.broadcast %cst_78 : f32 to vector<80x80xf32>
    %232 = arith.cmpf oge, %5, %231 : vector<80x80xf32>
    %cst_79 = arith.constant -1.000000e+09 : f32
    %233 = vector.broadcast %cst_79 : f32 to vector<80x80xf32>
    %234 = arith.select %232, %233, %228 : vector<80x80xi1>, vector<80x80xf32>
    %cst_80 = arith.constant -1.000000e+30 : f32
    %235 = vector.broadcast %cst_80 : f32 to vector<80x80xf32>
    %236 = arith.select %230, %235, %234 : vector<80x80xi1>, vector<80x80xf32>
    %cst_81 = arith.constant dense<0xFF800000> : vector<80xf32>
    %237 = vector.multi_reduction <maximumf>, %236, %cst_81 [1] : vector<80x80xf32> to vector<80xf32>
    %238 = vector.shape_cast %237 : vector<80xf32> to vector<80x1xf32>
    %239 = vector.broadcast %238 : vector<80x1xf32> to vector<80x80xf32>
    %240 = arith.subf %236, %239 : vector<80x80xf32>
    %241 = math.exp %240 : vector<80x80xf32>
    %cst_82 = arith.constant dense<0.000000e+00> : vector<80xf32>
    %242 = vector.multi_reduction <add>, %241, %cst_82 [1] : vector<80x80xf32> to vector<80xf32>
    %243 = vector.shape_cast %242 : vector<80xf32> to vector<80x1xf32>
    %244 = vector.broadcast %243 : vector<80x1xf32> to vector<80x80xf32>
    %245 = arith.divf %241, %244 : vector<80x80xf32>
    %246 = vector.broadcast %223 : vector<1x64xf32> to vector<80x64xf32>
    %247 = arith.mulf %16, %246 : vector<80x64xf32>
    %cst_83 = arith.constant dense<0.000000e+00> : vector<80x64xf32>
    %248 = tpu.matmul %245, %247, %cst_83 {dimension_numbers = #tpu.dot_dimension_numbers<[1], [0], [0], [1], [0, 0, 1, 1], [], []>} : vector<80x80xf32>, vector<80x64xf32>, vector<80x64xf32> -> vector<80x64xf32>
    %249 = arith.addf %216, %248 : vector<80x64xf32>
    %c56_i32_84 = arith.constant 56 : i32
    %250 = vector.broadcast %c56_i32_84 : i32 to vector<1x64xi32>
    %251 = arith.cmpi sge, %17, %250 : vector<1x64xi32>
    %c64_i32 = arith.constant 64 : i32
    %252 = vector.broadcast %c64_i32 : i32 to vector<1x64xi32>
    %253 = arith.cmpi slt, %17, %252 : vector<1x64xi32>
    %254 = arith.andi %251, %253 : vector<1x64xi1>
    %255 = arith.extui %254 : vector<1x64xi1> to vector<1x64xi32>
    %256 = arith.sitofp %255 : vector<1x64xi32> to vector<1x64xf32>
    %257 = vector.broadcast %256 : vector<1x64xf32> to vector<80x64xf32>
    %258 = arith.mulf %15, %257 : vector<80x64xf32>
    %cst_85 = arith.constant dense<0.000000e+00> : vector<80x80xf32>
    %259 = tpu.matmul %14, %258, %cst_85 {dimension_numbers = #tpu.dot_dimension_numbers<[1], [1], [0], [0], [0, 0, 1, 0], [], []>} : vector<80x64xf32>, vector<80x64xf32>, vector<80x80xf32> -> vector<80x80xf32>
    %cst_86 = arith.constant 0.353553385 : f32
    %260 = vector.broadcast %cst_86 : f32 to vector<80x80xf32>
    %261 = arith.mulf %259, %260 : vector<80x80xf32>
    %cst_87 = arith.constant 1.500000e+00 : f32
    %262 = vector.broadcast %cst_87 : f32 to vector<80x80xf32>
    %263 = arith.cmpf oge, %5, %262 : vector<80x80xf32>
    %cst_88 = arith.constant 5.000000e-01 : f32
    %264 = vector.broadcast %cst_88 : f32 to vector<80x80xf32>
    %265 = arith.cmpf oge, %5, %264 : vector<80x80xf32>
    %cst_89 = arith.constant -1.000000e+09 : f32
    %266 = vector.broadcast %cst_89 : f32 to vector<80x80xf32>
    %267 = arith.select %265, %266, %261 : vector<80x80xi1>, vector<80x80xf32>
    %cst_90 = arith.constant -1.000000e+30 : f32
    %268 = vector.broadcast %cst_90 : f32 to vector<80x80xf32>
    %269 = arith.select %263, %268, %267 : vector<80x80xi1>, vector<80x80xf32>
    %cst_91 = arith.constant dense<0xFF800000> : vector<80xf32>
    %270 = vector.multi_reduction <maximumf>, %269, %cst_91 [1] : vector<80x80xf32> to vector<80xf32>
    %271 = vector.shape_cast %270 : vector<80xf32> to vector<80x1xf32>
    %272 = vector.broadcast %271 : vector<80x1xf32> to vector<80x80xf32>
    %273 = arith.subf %269, %272 : vector<80x80xf32>
    %274 = math.exp %273 : vector<80x80xf32>
    %cst_92 = arith.constant dense<0.000000e+00> : vector<80xf32>
    %275 = vector.multi_reduction <add>, %274, %cst_92 [1] : vector<80x80xf32> to vector<80xf32>
    %276 = vector.shape_cast %275 : vector<80xf32> to vector<80x1xf32>
    %277 = vector.broadcast %276 : vector<80x1xf32> to vector<80x80xf32>
    %278 = arith.divf %274, %277 : vector<80x80xf32>
    %279 = vector.broadcast %256 : vector<1x64xf32> to vector<80x64xf32>
    %280 = arith.mulf %16, %279 : vector<80x64xf32>
    %cst_93 = arith.constant dense<0.000000e+00> : vector<80x64xf32>
    %281 = tpu.matmul %278, %280, %cst_93 {dimension_numbers = #tpu.dot_dimension_numbers<[1], [0], [0], [1], [0, 0, 1, 1], [], []>} : vector<80x80xf32>, vector<80x64xf32>, vector<80x64xf32> -> vector<80x64xf32>
    %282 = arith.addf %249, %281 : vector<80x64xf32>
    %283 = arith.truncf %282 : vector<80x64xf32> to vector<80x64xbf16>
    %c0_94 = arith.constant 0 : index
    %c0_95 = arith.constant 0 : index
    %c0_96 = arith.constant 0 : index
    %c0_97 = arith.constant 0 : index
    %284 = vector.load %arg8[%c0_94, %c0_95, %c0_96, %c0_97] : memref<1x1x64x64xbf16, #tpu.memory_space<vmem>>, vector<1x1x64x64xbf16>
    %285 = vector.shape_cast %284 : vector<1x1x64x64xbf16> to vector<64x64xbf16>
    %cst_98 = arith.constant dense<0.000000e+00> : vector<80x64xf32>
    %286 = tpu.matmul %283, %285, %cst_98 {dimension_numbers = #tpu.dot_dimension_numbers<[1], [0], [0], [1], [0, 0, 1, 1], [], []>} : vector<80x64xbf16>, vector<64x64xbf16>, vector<80x64xf32> -> vector<80x64xf32>
    %c0_99 = arith.constant 0 : index
    %c0_100 = arith.constant 0 : index
    %c0_101 = arith.constant 0 : index
    %c0_102 = arith.constant 0 : index
    %287 = vector.load %arg9[%c0_99, %c0_100, %c0_101, %c0_102] : memref<1x1x1x64xf32, #tpu.memory_space<vmem>>, vector<1x1x1x64xf32>
    %288 = vector.shape_cast %287 : vector<1x1x1x64xf32> to vector<1x64xf32>
    %289 = vector.broadcast %288 : vector<1x64xf32> to vector<80x64xf32>
    %290 = arith.addf %286, %289 : vector<80x64xf32>
    %291 = arith.addf %3, %290 : vector<80x64xf32>
    %cst_103 = arith.constant dense<0.000000e+00> : vector<80xf32>
    %292 = vector.multi_reduction <add>, %291, %cst_103 [1] : vector<80x64xf32> to vector<80xf32>
    %293 = vector.shape_cast %292 : vector<80xf32> to vector<80x1xf32>
    %cst_104 = arith.constant 6.400000e+01 : f32
    %294 = vector.broadcast %cst_104 : f32 to vector<80x1xf32>
    %295 = arith.divf %293, %294 : vector<80x1xf32>
    %296 = vector.broadcast %295 : vector<80x1xf32> to vector<80x64xf32>
    %297 = arith.subf %291, %296 : vector<80x64xf32>
    %298 = arith.mulf %297, %297 : vector<80x64xf32>
    %cst_105 = arith.constant dense<0.000000e+00> : vector<80xf32>
    %299 = vector.multi_reduction <add>, %298, %cst_105 [1] : vector<80x64xf32> to vector<80xf32>
    %300 = vector.shape_cast %299 : vector<80xf32> to vector<80x1xf32>
    %cst_106 = arith.constant 6.400000e+01 : f32
    %301 = vector.broadcast %cst_106 : f32 to vector<80x1xf32>
    %302 = arith.divf %300, %301 : vector<80x1xf32>
    %cst_107 = arith.constant 9.99999974E-6 : f32
    %303 = vector.broadcast %cst_107 : f32 to vector<80x1xf32>
    %304 = arith.addf %302, %303 : vector<80x1xf32>
    %305 = math.rsqrt %304 : vector<80x1xf32>
    %306 = vector.broadcast %305 : vector<80x1xf32> to vector<80x64xf32>
    %307 = arith.mulf %297, %306 : vector<80x64xf32>
    %c0_108 = arith.constant 0 : index
    %c0_109 = arith.constant 0 : index
    %c0_110 = arith.constant 0 : index
    %c0_111 = arith.constant 0 : index
    %308 = vector.load %arg14[%c0_108, %c0_109, %c0_110, %c0_111] : memref<1x1x1x64xf32, #tpu.memory_space<vmem>>, vector<1x1x1x64xf32>
    %309 = vector.shape_cast %308 : vector<1x1x1x64xf32> to vector<1x64xf32>
    %310 = vector.broadcast %309 : vector<1x64xf32> to vector<80x64xf32>
    %311 = arith.mulf %307, %310 : vector<80x64xf32>
    %c0_112 = arith.constant 0 : index
    %c0_113 = arith.constant 0 : index
    %c0_114 = arith.constant 0 : index
    %c0_115 = arith.constant 0 : index
    %312 = vector.load %arg15[%c0_112, %c0_113, %c0_114, %c0_115] : memref<1x1x1x64xf32, #tpu.memory_space<vmem>>, vector<1x1x1x64xf32>
    %313 = vector.shape_cast %312 : vector<1x1x1x64xf32> to vector<1x64xf32>
    %314 = vector.broadcast %313 : vector<1x64xf32> to vector<80x64xf32>
    %315 = arith.addf %311, %314 : vector<80x64xf32>
    %316 = arith.truncf %315 : vector<80x64xf32> to vector<80x64xbf16>
    %c0_116 = arith.constant 0 : index
    %c0_117 = arith.constant 0 : index
    %c0_118 = arith.constant 0 : index
    %c0_119 = arith.constant 0 : index
    %317 = vector.load %arg10[%c0_116, %c0_117, %c0_118, %c0_119] : memref<1x1x64x2048xbf16, #tpu.memory_space<vmem>>, vector<1x1x64x2048xbf16>
    %318 = vector.shape_cast %317 : vector<1x1x64x2048xbf16> to vector<64x2048xbf16>
    %cst_120 = arith.constant dense<0.000000e+00> : vector<80x2048xf32>
    %319 = tpu.matmul %316, %318, %cst_120 {dimension_numbers = #tpu.dot_dimension_numbers<[1], [0], [0], [1], [0, 0, 1, 1], [], []>} : vector<80x64xbf16>, vector<64x2048xbf16>, vector<80x2048xf32> -> vector<80x2048xf32>
    %c0_121 = arith.constant 0 : index
    %c0_122 = arith.constant 0 : index
    %c0_123 = arith.constant 0 : index
    %c0_124 = arith.constant 0 : index
    %320 = vector.load %arg11[%c0_121, %c0_122, %c0_123, %c0_124] : memref<1x1x1x2048xf32, #tpu.memory_space<vmem>>, vector<1x1x1x2048xf32>
    %321 = vector.shape_cast %320 : vector<1x1x1x2048xf32> to vector<1x2048xf32>
    %322 = vector.broadcast %321 : vector<1x2048xf32> to vector<80x2048xf32>
    %323 = arith.addf %319, %322 : vector<80x2048xf32>
    %cst_125 = arith.constant 0.000000e+00 : f32
    %324 = vector.broadcast %cst_125 : f32 to vector<80x2048xf32>
    %325 = arith.maximumf %323, %324 : vector<80x2048xf32>
    %326 = arith.truncf %325 : vector<80x2048xf32> to vector<80x2048xbf16>
    %c0_126 = arith.constant 0 : index
    %c0_127 = arith.constant 0 : index
    %c0_128 = arith.constant 0 : index
    %c0_129 = arith.constant 0 : index
    %327 = vector.load %arg12[%c0_126, %c0_127, %c0_128, %c0_129] : memref<1x1x2048x64xbf16, #tpu.memory_space<vmem>>, vector<1x1x2048x64xbf16>
    %328 = vector.shape_cast %327 : vector<1x1x2048x64xbf16> to vector<2048x64xbf16>
    %cst_130 = arith.constant dense<0.000000e+00> : vector<80x64xf32>
    %329 = tpu.matmul %326, %328, %cst_130 {dimension_numbers = #tpu.dot_dimension_numbers<[1], [0], [0], [1], [0, 0, 1, 1], [], []>} : vector<80x2048xbf16>, vector<2048x64xbf16>, vector<80x64xf32> -> vector<80x64xf32>
    %c0_131 = arith.constant 0 : index
    %c0_132 = arith.constant 0 : index
    %c0_133 = arith.constant 0 : index
    %c0_134 = arith.constant 0 : index
    %330 = vector.load %arg13[%c0_131, %c0_132, %c0_133, %c0_134] : memref<1x1x1x64xf32, #tpu.memory_space<vmem>>, vector<1x1x1x64xf32>
    %331 = vector.shape_cast %330 : vector<1x1x1x64xf32> to vector<1x64xf32>
    %332 = vector.broadcast %331 : vector<1x64xf32> to vector<80x64xf32>
    %333 = arith.addf %329, %332 : vector<80x64xf32>
    %334 = arith.addf %315, %333 : vector<80x64xf32>
    %cst_135 = arith.constant dense<0.000000e+00> : vector<80xf32>
    %335 = vector.multi_reduction <add>, %334, %cst_135 [1] : vector<80x64xf32> to vector<80xf32>
    %336 = vector.shape_cast %335 : vector<80xf32> to vector<80x1xf32>
    %cst_136 = arith.constant 6.400000e+01 : f32
    %337 = vector.broadcast %cst_136 : f32 to vector<80x1xf32>
    %338 = arith.divf %336, %337 : vector<80x1xf32>
    %339 = vector.broadcast %338 : vector<80x1xf32> to vector<80x64xf32>
    %340 = arith.subf %334, %339 : vector<80x64xf32>
    %341 = arith.mulf %340, %340 : vector<80x64xf32>
    %cst_137 = arith.constant dense<0.000000e+00> : vector<80xf32>
    %342 = vector.multi_reduction <add>, %341, %cst_137 [1] : vector<80x64xf32> to vector<80xf32>
    %343 = vector.shape_cast %342 : vector<80xf32> to vector<80x1xf32>
    %cst_138 = arith.constant 6.400000e+01 : f32
    %344 = vector.broadcast %cst_138 : f32 to vector<80x1xf32>
    %345 = arith.divf %343, %344 : vector<80x1xf32>
    %cst_139 = arith.constant 9.99999974E-6 : f32
    %346 = vector.broadcast %cst_139 : f32 to vector<80x1xf32>
    %347 = arith.addf %345, %346 : vector<80x1xf32>
    %348 = math.rsqrt %347 : vector<80x1xf32>
    %349 = vector.broadcast %348 : vector<80x1xf32> to vector<80x64xf32>
    %350 = arith.mulf %340, %349 : vector<80x64xf32>
    %c0_140 = arith.constant 0 : index
    %c0_141 = arith.constant 0 : index
    %c0_142 = arith.constant 0 : index
    %c0_143 = arith.constant 0 : index
    %351 = vector.load %arg16[%c0_140, %c0_141, %c0_142, %c0_143] : memref<1x1x1x64xf32, #tpu.memory_space<vmem>>, vector<1x1x1x64xf32>
    %352 = vector.shape_cast %351 : vector<1x1x1x64xf32> to vector<1x64xf32>
    %353 = vector.broadcast %352 : vector<1x64xf32> to vector<80x64xf32>
    %354 = arith.mulf %350, %353 : vector<80x64xf32>
    %c0_144 = arith.constant 0 : index
    %c0_145 = arith.constant 0 : index
    %c0_146 = arith.constant 0 : index
    %c0_147 = arith.constant 0 : index
    %355 = vector.load %arg17[%c0_144, %c0_145, %c0_146, %c0_147] : memref<1x1x1x64xf32, #tpu.memory_space<vmem>>, vector<1x1x1x64xf32>
    %356 = vector.shape_cast %355 : vector<1x1x1x64xf32> to vector<1x64xf32>
    %357 = vector.broadcast %356 : vector<1x64xf32> to vector<80x64xf32>
    %358 = arith.addf %354, %357 : vector<80x64xf32>
    %c0_148 = arith.constant 0 : index
    %c0_149 = arith.constant 0 : index
    %359 = vector.load %arg19[%c0_148, %c0_149] : memref<80x64xf32, #tpu.memory_space<vmem>>, vector<80x64xf32>
    tpu.vector_store %arg19[%c0_148, %c0_149], %358 {strides = array<i32>} : memref<80x64xf32, #tpu.memory_space<vmem>>, vector<80x64xf32>,
    %c5_i32 = arith.constant 5 : i32
    %360 = arith.cmpi eq, %arg1, %c5_i32 : i32
    %361 = arith.extui %360 : i1 to i32
    %c0_i32_150 = arith.constant 0 : i32
    %362 = arith.cmpi ne, %361, %c0_i32_150 : i32
    scf.if %362 {
      %c0_151 = arith.constant 0 : index
      %c0_152 = arith.constant 0 : index
      %363 = vector.load %arg19[%c0_151, %c0_152] : memref<80x64xf32, #tpu.memory_space<vmem>>, vector<80x64xf32>
      %c0_153 = arith.constant 0 : index
      %c0_154 = arith.constant 0 : index
      %c0_155 = arith.constant 0 : index
      %364 = vector.load %arg18[%c0_153, %c0_154, %c0_155] : memref<1x80x64xf32, #tpu.memory_space<vmem>>, vector<1x80x64xf32>
      %365 = vector.shape_cast %364 : vector<1x80x64xf32> to vector<80x64xf32>
      %366 = vector.shape_cast %363 : vector<80x64xf32> to vector<1x80x64xf32>
      tpu.vector_store %arg18[%c0_153, %c0_154, %c0_155], %366 {strides = array<i32>} : memref<1x80x64xf32, #tpu.memory_space<vmem>>, vector<1x80x64xf32>,
    } else {
    }
    return
  }
  func.func @transform_0(%arg0: i32, %arg1: i32) -> (i32, i32, i32) {
    %c0_i32 = arith.constant 0 : i32
    %c0_i32_0 = arith.constant 0 : i32
    %c0_i32_1 = arith.constant 0 : i32
    return %arg0, %c0_i32, %c0_i32_0 : i32, i32, i32
  }
  func.func @transform_1(%arg0: i32, %arg1: i32) -> (i32, i32, i32) {
    %c0_i32 = arith.constant 0 : i32
    %c0_i32_0 = arith.constant 0 : i32
    %c0_i32_1 = arith.constant 0 : i32
    return %arg0, %c0_i32, %c0_i32_0 : i32, i32, i32
  }
  func.func @transform_2(%arg0: i32, %arg1: i32) -> (i32, i32, i32) {
    %c0_i32 = arith.constant 0 : i32
    %c0_i32_0 = arith.constant 0 : i32
    %c0_i32_1 = arith.constant 0 : i32
    return %arg0, %c0_i32, %c0_i32_0 : i32, i32, i32
  }
  func.func @transform_3(%arg0: i32, %arg1: i32) -> (i32, i32, i32) {
    %c0_i32 = arith.constant 0 : i32
    %c0_i32_0 = arith.constant 0 : i32
    %c0_i32_1 = arith.constant 0 : i32
    return %arg0, %c0_i32, %c0_i32_0 : i32, i32, i32
  }
  func.func @transform_4(%arg0: i32, %arg1: i32) -> (i32, i32, i32, i32) {
    %c0_i32 = arith.constant 0 : i32
    %c0_i32_0 = arith.constant 0 : i32
    %c0_i32_1 = arith.constant 0 : i32
    return %arg0, %arg1, %c0_i32, %c0_i32_0 : i32, i32, i32, i32
  }
  func.func @transform_5(%arg0: i32, %arg1: i32) -> (i32, i32, i32, i32) {
    %c0_i32 = arith.constant 0 : i32
    %c0_i32_0 = arith.constant 0 : i32
    %c0_i32_1 = arith.constant 0 : i32
    return %arg0, %arg1, %c0_i32, %c0_i32_0 : i32, i32, i32, i32
  }
  func.func @transform_6(%arg0: i32, %arg1: i32) -> (i32, i32, i32, i32) {
    %c0_i32 = arith.constant 0 : i32
    %c0_i32_0 = arith.constant 0 : i32
    %c0_i32_1 = arith.constant 0 : i32
    return %arg0, %arg1, %c0_i32, %c0_i32_0 : i32, i32, i32, i32
  }
  func.func @transform_7(%arg0: i32, %arg1: i32) -> (i32, i32, i32, i32) {
    %c0_i32 = arith.constant 0 : i32
    %c0_i32_0 = arith.constant 0 : i32
    %c0_i32_1 = arith.constant 0 : i32
    return %arg0, %arg1, %c0_i32, %c0_i32_0 : i32, i32, i32, i32
  }
  func.func @transform_8(%arg0: i32, %arg1: i32) -> (i32, i32, i32, i32) {
    %c0_i32 = arith.constant 0 : i32
    %c0_i32_0 = arith.constant 0 : i32
    %c0_i32_1 = arith.constant 0 : i32
    return %arg0, %arg1, %c0_i32, %c0_i32_0 : i32, i32, i32, i32
  }
  func.func @transform_9(%arg0: i32, %arg1: i32) -> (i32, i32, i32, i32) {
    %c0_i32 = arith.constant 0 : i32
    %c0_i32_0 = arith.constant 0 : i32
    %c0_i32_1 = arith.constant 0 : i32
    return %arg0, %arg1, %c0_i32, %c0_i32_0 : i32, i32, i32, i32
  }
  func.func @transform_10(%arg0: i32, %arg1: i32) -> (i32, i32, i32, i32) {
    %c0_i32 = arith.constant 0 : i32
    %c0_i32_0 = arith.constant 0 : i32
    %c0_i32_1 = arith.constant 0 : i32
    return %arg0, %arg1, %c0_i32, %c0_i32_0 : i32, i32, i32, i32
  }
  func.func @transform_11(%arg0: i32, %arg1: i32) -> (i32, i32, i32, i32) {
    %c0_i32 = arith.constant 0 : i32
    %c0_i32_0 = arith.constant 0 : i32
    %c0_i32_1 = arith.constant 0 : i32
    return %arg0, %arg1, %c0_i32, %c0_i32_0 : i32, i32, i32, i32
  }
  func.func @transform_12(%arg0: i32, %arg1: i32) -> (i32, i32, i32, i32) {
    %c0_i32 = arith.constant 0 : i32
    %c0_i32_0 = arith.constant 0 : i32
    %c0_i32_1 = arith.constant 0 : i32
    return %arg0, %arg1, %c0_i32, %c0_i32_0 : i32, i32, i32, i32
  }
  func.func @transform_13(%arg0: i32, %arg1: i32) -> (i32, i32, i32, i32) {
    %c0_i32 = arith.constant 0 : i32
    %c0_i32_0 = arith.constant 0 : i32
    %c0_i32_1 = arith.constant 0 : i32
    return %arg0, %arg1, %c0_i32, %c0_i32_0 : i32, i32, i32, i32
  }
  func.func @transform_14(%arg0: i32, %arg1: i32) -> (i32, i32, i32, i32) {
    %c0_i32 = arith.constant 0 : i32
    %c0_i32_0 = arith.constant 0 : i32
    %c0_i32_1 = arith.constant 0 : i32
    return %arg0, %arg1, %c0_i32, %c0_i32_0 : i32, i32, i32, i32
  }
  func.func @transform_15(%arg0: i32, %arg1: i32) -> (i32, i32, i32, i32) {
    %c0_i32 = arith.constant 0 : i32
    %c0_i32_0 = arith.constant 0 : i32
    %c0_i32_1 = arith.constant 0 : i32
    return %arg0, %arg1, %c0_i32, %c0_i32_0 : i32, i32, i32, i32
  }
  func.func @transform_16(%arg0: i32, %arg1: i32) -> (i32, i32, i32) {
    %c0_i32 = arith.constant 0 : i32
    %c0_i32_0 = arith.constant 0 : i32
    %c0_i32_1 = arith.constant 0 : i32
    return %arg0, %c0_i32, %c0_i32_0 : i32, i32, i32
  }
}

module attributes {stable_mosaic.version = 11 : i64} {
  func.func @_head_kernel(%arg0: memref<16x64xf32, #tpu.memory_space<vmem>>, %arg1: memref<16x64xf32, #tpu.memory_space<vmem>>, %arg2: memref<16x64xf32, #tpu.memory_space<vmem>>, %arg3: memref<1x16xf32, #tpu.memory_space<vmem>>, %arg4: memref<64x64xf32, #tpu.memory_space<vmem>>, %arg5: memref<64x64xf32, #tpu.memory_space<vmem>>, %arg6: memref<1x64xf32, #tpu.memory_space<vmem>>, %arg7: memref<64x64xf32, #tpu.memory_space<vmem>>, %arg8: memref<64x64xf32, #tpu.memory_space<vmem>>, %arg9: memref<1x64xf32, #tpu.memory_space<vmem>>, %arg10: memref<64x2xf32, #tpu.memory_space<vmem>>, %arg11: memref<16x2xf32, #tpu.memory_space<vmem>>, %arg12: memref<1x2xf32, #tpu.memory_space<vmem>>, %arg13: memref<16x2xf32, #tpu.memory_space<vmem>>) attributes {dimension_semantics = [], scalar_prefetch = 0 : i64, scratch_operands = 0 : i64, tpu.core_type = #tpu.core_type<tc>} {
    %c0 = arith.constant 0 : index
    %c0_0 = arith.constant 0 : index
    %0 = vector.load %arg0[%c0, %c0_0] : memref<16x64xf32, #tpu.memory_space<vmem>>, vector<16x64xf32>
    %c0_1 = arith.constant 0 : index
    %c0_2 = arith.constant 0 : index
    %1 = vector.load %arg4[%c0_1, %c0_2] : memref<64x64xf32, #tpu.memory_space<vmem>>, vector<64x64xf32>
    %cst = arith.constant dense<0.000000e+00> : vector<16x64xf32>
    %2 = tpu.matmul %0, %1, %cst {dimension_numbers = #tpu.dot_dimension_numbers<[1], [0], [0], [1], [0, 0, 1, 1], [], []>} : vector<16x64xf32>, vector<64x64xf32>, vector<16x64xf32> -> vector<16x64xf32>
    %c0_3 = arith.constant 0 : index
    %c0_4 = arith.constant 0 : index
    %3 = vector.load %arg1[%c0_3, %c0_4] : memref<16x64xf32, #tpu.memory_space<vmem>>, vector<16x64xf32>
    %c0_5 = arith.constant 0 : index
    %c0_6 = arith.constant 0 : index
    %4 = vector.load %arg5[%c0_5, %c0_6] : memref<64x64xf32, #tpu.memory_space<vmem>>, vector<64x64xf32>
    %cst_7 = arith.constant dense<0.000000e+00> : vector<16x64xf32>
    %5 = tpu.matmul %3, %4, %cst_7 {dimension_numbers = #tpu.dot_dimension_numbers<[1], [0], [0], [1], [0, 0, 1, 1], [], []>} : vector<16x64xf32>, vector<64x64xf32>, vector<16x64xf32> -> vector<16x64xf32>
    %6 = arith.addf %2, %5 : vector<16x64xf32>
    %c0_8 = arith.constant 0 : index
    %c0_9 = arith.constant 0 : index
    %7 = vector.load %arg6[%c0_8, %c0_9] : memref<1x64xf32, #tpu.memory_space<vmem>>, vector<1x64xf32>
    %8 = vector.broadcast %7 : vector<1x64xf32> to vector<16x64xf32>
    %9 = arith.addf %6, %8 : vector<16x64xf32>
    %c0_10 = arith.constant 0 : index
    %c0_11 = arith.constant 0 : index
    %10 = vector.load %arg7[%c0_10, %c0_11] : memref<64x64xf32, #tpu.memory_space<vmem>>, vector<64x64xf32>
    %cst_12 = arith.constant dense<0.000000e+00> : vector<16x64xf32>
    %11 = tpu.matmul %9, %10, %cst_12 {dimension_numbers = #tpu.dot_dimension_numbers<[1], [0], [0], [1], [0, 0, 1, 1], [], []>} : vector<16x64xf32>, vector<64x64xf32>, vector<16x64xf32> -> vector<16x64xf32>
    %c0_13 = arith.constant 0 : index
    %c0_14 = arith.constant 0 : index
    %12 = vector.load %arg2[%c0_13, %c0_14] : memref<16x64xf32, #tpu.memory_space<vmem>>, vector<16x64xf32>
    %c0_15 = arith.constant 0 : index
    %c0_16 = arith.constant 0 : index
    %13 = vector.load %arg8[%c0_15, %c0_16] : memref<64x64xf32, #tpu.memory_space<vmem>>, vector<64x64xf32>
    %cst_17 = arith.constant dense<0.000000e+00> : vector<16x64xf32>
    %14 = tpu.matmul %12, %13, %cst_17 {dimension_numbers = #tpu.dot_dimension_numbers<[1], [0], [0], [1], [0, 0, 1, 1], [], []>} : vector<16x64xf32>, vector<64x64xf32>, vector<16x64xf32> -> vector<16x64xf32>
    %15 = arith.addf %11, %14 : vector<16x64xf32>
    %c0_18 = arith.constant 0 : index
    %c0_19 = arith.constant 0 : index
    %16 = vector.load %arg9[%c0_18, %c0_19] : memref<1x64xf32, #tpu.memory_space<vmem>>, vector<1x64xf32>
    %17 = vector.broadcast %16 : vector<1x64xf32> to vector<16x64xf32>
    %18 = arith.addf %15, %17 : vector<16x64xf32>
    %c0_20 = arith.constant 0 : index
    %c0_21 = arith.constant 0 : index
    %19 = vector.load %arg3[%c0_20, %c0_21] : memref<1x16xf32, #tpu.memory_space<vmem>>, vector<1x16xf32>
    %c0_22 = arith.constant 0 : index
    %c0_23 = arith.constant 0 : index
    %20 = vector.load %arg11[%c0_22, %c0_23] : memref<16x2xf32, #tpu.memory_space<vmem>>, vector<16x2xf32>
    %cst_24 = arith.constant dense<0.000000e+00> : vector<1x2xf32>
    %21 = tpu.matmul %19, %20, %cst_24 {dimension_numbers = #tpu.dot_dimension_numbers<[1], [0], [0], [1], [0, 0, 1, 1], [], []>} : vector<1x16xf32>, vector<16x2xf32>, vector<1x2xf32> -> vector<1x2xf32>
    %c0_25 = arith.constant 0 : index
    %c0_26 = arith.constant 0 : index
    %22 = vector.load %arg10[%c0_25, %c0_26] : memref<64x2xf32, #tpu.memory_space<vmem>>, vector<64x2xf32>
    %cst_27 = arith.constant dense<0.000000e+00> : vector<16x2xf32>
    %23 = tpu.matmul %18, %22, %cst_27 {dimension_numbers = #tpu.dot_dimension_numbers<[1], [0], [0], [1], [0, 0, 1, 1], [], []>} : vector<16x64xf32>, vector<64x2xf32>, vector<16x2xf32> -> vector<16x2xf32>
    %24 = vector.broadcast %21 : vector<1x2xf32> to vector<16x2xf32>
    %25 = arith.addf %23, %24 : vector<16x2xf32>
    %c0_28 = arith.constant 0 : index
    %c0_29 = arith.constant 0 : index
    %26 = vector.load %arg12[%c0_28, %c0_29] : memref<1x2xf32, #tpu.memory_space<vmem>>, vector<1x2xf32>
    %27 = vector.broadcast %26 : vector<1x2xf32> to vector<16x2xf32>
    %28 = arith.addf %25, %27 : vector<16x2xf32>
    %c0_30 = arith.constant 0 : index
    %c0_31 = arith.constant 0 : index
    %29 = vector.load %arg13[%c0_30, %c0_31] : memref<16x2xf32, #tpu.memory_space<vmem>>, vector<16x2xf32>
    tpu.vector_store %arg13[%c0_30, %c0_31], %28 {strides = array<i32>} : memref<16x2xf32, #tpu.memory_space<vmem>>, vector<16x2xf32>,
    return
  }
}

</mosaic_0001>

<llo_original>
// kernel: squeeze.6
$region0: #{squeeze.6}
  %s0 = inlined_call_operand.vmem [shape: f32[1,15,64], index: 0, kind: input, shape index: {}]
  %s1 = inlined_call_operand.vmem [shape: f32[5,3,64], index: 1, kind: output, shape index: {}]
  $region1: #{squeeze.6} parent=0
    #allocation0 [shape = 'u8[20480]{0}', space=vmem, size = 0x5000, scoped, tag = 'scoped mem for output reshape']
    %v2 = vld [vmem:[%s0] sm:$0xff]
    %vm3 = vcmask 523264
    %4 = vst.msk [vmem:[#allocation0] sm:$0x7] %vm3, %v2
    %s5 = scalar_lea.vmem [#allocation0], 5
    %6 = vst.msk [vmem:[%s5] sm:$0x38] %vm3, %v2
    %s7 = scalar_lea.vmem [#allocation0], 10
    %8 = vst.msk [vmem:[%s7] sm:$0xc0] %vm3, %v2
    %s9 = scalar_lea.vmem %s0, 8
    %v10 = vld [vmem:[%s9] sm:$0x7f]
    %vm11 = vcmask 523264
    %s12 = scalar_lea.vmem [#allocation0], 18
    %13 = vst.msk [vmem:[%s12] ss:$6 sm:$0x3] %vm11, %v10
    %s14 = scalar_lea.vmem [#allocation0], 23
    %15 = vst.msk [vmem:[%s14] sm:$0xc] %vm11, %v10
    %s16 = scalar_lea.vmem [#allocation0], 28
    %17 = vst.msk [vmem:[%s16] sm:$0x70] %vm11, %v10
    %s19 = sshllo.u32 0, 4
    %v21 = vld [vmem:[#allocation0] sm:%s19]
    %s22 = sshllo.u32 0, 4
    %23 = vst [vmem:[%s1] sm:%s22] %v21
    %s24 = scalar_lea.vmem [#allocation0], 8
    %v25 = vld [vmem:[%s24] sm:%s19]
    %s26 = sshllo.u32 0, 4
    %s27 = scalar_lea.vmem %s1, 4
    %28 = vst [vmem:[%s27] sm:%s26] %v25
    %s29 = scalar_lea.vmem [#allocation0], 16
    %v30 = vld [vmem:[%s29] sm:%s19]
    %s31 = sshllo.u32 0, 4
    %s32 = smul.addr 4, 2
    %s33 = scalar_lea.vmem %s1, %s32
    %34 = vst [vmem:[%s33] sm:%s31] %v30
    %s35 = scalar_lea.vmem [#allocation0], 24
    %v36 = vld [vmem:[%s35] sm:%s19]
    %s37 = sshllo.u32 0, 4
    %s38 = smul.addr 4, 3
    %s39 = scalar_lea.vmem %s1, %s38
    %40 = vst [vmem:[%s39] sm:%s37] %v36
    %s41 = scalar_lea.vmem [#allocation0], 32
    %v42 = vld [vmem:[%s41] sm:%s19]
    %s43 = sshllo.u32 0, 4
    %s44 = smul.addr 4, 4
    %s45 = scalar_lea.vmem %s1, %s44
    %46 = vst [vmem:[%s45] sm:%s43] %v42

// kernel: squeeze.7
$region0: #{squeeze.7}
  %s0 = inlined_call_operand.vmem [shape: f32[1,75,64], index: 0, kind: input, shape index: {}]
  %s1 = inlined_call_operand.vmem [shape: f32[5,3,5,64], index: 1, kind: output, shape index: {}]
  %v2 = vld [vmem:[%s0] sm:$0xff]
  %vm3 = vcmask 523264
  %4 = vst.msk [vmem:[%s1] sm:$0x1f] %vm3, %v2
  %s5 = scalar_lea.vmem %s1, 3
  %6 = vst.msk [vmem:[%s5] sm:$0xe0] %vm3, %v2
  %s7 = scalar_lea.vmem %s0, 8
  %v8 = vld [vmem:[%s7] sm:$0xff]
  %vm9 = vcmask 523264
  %s10 = scalar_lea.vmem %s1, 11
  %11 = vst.msk [vmem:[%s10] sm:$0x3] %vm9, %v8
  %s12 = scalar_lea.vmem %s1, 14
  %13 = vst.msk [vmem:[%s12] sm:$0x7c] %vm9, %v8
  %s14 = scalar_lea.vmem %s1, 17
  %15 = vst.msk [vmem:[%s14] sm:$0x80] %vm9, %v8
  %s16 = scalar_lea.vmem %s0, 16
  %v17 = vld [vmem:[%s16] sm:$0xff]
  %vm18 = vcmask 523264
  %s19 = scalar_lea.vmem %s1, 25
  %20 = vst.msk [vmem:[%s19] sm:$0xf] %vm18, %v17
  %s21 = scalar_lea.vmem %s1, 28
  %22 = vst.msk [vmem:[%s21] sm:$0xf0] %vm18, %v17
  %s23 = scalar_lea.vmem %s0, 24
  %v24 = vld [vmem:[%s23] sm:$0xff]
  %vm25 = vcmask 523264
  %s26 = scalar_lea.vmem %s1, 36
  %27 = vst.msk [vmem:[%s26] ss:$4 sm:$0x3] %vm25, %v24
  %s28 = scalar_lea.vmem %s1, 39
  %29 = vst.msk [vmem:[%s28] sm:$0x3c] %vm25, %v24
  %s30 = scalar_lea.vmem %s1, 42
  %31 = vst.msk [vmem:[%s30] sm:$0xc0] %vm25, %v24
  %s32 = scalar_lea.vmem %s0, 32
  %v33 = vld [vmem:[%s32] sm:$0xff]
  %vm34 = vcmask 523264
  %s35 = scalar_lea.vmem %s1, 50
  %36 = vst.msk [vmem:[%s35] sm:$0x7] %vm34, %v33
  %s37 = scalar_lea.vmem %s1, 53
  %38 = vst.msk [vmem:[%s37] sm:$0xf8] %vm34, %v33
  %s39 = scalar_lea.vmem %s0, 40
  %v40 = vld [vmem:[%s39] sm:$0xff]
  %vm41 = vcmask 523264
  %s42 = scalar_lea.vmem %s1, 64
  %43 = vst.msk [vmem:[%s42] sm:$0x1f] %vm41, %v40
  %s44 = scalar_lea.vmem %s1, 67
  %45 = vst.msk [vmem:[%s44] sm:$0xe0] %vm41, %v40
  %s46 = scalar_lea.vmem %s0, 48
  %v47 = vld [vmem:[%s46] sm:$0xff]
  %vm48 = vcmask 523264
  %s49 = scalar_lea.vmem %s1, 75
  %50 = vst.msk [vmem:[%s49] sm:$0x3] %vm48, %v47
  %s51 = scalar_lea.vmem %s1, 78
  %52 = vst.msk [vmem:[%s51] sm:$0x7c] %vm48, %v47
  %s53 = scalar_lea.vmem %s1, 81
  %54 = vst.msk [vmem:[%s53] sm:$0x80] %vm48, %v47
  %s55 = scalar_lea.vmem %s0, 56
  %v56 = vld [vmem:[%s55] sm:$0xff]
  %vm57 = vcmask 523264
  %s58 = scalar_lea.vmem %s1, 89
  %59 = vst.msk [vmem:[%s58] sm:$0xf] %vm57, %v56
  %s60 = scalar_lea.vmem %s1, 92
  %61 = vst.msk [vmem:[%s60] sm:$0xf0] %vm57, %v56
  %s62 = scalar_lea.vmem %s0, 64
  %v63 = vld [vmem:[%s62] sm:$0xff]
  %vm64 = vcmask 523264
  %s65 = scalar_lea.vmem %s1, 100
  %66 = vst.msk [vmem:[%s65] ss:$4 sm:$0x3] %vm64, %v63
  %s67 = scalar_lea.vmem %s1, 103
  %68 = vst.msk [vmem:[%s67] sm:$0x3c] %vm64, %v63
  %s69 = scalar_lea.vmem %s1, 106
  %70 = vst.msk [vmem:[%s69] sm:$0xc0] %vm64, %v63
  %s71 = scalar_lea.vmem %s0, 72
  %v72 = vld [vmem:[%s71] sm:$0x7]
  %vm73 = vcmask 523264
  %s74 = scalar_lea.vmem %s1, 114
  %75 = vst.msk [vmem:[%s74] sm:$0x7] %vm73, %v72

// kernel: trajectory_model_forward.3
$region0: #{trajectory_model_forward.3}
  #allocation0 [shape = 'u32[]', space=smem, size = 0x4, offset = 0x4, fixed_abs, tag = 'smem constant byte address 0x4 - core index']
  #allocation1 [shape = 'u32[144,128]{1,0:T(1,128)}', space=vmem, size = 0x12000, scoped, tag = 'internal scratch']
  %s0 = inlined_call_operand.vmem [shape: f32[16,64], index: 0, kind: input, shape index: {}]
  %s1 = inlined_call_operand.vmem [shape: f32[16,64], index: 1, kind: input, shape index: {}]
  %s2 = inlined_call_operand.vmem [shape: f32[16,64], index: 2, kind: input, shape index: {}]
  %s3 = inlined_call_operand.vmem [shape: f32[1,16], index: 3, kind: input, shape index: {}]
  %s4 = inlined_call_operand.vmem [shape: f32[64,64], index: 4, kind: input, shape index: {}]
  %s5 = inlined_call_operand.vmem [shape: f32[64,64], index: 5, kind: input, shape index: {}]
  %s6 = inlined_call_operand.vmem [shape: f32[1,64], index: 6, kind: input, shape index: {}]
  %s7 = inlined_call_operand.vmem [shape: f32[64,64], index: 7, kind: input, shape index: {}]
  %s8 = inlined_call_operand.vmem [shape: f32[64,64], index: 8, kind: input, shape index: {}]
  %s9 = inlined_call_operand.vmem [shape: f32[1,64], index: 9, kind: input, shape index: {}]
  %s10 = inlined_call_operand.vmem [shape: f32[64,2], index: 10, kind: input, shape index: {}]
  %s11 = inlined_call_operand.vmem [shape: f32[16,2], index: 11, kind: input, shape index: {}]
  %s12 = inlined_call_operand.vmem [shape: f32[1,2], index: 12, kind: input, shape index: {}]
  %s13 = inlined_call_operand.vmem [shape: f32[16,2], index: 13, kind: output, shape index: {}]
  %s14 = sld [smem:[#allocation0]]
  $region62: #{trajectory_model_forward.3} parent=0
    _
  %s16 = ssub.s32 1, %s14
  %s17 = scalar_select 0, %s16, %s14
  // Predicated region
  $region2: #{trajectory_model_forward.3} parent=0 // pred_check
    _
  $region3: #{trajectory_model_forward.3} parent=0 // pred_check_branch
    %19 = sbr.rel (0) target = $region5
  $region4: #{trajectory_model_forward.3} parent=0 // pred_region
    _
  $region5: #{trajectory_model_forward.3} parent=0 // pred_fallthru
    _
  // Predicated region
  $region6: #{trajectory_model_forward.3} parent=0 // pred_check
    _
  $region7: #{trajectory_model_forward.3} parent=0 // pred_check_branch
    %21 = sbr.rel (0) target = $region9
  $region8: #{trajectory_model_forward.3} parent=0 // pred_region
    _
  $region9: #{trajectory_model_forward.3} parent=0 // pred_fallthru
    _
  // Predicated region
  $region10: #{trajectory_model_forward.3} parent=0 // pred_check
    _
  $region11: #{trajectory_model_forward.3} parent=0 // pred_check_branch
    %23 = sbr.rel (0) target = $region13
  $region12: #{trajectory_model_forward.3} parent=0 // pred_region
    _
  $region13: #{trajectory_model_forward.3} parent=0 // pred_fallthru
    _
  // Predicated region
  $region14: #{trajectory_model_forward.3} parent=0 // pred_check
    _
  $region15: #{trajectory_model_forward.3} parent=0 // pred_check_branch
    %25 = sbr.rel (0) target = $region17
  $region16: #{trajectory_model_forward.3} parent=0 // pred_region
    _
  $region17: #{trajectory_model_forward.3} parent=0 // pred_fallthru
    _
  // Predicated region
  $region18: #{trajectory_model_forward.3} parent=0 // pred_check
    _
  $region19: #{trajectory_model_forward.3} parent=0 // pred_check_branch
    %27 = sbr.rel (0) target = $region21
  $region20: #{trajectory_model_forward.3} parent=0 // pred_region
    _
  $region21: #{trajectory_model_forward.3} parent=0 // pred_fallthru
    _
  // Predicated region
  $region22: #{trajectory_model_forward.3} parent=0 // pred_check
    _
  $region23: #{trajectory_model_forward.3} parent=0 // pred_check_branch
    %29 = sbr.rel (0) target = $region25
  $region24: #{trajectory_model_forward.3} parent=0 // pred_region
    _
  $region25: #{trajectory_model_forward.3} parent=0 // pred_fallthru
    _
  // Predicated region
  $region26: #{trajectory_model_forward.3} parent=0 // pred_check
    _
  $region27: #{trajectory_model_forward.3} parent=0 // pred_check_branch
    %31 = sbr.rel (0) target = $region29
  $region28: #{trajectory_model_forward.3} parent=0 // pred_region
    _
  $region29: #{trajectory_model_forward.3} parent=0 // pred_fallthru
    _
  // Predicated region
  $region30: #{trajectory_model_forward.3} parent=0 // pred_check
    _
  $region31: #{trajectory_model_forward.3} parent=0 // pred_check_branch
    %33 = sbr.rel (0) target = $region33
  $region32: #{trajectory_model_forward.3} parent=0 // pred_region
    _
  $region33: #{trajectory_model_forward.3} parent=0 // pred_fallthru
    _
  // Predicated region
  $region34: #{trajectory_model_forward.3} parent=0 // pred_check
    _
  $region35: #{trajectory_model_forward.3} parent=0 // pred_check_branch
    %35 = sbr.rel (0) target = $region37
  $region36: #{trajectory_model_forward.3} parent=0 // pred_region
    _
  $region37: #{trajectory_model_forward.3} parent=0 // pred_fallthru
    _
  // Predicated region
  $region38: #{trajectory_model_forward.3} parent=0 // pred_check
    _
  $region39: #{trajectory_model_forward.3} parent=0 // pred_check_branch
    %37 = sbr.rel (0) target = $region41
  $region40: #{trajectory_model_forward.3} parent=0 // pred_region
    _
  $region41: #{trajectory_model_forward.3} parent=0 // pred_fallthru
    _
  // Predicated region
  $region42: #{trajectory_model_forward.3} parent=0 // pred_check
    _
  $region43: #{trajectory_model_forward.3} parent=0 // pred_check_branch
    %39 = sbr.rel (0) target = $region45
  $region44: #{trajectory_model_forward.3} parent=0 // pred_region
    _
  $region45: #{trajectory_model_forward.3} parent=0 // pred_fallthru
    _
  // Predicated region
  $region46: #{trajectory_model_forward.3} parent=0 // pred_check
    _
  $region47: #{trajectory_model_forward.3} parent=0 // pred_check_branch
    %41 = sbr.rel (0) target = $region49
  $region48: #{trajectory_model_forward.3} parent=0 // pred_region
    _
  $region49: #{trajectory_model_forward.3} parent=0 // pred_fallthru
    _
  // Predicated region
  $region50: #{trajectory_model_forward.3} parent=0 // pred_check
    _
  $region51: #{trajectory_model_forward.3} parent=0 // pred_check_branch
    %43 = sbr.rel (0) target = $region53
  $region52: #{trajectory_model_forward.3} parent=0 // pred_region
    _
  $region53: #{trajectory_model_forward.3} parent=0 // pred_fallthru
    _
  %v44 = vld [vmem:[%s0] sm:$0xff]
  %v45 = vld [vmem:[%s0 + $0x8] sm:$0xff]
  %v46 = vld [vmem:[%s4] sm:$0xff]
  %v47 = vld [vmem:[%s4 + $0x8] sm:$0xff]
  %v48 = vld [vmem:[%s4 + $0x10] sm:$0xff]
  %v49 = vld [vmem:[%s4 + $0x18] sm:$0xff]
  %v50 = vld [vmem:[%s4 + $0x20] sm:$0xff]
  %v51 = vld [vmem:[%s4 + $0x28] sm:$0xff]
  %v52 = vld [vmem:[%s4 + $0x30] sm:$0xff]
  %v53 = vld [vmem:[%s4 + $0x38] sm:$0xff]
  %v54 = vld [vmem:[%s1] sm:$0xff]
  %v55 = vld [vmem:[%s1 + $0x8] sm:$0xff]
  %v56 = vld [vmem:[%s5] sm:$0xff]
  %v57 = vld [vmem:[%s5 + $0x8] sm:$0xff]
  %v58 = vld [vmem:[%s5 + $0x10] sm:$0xff]
  %v59 = vld [vmem:[%s5 + $0x18] sm:$0xff]
  %v60 = vld [vmem:[%s5 + $0x20] sm:$0xff]
  %v61 = vld [vmem:[%s5 + $0x28] sm:$0xff]
  %v62 = vld [vmem:[%s5 + $0x30] sm:$0xff]
  %v63 = vld [vmem:[%s5 + $0x38] sm:$0xff]
  %vm64 = vcmask 523264
  %v66 = vsel %vm64, %v54, 0
  %v69 = vsel %vm64, %v55, 0
  %71 = vmatprep.subr.mxu0 0.0
  %72 = vmatpush1.msra.mxu0 %v56
  %73 = vmatprep.subr.mxu0 0.0
  %74 = vmatpush1.msra.mxu0 %v57
  %75 = vmatprep.subr.mxu0 0.0
  %76 = vmatpush1.msra.mxu0 %v58
  %77 = vmatprep.subr.mxu0 0.0
  %78 = vmatpush1.msra.mxu0 %v59
  %79 = vmatprep.subr.mxu0 0.0
  %80 = vmatpush1.msra.mxu0 %v60
  %81 = vmatprep.subr.mxu0 0.0
  %82 = vmatpush1.msra.mxu0 %v61
  %83 = vmatprep.subr.mxu0 0.0
  %84 = vmatpush1.msra.mxu0 %v62
  %85 = vmatprep.subr.mxu0 0.0
  %86 = vmatpush1.msra.mxu0 %v63
  %87 = vmatprep.subr.mxu0 0.0
  %88 = vmatpush1.msra.mxu0 0.0
  %89 = vmatprep.subr.mxu0 0.0
  %90 = vmatpush1.msra.mxu0 0.0
  %91 = vmatprep.subr.mxu0 0.0
  %92 = vmatpush1.msra.mxu0 0.0
  %93 = vmatprep.subr.mxu0 0.0
  %94 = vmatpush1.msra.mxu0 0.0
  %95 = vmatprep.subr.mxu0 0.0
  %96 = vmatpush1.msra.mxu0 0.0
  %97 = vmatprep.subr.mxu0 0.0
  %98 = vmatpush1.msra.mxu0 0.0
  %99 = vmatprep.subr.mxu0 0.0
  %100 = vmatpush1.msra.mxu0 0.0
  %101 = vmatprep.subr.mxu0 0.0
  %102 = vmatpush1.msra.mxu0 0.0
  %103 = vmatprep.subr.mxu0 0.0
  %104 = vmatpush1.msra.mxu0 0.0
  %105 = vmatprep.subr.mxu0 0.0
  %106 = vmatpush1.msra.mxu0 0.0
  %107 = vmatprep.subr.mxu0 0.0
  %108 = vmatpush1.msra.mxu0 0.0
  %109 = vmatprep.subr.mxu0 0.0
  %110 = vmatpush1.msra.mxu0 0.0
  %111 = vmatprep.subr.mxu0 0.0
  %112 = vmatpush1.msra.mxu0 0.0
  %113 = vmatprep.subr.mxu0 0.0
  %114 = vmatpush1.msra.mxu0 0.0
  %115 = vmatprep.subr.mxu0 0.0
  %116 = vmatpush1.msra.mxu0 0.0
  %117 = vmatprep.subr.mxu0 0.0
  %118 = vmatpush1.msra.mxu0 0.0
  %119 = vmatprep.subr.mxu0 0.0
  %120 = vmatpush1.msra.mxu0 0.0
  %121 = vmatprep.subr.mxu0 0.0
  %122 = vmatpush1.msra.mxu0 0.0
  %123 = vmatprep.subr.mxu0 0.0
  %124 = vmatpush1.msra.mxu0 0.0
  %125 = vmatprep.subr.mxu0 0.0
  %126 = vmatpush1.msra.mxu0 0.0
  %127 = vmatprep.subr.mxu0 0.0
  %128 = vmatpush1.msra.mxu0 0.0
  %129 = vmatprep.subr.mxu0 0.0
  %130 = vmatpush1.msra.mxu0 0.0
  %131 = vmatprep.subr.mxu0 0.0
  %132 = vmatpush1.msra.mxu0 0.0
  %133 = vmatprep.subr.mxu0 0.0
  %134 = vmatpush1.msra.mxu0 0.0
  %135 = vmatprep.mubr.f32.mxu0 0.0
  %136 = vmatmul.mubr.f32.gmra.mrb[0].mxu0 %v66
  %v137 = vpop.f32.mrb[0].mxu0
  %v138 = vadd.f32 0.0, %v137
  %v139 = vpop.f32.mrb[0].mxu0
  %140 = vmatprep.mubr.f32.mxu0 0.0
  %141 = vmatmul.mubr.f32.gmra.mrb[0].mxu0 %v69
  %v142 = vpop.f32.mrb[0].mxu0
  %v143 = vadd.f32 0.0, %v142
  %v144 = vpop.f32.mrb[0].mxu0
  %145 = vdwg.mxu0
  %v147 = vsel %vm64, %v44, 0
  %v150 = vsel %vm64, %v45, 0
  %152 = vmatprep.subr.mxu0 0.0
  %153 = vmatpush1.msra.mxu0 %v46
  %154 = vmatprep.subr.mxu0 0.0
  %155 = vmatpush1.msra.mxu0 %v47
  %156 = vmatprep.subr.mxu0 0.0
  %157 = vmatpush1.msra.mxu0 %v48
  %158 = vmatprep.subr.mxu0 0.0
  %159 = vmatpush1.msra.mxu0 %v49
  %160 = vmatprep.subr.mxu0 0.0
  %161 = vmatpush1.msra.mxu0 %v50
  %162 = vmatprep.subr.mxu0 0.0
  %163 = vmatpush1.msra.mxu0 %v51
  %164 = vmatprep.subr.mxu0 0.0
  %165 = vmatpush1.msra.mxu0 %v52
  %166 = vmatprep.subr.mxu0 0.0
  %167 = vmatpush1.msra.mxu0 %v53
  %168 = vmatprep.subr.mxu0 0.0
  %169 = vmatpush1.msra.mxu0 0.0
  %170 = vmatprep.subr.mxu0 0.0
  %171 = vmatpush1.msra.mxu0 0.0
  %172 = vmatprep.subr.mxu0 0.0
  %173 = vmatpush1.msra.mxu0 0.0
  %174 = vmatprep.subr.mxu0 0.0
  %175 = vmatpush1.msra.mxu0 0.0
  %176 = vmatprep.subr.mxu0 0.0
  %177 = vmatpush1.msra.mxu0 0.0
  %178 = vmatprep.subr.mxu0 0.0
  %179 = vmatpush1.msra.mxu0 0.0
  %180 = vmatprep.subr.mxu0 0.0
  %181 = vmatpush1.msra.mxu0 0.0
  %182 = vmatprep.subr.mxu0 0.0
  %183 = vmatpush1.msra.mxu0 0.0
  %184 = vmatprep.subr.mxu0 0.0
  %185 = vmatpush1.msra.mxu0 0.0
  %186 = vmatprep.subr.mxu0 0.0
  %187 = vmatpush1.msra.mxu0 0.0
  %188 = vmatprep.subr.mxu0 0.0
  %189 = vmatpush1.msra.mxu0 0.0
  %190 = vmatprep.subr.mxu0 0.0
  %191 = vmatpush1.msra.mxu0 0.0
  %192 = vmatprep.subr.mxu0 0.0
  %193 = vmatpush1.msra.mxu0 0.0
  %194 = vmatprep.subr.mxu0 0.0
  %195 = vmatpush1.msra.mxu0 0.0
  %196 = vmatprep.subr.mxu0 0.0
  %197 = vmatpush1.msra.mxu0 0.0
  %198 = vmatprep.subr.mxu0 0.0
  %199 = vmatpush1.msra.mxu0 0.0
  %200 = vmatprep.subr.mxu0 0.0
  %201 = vmatpush1.msra.mxu0 0.0
  %202 = vmatprep.subr.mxu0 0.0
  %203 = vmatpush1.msra.mxu0 0.0
  %204 = vmatprep.subr.mxu0 0.0
  %205 = vmatpush1.msra.mxu0 0.0
  %206 = vmatprep.subr.mxu0 0.0
  %207 = vmatpush1.msra.mxu0 0.0
  %208 = vmatprep.subr.mxu0 0.0
  %209 = vmatpush1.msra.mxu0 0.0
  %210 = vmatprep.subr.mxu0 0.0
  %211 = vmatpush1.msra.mxu0 0.0
  %212 = vmatprep.subr.mxu0 0.0
  %213 = vmatpush1.msra.mxu0 0.0
  %214 = vmatprep.subr.mxu0 0.0
  %215 = vmatpush1.msra.mxu0 0.0
  %216 = vmatprep.mubr.f32.mxu0 0.0
  %217 = vmatmul.mubr.f32.gmra.mrb[0].mxu0 %v147
  %v218 = vpop.f32.mrb[0].mxu0
  %v219 = vadd.f32 %v138, %v218
  %v220 = vpop.f32.mrb[0].mxu0
  %221 = vmatprep.mubr.f32.mxu0 0.0
  %222 = vmatmul.mubr.f32.gmra.mrb[0].mxu0 %v150
  %v223 = vpop.f32.mrb[0].mxu0
  %v224 = vadd.f32 %v143, %v223
  %v225 = vpop.f32.mrb[0].mxu0
  %226 = vdwg.mxu0
  %v227 = vld [vmem:[%s6] sm:$0x1]
  %v229 = vlaneseq
  %v230 = vshrl.u32 %v229, 7
  %v231 = vsub.s32 0, %v230
  %v232 = vrot.slane %v227, %v231
  %v234 = vadd.f32 %v219, %v232
  %v235 = vadd.f32 %v224, %v232
  %v236 = vld [vmem:[%s7] sm:$0xff]
  %v237 = vld [vmem:[%s7 + $0x8] sm:$0xff]
  %v238 = vld [vmem:[%s7 + $0x10] sm:$0xff]
  %v239 = vld [vmem:[%s7 + $0x18] sm:$0xff]
  %v240 = vld [vmem:[%s7 + $0x20] sm:$0xff]
  %v241 = vld [vmem:[%s7 + $0x28] sm:$0xff]
  %v242 = vld [vmem:[%s7 + $0x30] sm:$0xff]
  %v243 = vld [vmem:[%s7 + $0x38] sm:$0xff]
  %v244 = vld [vmem:[%s2] sm:$0xff]
  %v245 = vld [vmem:[%s2 + $0x8] sm:$0xff]
  %v246 = vld [vmem:[%s8] sm:$0xff]
  %v247 = vld [vmem:[%s8 + $0x8] sm:$0xff]
  %v248 = vld [vmem:[%s8 + $0x10] sm:$0xff]
  %v249 = vld [vmem:[%s8 + $0x18] sm:$0xff]
  %v250 = vld [vmem:[%s8 + $0x20] sm:$0xff]
  %v251 = vld [vmem:[%s8 + $0x28] sm:$0xff]
  %v252 = vld [vmem:[%s8 + $0x30] sm:$0xff]
  %v253 = vld [vmem:[%s8 + $0x38] sm:$0xff]
  %v255 = vsel %vm64, %v244, 0
  %v258 = vsel %vm64, %v245, 0
  %260 = vmatprep.subr.mxu0 0.0
  %261 = vmatpush1.msra.mxu0 %v246
  %262 = vmatprep.subr.mxu0 0.0
  %263 = vmatpush1.msra.mxu0 %v247
  %264 = vmatprep.subr.mxu0 0.0
  %265 = vmatpush1.msra.mxu0 %v248
  %266 = vmatprep.subr.mxu0 0.0
  %267 = vmatpush1.msra.mxu0 %v249
  %268 = vmatprep.subr.mxu0 0.0
  %269 = vmatpush1.msra.mxu0 %v250
  %270 = vmatprep.subr.mxu0 0.0
  %271 = vmatpush1.msra.mxu0 %v251
  %272 = vmatprep.subr.mxu0 0.0
  %273 = vmatpush1.msra.mxu0 %v252
  %274 = vmatprep.subr.mxu0 0.0
  %275 = vmatpush1.msra.mxu0 %v253
  %276 = vmatprep.subr.mxu0 0.0
  %277 = vmatpush1.msra.mxu0 0.0
  %278 = vmatprep.subr.mxu0 0.0
  %279 = vmatpush1.msra.mxu0 0.0
  %280 = vmatprep.subr.mxu0 0.0
  %281 = vmatpush1.msra.mxu0 0.0
  %282 = vmatprep.subr.mxu0 0.0
  %283 = vmatpush1.msra.mxu0 0.0
  %284 = vmatprep.subr.mxu0 0.0
  %285 = vmatpush1.msra.mxu0 0.0
  %286 = vmatprep.subr.mxu0 0.0
  %287 = vmatpush1.msra.mxu0 0.0
  %288 = vmatprep.subr.mxu0 0.0
  %289 = vmatpush1.msra.mxu0 0.0
  %290 = vmatprep.subr.mxu0 0.0
  %291 = vmatpush1.msra.mxu0 0.0
  %292 = vmatprep.subr.mxu0 0.0
  %293 = vmatpush1.msra.mxu0 0.0
  %294 = vmatprep.subr.mxu0 0.0
  %295 = vmatpush1.msra.mxu0 0.0
  %296 = vmatprep.subr.mxu0 0.0
  %297 = vmatpush1.msra.mxu0 0.0
  %298 = vmatprep.subr.mxu0 0.0
  %299 = vmatpush1.msra.mxu0 0.0
  %300 = vmatprep.subr.mxu0 0.0
  %301 = vmatpush1.msra.mxu0 0.0
  %302 = vmatprep.subr.mxu0 0.0
  %303 = vmatpush1.msra.mxu0 0.0
  %304 = vmatprep.subr.mxu0 0.0
  %305 = vmatpush1.msra.mxu0 0.0
  %306 = vmatprep.subr.mxu0 0.0
  %307 = vmatpush1.msra.mxu0 0.0
  %308 = vmatprep.subr.mxu0 0.0
  %309 = vmatpush1.msra.mxu0 0.0
  %310 = vmatprep.subr.mxu0 0.0
  %311 = vmatpush1.msra.mxu0 0.0
  %312 = vmatprep.subr.mxu0 0.0
  %313 = vmatpush1.msra.mxu0 0.0
  %314 = vmatprep.subr.mxu0 0.0
  %315 = vmatpush1.msra.mxu0 0.0
  %316 = vmatprep.subr.mxu0 0.0
  %317 = vmatpush1.msra.mxu0 0.0
  %318 = vmatprep.subr.mxu0 0.0
  %319 = vmatpush1.msra.mxu0 0.0
  %320 = vmatprep.subr.mxu0 0.0
  %321 = vmatpush1.msra.mxu0 0.0
  %322 = vmatprep.subr.mxu0 0.0
  %323 = vmatpush1.msra.mxu0 0.0
  %324 = vmatprep.mubr.f32.mxu0 0.0
  %325 = vmatmul.mubr.f32.gmra.mrb[0].mxu0 %v255
  %v326 = vpop.f32.mrb[0].mxu0
  %v327 = vadd.f32 0.0, %v326
  %v328 = vpop.f32.mrb[0].mxu0
  %329 = vmatprep.mubr.f32.mxu0 0.0
  %330 = vmatmul.mubr.f32.gmra.mrb[0].mxu0 %v258
  %v331 = vpop.f32.mrb[0].mxu0
  %v332 = vadd.f32 0.0, %v331
  %v333 = vpop.f32.mrb[0].mxu0
  %334 = vdwg.mxu0
  %v336 = vsel %vm64, %v234, 0
  %v339 = vsel %vm64, %v235, 0
  %341 = vmatprep.subr.mxu0 0.0
  %342 = vmatpush1.msra.mxu0 %v236
  %343 = vmatprep.subr.mxu0 0.0
  %344 = vmatpush1.msra.mxu0 %v237
  %345 = vmatprep.subr.mxu0 0.0
  %346 = vmatpush1.msra.mxu0 %v238
  %347 = vmatprep.subr.mxu0 0.0
  %348 = vmatpush1.msra.mxu0 %v239
  %349 = vmatprep.subr.mxu0 0.0
  %350 = vmatpush1.msra.mxu0 %v240
  %351 = vmatprep.subr.mxu0 0.0
  %352 = vmatpush1.msra.mxu0 %v241
  %353 = vmatprep.subr.mxu0 0.0
  %354 = vmatpush1.msra.mxu0 %v242
  %355 = vmatprep.subr.mxu0 0.0
  %356 = vmatpush1.msra.mxu0 %v243
  %357 = vmatprep.subr.mxu0 0.0
  %358 = vmatpush1.msra.mxu0 0.0
  %359 = vmatprep.subr.mxu0 0.0
  %360 = vmatpush1.msra.mxu0 0.0
  %361 = vmatprep.subr.mxu0 0.0
  %362 = vmatpush1.msra.mxu0 0.0
  %363 = vmatprep.subr.mxu0 0.0
  %364 = vmatpush1.msra.mxu0 0.0
  %365 = vmatprep.subr.mxu0 0.0
  %366 = vmatpush1.msra.mxu0 0.0
  %367 = vmatprep.subr.mxu0 0.0
  %368 = vmatpush1.msra.mxu0 0.0
  %369 = vmatprep.subr.mxu0 0.0
  %370 = vmatpush1.msra.mxu0 0.0
  %371 = vmatprep.subr.mxu0 0.0
  %372 = vmatpush1.msra.mxu0 0.0
  %373 = vmatprep.subr.mxu0 0.0
  %374 = vmatpush1.msra.mxu0 0.0
  %375 = vmatprep.subr.mxu0 0.0
  %376 = vmatpush1.msra.mxu0 0.0
  %377 = vmatprep.subr.mxu0 0.0
  %378 = vmatpush1.msra.mxu0 0.0
  %379 = vmatprep.subr.mxu0 0.0
  %380 = vmatpush1.msra.mxu0 0.0
  %381 = vmatprep.subr.mxu0 0.0
  %382 = vmatpush1.msra.mxu0 0.0
  %383 = vmatprep.subr.mxu0 0.0
  %384 = vmatpush1.msra.mxu0 0.0
  %385 = vmatprep.subr.mxu0 0.0
  %386 = vmatpush1.msra.mxu0 0.0
  %387 = vmatprep.subr.mxu0 0.0
  %388 = vmatpush1.msra.mxu0 0.0
  %389 = vmatprep.subr.mxu0 0.0
  %390 = vmatpush1.msra.mxu0 0.0
  %391 = vmatprep.subr.mxu0 0.0
  %392 = vmatpush1.msra.mxu0 0.0
  %393 = vmatprep.subr.mxu0 0.0
  %394 = vmatpush1.msra.mxu0 0.0
  %395 = vmatprep.subr.mxu0 0.0
  %396 = vmatpush1.msra.mxu0 0.0
  %397 = vmatprep.subr.mxu0 0.0
  %398 = vmatpush1.msra.mxu0 0.0
  %399 = vmatprep.subr.mxu0 0.0
  %400 = vmatpush1.msra.mxu0 0.0
  %401 = vmatprep.subr.mxu0 0.0
  %402 = vmatpush1.msra.mxu0 0.0
  %403 = vmatprep.subr.mxu0 0.0
  %404 = vmatpush1.msra.mxu0 0.0
  %405 = vmatprep.mubr.f32.mxu0 0.0
  %406 = vmatmul.mubr.f32.gmra.mrb[0].mxu0 %v336
  %v407 = vpop.f32.mrb[0].mxu0
  %v408 = vadd.f32 %v327, %v407
  %v409 = vpop.f32.mrb[0].mxu0
  %410 = vmatprep.mubr.f32.mxu0 0.0
  %411 = vmatmul.mubr.f32.gmra.mrb[0].mxu0 %v339
  %v412 = vpop.f32.mrb[0].mxu0
  %v413 = vadd.f32 %v332, %v412
  %v414 = vpop.f32.mrb[0].mxu0
  %415 = vdwg.mxu0
  %v416 = vld [vmem:[%s9] sm:$0x1]
  %v418 = vlaneseq
  %v419 = vshrl.u32 %v418, 7
  %v420 = vsub.s32 0, %v419
  %v421 = vrot.slane %v416, %v420
  %v423 = vadd.f32 %v408, %v421
  %v424 = vadd.f32 %v413, %v421
  %v425 = vld [vmem:[%s3] sm:$0x1]
  %v426 = vld [vmem:[%s11] sm:$0xff]
  %v427 = vld [vmem:[%s11 + $0x8] sm:$0xff]
  %vm428 = vcmask 130048
  %v430 = vsel %vm428, %v425, 0
  %432 = vmatprep.subr.mxu0 0.0
  %433 = vmatpush1.msra.mxu0 %v426
  %434 = vmatprep.subr.mxu0 0.0
  %435 = vmatpush1.msra.mxu0 %v427
  %436 = vmatprep.subr.mxu0 0.0
  %437 = vmatpush1.msra.mxu0 0.0
  %438 = vmatprep.subr.mxu0 0.0
  %439 = vmatpush1.msra.mxu0 0.0
  %440 = vmatprep.subr.mxu0 0.0
  %441 = vmatpush1.msra.mxu0 0.0
  %442 = vmatprep.subr.mxu0 0.0
  %443 = vmatpush1.msra.mxu0 0.0
  %444 = vmatprep.subr.mxu0 0.0
  %445 = vmatpush1.msra.mxu0 0.0
  %446 = vmatprep.subr.mxu0 0.0
  %447 = vmatpush1.msra.mxu0 0.0
  %448 = vmatprep.subr.mxu0 0.0
  %449 = vmatpush1.msra.mxu0 0.0
  %450 = vmatprep.subr.mxu0 0.0
  %451 = vmatpush1.msra.mxu0 0.0
  %452 = vmatprep.subr.mxu0 0.0
  %453 = vmatpush1.msra.mxu0 0.0
  %454 = vmatprep.subr.mxu0 0.0
  %455 = vmatpush1.msra.mxu0 0.0
  %456 = vmatprep.subr.mxu0 0.0
  %457 = vmatpush1.msra.mxu0 0.0
  %458 = vmatprep.subr.mxu0 0.0
  %459 = vmatpush1.msra.mxu0 0.0
  %460 = vmatprep.subr.mxu0 0.0
  %461 = vmatpush1.msra.mxu0 0.0
  %462 = vmatprep.subr.mxu0 0.0
  %463 = vmatpush1.msra.mxu0 0.0
  %464 = vmatprep.subr.mxu0 0.0
  %465 = vmatpush1.msra.mxu0 0.0
  %466 = vmatprep.subr.mxu0 0.0
  %467 = vmatpush1.msra.mxu0 0.0
  %468 = vmatprep.subr.mxu0 0.0
  %469 = vmatpush1.msra.mxu0 0.0
  %470 = vmatprep.subr.mxu0 0.0
  %471 = vmatpush1.msra.mxu0 0.0
  %472 = vmatprep.subr.mxu0 0.0
  %473 = vmatpush1.msra.mxu0 0.0
  %474 = vmatprep.subr.mxu0 0.0
  %475 = vmatpush1.msra.mxu0 0.0
  %476 = vmatprep.subr.mxu0 0.0
  %477 = vmatpush1.msra.mxu0 0.0
  %478 = vmatprep.subr.mxu0 0.0
  %479 = vmatpush1.msra.mxu0 0.0
  %480 = vmatprep.subr.mxu0 0.0
  %481 = vmatpush1.msra.mxu0 0.0
  %482 = vmatprep.subr.mxu0 0.0
  %483 = vmatpush1.msra.mxu0 0.0
  %484 = vmatprep.subr.mxu0 0.0
  %485 = vmatpush1.msra.mxu0 0.0
  %486 = vmatprep.subr.mxu0 0.0
  %487 = vmatpush1.msra.mxu0 0.0
  %488 = vmatprep.subr.mxu0 0.0
  %489 = vmatpush1.msra.mxu0 0.0
  %490 = vmatprep.subr.mxu0 0.0
  %491 = vmatpush1.msra.mxu0 0.0
  %492 = vmatprep.subr.mxu0 0.0
  %493 = vmatpush1.msra.mxu0 0.0
  %494 = vmatprep.subr.mxu0 0.0
  %495 = vmatpush1.msra.mxu0 0.0
  %496 = vmatprep.mubr.f32.mxu0 0.0
  %497 = vmatmul.mubr.f32.gmra.mrb[0].mxu0 %v430
  %v498 = vpop.f32.mrb[0].mxu0
  %v499 = vadd.f32 0.0, %v498
  %v500 = vpop.f32.mrb[0].mxu0
  %501 = vdwg.mxu0
  %v502 = vld [vmem:[%s10] sm:$0xff]
  %v503 = vld [vmem:[%s10 + $0x8] sm:$0xff]
  %v504 = vld [vmem:[%s10 + $0x10] sm:$0xff]
  %v505 = vld [vmem:[%s10 + $0x18] sm:$0xff]
  %v506 = vld [vmem:[%s10 + $0x20] sm:$0xff]
  %v507 = vld [vmem:[%s10 + $0x28] sm:$0xff]
  %v508 = vld [vmem:[%s10 + $0x30] sm:$0xff]
  %v509 = vld [vmem:[%s10 + $0x38] sm:$0xff]
  %v510 = vlaneseq
  %v511 = vshrl.u32 %v510, 7
  %v512 = vsub.s32 0, %v511
  %v513 = vrot.slane %v499, %v512
  %v515 = vsel %vm64, %v423, 0
  %v518 = vsel %vm64, %v424, 0
  %520 = vmatprep.subr.mxu0 0.0
  %521 = vmatpush1.msra.mxu0 %v502
  %522 = vmatprep.subr.mxu0 0.0
  %523 = vmatpush1.msra.mxu0 %v503
  %524 = vmatprep.subr.mxu0 0.0
  %525 = vmatpush1.msra.mxu0 %v504
  %526 = vmatprep.subr.mxu0 0.0
  %527 = vmatpush1.msra.mxu0 %v505
  %528 = vmatprep.subr.mxu0 0.0
  %529 = vmatpush1.msra.mxu0 %v506
  %530 = vmatprep.subr.mxu0 0.0
  %531 = vmatpush1.msra.mxu0 %v507
  %532 = vmatprep.subr.mxu0 0.0
  %533 = vmatpush1.msra.mxu0 %v508
  %534 = vmatprep.subr.mxu0 0.0
  %535 = vmatpush1.msra.mxu0 %v509
  %536 = vmatprep.subr.mxu0 0.0
  %537 = vmatpush1.msra.mxu0 0.0
  %538 = vmatprep.subr.mxu0 0.0
  %539 = vmatpush1.msra.mxu0 0.0
  %540 = vmatprep.subr.mxu0 0.0
  %541 = vmatpush1.msra.mxu0 0.0
  %542 = vmatprep.subr.mxu0 0.0
  %543 = vmatpush1.msra.mxu0 0.0
  %544 = vmatprep.subr.mxu0 0.0
  %545 = vmatpush1.msra.mxu0 0.0
  %546 = vmatprep.subr.mxu0 0.0
  %547 = vmatpush1.msra.mxu0 0.0
  %548 = vmatprep.subr.mxu0 0.0
  %549 = vmatpush1.msra.mxu0 0.0
  %550 = vmatprep.subr.mxu0 0.0
  %551 = vmatpush1.msra.mxu0 0.0
  %552 = vmatprep.subr.mxu0 0.0
  %553 = vmatpush1.msra.mxu0 0.0
  %554 = vmatprep.subr.mxu0 0.0
  %555 = vmatpush1.msra.mxu0 0.0
  %556 = vmatprep.subr.mxu0 0.0
  %557 = vmatpush1.msra.mxu0 0.0
  %558 = vmatprep.subr.mxu0 0.0
  %559 = vmatpush1.msra.mxu0 0.0
  %560 = vmatprep.subr.mxu0 0.0
  %561 = vmatpush1.msra.mxu0 0.0
  %562 = vmatprep.subr.mxu0 0.0
  %563 = vmatpush1.msra.mxu0 0.0
  %564 = vmatprep.subr.mxu0 0.0
  %565 = vmatpush1.msra.mxu0 0.0
  %566 = vmatprep.subr.mxu0 0.0
  %567 = vmatpush1.msra.mxu0 0.0
  %568 = vmatprep.subr.mxu0 0.0
  %569 = vmatpush1.msra.mxu0 0.0
  %570 = vmatprep.subr.mxu0 0.0
  %571 = vmatpush1.msra.mxu0 0.0
  %572 = vmatprep.subr.mxu0 0.0
  %573 = vmatpush1.msra.mxu0 0.0
  %574 = vmatprep.subr.mxu0 0.0
  %575 = vmatpush1.msra.mxu0 0.0
  %576 = vmatprep.subr.mxu0 0.0
  %577 = vmatpush1.msra.mxu0 0.0
  %578 = vmatprep.subr.mxu0 0.0
  %579 = vmatpush1.msra.mxu0 0.0
  %580 = vmatprep.subr.mxu0 0.0
  %581 = vmatpush1.msra.mxu0 0.0
  %582 = vmatprep.subr.mxu0 0.0
  %583 = vmatpush1.msra.mxu0 0.0
  %584 = vmatprep.mubr.f32.mxu0 0.0
  %585 = vmatmul.mubr.f32.gmra.mrb[0].mxu0 %v515
  %v586 = vpop.f32.mrb[0].mxu0
  %v587 = vadd.f32 %v513, %v586
  %v588 = vpop.f32.mrb[0].mxu0
  %589 = vmatprep.mubr.f32.mxu0 0.0
  %590 = vmatmul.mubr.f32.gmra.mrb[0].mxu0 %v518
  %v591 = vpop.f32.mrb[0].mxu0
  %v592 = vadd.f32 %v513, %v591
  %v593 = vpop.f32.mrb[0].mxu0
  %594 = vdwg.mxu0
  %v595 = vld [vmem:[%s12] sm:$0x1]
  %v597 = vlaneseq
  %v598 = vshrl.u32 %v597, 7
  %v599 = vsub.s32 0, %v598
  %v600 = vrot.slane %v595, %v599
  %v602 = vadd.f32 %v587, %v600
  %v603 = vadd.f32 %v592, %v600
  %vm604 = vcmask 15360
  %605 = vst.msk [vmem:[%s13] sm:$0xff] %vm604, %v602
  %606 = vst.msk [vmem:[%s13 + $0x8] sm:$0xff] %vm604, %v603
  // Predicated region
  $region54: #{trajectory_model_forward.3} parent=0 // pred_check
    _
  $region55: #{trajectory_model_forward.3} parent=0 // pred_check_branch
    %608 = sbr.rel (0) target = $region57
  $region56: #{trajectory_model_forward.3} parent=0 // pred_region
    _
  $region57: #{trajectory_model_forward.3} parent=0 // pred_fallthru
    _
  // Predicated region
  $region58: #{trajectory_model_forward.3} parent=0 // pred_check
    _
  $region59: #{trajectory_model_forward.3} parent=0 // pred_check_branch
    %610 = sbr.rel (0) target = $region61
  $region60: #{trajectory_model_forward.3} parent=0 // pred_region
    _
  $region61: #{trajectory_model_forward.3} parent=0 // pred_fallthru
    _

// kernel: trajectory_model_forward.2
$region0: #{trajectory_model_forward.2}
  #allocation0 [shape = 'u32[]', space=smem, size = 0x4, offset = 0x4, fixed_abs, tag = 'smem constant byte address 0x4 - core index']
  #allocation1 [shape = 'u32[144,128]{1,0:T(1,128)}', space=vmem, size = 0x12000, scoped, tag = 'internal scratch']
  #allocation2 [shape = 'f32[80,64]{1,0:T(8,128)}', space=vmem, size = 0xa000, scoped, tag = 'scratch operand']
  %s0 = inlined_call_operand.vmem [shape: f32[3,80,2], index: 0, kind: input, shape index: {}]
  %s1 = inlined_call_operand.vmem [shape: f32[3,80,80], index: 1, kind: input, shape index: {}]
  %s2 = inlined_call_operand.vmem [shape: f32[3,2,64], index: 2, kind: input, shape index: {}]
  %s3 = inlined_call_operand.vmem [shape: f32[3,1,64], index: 3, kind: input, shape index: {}]
  %s4 = inlined_call_operand.vmem [shape: bf16[3,6,64,192], index: 4, kind: input, shape index: {}]
  %s5 = inlined_call_operand.vmem [shape: f32[3,6,1,192], index: 5, kind: input, shape index: {}]
  %s6 = inlined_call_operand.vmem [shape: bf16[3,6,64,64], index: 6, kind: input, shape index: {}]
  %s7 = inlined_call_operand.vmem [shape: f32[3,6,1,64], index: 7, kind: input, shape index: {}]
  %s8 = inlined_call_operand.vmem [shape: bf16[3,6,64,2048], index: 8, kind: input, shape index: {}]
  %s9 = inlined_call_operand.vmem [shape: f32[3,6,1,2048], index: 9, kind: input, shape index: {}]
  %s10 = inlined_call_operand.vmem [shape: bf16[3,6,2048,64], index: 10, kind: input, shape index: {}]
  %s11 = inlined_call_operand.vmem [shape: f32[3,6,1,64], index: 11, kind: input, shape index: {}]
  %s12 = inlined_call_operand.vmem [shape: f32[3,6,1,64], index: 12, kind: input, shape index: {}]
  %s13 = inlined_call_operand.vmem [shape: f32[3,6,1,64], index: 13, kind: input, shape index: {}]
  %s14 = inlined_call_operand.vmem [shape: f32[3,6,1,64], index: 14, kind: input, shape index: {}]
  %s15 = inlined_call_operand.vmem [shape: f32[3,6,1,64], index: 15, kind: input, shape index: {}]
  %s16 = inlined_call_operand.vmem [shape: f32[3,80,64], index: 16, kind: output, shape index: {}]
  %s17 = sld [smem:[#allocation0]]
  $region105: #{trajectory_model_forward.2} parent=0
    _
  %s19 = ssub.s32 1, %s17
  %s20 = scalar_select 0, %s19, %s17
  loop: start=0, step=1, limit=20
  $region2: #{trajectory_model_forward.2} parent=0 // loop_pre_header
    _
  $region3: #{trajectory_model_forward.2} parent=0 // loop_header
    %s22 = sphi 0, %s26
    %p23 = scmp.ge.s32.totalorder %s22, 20
    %s29 = sphi 0, %s41
    %s30 = sphi 0, %s37
    %s31 = sphi 0, %s29
    %s32 = sphi 0, %s30
    %s33 = sphi 0, %s31
    %s34 = sphi 0, %s32
    %s44 = sphi 0, %s46
    %s47 = sphi 0, %s44
    %s48 = sphi 0, %s47
    %s64 = sphi 0, %s48
    %s70 = sphi 0, %s72
    %s73 = sphi 0, %s70
    %s74 = sphi 0, %s73
    %s90 = sphi 0, %s74
    %s96 = sphi 0, %s98
    %s99 = sphi 0, %s96
    %s100 = sphi 0, %s99
    %s116 = sphi 0, %s100
    %s122 = sphi 0, %s124
    %s125 = sphi 0, %s122
    %s126 = sphi 0, %s125
    %s142 = sphi 0, %s126
    %s150 = sphi 0, %s152
    %s153 = sphi 0, %s150
    %s154 = sphi 0, %s153
    %s170 = sphi 0, %s154
    %s178 = sphi 0, %s180
    %s181 = sphi 0, %s178
    %s182 = sphi 0, %s181
    %s198 = sphi 0, %s182
    %s206 = sphi 0, %s208
    %s209 = sphi 0, %s206
    %s210 = sphi 0, %s209
    %s226 = sphi 0, %s210
    %s234 = sphi 0, %s236
    %s237 = sphi 0, %s234
    %s238 = sphi 0, %s237
    %s254 = sphi 0, %s238
    %s262 = sphi 0, %s264
    %s265 = sphi 0, %s262
    %s266 = sphi 0, %s265
    %s282 = sphi 0, %s266
    %s290 = sphi 0, %s292
    %s293 = sphi 0, %s290
    %s294 = sphi 0, %s293
    %s310 = sphi 0, %s294
    %s318 = sphi 0, %s320
    %s321 = sphi 0, %s318
    %s322 = sphi 0, %s321
    %s338 = sphi 0, %s322
    %s346 = sphi 0, %s348
    %s349 = sphi 0, %s346
    %s350 = sphi 0, %s349
    %s366 = sphi 0, %s350
    %s374 = sphi 0, %s376
    %s377 = sphi 0, %s374
    %s378 = sphi 0, %s377
    %s394 = sphi 0, %s378
    %s402 = sphi 0, %s404
    %s405 = sphi 0, %s402
    %s406 = sphi 0, %s405
    %s422 = sphi 0, %s406
    %s430 = sphi 0, %s432
    %s433 = sphi 0, %s430
    %s434 = sphi 0, %s433
    %s450 = sphi 0, %s434
    %s458 = sphi 0, %s460
    %s461 = sphi 0, %s458
    %s462 = sphi 0, %s461
    %s478 = sphi 0, %s462
    %s484 = sphi 0, %s486
    %s487 = sphi 0, %s484
    %s488 = sphi 0, %s487
    %s504 = sphi 0, %s488
  $region4: #{trajectory_model_forward.2} parent=0 // loop_header_branch
    %25 = sbr.rel (%p23) target = $region8
  $region5: #{trajectory_model_forward.2} parent=0 // loop_body
    %s27 = ssub.s32 %s22, 1
    %s28 = ssub.s32 %s22, 2
    %s35 = sadd.s32 1, %s30
    %p36 = scmp.ge.s32.totalorder %s35, 6
    %s37 = scalar_select %p36, 0, %s35
    %s38 = sadd.s32 1, %s29
    %s39 = scalar_select %p36, %s38, %s29
    %p40 = scmp.ge.s32.totalorder %s39, 3
    %s41 = scalar_select %p40, 0, %s39
    %s42 = ssub.s32 %s29, %s41
    %p43 = scmp.eq.s32.totalorder %s42, 0
    %s45 = sadd.s32 %s44, 1
    %s46 = scalar_select %p43, %s44, %s45
    %p49 = pneg %p43
    %p50 = scmp.eq.s32.totalorder %s22, 17
    %p51 = por %p49, %p50
    %p52 = scmp.ne.s32.totalorder %s44, %s47
    %p53 = scmp.eq.s32.totalorder %s22, 0
    %p54 = por %p52, %p53
    %p55 = scmp.ne.s32.totalorder %s44, %s47
    %p56 = scmp.eq.s32.totalorder %s27, 17
    %p57 = por %p55, %p56
    %p58 = scmp.ne.s32.totalorder %s47, %s48
    %p59 = scmp.eq.s32.totalorder %s27, 0
    %p60 = por %p58, %p59
    %p61 = scmp.ne.s32.totalorder %s47, %s48
    %p62 = scmp.eq.s32.totalorder %s28, 17
    %p63 = por %p61, %p62
    %p65 = scmp.ne.s32.totalorder %s48, %s64
    %p66 = scmp.eq.s32.totalorder %s28, 0
    %p67 = por %p65, %p66
    %s68 = ssub.s32 %s29, %s41
    %p69 = scmp.eq.s32.totalorder %s68, 0
    %s71 = sadd.s32 %s70, 1
    %s72 = scalar_select %p69, %s70, %s71
    %p75 = pneg %p69
    %p76 = scmp.eq.s32.totalorder %s22, 17
    %p77 = por %p75, %p76
    %p78 = scmp.ne.s32.totalorder %s70, %s73
    %p79 = scmp.eq.s32.totalorder %s22, 0
    %p80 = por %p78, %p79
    %p81 = scmp.ne.s32.totalorder %s70, %s73
    %p82 = scmp.eq.s32.totalorder %s27, 17
    %p83 = por %p81, %p82
    %p84 = scmp.ne.s32.totalorder %s73, %s74
    %p85 = scmp.eq.s32.totalorder %s27, 0
    %p86 = por %p84, %p85
    %p87 = scmp.ne.s32.totalorder %s73, %s74
    %p88 = scmp.eq.s32.totalorder %s28, 17
    %p89 = por %p87, %p88
    %p91 = scmp.ne.s32.totalorder %s74, %s90
    %p92 = scmp.eq.s32.totalorder %s28, 0
    %p93 = por %p91, %p92
    %s94 = ssub.s32 %s29, %s41
    %p95 = scmp.eq.s32.totalorder %s94, 0
    %s97 = sadd.s32 %s96, 1
    %s98 = scalar_select %p95, %s96, %s97
    %p101 = pneg %p95
    %p102 = scmp.eq.s32.totalorder %s22, 17
    %p103 = por %p101, %p102
    %p104 = scmp.ne.s32.totalorder %s96, %s99
    %p105 = scmp.eq.s32.totalorder %s22, 0
    %p106 = por %p104, %p105
    %p107 = scmp.ne.s32.totalorder %s96, %s99
    %p108 = scmp.eq.s32.totalorder %s27, 17
    %p109 = por %p107, %p108
    %p110 = scmp.ne.s32.totalorder %s99, %s100
    %p111 = scmp.eq.s32.totalorder %s27, 0
    %p112 = por %p110, %p111
    %p113 = scmp.ne.s32.totalorder %s99, %s100
    %p114 = scmp.eq.s32.totalorder %s28, 17
    %p115 = por %p113, %p114
    %p117 = scmp.ne.s32.totalorder %s100, %s116
    %p118 = scmp.eq.s32.totalorder %s28, 0
    %p119 = por %p117, %p118
    %s120 = ssub.s32 %s29, %s41
    %p121 = scmp.eq.s32.totalorder %s120, 0
    %s123 = sadd.s32 %s122, 1
    %s124 = scalar_select %p121, %s122, %s123
    %p127 = pneg %p121
    %p128 = scmp.eq.s32.totalorder %s22, 17
    %p129 = por %p127, %p128
    %p130 = scmp.ne.s32.totalorder %s122, %s125
    %p131 = scmp.eq.s32.totalorder %s22, 0
    %p132 = por %p130, %p131
    %p133 = scmp.ne.s32.totalorder %s122, %s125
    %p134 = scmp.eq.s32.totalorder %s27, 17
    %p135 = por %p133, %p134
    %p136 = scmp.ne.s32.totalorder %s125, %s126
    %p137 = scmp.eq.s32.totalorder %s27, 0
    %p138 = por %p136, %p137
    %p139 = scmp.ne.s32.totalorder %s125, %s126
    %p140 = scmp.eq.s32.totalorder %s28, 17
    %p141 = por %p139, %p140
    %p143 = scmp.ne.s32.totalorder %s126, %s142
    %p144 = scmp.eq.s32.totalorder %s28, 0
    %p145 = por %p143, %p144
    %s146 = ssub.s32 %s29, %s41
    %s147 = ssub.s32 %s30, %s37
    %s148 = sor.u32 %s146, %s147
    %p149 = scmp.eq.s32.totalorder %s148, 0
    %s151 = sadd.s32 %s150, 1
    %s152 = scalar_select %p149, %s150, %s151
    %p155 = pneg %p149
    %p156 = scmp.eq.s32.totalorder %s22, 17
    %p157 = por %p155, %p156
    %p158 = scmp.ne.s32.totalorder %s150, %s153
    %p159 = scmp.eq.s32.totalorder %s22, 0
    %p160 = por %p158, %p159
    %p161 = scmp.ne.s32.totalorder %s150, %s153
    %p162 = scmp.eq.s32.totalorder %s27, 17
    %p163 = por %p161, %p162
    %p164 = scmp.ne.s32.totalorder %s153, %s154
    %p165 = scmp.eq.s32.totalorder %s27, 0
    %p166 = por %p164, %p165
    %p167 = scmp.ne.s32.totalorder %s153, %s154
    %p168 = scmp.eq.s32.totalorder %s28, 17
    %p169 = por %p167, %p168
    %p171 = scmp.ne.s32.totalorder %s154, %s170
    %p172 = scmp.eq.s32.totalorder %s28, 0
    %p173 = por %p171, %p172
    %s174 = ssub.s32 %s29, %s41
    %s175 = ssub.s32 %s30, %s37
    %s176 = sor.u32 %s174, %s175
    %p177 = scmp.eq.s32.totalorder %s176, 0
    %s179 = sadd.s32 %s178, 1
    %s180 = scalar_select %p177, %s178, %s179
    %p183 = pneg %p177
    %p184 = scmp.eq.s32.totalorder %s22, 17
    %p185 = por %p183, %p184
    %p186 = scmp.ne.s32.totalorder %s178, %s181
    %p187 = scmp.eq.s32.totalorder %s22, 0
    %p188 = por %p186, %p187
    %p189 = scmp.ne.s32.totalorder %s178, %s181
    %p190 = scmp.eq.s32.totalorder %s27, 17
    %p191 = por %p189, %p190
    %p192 = scmp.ne.s32.totalorder %s181, %s182
    %p193 = scmp.eq.s32.totalorder %s27, 0
    %p194 = por %p192, %p193
    %p195 = scmp.ne.s32.totalorder %s181, %s182
    %p196 = scmp.eq.s32.totalorder %s28, 17
    %p197 = por %p195, %p196
    %p199 = scmp.ne.s32.totalorder %s182, %s198
    %p200 = scmp.eq.s32.totalorder %s28, 0
    %p201 = por %p199, %p200
    %s202 = ssub.s32 %s29, %s41
    %s203 = ssub.s32 %s30, %s37
    %s204 = sor.u32 %s202, %s203
    %p205 = scmp.eq.s32.totalorder %s204, 0
    %s207 = sadd.s32 %s206, 1
    %s208 = scalar_select %p205, %s206, %s207
    %p211 = pneg %p205
    %p212 = scmp.eq.s32.totalorder %s22, 17
    %p213 = por %p211, %p212
    %p214 = scmp.ne.s32.totalorder %s206, %s209
    %p215 = scmp.eq.s32.totalorder %s22, 0
    %p216 = por %p214, %p215
    %p217 = scmp.ne.s32.totalorder %s206, %s209
    %p218 = scmp.eq.s32.totalorder %s27, 17
    %p219 = por %p217, %p218
    %p220 = scmp.ne.s32.totalorder %s209, %s210
    %p221 = scmp.eq.s32.totalorder %s27, 0
    %p222 = por %p220, %p221
    %p223 = scmp.ne.s32.totalorder %s209, %s210
    %p224 = scmp.eq.s32.totalorder %s28, 17
    %p225 = por %p223, %p224
    %p227 = scmp.ne.s32.totalorder %s210, %s226
    %p228 = scmp.eq.s32.totalorder %s28, 0
    %p229 = por %p227, %p228
    %s230 = ssub.s32 %s29, %s41
    %s231 = ssub.s32 %s30, %s37
    %s232 = sor.u32 %s230, %s231
    %p233 = scmp.eq.s32.totalorder %s232, 0
    %s235 = sadd.s32 %s234, 1
    %s236 = scalar_select %p233, %s234, %s235
    %p239 = pneg %p233
    %p240 = scmp.eq.s32.totalorder %s22, 17
    %p241 = por %p239, %p240
    %p242 = scmp.ne.s32.totalorder %s234, %s237
    %p243 = scmp.eq.s32.totalorder %s22, 0
    %p244 = por %p242, %p243
    %p245 = scmp.ne.s32.totalorder %s234, %s237
    %p246 = scmp.eq.s32.totalorder %s27, 17
    %p247 = por %p245, %p246
    %p248 = scmp.ne.s32.totalorder %s237, %s238
    %p249 = scmp.eq.s32.totalorder %s27, 0
    %p250 = por %p248, %p249
    %p251 = scmp.ne.s32.totalorder %s237, %s238
    %p252 = scmp.eq.s32.totalorder %s28, 17
    %p253 = por %p251, %p252
    %p255 = scmp.ne.s32.totalorder %s238, %s254
    %p256 = scmp.eq.s32.totalorder %s28, 0
    %p257 = por %p255, %p256
    %s258 = ssub.s32 %s29, %s41
    %s259 = ssub.s32 %s30, %s37
    %s260 = sor.u32 %s258, %s259
    %p261 = scmp.eq.s32.totalorder %s260, 0
    %s263 = sadd.s32 %s262, 1
    %s264 = scalar_select %p261, %s262, %s263
    %p267 = pneg %p261
    %p268 = scmp.eq.s32.totalorder %s22, 17
    %p269 = por %p267, %p268
    %p270 = scmp.ne.s32.totalorder %s262, %s265
    %p271 = scmp.eq.s32.totalorder %s22, 0
    %p272 = por %p270, %p271
    %p273 = scmp.ne.s32.totalorder %s262, %s265
    %p274 = scmp.eq.s32.totalorder %s27, 17
    %p275 = por %p273, %p274
    %p276 = scmp.ne.s32.totalorder %s265, %s266
    %p277 = scmp.eq.s32.totalorder %s27, 0
    %p278 = por %p276, %p277
    %p279 = scmp.ne.s32.totalorder %s265, %s266
    %p280 = scmp.eq.s32.totalorder %s28, 17
    %p281 = por %p279, %p280
    %p283 = scmp.ne.s32.totalorder %s266, %s282
    %p284 = scmp.eq.s32.totalorder %s28, 0
    %p285 = por %p283, %p284
    %s286 = ssub.s32 %s29, %s41
    %s287 = ssub.s32 %s30, %s37
    %s288 = sor.u32 %s286, %s287
    %p289 = scmp.eq.s32.totalorder %s288, 0
    %s291 = sadd.s32 %s290, 1
    %s292 = scalar_select %p289, %s290, %s291
    %p295 = pneg %p289
    %p296 = scmp.eq.s32.totalorder %s22, 17
    %p297 = por %p295, %p296
    %p298 = scmp.ne.s32.totalorder %s290, %s293
    %p299 = scmp.eq.s32.totalorder %s22, 0
    %p300 = por %p298, %p299
    %p301 = scmp.ne.s32.totalorder %s290, %s293
    %p302 = scmp.eq.s32.totalorder %s27, 17
    %p303 = por %p301, %p302
    %p304 = scmp.ne.s32.totalorder %s293, %s294
    %p305 = scmp.eq.s32.totalorder %s27, 0
    %p306 = por %p304, %p305
    %p307 = scmp.ne.s32.totalorder %s293, %s294
    %p308 = scmp.eq.s32.totalorder %s28, 17
    %p309 = por %p307, %p308
    %p311 = scmp.ne.s32.totalorder %s294, %s310
    %p312 = scmp.eq.s32.totalorder %s28, 0
    %p313 = por %p311, %p312
    %s314 = ssub.s32 %s29, %s41
    %s315 = ssub.s32 %s30, %s37
    %s316 = sor.u32 %s314, %s315
    %p317 = scmp.eq.s32.totalorder %s316, 0
    %s319 = sadd.s32 %s318, 1
    %s320 = scalar_select %p317, %s318, %s319
    %p323 = pneg %p317
    %p324 = scmp.eq.s32.totalorder %s22, 17
    %p325 = por %p323, %p324
    %p326 = scmp.ne.s32.totalorder %s318, %s321
    %p327 = scmp.eq.s32.totalorder %s22, 0
    %p328 = por %p326, %p327
    %p329 = scmp.ne.s32.totalorder %s318, %s321
    %p330 = scmp.eq.s32.totalorder %s27, 17
    %p331 = por %p329, %p330
    %p332 = scmp.ne.s32.totalorder %s321, %s322
    %p333 = scmp.eq.s32.totalorder %s27, 0
    %p334 = por %p332, %p333
    %p335 = scmp.ne.s32.totalorder %s321, %s322
    %p336 = scmp.eq.s32.totalorder %s28, 17
    %p337 = por %p335, %p336
    %p339 = scmp.ne.s32.totalorder %s322, %s338
    %p340 = scmp.eq.s32.totalorder %s28, 0
    %p341 = por %p339, %p340
    %s342 = ssub.s32 %s29, %s41
    %s343 = ssub.s32 %s30, %s37
    %s344 = sor.u32 %s342, %s343
    %p345 = scmp.eq.s32.totalorder %s344, 0
    %s347 = sadd.s32 %s346, 1
    %s348 = scalar_select %p345, %s346, %s347
    %p351 = pneg %p345
    %p352 = scmp.eq.s32.totalorder %s22, 17
    %p353 = por %p351, %p352
    %p354 = scmp.ne.s32.totalorder %s346, %s349
    %p355 = scmp.eq.s32.totalorder %s22, 0
    %p356 = por %p354, %p355
    %p357 = scmp.ne.s32.totalorder %s346, %s349
    %p358 = scmp.eq.s32.totalorder %s27, 17
    %p359 = por %p357, %p358
    %p360 = scmp.ne.s32.totalorder %s349, %s350
    %p361 = scmp.eq.s32.totalorder %s27, 0
    %p362 = por %p360, %p361
    %p363 = scmp.ne.s32.totalorder %s349, %s350
    %p364 = scmp.eq.s32.totalorder %s28, 17
    %p365 = por %p363, %p364
    %p367 = scmp.ne.s32.totalorder %s350, %s366
    %p368 = scmp.eq.s32.totalorder %s28, 0
    %p369 = por %p367, %p368
    %s370 = ssub.s32 %s29, %s41
    %s371 = ssub.s32 %s30, %s37
    %s372 = sor.u32 %s370, %s371
    %p373 = scmp.eq.s32.totalorder %s372, 0
    %s375 = sadd.s32 %s374, 1
    %s376 = scalar_select %p373, %s374, %s375
    %p379 = pneg %p373
    %p380 = scmp.eq.s32.totalorder %s22, 17
    %p381 = por %p379, %p380
    %p382 = scmp.ne.s32.totalorder %s374, %s377
    %p383 = scmp.eq.s32.totalorder %s22, 0
    %p384 = por %p382, %p383
    %p385 = scmp.ne.s32.totalorder %s374, %s377
    %p386 = scmp.eq.s32.totalorder %s27, 17
    %p387 = por %p385, %p386
    %p388 = scmp.ne.s32.totalorder %s377, %s378
    %p389 = scmp.eq.s32.totalorder %s27, 0
    %p390 = por %p388, %p389
    %p391 = scmp.ne.s32.totalorder %s377, %s378
    %p392 = scmp.eq.s32.totalorder %s28, 17
    %p393 = por %p391, %p392
    %p395 = scmp.ne.s32.totalorder %s378, %s394
    %p396 = scmp.eq.s32.totalorder %s28, 0
    %p397 = por %p395, %p396
    %s398 = ssub.s32 %s29, %s41
    %s399 = ssub.s32 %s30, %s37
    %s400 = sor.u32 %s398, %s399
    %p401 = scmp.eq.s32.totalorder %s400, 0
    %s403 = sadd.s32 %s402, 1
    %s404 = scalar_select %p401, %s402, %s403
    %p407 = pneg %p401
    %p408 = scmp.eq.s32.totalorder %s22, 17
    %p409 = por %p407, %p408
    %p410 = scmp.ne.s32.totalorder %s402, %s405
    %p411 = scmp.eq.s32.totalorder %s22, 0
    %p412 = por %p410, %p411
    %p413 = scmp.ne.s32.totalorder %s402, %s405
    %p414 = scmp.eq.s32.totalorder %s27, 17
    %p415 = por %p413, %p414
    %p416 = scmp.ne.s32.totalorder %s405, %s406
    %p417 = scmp.eq.s32.totalorder %s27, 0
    %p418 = por %p416, %p417
    %p419 = scmp.ne.s32.totalorder %s405, %s406
    %p420 = scmp.eq.s32.totalorder %s28, 17
    %p421 = por %p419, %p420
    %p423 = scmp.ne.s32.totalorder %s406, %s422
    %p424 = scmp.eq.s32.totalorder %s28, 0
    %p425 = por %p423, %p424
    %s426 = ssub.s32 %s29, %s41
    %s427 = ssub.s32 %s30, %s37
    %s428 = sor.u32 %s426, %s427
    %p429 = scmp.eq.s32.totalorder %s428, 0
    %s431 = sadd.s32 %s430, 1
    %s432 = scalar_select %p429, %s430, %s431
    %p435 = pneg %p429
    %p436 = scmp.eq.s32.totalorder %s22, 17
    %p437 = por %p435, %p436
    %p438 = scmp.ne.s32.totalorder %s430, %s433
    %p439 = scmp.eq.s32.totalorder %s22, 0
    %p440 = por %p438, %p439
    %p441 = scmp.ne.s32.totalorder %s430, %s433
    %p442 = scmp.eq.s32.totalorder %s27, 17
    %p443 = por %p441, %p442
    %p444 = scmp.ne.s32.totalorder %s433, %s434
    %p445 = scmp.eq.s32.totalorder %s27, 0
    %p446 = por %p444, %p445
    %p447 = scmp.ne.s32.totalorder %s433, %s434
    %p448 = scmp.eq.s32.totalorder %s28, 17
    %p449 = por %p447, %p448
    %p451 = scmp.ne.s32.totalorder %s434, %s450
    %p452 = scmp.eq.s32.totalorder %s28, 0
    %p453 = por %p451, %p452
    %s454 = ssub.s32 %s29, %s41
    %s455 = ssub.s32 %s30, %s37
    %s456 = sor.u32 %s454, %s455
    %p457 = scmp.eq.s32.totalorder %s456, 0
    %s459 = sadd.s32 %s458, 1
    %s460 = scalar_select %p457, %s458, %s459
    %p463 = pneg %p457
    %p464 = scmp.eq.s32.totalorder %s22, 17
    %p465 = por %p463, %p464
    %p466 = scmp.ne.s32.totalorder %s458, %s461
    %p467 = scmp.eq.s32.totalorder %s22, 0
    %p468 = por %p466, %p467
    %p469 = scmp.ne.s32.totalorder %s458, %s461
    %p470 = scmp.eq.s32.totalorder %s27, 17
    %p471 = por %p469, %p470
    %p472 = scmp.ne.s32.totalorder %s461, %s462
    %p473 = scmp.eq.s32.totalorder %s27, 0
    %p474 = por %p472, %p473
    %p475 = scmp.ne.s32.totalorder %s461, %s462
    %p476 = scmp.eq.s32.totalorder %s28, 17
    %p477 = por %p475, %p476
    %p479 = scmp.ne.s32.totalorder %s462, %s478
    %p480 = scmp.eq.s32.totalorder %s28, 0
    %p481 = por %p479, %p480
    %s482 = ssub.s32 %s29, %s41
    %p483 = scmp.eq.s32.totalorder %s482, 0
    %s485 = sadd.s32 %s484, 1
    %s486 = scalar_select %p483, %s484, %s485
    %p489 = pneg %p483
    %p490 = scmp.eq.s32.totalorder %s22, 17
    %p491 = por %p489, %p490
    %p492 = scmp.ne.s32.totalorder %s484, %s487
    %p493 = scmp.eq.s32.totalorder %s22, 0
    %p494 = por %p492, %p493
    %p495 = scmp.ne.s32.totalorder %s484, %s487
    %p496 = scmp.eq.s32.totalorder %s27, 17
    %p497 = por %p495, %p496
    %p498 = scmp.ne.s32.totalorder %s487, %s488
    %p499 = scmp.eq.s32.totalorder %s27, 0
    %p500 = por %p498, %p499
    %p501 = scmp.ne.s32.totalorder %s487, %s488
    %p502 = scmp.eq.s32.totalorder %s28, 17
    %p503 = por %p501, %p502
    %p505 = scmp.ne.s32.totalorder %s488, %s504
    %p506 = scmp.eq.s32.totalorder %s28, 0
    %p507 = por %p505, %p506
    %p508 = scmp.le.s32.totalorder 1, %s22
    %p509 = scmp.lt.s32.totalorder %s22, 19
    %p510 = pnand %p508, %p509
    %p511 = pneg %p510
    // Predicated region
    $region9: #{trajectory_model_forward.2} parent=5 // pred_check
      _
    $region10: #{trajectory_model_forward.2} parent=5 // pred_check_branch
      %513 = sbr.rel (%p510) target = $region12
    $region11: #{trajectory_model_forward.2} parent=5 // pred_region
      %s514 = ssub.s32 %s22, 1
    $region12: #{trajectory_model_forward.2} parent=5 // pred_fallthru
      _
    %p515 = scmp.lt.s32.totalorder %s22, 18
    // Predicated region
    $region13: #{trajectory_model_forward.2} parent=5 // pred_check
      %p516 = pneg %p515
    $region14: #{trajectory_model_forward.2} parent=5 // pred_check_branch
      %518 = sbr.rel (%p516) target = $region16
    $region15: #{trajectory_model_forward.2} parent=5 // pred_region
      // Predicated region
      $region17: #{trajectory_model_forward.2} parent=15 // pred_check
        %p519 = pneg %p54
      $region18: #{trajectory_model_forward.2} parent=15 // pred_check_branch
        %521 = sbr.rel (%p519) target = $region20
      $region19: #{trajectory_model_forward.2} parent=15 // pred_region
        %p522 = scmp.lt.s32.totalorder %s29, 2
        %s523 = scalar_select %p522, %s29, 2
        %s524 = smul.addr %s523, 10
        %s525 = smul.addr %s524, 8
        %s526 = scalar_lea.vmem %s0, %s525
      $region20: #{trajectory_model_forward.2} parent=15 // pred_fallthru
        _
      // Predicated region
      $region21: #{trajectory_model_forward.2} parent=15 // pred_check
        %p527 = pneg %p80
      $region22: #{trajectory_model_forward.2} parent=15 // pred_check_branch
        %529 = sbr.rel (%p527) target = $region24
      $region23: #{trajectory_model_forward.2} parent=15 // pred_region
        %p530 = scmp.lt.s32.totalorder %s29, 2
        %s531 = scalar_select %p530, %s29, 2
        %s532 = smul.addr %s531, 10
        %s533 = smul.addr %s532, 8
        %s534 = scalar_lea.vmem %s1, %s533
      $region24: #{trajectory_model_forward.2} parent=15 // pred_fallthru
        _
      // Predicated region
      $region25: #{trajectory_model_forward.2} parent=15 // pred_check
        %p535 = pneg %p106
      $region26: #{trajectory_model_forward.2} parent=15 // pred_check_branch
        %537 = sbr.rel (%p535) target = $region28
      $region27: #{trajectory_model_forward.2} parent=15 // pred_region
        %p538 = scmp.lt.s32.totalorder %s29, 2
        %s539 = scalar_select %p538, %s29, 2
        %s540 = smul.addr %s539, 2
        %s541 = scalar_lea.vmem %s2, %s540
      $region28: #{trajectory_model_forward.2} parent=15 // pred_fallthru
        _
      // Predicated region
      $region29: #{trajectory_model_forward.2} parent=15 // pred_check
        %p542 = pneg %p132
      $region30: #{trajectory_model_forward.2} parent=15 // pred_check_branch
        %544 = sbr.rel (%p542) target = $region32
      $region31: #{trajectory_model_forward.2} parent=15 // pred_region
        %p545 = scmp.lt.s32.totalorder %s29, 2
        %s546 = scalar_select %p545, %s29, 2
        %s547 = scalar_lea.vmem %s3, %s546
      $region32: #{trajectory_model_forward.2} parent=15 // pred_fallthru
        _
      // Predicated region
      $region33: #{trajectory_model_forward.2} parent=15 // pred_check
        %p548 = pneg %p160
      $region34: #{trajectory_model_forward.2} parent=15 // pred_check_branch
        %550 = sbr.rel (%p548) target = $region36
      $region35: #{trajectory_model_forward.2} parent=15 // pred_region
        %p551 = scmp.lt.s32.totalorder %s29, 2
        %s552 = scalar_select %p551, %s29, 2
        %p553 = scmp.lt.s32.totalorder %s30, 5
        %s554 = scalar_select %p553, %s30, 5
        %s555 = smul.addr %s554, 16
        %s556 = smul.addr %s552, 96
        %s557 = sadd.s32 %s555, %s556
        %s558 = smul.addr %s557, 4
        %s559 = scalar_lea.vmem %s4, %s558
      $region36: #{trajectory_model_forward.2} parent=15 // pred_fallthru
        _
      // Predicated region
      $region37: #{trajectory_model_forward.2} parent=15 // pred_check
        %p560 = pneg %p188
      $region38: #{trajectory_model_forward.2} parent=15 // pred_check_branch
        %562 = sbr.rel (%p560) target = $region40
      $region39: #{trajectory_model_forward.2} parent=15 // pred_region
        %p563 = scmp.lt.s32.totalorder %s29, 2
        %s564 = scalar_select %p563, %s29, 2
        %p565 = scmp.lt.s32.totalorder %s30, 5
        %s566 = scalar_select %p565, %s30, 5
        %s567 = smul.addr %s566, 2
        %s568 = smul.addr %s564, 12
        %s569 = sadd.s32 %s567, %s568
        %s570 = scalar_lea.vmem %s5, %s569
      $region40: #{trajectory_model_forward.2} parent=15 // pred_fallthru
        _
      // Predicated region
      $region41: #{trajectory_model_forward.2} parent=15 // pred_check
        %p571 = pneg %p216
      $region42: #{trajectory_model_forward.2} parent=15 // pred_check_branch
        %573 = sbr.rel (%p571) target = $region44
      $region43: #{trajectory_model_forward.2} parent=15 // pred_region
        %p574 = scmp.lt.s32.totalorder %s29, 2
        %s575 = scalar_select %p574, %s29, 2
        %p576 = scmp.lt.s32.totalorder %s30, 5
        %s577 = scalar_select %p576, %s30, 5
        %s578 = smul.addr %s577, 8
        %s579 = smul.addr %s575, 48
        %s580 = sadd.s32 %s578, %s579
        %s581 = smul.addr %s580, 4
        %s582 = scalar_lea.vmem %s6, %s581
      $region44: #{trajectory_model_forward.2} parent=15 // pred_fallthru
        _
      // Predicated region
      $region45: #{trajectory_model_forward.2} parent=15 // pred_check
        %p583 = pneg %p244
      $region46: #{trajectory_model_forward.2} parent=15 // pred_check_branch
        %585 = sbr.rel (%p583) target = $region48
      $region47: #{trajectory_model_forward.2} parent=15 // pred_region
        %p586 = scmp.lt.s32.totalorder %s29, 2
        %s587 = scalar_select %p586, %s29, 2
        %p588 = scmp.lt.s32.totalorder %s30, 5
        %s589 = scalar_select %p588, %s30, 5
        %s590 = smul.addr %s587, 6
        %s591 = sadd.s32 %s589, %s590
        %s592 = scalar_lea.vmem %s7, %s591
      $region48: #{trajectory_model_forward.2} parent=15 // pred_fallthru
        _
      // Predicated region
      $region49: #{trajectory_model_forward.2} parent=15 // pred_check
        %p593 = pneg %p272
      $region50: #{trajectory_model_forward.2} parent=15 // pred_check_branch
        %595 = sbr.rel (%p593) target = $region52
      $region51: #{trajectory_model_forward.2} parent=15 // pred_region
        %p596 = scmp.lt.s32.totalorder %s29, 2
        %s597 = scalar_select %p596, %s29, 2
        %p598 = scmp.lt.s32.totalorder %s30, 5
        %s599 = scalar_select %p598, %s30, 5
        %s600 = smul.addr %s599, 128
        %s601 = smul.addr %s597, 768
        %s602 = sadd.s32 %s600, %s601
        %s603 = smul.addr %s602, 4
        %s604 = scalar_lea.vmem %s8, %s603
      $region52: #{trajectory_model_forward.2} parent=15 // pred_fallthru
        _
      // Predicated region
      $region53: #{trajectory_model_forward.2} parent=15 // pred_check
        %p605 = pneg %p300
      $region54: #{trajectory_model_forward.2} parent=15 // pred_check_branch
        %607 = sbr.rel (%p605) target = $region56
      $region55: #{trajectory_model_forward.2} parent=15 // pred_region
        %p608 = scmp.lt.s32.totalorder %s29, 2
        %s609 = scalar_select %p608, %s29, 2
        %p610 = scmp.lt.s32.totalorder %s30, 5
        %s611 = scalar_select %p610, %s30, 5
        %s612 = smul.addr %s611, 16
        %s613 = smul.addr %s609, 96
        %s614 = sadd.s32 %s612, %s613
        %s615 = scalar_lea.vmem %s9, %s614
      $region56: #{trajectory_model_forward.2} parent=15 // pred_fallthru
        _
      // Predicated region
      $region57: #{trajectory_model_forward.2} parent=15 // pred_check
        %p616 = pneg %p328
      $region58: #{trajectory_model_forward.2} parent=15 // pred_check_branch
        %618 = sbr.rel (%p616) target = $region60
      $region59: #{trajectory_model_forward.2} parent=15 // pred_region
        %p619 = scmp.lt.s32.totalorder %s29, 2
        %s620 = scalar_select %p619, %s29, 2
        %p621 = scmp.lt.s32.totalorder %s30, 5
        %s622 = scalar_select %p621, %s30, 5
        %s623 = smul.addr %s622, 256
        %s624 = smul.addr %s620, 1536
        %s625 = sadd.s32 %s623, %s624
        %s626 = smul.addr %s625, 4
        %s627 = scalar_lea.vmem %s10, %s626
      $region60: #{trajectory_model_forward.2} parent=15 // pred_fallthru
        _
      // Predicated region
      $region61: #{trajectory_model_forward.2} parent=15 // pred_check
        %p628 = pneg %p356
      $region62: #{trajectory_model_forward.2} parent=15 // pred_check_branch
        %630 = sbr.rel (%p628) target = $region64
      $region63: #{trajectory_model_forward.2} parent=15 // pred_region
        %p631 = scmp.lt.s32.totalorder %s29, 2
        %s632 = scalar_select %p631, %s29, 2
        %p633 = scmp.lt.s32.totalorder %s30, 5
        %s634 = scalar_select %p633, %s30, 5
        %s635 = smul.addr %s632, 6
        %s636 = sadd.s32 %s634, %s635
        %s637 = scalar_lea.vmem %s11, %s636
      $region64: #{trajectory_model_forward.2} parent=15 // pred_fallthru
        _
      // Predicated region
      $region65: #{trajectory_model_forward.2} parent=15 // pred_check
        %p638 = pneg %p384
      $region66: #{trajectory_model_forward.2} parent=15 // pred_check_branch
        %640 = sbr.rel (%p638) target = $region68
      $region67: #{trajectory_model_forward.2} parent=15 // pred_region
        %p641 = scmp.lt.s32.totalorder %s29, 2
        %s642 = scalar_select %p641, %s29, 2
        %p643 = scmp.lt.s32.totalorder %s30, 5
        %s644 = scalar_select %p643, %s30, 5
        %s645 = smul.addr %s642, 6
        %s646 = sadd.s32 %s644, %s645
        %s647 = scalar_lea.vmem %s12, %s646
      $region68: #{trajectory_model_forward.2} parent=15 // pred_fallthru
        _
      // Predicated region
      $region69: #{trajectory_model_forward.2} parent=15 // pred_check
        %p648 = pneg %p412
      $region70: #{trajectory_model_forward.2} parent=15 // pred_check_branch
        %650 = sbr.rel (%p648) target = $region72
      $region71: #{trajectory_model_forward.2} parent=15 // pred_region
        %p651 = scmp.lt.s32.totalorder %s29, 2
        %s652 = scalar_select %p651, %s29, 2
        %p653 = scmp.lt.s32.totalorder %s30, 5
        %s654 = scalar_select %p653, %s30, 5
        %s655 = smul.addr %s652, 6
        %s656 = sadd.s32 %s654, %s655
        %s657 = scalar_lea.vmem %s13, %s656
      $region72: #{trajectory_model_forward.2} parent=15 // pred_fallthru
        _
      // Predicated region
      $region73: #{trajectory_model_forward.2} parent=15 // pred_check
        %p658 = pneg %p440
      $region74: #{trajectory_model_forward.2} parent=15 // pred_check_branch
        %660 = sbr.rel (%p658) target = $region76
      $region75: #{trajectory_model_forward.2} parent=15 // pred_region
        %p661 = scmp.lt.s32.totalorder %s29, 2
        %s662 = scalar_select %p661, %s29, 2
        %p663 = scmp.lt.s32.totalorder %s30, 5
        %s664 = scalar_select %p663, %s30, 5
        %s665 = smul.addr %s662, 6
        %s666 = sadd.s32 %s664, %s665
        %s667 = scalar_lea.vmem %s14, %s666
      $region76: #{trajectory_model_forward.2} parent=15 // pred_fallthru
        _
      // Predicated region
      $region77: #{trajectory_model_forward.2} parent=15 // pred_check
        %p668 = pneg %p468
      $region78: #{trajectory_model_forward.2} parent=15 // pred_check_branch
        %670 = sbr.rel (%p668) target = $region80
      $region79: #{trajectory_model_forward.2} parent=15 // pred_region
        %p671 = scmp.lt.s32.totalorder %s29, 2
        %s672 = scalar_select %p671, %s29, 2
        %p673 = scmp.lt.s32.totalorder %s30, 5
        %s674 = scalar_select %p673, %s30, 5
        %s675 = smul.addr %s672, 6
        %s676 = sadd.s32 %s674, %s675
        %s677 = scalar_lea.vmem %s15, %s676
      $region80: #{trajectory_model_forward.2} parent=15 // pred_fallthru
        _
    $region16: #{trajectory_model_forward.2} parent=5 // pred_fallthru
      _
    %p678 = scmp.le.s32.totalorder 1, %s22
    %p679 = scmp.lt.s32.totalorder %s22, 19
    %p680 = pnand %p678, %p679
    %p681 = pneg %p680
    // Predicated region
    $region81: #{trajectory_model_forward.2} parent=5 // pred_check
      _
    $region82: #{trajectory_model_forward.2} parent=5 // pred_check_branch
      %683 = sbr.rel (%p680) target = $region84
    $region83: #{trajectory_model_forward.2} parent=5 // pred_region
      %s684 = ssub.s32 %s22, 1
      %p685 = scmp.lt.s32.totalorder %s31, 2
      %s686 = scalar_select %p685, %s31, 2
      %s687 = smul.addr %s686, 10
      %s688 = smul.addr %s687, 8
      %s689 = scalar_lea.vmem %s0, %s688
      %p690 = pneg %p60
      %p691 = pneg %p57
      %p692 = scmp.lt.s32.totalorder %s31, 2
      %s693 = scalar_select %p692, %s31, 2
      %s694 = smul.addr %s693, 10
      %s695 = smul.addr %s694, 8
      %s696 = scalar_lea.vmem %s1, %s695
      %p697 = pneg %p86
      %p698 = pneg %p83
      %p699 = scmp.lt.s32.totalorder %s31, 2
      %s700 = scalar_select %p699, %s31, 2
      %s701 = smul.addr %s700, 2
      %s702 = scalar_lea.vmem %s2, %s701
      %p703 = pneg %p112
      %p704 = pneg %p109
      %p705 = scmp.lt.s32.totalorder %s31, 2
      %s706 = scalar_select %p705, %s31, 2
      %s707 = scalar_lea.vmem %s3, %s706
      %p708 = pneg %p138
      %p709 = pneg %p135
      %p710 = scmp.lt.s32.totalorder %s31, 2
      %s711 = scalar_select %p710, %s31, 2
      %p712 = scmp.lt.s32.totalorder %s32, 5
      %s713 = scalar_select %p712, %s32, 5
      %s714 = smul.addr %s713, 16
      %s715 = smul.addr %s711, 96
      %s716 = sadd.s32 %s714, %s715
      %s717 = smul.addr %s716, 4
      %s718 = scalar_lea.vmem %s4, %s717
      %p719 = pneg %p166
      %p720 = pneg %p163
      %p721 = scmp.lt.s32.totalorder %s31, 2
      %s722 = scalar_select %p721, %s31, 2
      %p723 = scmp.lt.s32.totalorder %s32, 5
      %s724 = scalar_select %p723, %s32, 5
      %s725 = smul.addr %s724, 2
      %s726 = smul.addr %s722, 12
      %s727 = sadd.s32 %s725, %s726
      %s728 = scalar_lea.vmem %s5, %s727
      %p729 = pneg %p194
      %p730 = pneg %p191
      %p731 = scmp.lt.s32.totalorder %s31, 2
      %s732 = scalar_select %p731, %s31, 2
      %p733 = scmp.lt.s32.totalorder %s32, 5
      %s734 = scalar_select %p733, %s32, 5
      %s735 = smul.addr %s734, 8
      %s736 = smul.addr %s732, 48
      %s737 = sadd.s32 %s735, %s736
      %s738 = smul.addr %s737, 4
      %s739 = scalar_lea.vmem %s6, %s738
      %p740 = pneg %p222
      %p741 = pneg %p219
      %p742 = scmp.lt.s32.totalorder %s31, 2
      %s743 = scalar_select %p742, %s31, 2
      %p744 = scmp.lt.s32.totalorder %s32, 5
      %s745 = scalar_select %p744, %s32, 5
      %s746 = smul.addr %s743, 6
      %s747 = sadd.s32 %s745, %s746
      %s748 = scalar_lea.vmem %s7, %s747
      %p749 = pneg %p250
      %p750 = pneg %p247
      %p751 = scmp.lt.s32.totalorder %s31, 2
      %s752 = scalar_select %p751, %s31, 2
      %p753 = scmp.lt.s32.totalorder %s32, 5
      %s754 = scalar_select %p753, %s32, 5
      %s755 = smul.addr %s754, 128
      %s756 = smul.addr %s752, 768
      %s757 = sadd.s32 %s755, %s756
      %s758 = smul.addr %s757, 4
      %s759 = scalar_lea.vmem %s8, %s758
      %p760 = pneg %p278
      %p761 = pneg %p275
      %p762 = scmp.lt.s32.totalorder %s31, 2
      %s763 = scalar_select %p762, %s31, 2
      %p764 = scmp.lt.s32.totalorder %s32, 5
      %s765 = scalar_select %p764, %s32, 5
      %s766 = smul.addr %s765, 16
      %s767 = smul.addr %s763, 96
      %s768 = sadd.s32 %s766, %s767
      %s769 = scalar_lea.vmem %s9, %s768
      %p770 = pneg %p306
      %p771 = pneg %p303
      %p772 = scmp.lt.s32.totalorder %s31, 2
      %s773 = scalar_select %p772, %s31, 2
      %p774 = scmp.lt.s32.totalorder %s32, 5
      %s775 = scalar_select %p774, %s32, 5
      %s776 = smul.addr %s775, 256
      %s777 = smul.addr %s773, 1536
      %s778 = sadd.s32 %s776, %s777
      %s779 = smul.addr %s778, 4
      %s780 = scalar_lea.vmem %s10, %s779
      %p781 = pneg %p334
      %p782 = pneg %p331
      %p783 = scmp.lt.s32.totalorder %s31, 2
      %s784 = scalar_select %p783, %s31, 2
      %p785 = scmp.lt.s32.totalorder %s32, 5
      %s786 = scalar_select %p785, %s32, 5
      %s787 = smul.addr %s784, 6
      %s788 = sadd.s32 %s786, %s787
      %s789 = scalar_lea.vmem %s11, %s788
      %p790 = pneg %p362
      %p791 = pneg %p359
      %p792 = scmp.lt.s32.totalorder %s31, 2
      %s793 = scalar_select %p792, %s31, 2
      %p794 = scmp.lt.s32.totalorder %s32, 5
      %s795 = scalar_select %p794, %s32, 5
      %s796 = smul.addr %s793, 6
      %s797 = sadd.s32 %s795, %s796
      %s798 = scalar_lea.vmem %s12, %s797
      %p799 = pneg %p390
      %p800 = pneg %p387
      %p801 = scmp.lt.s32.totalorder %s31, 2
      %s802 = scalar_select %p801, %s31, 2
      %p803 = scmp.lt.s32.totalorder %s32, 5
      %s804 = scalar_select %p803, %s32, 5
      %s805 = smul.addr %s802, 6
      %s806 = sadd.s32 %s804, %s805
      %s807 = scalar_lea.vmem %s13, %s806
      %p808 = pneg %p418
      %p809 = pneg %p415
      %p810 = scmp.lt.s32.totalorder %s31, 2
      %s811 = scalar_select %p810, %s31, 2
      %p812 = scmp.lt.s32.totalorder %s32, 5
      %s813 = scalar_select %p812, %s32, 5
      %s814 = smul.addr %s811, 6
      %s815 = sadd.s32 %s813, %s814
      %s816 = scalar_lea.vmem %s14, %s815
      %p817 = pneg %p446
      %p818 = pneg %p443
      %p819 = scmp.lt.s32.totalorder %s31, 2
      %s820 = scalar_select %p819, %s31, 2
      %p821 = scmp.lt.s32.totalorder %s32, 5
      %s822 = scalar_select %p821, %s32, 5
      %s823 = smul.addr %s820, 6
      %s824 = sadd.s32 %s822, %s823
      %s825 = scalar_lea.vmem %s15, %s824
      %p826 = pneg %p474
      %p827 = pneg %p471
      %p828 = pneg %p500
      %p829 = pneg %p497
      %p830 = scmp.lt.s32.totalorder %s31, 2
      %s831 = scalar_select %p830, %s31, 2
      %s832 = smul.addr %s831, 10
      %s833 = smul.addr %s832, 8
      %s834 = scalar_lea.vmem %s16, %s833
      %p835 = scmp.lt.s32.totalorder %s31, 2
      %s836 = scalar_select %p835, %s31, 2
      %s837 = smul.addr %s836, 10
      %s838 = smul.addr %s837, 8
      %s839 = scalar_lea.vmem %s0, %s838
      %p840 = scmp.lt.s32.totalorder %s31, 2
      %s841 = scalar_select %p840, %s31, 2
      %s842 = smul.addr %s841, 10
      %s843 = smul.addr %s842, 8
      %s844 = scalar_lea.vmem %s1, %s843
      %p845 = scmp.lt.s32.totalorder %s31, 2
      %s846 = scalar_select %p845, %s31, 2
      %s847 = smul.addr %s846, 2
      %s848 = scalar_lea.vmem %s2, %s847
      %p849 = scmp.lt.s32.totalorder %s31, 2
      %s850 = scalar_select %p849, %s31, 2
      %s851 = scalar_lea.vmem %s3, %s850
      %p852 = scmp.lt.s32.totalorder %s31, 2
      %s853 = scalar_select %p852, %s31, 2
      %p854 = scmp.lt.s32.totalorder %s32, 5
      %s855 = scalar_select %p854, %s32, 5
      %s856 = smul.addr %s855, 16
      %s857 = smul.addr %s853, 96
      %s858 = sadd.s32 %s856, %s857
      %s859 = smul.addr %s858, 4
      %s860 = scalar_lea.vmem %s4, %s859
      %p861 = scmp.lt.s32.totalorder %s31, 2
      %s862 = scalar_select %p861, %s31, 2
      %p863 = scmp.lt.s32.totalorder %s32, 5
      %s864 = scalar_select %p863, %s32, 5
      %s865 = smul.addr %s864, 2
      %s866 = smul.addr %s862, 12
      %s867 = sadd.s32 %s865, %s866
      %s868 = scalar_lea.vmem %s5, %s867
      %p869 = scmp.lt.s32.totalorder %s31, 2
      %s870 = scalar_select %p869, %s31, 2
      %p871 = scmp.lt.s32.totalorder %s32, 5
      %s872 = scalar_select %p871, %s32, 5
      %s873 = smul.addr %s872, 8
      %s874 = smul.addr %s870, 48
      %s875 = sadd.s32 %s873, %s874
      %s876 = smul.addr %s875, 4
      %s877 = scalar_lea.vmem %s6, %s876
      %p878 = scmp.lt.s32.totalorder %s31, 2
      %s879 = scalar_select %p878, %s31, 2
      %p880 = scmp.lt.s32.totalorder %s32, 5
      %s881 = scalar_select %p880, %s32, 5
      %s882 = smul.addr %s879, 6
      %s883 = sadd.s32 %s881, %s882
      %s884 = scalar_lea.vmem %s7, %s883
      %p885 = scmp.lt.s32.totalorder %s31, 2
      %s886 = scalar_select %p885, %s31, 2
      %p887 = scmp.lt.s32.totalorder %s32, 5
      %s888 = scalar_select %p887, %s32, 5
      %s889 = smul.addr %s888, 128
      %s890 = smul.addr %s886, 768
      %s891 = sadd.s32 %s889, %s890
      %s892 = smul.addr %s891, 4
      %s893 = scalar_lea.vmem %s8, %s892
      %p894 = scmp.lt.s32.totalorder %s31, 2
      %s895 = scalar_select %p894, %s31, 2
      %p896 = scmp.lt.s32.totalorder %s32, 5
      %s897 = scalar_select %p896, %s32, 5
      %s898 = smul.addr %s897, 16
      %s899 = smul.addr %s895, 96
      %s900 = sadd.s32 %s898, %s899
      %s901 = scalar_lea.vmem %s9, %s900
      %p902 = scmp.lt.s32.totalorder %s31, 2
      %s903 = scalar_select %p902, %s31, 2
      %p904 = scmp.lt.s32.totalorder %s32, 5
      %s905 = scalar_select %p904, %s32, 5
      %s906 = smul.addr %s905, 256
      %s907 = smul.addr %s903, 1536
      %s908 = sadd.s32 %s906, %s907
      %s909 = smul.addr %s908, 4
      %s910 = scalar_lea.vmem %s10, %s909
      %p911 = scmp.lt.s32.totalorder %s31, 2
      %s912 = scalar_select %p911, %s31, 2
      %p913 = scmp.lt.s32.totalorder %s32, 5
      %s914 = scalar_select %p913, %s32, 5
      %s915 = smul.addr %s912, 6
      %s916 = sadd.s32 %s914, %s915
      %s917 = scalar_lea.vmem %s11, %s916
      %p918 = scmp.lt.s32.totalorder %s31, 2
      %s919 = scalar_select %p918, %s31, 2
      %p920 = scmp.lt.s32.totalorder %s32, 5
      %s921 = scalar_select %p920, %s32, 5
      %s922 = smul.addr %s919, 6
      %s923 = sadd.s32 %s921, %s922
      %s924 = scalar_lea.vmem %s12, %s923
      %p925 = scmp.lt.s32.totalorder %s31, 2
      %s926 = scalar_select %p925, %s31, 2
      %p927 = scmp.lt.s32.totalorder %s32, 5
      %s928 = scalar_select %p927, %s32, 5
      %s929 = smul.addr %s926, 6
      %s930 = sadd.s32 %s928, %s929
      %s931 = scalar_lea.vmem %s13, %s930
      %p932 = scmp.lt.s32.totalorder %s31, 2
      %s933 = scalar_select %p932, %s31, 2
      %p934 = scmp.lt.s32.totalorder %s32, 5
      %s935 = scalar_select %p934, %s32, 5
      %s936 = smul.addr %s933, 6
      %s937 = sadd.s32 %s935, %s936
      %s938 = scalar_lea.vmem %s14, %s937
      %p939 = scmp.lt.s32.totalorder %s31, 2
      %s940 = scalar_select %p939, %s31, 2
      %p941 = scmp.lt.s32.totalorder %s32, 5
      %s942 = scalar_select %p941, %s32, 5
      %s943 = smul.addr %s940, 6
      %s944 = sadd.s32 %s942, %s943
      %s945 = scalar_lea.vmem %s15, %s944
      %p946 = scmp.lt.s32.totalorder %s31, 2
      %s947 = scalar_select %p946, %s31, 2
      %s948 = smul.addr %s947, 10
      %s949 = smul.addr %s948, 8
      %s950 = scalar_lea.vmem %s16, %s949
      %p952 = scmp.eq.s32.totalorder %s32, 0
      // Predicated region
      $region85: #{trajectory_model_forward.2} parent=83 // pred_check
        %p953 = pneg %p952
      $region86: #{trajectory_model_forward.2} parent=83 // pred_check_branch
        %955 = sbr.rel (%p953) target = $region88
      $region87: #{trajectory_model_forward.2} parent=83 // pred_region
        %v956 = vld [vmem:[%s839] sm:$0xff]
        %v957 = vld [vmem:[%s839 + $0x8] sm:$0xff]
        %v958 = vld [vmem:[%s839 + $0x10] sm:$0xff]
        %v959 = vld [vmem:[%s839 + $0x18] sm:$0xff]
        %v960 = vld [vmem:[%s839 + $0x20] sm:$0xff]
        %v961 = vld [vmem:[%s839 + $0x28] sm:$0xff]
        %v962 = vld [vmem:[%s839 + $0x30] sm:$0xff]
        %v963 = vld [vmem:[%s839 + $0x38] sm:$0xff]
        %v964 = vld [vmem:[%s839 + $0x40] sm:$0xff]
        %v965 = vld [vmem:[%s839 + $0x48] sm:$0xff]
        %v966 = vld [vmem:[%s848] sm:$0x3]
        %968 = vset.pattern.permute.xlu0 0
        %969 = vperm.xlu0 %968, %v956
        %v970 = vpop.permute.xlu0 %969
        %973 = vset.pattern.permute.xlu0 0
        %974 = vperm.xlu0 %973, %v957
        %v975 = vpop.permute.xlu0 %974
        %978 = vset.pattern.permute.xlu0 0
        %979 = vperm.xlu0 %978, %v958
        %v980 = vpop.permute.xlu0 %979
        %983 = vset.pattern.permute.xlu0 0
        %984 = vperm.xlu0 %983, %v959
        %v985 = vpop.permute.xlu0 %984
        %988 = vset.pattern.permute.xlu0 0
        %989 = vperm.xlu0 %988, %v960
        %v990 = vpop.permute.xlu0 %989
        %993 = vset.pattern.permute.xlu0 0
        %994 = vperm.xlu0 %993, %v961
        %v995 = vpop.permute.xlu0 %994
        %998 = vset.pattern.permute.xlu0 0
        %999 = vperm.xlu0 %998, %v962
        %v1000 = vpop.permute.xlu0 %999
        %1003 = vset.pattern.permute.xlu0 0
        %1004 = vperm.xlu0 %1003, %v963
        %v1005 = vpop.permute.xlu0 %1004
        %1008 = vset.pattern.permute.xlu0 0
        %1009 = vperm.xlu0 %1008, %v964
        %v1010 = vpop.permute.xlu0 %1009
        %1013 = vset.pattern.permute.xlu0 0
        %1014 = vperm.xlu0 %1013, %v965
        %v1015 = vpop.permute.xlu0 %1014
        %v1017 = vlaneseq
        %v1018 = vshrl.u32 %v1017, 7
        %v1019 = vsub.s32 0, %v1018
        %v1020 = vrot.slane %v966, %v1019
        %v1021 = vmul.f32 %v970, %v1020
        %v1022 = vmul.f32 %v975, %v1020
        %v1023 = vmul.f32 %v980, %v1020
        %v1024 = vmul.f32 %v985, %v1020
        %v1025 = vmul.f32 %v990, %v1020
        %v1026 = vmul.f32 %v995, %v1020
        %v1027 = vmul.f32 %v1000, %v1020
        %v1028 = vmul.f32 %v1005, %v1020
        %v1029 = vmul.f32 %v1010, %v1020
        %v1030 = vmul.f32 %v1015, %v1020
        %1031 = vset.pattern.permute.xlu0 1
        %1032 = vperm.xlu0 %1031, %v956
        %v1033 = vpop.permute.xlu0 %1032
        %1035 = vset.pattern.permute.xlu0 1
        %1036 = vperm.xlu0 %1035, %v957
        %v1037 = vpop.permute.xlu0 %1036
        %1039 = vset.pattern.permute.xlu0 1
        %1040 = vperm.xlu0 %1039, %v958
        %v1041 = vpop.permute.xlu0 %1040
        %1043 = vset.pattern.permute.xlu0 1
        %1044 = vperm.xlu0 %1043, %v959
        %v1045 = vpop.permute.xlu0 %1044
        %1047 = vset.pattern.permute.xlu0 1
        %1048 = vperm.xlu0 %1047, %v960
        %v1049 = vpop.permute.xlu0 %1048
        %1051 = vset.pattern.permute.xlu0 1
        %1052 = vperm.xlu0 %1051, %v961
        %v1053 = vpop.permute.xlu0 %1052
        %1055 = vset.pattern.permute.xlu0 1
        %1056 = vperm.xlu0 %1055, %v962
        %v1057 = vpop.permute.xlu0 %1056
        %1059 = vset.pattern.permute.xlu0 1
        %1060 = vperm.xlu0 %1059, %v963
        %v1061 = vpop.permute.xlu0 %1060
        %1063 = vset.pattern.permute.xlu0 1
        %1064 = vperm.xlu0 %1063, %v964
        %v1065 = vpop.permute.xlu0 %1064
        %1067 = vset.pattern.permute.xlu0 1
        %1068 = vperm.xlu0 %1067, %v965
        %v1069 = vpop.permute.xlu0 %1068
        %v1071 = vlaneseq
        %v1072 = vshrl.u32 %v1071, 7
        %v1073 = vsub.s32 1, %v1072
        %v1074 = vrot.slane %v966, %v1073
        %v1075 = vmul.f32 %v1033, %v1074
        %v1076 = vmul.f32 %v1037, %v1074
        %v1077 = vmul.f32 %v1041, %v1074
        %v1078 = vmul.f32 %v1045, %v1074
        %v1079 = vmul.f32 %v1049, %v1074
        %v1080 = vmul.f32 %v1053, %v1074
        %v1081 = vmul.f32 %v1057, %v1074
        %v1082 = vmul.f32 %v1061, %v1074
        %v1083 = vmul.f32 %v1065, %v1074
        %v1084 = vmul.f32 %v1069, %v1074
        %v1085 = vadd.f32 %v1021, %v1075
        %v1086 = vadd.f32 %v1022, %v1076
        %v1087 = vadd.f32 %v1023, %v1077
        %v1088 = vadd.f32 %v1024, %v1078
        %v1089 = vadd.f32 %v1025, %v1079
        %v1090 = vadd.f32 %v1026, %v1080
        %v1091 = vadd.f32 %v1027, %v1081
        %v1092 = vadd.f32 %v1028, %v1082
        %v1093 = vadd.f32 %v1029, %v1083
        %v1094 = vadd.f32 %v1030, %v1084
        %v1095 = vld [vmem:[%s851] sm:$0x1]
        %v1097 = vlaneseq
        %v1098 = vshrl.u32 %v1097, 7
        %v1099 = vsub.s32 0, %v1098
        %v1100 = vrot.slane %v1095, %v1099
        %v1102 = vadd.f32 %v1085, %v1100
        %v1103 = vadd.f32 %v1086, %v1100
        %v1104 = vadd.f32 %v1087, %v1100
        %v1105 = vadd.f32 %v1088, %v1100
        %v1106 = vadd.f32 %v1089, %v1100
        %v1107 = vadd.f32 %v1090, %v1100
        %v1108 = vadd.f32 %v1091, %v1100
        %v1109 = vadd.f32 %v1092, %v1100
        %v1110 = vadd.f32 %v1093, %v1100
        %v1111 = vadd.f32 %v1094, %v1100
        %vm1112 = vcmask 523264
        %1113 = vst.msk [vmem:[#allocation2] sm:$0xff] %vm1112, %v1102
        %1114 = vst.msk [vmem:[#allocation2 + $0x8] sm:$0xff] %vm1112, %v1103
        %1115 = vst.msk [vmem:[#allocation2 + $0x10] sm:$0xff] %vm1112, %v1104
        %1116 = vst.msk [vmem:[#allocation2 + $0x18] sm:$0xff] %vm1112, %v1105
        %1117 = vst.msk [vmem:[#allocation2 + $0x20] sm:$0xff] %vm1112, %v1106
        %1118 = vst.msk [vmem:[#allocation2 + $0x28] sm:$0xff] %vm1112, %v1107
        %1119 = vst.msk [vmem:[#allocation2 + $0x30] sm:$0xff] %vm1112, %v1108
        %1120 = vst.msk [vmem:[#allocation2 + $0x38] sm:$0xff] %vm1112, %v1109
        %1121 = vst.msk [vmem:[#allocation2 + $0x40] sm:$0xff] %vm1112, %v1110
        %1122 = vst.msk [vmem:[#allocation2 + $0x48] sm:$0xff] %vm1112, %v1111
      $region88: #{trajectory_model_forward.2} parent=83 // pred_fallthru
        _
      %v1123 = vld [vmem:[#allocation2] sm:$0xff]
      %v1124 = vld [vmem:[#allocation2 + $0x8] sm:$0xff]
      %v1125 = vld [vmem:[#allocation2 + $0x10] sm:$0xff]
      %v1126 = vld [vmem:[#allocation2 + $0x18] sm:$0xff]
      %v1127 = vld [vmem:[#allocation2 + $0x20] sm:$0xff]
      %v1128 = vld [vmem:[#allocation2 + $0x28] sm:$0xff]
      %v1129 = vld [vmem:[#allocation2 + $0x30] sm:$0xff]
      %v1130 = vld [vmem:[#allocation2 + $0x38] sm:$0xff]
      %v1131 = vld [vmem:[#allocation2 + $0x40] sm:$0xff]
      %v1132 = vld [vmem:[#allocation2 + $0x48] sm:$0xff]
      %v1133 = vld [vmem:[%s844] sm:$0xff]
      %v1134 = vld [vmem:[%s844 + $0x8] sm:$0xff]
      %v1135 = vld [vmem:[%s844 + $0x10] sm:$0xff]
      %v1136 = vld [vmem:[%s844 + $0x18] sm:$0xff]
      %v1137 = vld [vmem:[%s844 + $0x20] sm:$0xff]
      %v1138 = vld [vmem:[%s844 + $0x28] sm:$0xff]
      %v1139 = vld [vmem:[%s844 + $0x30] sm:$0xff]
      %v1140 = vld [vmem:[%s844 + $0x38] sm:$0xff]
      %v1141 = vld [vmem:[%s844 + $0x40] sm:$0xff]
      %v1142 = vld [vmem:[%s844 + $0x48] sm:$0xff]
      %v1143 = vpack.c.bf16 %v1124, %v1123
      %v1144 = vpack.c.bf16 %v1126, %v1125
      %v1145 = vpack.c.bf16 %v1128, %v1127
      %v1146 = vpack.c.bf16 %v1130, %v1129
      %v1147 = vpack.c.bf16 %v1132, %v1131
      %v1148 = vld [vmem:[%s860] sm:$0xff]
      %v1149 = vld [vmem:[%s860 + $0x8] sm:$0xff]
      %v1150 = vld [vmem:[%s860 + $0x10] sm:$0xff]
      %v1151 = vld [vmem:[%s860 + $0x18] sm:$0xff]
      %v1152 = vld [vmem:[%s860 + $0x20] sm:$0xff]
      %v1153 = vld [vmem:[%s860 + $0x28] sm:$0xff]
      %v1154 = vld [vmem:[%s860 + $0x30] sm:$0xff]
      %v1155 = vld [vmem:[%s860 + $0x38] sm:$0xff]
      %v1156 = vld [vmem:[%s868] sm:$0x3]
      %v1158 = vlaneseq
      %v1159 = vshrl.u32 %v1158, 7
      %v1160 = vsub.s32 0, %v1159
      %v1161 = vrot.slane %v1156, %v1160
      %v1162 = vlaneseq
      %v1163 = vshrl.u32 %v1162, 7
      %v1164 = vsub.s32 1, %v1163
      %v1165 = vrot.slane %v1156, %v1164
      %v1176 = vunpack.c.l.b16 %v1148
      %v1177 = vunpack.c.h.b16 %v1148
      %v1178 = vunpack.c.l.b16 %v1149
      %v1179 = vunpack.c.h.b16 %v1149
      %v1180 = vunpack.c.l.b16 %v1150
      %v1181 = vunpack.c.h.b16 %v1150
      %v1182 = vunpack.c.l.b16 %v1151
      %v1183 = vunpack.c.h.b16 %v1151
      %v1184 = vunpack.c.l.b16 %v1152
      %v1185 = vunpack.c.h.b16 %v1152
      %v1186 = vunpack.c.l.b16 %v1153
      %v1187 = vunpack.c.h.b16 %v1153
      %v1188 = vunpack.c.l.b16 %v1154
      %v1189 = vunpack.c.h.b16 %v1154
      %v1190 = vunpack.c.l.b16 %v1155
      %v1191 = vunpack.c.h.b16 %v1155
      %v1192 = vpack.c.b16 %v1178, %v1176
      %v1193 = vpack.c.b16 %v1179, %v1177
      %v1194 = vpack.c.b16 %v1182, %v1180
      %v1195 = vpack.c.b16 %v1183, %v1181
      %v1196 = vpack.c.b16 %v1186, %v1184
      %v1197 = vpack.c.b16 %v1187, %v1185
      %v1198 = vpack.c.b16 %v1190, %v1188
      %v1199 = vpack.c.b16 %v1191, %v1189
      %vm1208 = vcmask 523264
      %v1210 = vsel %vm1208, %v1143, 0
      %v1213 = vsel %vm1208, %v1144, 0
      %v1216 = vsel %vm1208, %v1145, 0
      %v1219 = vsel %vm1208, %v1146, 0
      %v1222 = vsel %vm1208, %v1147, 0
      %1224 = vmatprep.subr.bf16.mxu0 %v1193
      %1225 = vmatpush1.bf16.msra.mxu0 %v1192
      %1226 = vmatprep.subr.bf16.mxu0 %v1195
      %1227 = vmatpush1.bf16.msra.mxu0 %v1194
      %1228 = vmatprep.subr.bf16.mxu0 %v1197
      %1229 = vmatpush1.bf16.msra.mxu0 %v1196
      %1230 = vmatprep.subr.bf16.mxu0 %v1199
      %1231 = vmatpush1.bf16.msra.mxu0 %v1198
      %1232 = vmatprep.subr.bf16.mxu0 0
      %1233 = vmatpush1.bf16.msra.mxu0 0
      %1234 = vmatprep.subr.bf16.mxu0 0
      %1235 = vmatpush1.bf16.msra.mxu0 0
      %1236 = vmatprep.subr.bf16.mxu0 0
      %1237 = vmatpush1.bf16.msra.mxu0 0
      %1238 = vmatprep.subr.bf16.mxu0 0
      %1239 = vmatpush1.bf16.msra.mxu0 0
      %1240 = vmatprep.subr.bf16.mxu0 0
      %1241 = vmatpush1.bf16.msra.mxu0 0
      %1242 = vmatprep.subr.bf16.mxu0 0
      %1243 = vmatpush1.bf16.msra.mxu0 0
      %1244 = vmatprep.subr.bf16.mxu0 0
      %1245 = vmatpush1.bf16.msra.mxu0 0
      %1246 = vmatprep.subr.bf16.mxu0 0
      %1247 = vmatpush1.bf16.msra.mxu0 0
      %1248 = vmatprep.subr.bf16.mxu0 0
      %1249 = vmatpush1.bf16.msra.mxu0 0
      %1250 = vmatprep.subr.bf16.mxu0 0
      %1251 = vmatpush1.bf16.msra.mxu0 0
      %1252 = vmatprep.subr.bf16.mxu0 0
      %1253 = vmatpush1.bf16.msra.mxu0 0
      %1254 = vmatprep.subr.bf16.mxu0 0
      %1255 = vmatpush1.bf16.msra.mxu0 0
      %1256 = vmatprep.mubr.bf16.mxu0 0
      %1257 = vmatmul.mubr.bf16.gmra.mrb[0].mxu0 %v1210
      %v1258 = vpop.f32.mrb[0].mxu0
      %v1259 = vadd.f32 %v1161, %v1258
      %v1260 = vpop.f32.mrb[0].mxu0
      %v1261 = vadd.f32 %v1165, %v1260
      %v1262 = vpop.f32.mrb[0].mxu0
      %v1263 = vadd.f32 %v1161, %v1262
      %v1264 = vpop.f32.mrb[0].mxu0
      %v1265 = vadd.f32 %v1165, %v1264
      %1266 = vmatprep.mubr.bf16.mxu0 0
      %1267 = vmatmul.mubr.bf16.gmra.mrb[0].mxu0 %v1213
      %v1268 = vpop.f32.mrb[0].mxu0
      %v1269 = vadd.f32 %v1161, %v1268
      %v1270 = vpop.f32.mrb[0].mxu0
      %v1271 = vadd.f32 %v1165, %v1270
      %v1272 = vpop.f32.mrb[0].mxu0
      %v1273 = vadd.f32 %v1161, %v1272
      %v1274 = vpop.f32.mrb[0].mxu0
      %v1275 = vadd.f32 %v1165, %v1274
      %1276 = vmatprep.mubr.bf16.mxu0 0
      %1277 = vmatmul.mubr.bf16.gmra.mrb[0].mxu0 %v1216
      %v1278 = vpop.f32.mrb[0].mxu0
      %v1279 = vadd.f32 %v1161, %v1278
      %v1280 = vpop.f32.mrb[0].mxu0
      %v1281 = vadd.f32 %v1165, %v1280
      %v1282 = vpop.f32.mrb[0].mxu0
      %v1283 = vadd.f32 %v1161, %v1282
      %v1284 = vpop.f32.mrb[0].mxu0
      %v1285 = vadd.f32 %v1165, %v1284
      %1286 = vmatprep.mubr.bf16.mxu0 0
      %1287 = vmatmul.mubr.bf16.gmra.mrb[0].mxu0 %v1219
      %v1288 = vpop.f32.mrb[0].mxu0
      %v1289 = vadd.f32 %v1161, %v1288
      %v1290 = vpop.f32.mrb[0].mxu0
      %v1291 = vadd.f32 %v1165, %v1290
      %v1292 = vpop.f32.mrb[0].mxu0
      %v1293 = vadd.f32 %v1161, %v1292
      %v1294 = vpop.f32.mrb[0].mxu0
      %v1295 = vadd.f32 %v1165, %v1294
      %1296 = vmatprep.mubr.bf16.mxu0 0
      %1297 = vmatmul.mubr.bf16.gmra.mrb[0].mxu0 %v1222
      %v1298 = vpop.f32.mrb[0].mxu0
      %v1299 = vadd.f32 %v1161, %v1298
      %v1300 = vpop.f32.mrb[0].mxu0
      %v1301 = vadd.f32 %v1165, %v1300
      %v1302 = vpop.f32.mrb[0].mxu0
      %v1303 = vadd.f32 %v1161, %v1302
      %v1304 = vpop.f32.mrb[0].mxu0
      %v1305 = vadd.f32 %v1165, %v1304
      %1306 = vdwg.mxu0
      %v1307 = vlaneseq
      %v1308 = vand.u32 %v1307, 127
      %vm1309 = vcmp.ge.s32.totalorder %v1308, 0
      %vm1310 = vcmp.lt.s32.totalorder %v1308, 8
      %vm1311 = vmand %vm1309, %vm1310
      %v1312 = vsel %vm1311, 1, 0
      %v1313 = vcvt.s32.f32 %v1312
      %1315 = vrot.lane.b32.xlu0 %v1313, 64
      %v1316 = vpop.permute.xlu0 %1315
      %v1318 = vmul.f32 %v1259, %v1316
      %v1319 = vmul.f32 %v1263, %v1316
      %v1320 = vmul.f32 %v1269, %v1316
      %v1321 = vmul.f32 %v1273, %v1316
      %v1322 = vmul.f32 %v1279, %v1316
      %v1323 = vmul.f32 %v1283, %v1316
      %v1324 = vmul.f32 %v1289, %v1316
      %v1325 = vmul.f32 %v1293, %v1316
      %v1326 = vmul.f32 %v1299, %v1316
      %v1327 = vmul.f32 %v1303, %v1316
      %1338 = vrot.lane.b32.xlu0 %v1318, 64
      %v1339 = vpop.permute.xlu0 %1338
      %1340 = vrot.lane.b32.xlu0 %v1319, 64
      %v1341 = vpop.permute.xlu0 %1340
      %1342 = vrot.lane.b32.xlu0 %v1320, 64
      %v1343 = vpop.permute.xlu0 %1342
      %1344 = vrot.lane.b32.xlu0 %v1321, 64
      %v1345 = vpop.permute.xlu0 %1344
      %1346 = vrot.lane.b32.xlu0 %v1322, 64
      %v1347 = vpop.permute.xlu0 %1346
      %1348 = vrot.lane.b32.xlu0 %v1323, 64
      %v1349 = vpop.permute.xlu0 %1348
      %1350 = vrot.lane.b32.xlu0 %v1324, 64
      %v1351 = vpop.permute.xlu0 %1350
      %1352 = vrot.lane.b32.xlu0 %v1325, 64
      %v1353 = vpop.permute.xlu0 %1352
      %1354 = vrot.lane.b32.xlu0 %v1326, 64
      %v1355 = vpop.permute.xlu0 %1354
      %1356 = vrot.lane.b32.xlu0 %v1327, 64
      %v1357 = vpop.permute.xlu0 %1356
      %v1359 = vsel %vm1208, %v1259, 0
      %v1362 = vsel %vm1208, %v1263, 0
      %v1365 = vsel %vm1208, %v1269, 0
      %v1368 = vsel %vm1208, %v1273, 0
      %v1371 = vsel %vm1208, %v1279, 0
      %v1374 = vsel %vm1208, %v1283, 0
      %v1377 = vsel %vm1208, %v1289, 0
      %v1380 = vsel %vm1208, %v1293, 0
      %v1383 = vsel %vm1208, %v1299, 0
      %v1386 = vsel %vm1208, %v1303, 0
      %v1388 = vsel %vm1208, %v1339, 0
      %v1390 = vsel %vm1208, %v1341, 0
      %v1392 = vsel %vm1208, %v1343, 0
      %v1394 = vsel %vm1208, %v1345, 0
      %v1396 = vsel %vm1208, %v1347, 0
      %v1398 = vsel %vm1208, %v1349, 0
      %v1400 = vsel %vm1208, %v1351, 0
      %v1402 = vsel %vm1208, %v1353, 0
      %v1404 = vsel %vm1208, %v1355, 0
      %v1406 = vsel %vm1208, %v1357, 0
      %1408 = vmatprep.subr.mxu0 0.0
      %1409 = vmatpush1.xpose.msra.mxu0 %v1388
      %1410 = vmatprep.subr.mxu0 0.0
      %1411 = vmatpush1.xpose.msra.mxu0 %v1390
      %1412 = vmatprep.subr.mxu0 0.0
      %1413 = vmatpush1.xpose.msra.mxu0 %v1392
      %1414 = vmatprep.subr.mxu0 0.0
      %1415 = vmatpush1.xpose.msra.mxu0 %v1394
      %1416 = vmatprep.subr.mxu0 0.0
      %1417 = vmatpush1.xpose.msra.mxu0 %v1396
      %1418 = vmatprep.subr.mxu0 0.0
      %1419 = vmatpush1.xpose.msra.mxu0 %v1398
      %1420 = vmatprep.subr.mxu0 0.0
      %1421 = vmatpush1.xpose.msra.mxu0 %v1400
      %1422 = vmatprep.subr.mxu0 0.0
      %1423 = vmatpush1.xpose.msra.mxu0 %v1402
      %1424 = vmatprep.subr.mxu0 0.0
      %1425 = vmatpush1.xpose.msra.mxu0 %v1404
      %1426 = vmatprep.subr.mxu0 0.0
      %1427 = vmatpush1.xpose.msra.mxu0 %v1406
      %1428 = vmatprep.subr.mxu0 0.0
      %1429 = vmatpush1.xpose.msra.mxu0 0.0
      %1430 = vmatprep.subr.mxu0 0.0
      %1431 = vmatpush1.xpose.msra.mxu0 0.0
      %1432 = vmatprep.subr.mxu0 0.0
      %1433 = vmatpush1.xpose.msra.mxu0 0.0
      %1434 = vmatprep.subr.mxu0 0.0
      %1435 = vmatpush1.xpose.msra.mxu0 0.0
      %1436 = vmatprep.subr.mxu0 0.0
      %1437 = vmatpush1.xpose.msra.mxu0 0.0
      %1438 = vmatprep.subr.mxu0 0.0
      %1439 = vmatpush1.xpose.msra.mxu0 0.0
      %1440 = vmatprep.subr.mxu0 0.0
      %1441 = vmatpush1.xpose.msra.mxu0 0.0
      %1442 = vmatprep.subr.mxu0 0.0
      %1443 = vmatpush1.xpose.msra.mxu0 0.0
      %1444 = vmatprep.subr.mxu0 0.0
      %1445 = vmatpush1.xpose.msra.mxu0 0.0
      %1446 = vmatprep.subr.mxu0 0.0
      %1447 = vmatpush1.xpose.msra.mxu0 0.0
      %1448 = vmatprep.subr.mxu0 0.0
      %1449 = vmatpush1.xpose.msra.mxu0 0.0
      %1450 = vmatprep.subr.mxu0 0.0
      %1451 = vmatpush1.xpose.msra.mxu0 0.0
      %1452 = vmatprep.subr.mxu0 0.0
      %1453 = vmatpush1.xpose.msra.mxu0 0.0
      %1454 = vmatprep.subr.mxu0 0.0
      %1455 = vmatpush1.xpose.msra.mxu0 0.0
      %1456 = vmatprep.subr.mxu0 0.0
      %1457 = vmatpush1.xpose.msra.mxu0 0.0
      %1458 = vmatprep.subr.mxu0 0.0
      %1459 = vmatpush1.xpose.msra.mxu0 0.0
      %1460 = vmatprep.subr.mxu0 0.0
      %1461 = vmatpush1.xpose.msra.mxu0 0.0
      %1462 = vmatprep.subr.mxu0 0.0
      %1463 = vmatpush1.xpose.msra.mxu0 0.0
      %1464 = vmatprep.subr.mxu0 0.0
      %1465 = vmatpush1.xpose.msra.mxu0 0.0
      %1466 = vmatprep.subr.mxu0 0.0
      %1467 = vmatpush1.xpose.msra.mxu0 0.0
      %1468 = vmatprep.subr.mxu0 0.0
      %1469 = vmatpush1.xpose.msra.mxu0 0.0
      %1470 = vmatprep.subr.mxu0 0.0
      %1471 = vmatpush1.xpose.msra.mxu0 0.0
      %1472 = vmatprep.mubr.f32.mxu0 0.0
      %1473 = vmatmul.mubr.f32.gmra.mrb[0].mxu0 %v1359
      %v1474 = vpop.f32.mrb[0].mxu0
      %v1475 = vadd.f32 0.0, %v1474
      %v1476 = vpop.f32.mrb[0].mxu0
      %1477 = vmatprep.mubr.f32.mxu0 0.0
      %1478 = vmatmul.mubr.f32.gmra.mrb[0].mxu0 %v1362
      %v1479 = vpop.f32.mrb[0].mxu0
      %v1480 = vadd.f32 0.0, %v1479
      %v1481 = vpop.f32.mrb[0].mxu0
      %1482 = vmatprep.mubr.f32.mxu0 0.0
      %1483 = vmatmul.mubr.f32.gmra.mrb[0].mxu0 %v1365
      %v1484 = vpop.f32.mrb[0].mxu0
      %v1485 = vadd.f32 0.0, %v1484
      %v1486 = vpop.f32.mrb[0].mxu0
      %1487 = vmatprep.mubr.f32.mxu0 0.0
      %1488 = vmatmul.mubr.f32.gmra.mrb[0].mxu0 %v1368
      %v1489 = vpop.f32.mrb[0].mxu0
      %v1490 = vadd.f32 0.0, %v1489
      %v1491 = vpop.f32.mrb[0].mxu0
      %1492 = vmatprep.mubr.f32.mxu0 0.0
      %1493 = vmatmul.mubr.f32.gmra.mrb[0].mxu0 %v1371
      %v1494 = vpop.f32.mrb[0].mxu0
      %v1495 = vadd.f32 0.0, %v1494
      %v1496 = vpop.f32.mrb[0].mxu0
      %1497 = vmatprep.mubr.f32.mxu0 0.0
      %1498 = vmatmul.mubr.f32.gmra.mrb[0].mxu0 %v1374
      %v1499 = vpop.f32.mrb[0].mxu0
      %v1500 = vadd.f32 0.0, %v1499
      %v1501 = vpop.f32.mrb[0].mxu0
      %1502 = vmatprep.mubr.f32.mxu0 0.0
      %1503 = vmatmul.mubr.f32.gmra.mrb[0].mxu0 %v1377
      %v1504 = vpop.f32.mrb[0].mxu0
      %v1505 = vadd.f32 0.0, %v1504
      %v1506 = vpop.f32.mrb[0].mxu0
      %1507 = vmatprep.mubr.f32.mxu0 0.0
      %1508 = vmatmul.mubr.f32.gmra.mrb[0].mxu0 %v1380
      %v1509 = vpop.f32.mrb[0].mxu0
      %v1510 = vadd.f32 0.0, %v1509
      %v1511 = vpop.f32.mrb[0].mxu0
      %1512 = vmatprep.mubr.f32.mxu0 0.0
      %1513 = vmatmul.mubr.f32.gmra.mrb[0].mxu0 %v1383
      %v1514 = vpop.f32.mrb[0].mxu0
      %v1515 = vadd.f32 0.0, %v1514
      %v1516 = vpop.f32.mrb[0].mxu0
      %1517 = vmatprep.mubr.f32.mxu0 0.0
      %1518 = vmatmul.mubr.f32.gmra.mrb[0].mxu0 %v1386
      %v1519 = vpop.f32.mrb[0].mxu0
      %v1520 = vadd.f32 0.0, %v1519
      %v1521 = vpop.f32.mrb[0].mxu0
      %1522 = vdwg.mxu0
      %v1523 = vmul.f32 %v1475, 0.35355338
      %v1524 = vmul.f32 %v1480, 0.35355338
      %v1525 = vmul.f32 %v1485, 0.35355338
      %v1526 = vmul.f32 %v1490, 0.35355338
      %v1527 = vmul.f32 %v1495, 0.35355338
      %v1528 = vmul.f32 %v1500, 0.35355338
      %v1529 = vmul.f32 %v1505, 0.35355338
      %v1530 = vmul.f32 %v1510, 0.35355338
      %v1531 = vmul.f32 %v1515, 0.35355338
      %v1532 = vmul.f32 %v1520, 0.35355338
      %vm1533 = vcmp.ge.f32.partialorder %v1133, 1.5
      %vm1534 = vcmp.ge.f32.partialorder %v1134, 1.5
      %vm1535 = vcmp.ge.f32.partialorder %v1135, 1.5
      %vm1536 = vcmp.ge.f32.partialorder %v1136, 1.5
      %vm1537 = vcmp.ge.f32.partialorder %v1137, 1.5
      %vm1538 = vcmp.ge.f32.partialorder %v1138, 1.5
      %vm1539 = vcmp.ge.f32.partialorder %v1139, 1.5
      %vm1540 = vcmp.ge.f32.partialorder %v1140, 1.5
      %vm1541 = vcmp.ge.f32.partialorder %v1141, 1.5
      %vm1542 = vcmp.ge.f32.partialorder %v1142, 1.5
      %vm1543 = vcmp.ge.f32.partialorder %v1133, 0.5
      %vm1544 = vcmp.ge.f32.partialorder %v1134, 0.5
      %vm1545 = vcmp.ge.f32.partialorder %v1135, 0.5
      %vm1546 = vcmp.ge.f32.partialorder %v1136, 0.5
      %vm1547 = vcmp.ge.f32.partialorder %v1137, 0.5
      %vm1548 = vcmp.ge.f32.partialorder %v1138, 0.5
      %vm1549 = vcmp.ge.f32.partialorder %v1139, 0.5
      %vm1550 = vcmp.ge.f32.partialorder %v1140, 0.5
      %vm1551 = vcmp.ge.f32.partialorder %v1141, 0.5
      %vm1552 = vcmp.ge.f32.partialorder %v1142, 0.5
      %v1553 = vsel %vm1543, -1e+09, %v1523
      %v1554 = vsel %vm1544, -1e+09, %v1524
      %v1555 = vsel %vm1545, -1e+09, %v1525
      %v1556 = vsel %vm1546, -1e+09, %v1526
      %v1557 = vsel %vm1547, -1e+09, %v1527
      %v1558 = vsel %vm1548, -1e+09, %v1528
      %v1559 = vsel %vm1549, -1e+09, %v1529
      %v1560 = vsel %vm1550, -1e+09, %v1530
      %v1561 = vsel %vm1551, -1e+09, %v1531
      %v1562 = vsel %vm1552, -1e+09, %v1532
      %v1563 = vsel %vm1533, -1e+30, %v1553
      %v1564 = vsel %vm1534, -1e+30, %v1554
      %v1565 = vsel %vm1535, -1e+30, %v1555
      %v1566 = vsel %vm1536, -1e+30, %v1556
      %v1567 = vsel %vm1537, -1e+30, %v1557
      %v1568 = vsel %vm1538, -1e+30, %v1558
      %v1569 = vsel %vm1539, -1e+30, %v1559
      %v1570 = vsel %vm1540, -1e+30, %v1560
      %v1571 = vsel %vm1541, -1e+30, %v1561
      %v1572 = vsel %vm1542, -1e+30, %v1562
      %vm1573 = vcmask 654336
      %v1574 = vsel %vm1573, %v1563, -inf
      %1575 = vmax.xlane.f32.xlu0 %v1574
      %v1576 = vpop.xlane.xlu0 %1575
      %v1577 = vsel %vm1573, %v1564, -inf
      %1578 = vmax.xlane.f32.xlu0 %v1577
      %v1579 = vpop.xlane.xlu0 %1578
      %v1580 = vsel %vm1573, %v1565, -inf
      %1581 = vmax.xlane.f32.xlu0 %v1580
      %v1582 = vpop.xlane.xlu0 %1581
      %v1583 = vsel %vm1573, %v1566, -inf
      %1584 = vmax.xlane.f32.xlu0 %v1583
      %v1585 = vpop.xlane.xlu0 %1584
      %v1586 = vsel %vm1573, %v1567, -inf
      %1587 = vmax.xlane.f32.xlu0 %v1586
      %v1588 = vpop.xlane.xlu0 %1587
      %v1589 = vsel %vm1573, %v1568, -inf
      %1590 = vmax.xlane.f32.xlu0 %v1589
      %v1591 = vpop.xlane.xlu0 %1590
      %v1592 = vsel %vm1573, %v1569, -inf
      %1593 = vmax.xlane.f32.xlu0 %v1592
      %v1594 = vpop.xlane.xlu0 %1593
      %v1595 = vsel %vm1573, %v1570, -inf
      %1596 = vmax.xlane.f32.xlu0 %v1595
      %v1597 = vpop.xlane.xlu0 %1596
      %v1598 = vsel %vm1573, %v1571, -inf
      %1599 = vmax.xlane.f32.xlu0 %v1598
      %v1600 = vpop.xlane.xlu0 %1599
      %v1601 = vsel %vm1573, %v1572, -inf
      %1602 = vmax.xlane.f32.xlu0 %v1601
      %v1603 = vpop.xlane.xlu0 %1602
      %v1604 = vsub.f32 %v1563, %v1576
      %v1605 = vsub.f32 %v1564, %v1579
      %v1606 = vsub.f32 %v1565, %v1582
      %v1607 = vsub.f32 %v1566, %v1585
      %v1608 = vsub.f32 %v1567, %v1588
      %v1609 = vsub.f32 %v1568, %v1591
      %v1610 = vsub.f32 %v1569, %v1594
      %v1611 = vsub.f32 %v1570, %v1597
      %v1612 = vsub.f32 %v1571, %v1600
      %v1613 = vsub.f32 %v1572, %v1603
      %v1614 = vmul.f32 %v1604, 1.442695
      %v1615 = vpow.pop %v1614
      %v1616 = vmul.f32 %v1605, 1.442695
      %v1617 = vpow.pop %v1616
      %v1618 = vmul.f32 %v1606, 1.442695
      %v1619 = vpow.pop %v1618
      %v1620 = vmul.f32 %v1607, 1.442695
      %v1621 = vpow.pop %v1620
      %v1622 = vmul.f32 %v1608, 1.442695
      %v1623 = vpow.pop %v1622
      %v1624 = vmul.f32 %v1609, 1.442695
      %v1625 = vpow.pop %v1624
      %v1626 = vmul.f32 %v1610, 1.442695
      %v1627 = vpow.pop %v1626
      %v1628 = vmul.f32 %v1611, 1.442695
      %v1629 = vpow.pop %v1628
      %v1630 = vmul.f32 %v1612, 1.442695
      %v1631 = vpow.pop %v1630
      %v1632 = vmul.f32 %v1613, 1.442695
      %v1633 = vpow.pop %v1632
      %v1634 = vsel %vm1573, %v1615, 0.0
      %1635 = vadd.xlane.f32.xlu0 %v1634
      %v1636 = vpop.xlane.xlu0 %1635
      %v1637 = vsel %vm1573, %v1617, 0.0
      %1638 = vadd.xlane.f32.xlu0 %v1637
      %v1639 = vpop.xlane.xlu0 %1638
      %v1640 = vsel %vm1573, %v1619, 0.0
      %1641 = vadd.xlane.f32.xlu0 %v1640
      %v1642 = vpop.xlane.xlu0 %1641
      %v1643 = vsel %vm1573, %v1621, 0.0
      %1644 = vadd.xlane.f32.xlu0 %v1643
      %v1645 = vpop.xlane.xlu0 %1644
      %v1646 = vsel %vm1573, %v1623, 0.0
      %1647 = vadd.xlane.f32.xlu0 %v1646
      %v1648 = vpop.xlane.xlu0 %1647
      %v1649 = vsel %vm1573, %v1625, 0.0
      %1650 = vadd.xlane.f32.xlu0 %v1649
      %v1651 = vpop.xlane.xlu0 %1650
      %v1652 = vsel %vm1573, %v1627, 0.0
      %1653 = vadd.xlane.f32.xlu0 %v1652
      %v1654 = vpop.xlane.xlu0 %1653
      %v1655 = vsel %vm1573, %v1629, 0.0
      %1656 = vadd.xlane.f32.xlu0 %v1655
      %v1657 = vpop.xlane.xlu0 %1656
      %v1658 = vsel %vm1573, %v1631, 0.0
      %1659 = vadd.xlane.f32.xlu0 %v1658
      %v1660 = vpop.xlane.xlu0 %1659
      %v1661 = vsel %vm1573, %v1633, 0.0
      %1662 = vadd.xlane.f32.xlu0 %v1661
      %v1663 = vpop.xlane.xlu0 %1662
      %v1664 = vrcp.pop %v1636
      %v1665 = vmul.f32 %v1615, %v1664
      %v1666 = vrcp.pop %v1639
      %v1667 = vmul.f32 %v1617, %v1666
      %v1668 = vrcp.pop %v1642
      %v1669 = vmul.f32 %v1619, %v1668
      %v1670 = vrcp.pop %v1645
      %v1671 = vmul.f32 %v1621, %v1670
      %v1672 = vrcp.pop %v1648
      %v1673 = vmul.f32 %v1623, %v1672
      %v1674 = vrcp.pop %v1651
      %v1675 = vmul.f32 %v1625, %v1674
      %v1676 = vrcp.pop %v1654
      %v1677 = vmul.f32 %v1627, %v1676
      %v1678 = vrcp.pop %v1657
      %v1679 = vmul.f32 %v1629, %v1678
      %v1680 = vrcp.pop %v1660
      %v1681 = vmul.f32 %v1631, %v1680
      %v1682 = vrcp.pop %v1663
      %v1683 = vmul.f32 %v1633, %v1682
      %v1684 = vmul.f32 %v1261, %v1313
      %v1685 = vmul.f32 %v1265, %v1313
      %v1686 = vmul.f32 %v1271, %v1313
      %v1687 = vmul.f32 %v1275, %v1313
      %v1688 = vmul.f32 %v1281, %v1313
      %v1689 = vmul.f32 %v1285, %v1313
      %v1690 = vmul.f32 %v1291, %v1313
      %v1691 = vmul.f32 %v1295, %v1313
      %v1692 = vmul.f32 %v1301, %v1313
      %v1693 = vmul.f32 %v1305, %v1313
      %vm1694 = vcmp.ge.s32.totalorder %v1308, 8
      %vm1695 = vcmp.lt.s32.totalorder %v1308, 16
      %vm1696 = vmand %vm1694, %vm1695
      %v1697 = vsel %vm1696, 1, 0
      %v1698 = vcvt.s32.f32 %v1697
      %1700 = vrot.lane.b32.xlu0 %v1698, 64
      %v1701 = vpop.permute.xlu0 %1700
      %v1703 = vmul.f32 %v1259, %v1701
      %v1704 = vmul.f32 %v1263, %v1701
      %v1705 = vmul.f32 %v1269, %v1701
      %v1706 = vmul.f32 %v1273, %v1701
      %v1707 = vmul.f32 %v1279, %v1701
      %v1708 = vmul.f32 %v1283, %v1701
      %v1709 = vmul.f32 %v1289, %v1701
      %v1710 = vmul.f32 %v1293, %v1701
      %v1711 = vmul.f32 %v1299, %v1701
      %v1712 = vmul.f32 %v1303, %v1701
      %1723 = vrot.lane.b32.xlu0 %v1703, 64
      %v1724 = vpop.permute.xlu0 %1723
      %1725 = vrot.lane.b32.xlu0 %v1704, 64
      %v1726 = vpop.permute.xlu0 %1725
      %1727 = vrot.lane.b32.xlu0 %v1705, 64
      %v1728 = vpop.permute.xlu0 %1727
      %1729 = vrot.lane.b32.xlu0 %v1706, 64
      %v1730 = vpop.permute.xlu0 %1729
      %1731 = vrot.lane.b32.xlu0 %v1707, 64
      %v1732 = vpop.permute.xlu0 %1731
      %1733 = vrot.lane.b32.xlu0 %v1708, 64
      %v1734 = vpop.permute.xlu0 %1733
      %1735 = vrot.lane.b32.xlu0 %v1709, 64
      %v1736 = vpop.permute.xlu0 %1735
      %1737 = vrot.lane.b32.xlu0 %v1710, 64
      %v1738 = vpop.permute.xlu0 %1737
      %1739 = vrot.lane.b32.xlu0 %v1711, 64
      %v1740 = vpop.permute.xlu0 %1739
      %1741 = vrot.lane.b32.xlu0 %v1712, 64
      %v1742 = vpop.permute.xlu0 %1741
      %v1743 = vsel %vm1208, %v1724, 0
      %v1745 = vsel %vm1208, %v1726, 0
      %v1747 = vsel %vm1208, %v1728, 0
      %v1749 = vsel %vm1208, %v1730, 0
      %v1751 = vsel %vm1208, %v1732, 0
      %v1753 = vsel %vm1208, %v1734, 0
      %v1755 = vsel %vm1208, %v1736, 0
      %v1757 = vsel %vm1208, %v1738, 0
      %v1759 = vsel %vm1208, %v1740, 0
      %v1761 = vsel %vm1208, %v1742, 0
      %1763 = vmatprep.subr.mxu0 0.0
      %1764 = vmatpush1.xpose.msra.mxu0 %v1743
      %1765 = vmatprep.subr.mxu0 0.0
      %1766 = vmatpush1.xpose.msra.mxu0 %v1745
      %1767 = vmatprep.subr.mxu0 0.0
      %1768 = vmatpush1.xpose.msra.mxu0 %v1747
      %1769 = vmatprep.subr.mxu0 0.0
      %1770 = vmatpush1.xpose.msra.mxu0 %v1749
      %1771 = vmatprep.subr.mxu0 0.0
      %1772 = vmatpush1.xpose.msra.mxu0 %v1751
      %1773 = vmatprep.subr.mxu0 0.0
      %1774 = vmatpush1.xpose.msra.mxu0 %v1753
      %1775 = vmatprep.subr.mxu0 0.0
      %1776 = vmatpush1.xpose.msra.mxu0 %v1755
      %1777 = vmatprep.subr.mxu0 0.0
      %1778 = vmatpush1.xpose.msra.mxu0 %v1757
      %1779 = vmatprep.subr.mxu0 0.0
      %1780 = vmatpush1.xpose.msra.mxu0 %v1759
      %1781 = vmatprep.subr.mxu0 0.0
      %1782 = vmatpush1.xpose.msra.mxu0 %v1761
      %1783 = vmatprep.subr.mxu0 0.0
      %1784 = vmatpush1.xpose.msra.mxu0 0.0
      %1785 = vmatprep.subr.mxu0 0.0
      %1786 = vmatpush1.xpose.msra.mxu0 0.0
      %1787 = vmatprep.subr.mxu0 0.0
      %1788 = vmatpush1.xpose.msra.mxu0 0.0
      %1789 = vmatprep.subr.mxu0 0.0
      %1790 = vmatpush1.xpose.msra.mxu0 0.0
      %1791 = vmatprep.subr.mxu0 0.0
      %1792 = vmatpush1.xpose.msra.mxu0 0.0
      %1793 = vmatprep.subr.mxu0 0.0
      %1794 = vmatpush1.xpose.msra.mxu0 0.0
      %1795 = vmatprep.subr.mxu0 0.0
      %1796 = vmatpush1.xpose.msra.mxu0 0.0
      %1797 = vmatprep.subr.mxu0 0.0
      %1798 = vmatpush1.xpose.msra.mxu0 0.0
      %1799 = vmatprep.subr.mxu0 0.0
      %1800 = vmatpush1.xpose.msra.mxu0 0.0
      %1801 = vmatprep.subr.mxu0 0.0
      %1802 = vmatpush1.xpose.msra.mxu0 0.0
      %1803 = vmatprep.subr.mxu0 0.0
      %1804 = vmatpush1.xpose.msra.mxu0 0.0
      %1805 = vmatprep.subr.mxu0 0.0
      %1806 = vmatpush1.xpose.msra.mxu0 0.0
      %1807 = vmatprep.subr.mxu0 0.0
      %1808 = vmatpush1.xpose.msra.mxu0 0.0
      %1809 = vmatprep.subr.mxu0 0.0
      %1810 = vmatpush1.xpose.msra.mxu0 0.0
      %1811 = vmatprep.subr.mxu0 0.0
      %1812 = vmatpush1.xpose.msra.mxu0 0.0
      %1813 = vmatprep.subr.mxu0 0.0
      %1814 = vmatpush1.xpose.msra.mxu0 0.0
      %1815 = vmatprep.subr.mxu0 0.0
      %1816 = vmatpush1.xpose.msra.mxu0 0.0
      %1817 = vmatprep.subr.mxu0 0.0
      %1818 = vmatpush1.xpose.msra.mxu0 0.0
      %1819 = vmatprep.subr.mxu0 0.0
      %1820 = vmatpush1.xpose.msra.mxu0 0.0
      %1821 = vmatprep.subr.mxu0 0.0
      %1822 = vmatpush1.xpose.msra.mxu0 0.0
      %1823 = vmatprep.subr.mxu0 0.0
      %1824 = vmatpush1.xpose.msra.mxu0 0.0
      %1825 = vmatprep.subr.mxu0 0.0
      %1826 = vmatpush1.xpose.msra.mxu0 0.0
      %1827 = vmatprep.mubr.f32.mxu0 0.0
      %1828 = vmatmul.mubr.f32.gmra.mrb[0].mxu0 %v1359
      %v1829 = vpop.f32.mrb[0].mxu0
      %v1830 = vadd.f32 0.0, %v1829
      %v1831 = vpop.f32.mrb[0].mxu0
      %1832 = vmatprep.mubr.f32.mxu0 0.0
      %1833 = vmatmul.mubr.f32.gmra.mrb[0].mxu0 %v1362
      %v1834 = vpop.f32.mrb[0].mxu0
      %v1835 = vadd.f32 0.0, %v1834
      %v1836 = vpop.f32.mrb[0].mxu0
      %1837 = vmatprep.mubr.f32.mxu0 0.0
      %1838 = vmatmul.mubr.f32.gmra.mrb[0].mxu0 %v1365
      %v1839 = vpop.f32.mrb[0].mxu0
      %v1840 = vadd.f32 0.0, %v1839
      %v1841 = vpop.f32.mrb[0].mxu0
      %1842 = vmatprep.mubr.f32.mxu0 0.0
      %1843 = vmatmul.mubr.f32.gmra.mrb[0].mxu0 %v1368
      %v1844 = vpop.f32.mrb[0].mxu0
      %v1845 = vadd.f32 0.0, %v1844
      %v1846 = vpop.f32.mrb[0].mxu0
      %1847 = vmatprep.mubr.f32.mxu0 0.0
      %1848 = vmatmul.mubr.f32.gmra.mrb[0].mxu0 %v1371
      %v1849 = vpop.f32.mrb[0].mxu0
      %v1850 = vadd.f32 0.0, %v1849
      %v1851 = vpop.f32.mrb[0].mxu0
      %1852 = vmatprep.mubr.f32.mxu0 0.0
      %1853 = vmatmul.mubr.f32.gmra.mrb[0].mxu0 %v1374
      %v1854 = vpop.f32.mrb[0].mxu0
      %v1855 = vadd.f32 0.0, %v1854
      %v1856 = vpop.f32.mrb[0].mxu0
      %1857 = vmatprep.mubr.f32.mxu0 0.0
      %1858 = vmatmul.mubr.f32.gmra.mrb[0].mxu0 %v1377
      %v1859 = vpop.f32.mrb[0].mxu0
      %v1860 = vadd.f32 0.0, %v1859
      %v1861 = vpop.f32.mrb[0].mxu0
      %1862 = vmatprep.mubr.f32.mxu0 0.0
      %1863 = vmatmul.mubr.f32.gmra.mrb[0].mxu0 %v1380
      %v1864 = vpop.f32.mrb[0].mxu0
      %v1865 = vadd.f32 0.0, %v1864
      %v1866 = vpop.f32.mrb[0].mxu0
      %1867 = vmatprep.mubr.f32.mxu0 0.0
      %1868 = vmatmul.mubr.f32.gmra.mrb[0].mxu0 %v1383
      %v1869 = vpop.f32.mrb[0].mxu0
      %v1870 = vadd.f32 0.0, %v1869
      %v1871 = vpop.f32.mrb[0].mxu0
      %1872 = vmatprep.mubr.f32.mxu0 0.0
      %1873 = vmatmul.mubr.f32.gmra.mrb[0].mxu0 %v1386
      %v1874 = vpop.f32.mrb[0].mxu0
      %v1875 = vadd.f32 0.0, %v1874
      %v1876 = vpop.f32.mrb[0].mxu0
      %1877 = vdwg.mxu0
      %v1878 = vmul.f32 %v1830, 0.35355338
      %v1879 = vmul.f32 %v1835, 0.35355338
      %v1880 = vmul.f32 %v1840, 0.35355338
      %v1881 = vmul.f32 %v1845, 0.35355338
      %v1882 = vmul.f32 %v1850, 0.35355338
      %v1883 = vmul.f32 %v1855, 0.35355338
      %v1884 = vmul.f32 %v1860, 0.35355338
      %v1885 = vmul.f32 %v1865, 0.35355338
      %v1886 = vmul.f32 %v1870, 0.35355338
      %v1887 = vmul.f32 %v1875, 0.35355338
      %v1888 = vsel %vm1543, -1e+09, %v1878
      %v1889 = vsel %vm1544, -1e+09, %v1879
      %v1890 = vsel %vm1545, -1e+09, %v1880
      %v1891 = vsel %vm1546, -1e+09, %v1881
      %v1892 = vsel %vm1547, -1e+09, %v1882
      %v1893 = vsel %vm1548, -1e+09, %v1883
      %v1894 = vsel %vm1549, -1e+09, %v1884
      %v1895 = vsel %vm1550, -1e+09, %v1885
      %v1896 = vsel %vm1551, -1e+09, %v1886
      %v1897 = vsel %vm1552, -1e+09, %v1887
      %v1898 = vsel %vm1533, -1e+30, %v1888
      %v1899 = vsel %vm1534, -1e+30, %v1889
      %v1900 = vsel %vm1535, -1e+30, %v1890
      %v1901 = vsel %vm1536, -1e+30, %v1891
      %v1902 = vsel %vm1537, -1e+30, %v1892
      %v1903 = vsel %vm1538, -1e+30, %v1893
      %v1904 = vsel %vm1539, -1e+30, %v1894
      %v1905 = vsel %vm1540, -1e+30, %v1895
      %v1906 = vsel %vm1541, -1e+30, %v1896
      %v1907 = vsel %vm1542, -1e+30, %v1897
      %v1908 = vsel %vm1573, %v1898, -inf
      %1909 = vmax.xlane.f32.xlu0 %v1908
      %v1910 = vpop.xlane.xlu0 %1909
      %v1911 = vsel %vm1573, %v1899, -inf
      %1912 = vmax.xlane.f32.xlu0 %v1911
      %v1913 = vpop.xlane.xlu0 %1912
      %v1914 = vsel %vm1573, %v1900, -inf
      %1915 = vmax.xlane.f32.xlu0 %v1914
      %v1916 = vpop.xlane.xlu0 %1915
      %v1917 = vsel %vm1573, %v1901, -inf
      %1918 = vmax.xlane.f32.xlu0 %v1917
      %v1919 = vpop.xlane.xlu0 %1918
      %v1920 = vsel %vm1573, %v1902, -inf
      %1921 = vmax.xlane.f32.xlu0 %v1920
      %v1922 = vpop.xlane.xlu0 %1921
      %v1923 = vsel %vm1573, %v1903, -inf
      %1924 = vmax.xlane.f32.xlu0 %v1923
      %v1925 = vpop.xlane.xlu0 %1924
      %v1926 = vsel %vm1573, %v1904, -inf
      %1927 = vmax.xlane.f32.xlu0 %v1926
      %v1928 = vpop.xlane.xlu0 %1927
      %v1929 = vsel %vm1573, %v1905, -inf
      %1930 = vmax.xlane.f32.xlu0 %v1929
      %v1931 = vpop.xlane.xlu0 %1930
      %v1932 = vsel %vm1573, %v1906, -inf
      %1933 = vmax.xlane.f32.xlu0 %v1932
      %v1934 = vpop.xlane.xlu0 %1933
      %v1935 = vsel %vm1573, %v1907, -inf
      %1936 = vmax.xlane.f32.xlu0 %v1935
      %v1937 = vpop.xlane.xlu0 %1936
      %v1938 = vsub.f32 %v1898, %v1910
      %v1939 = vsub.f32 %v1899, %v1913
      %v1940 = vsub.f32 %v1900, %v1916
      %v1941 = vsub.f32 %v1901, %v1919
      %v1942 = vsub.f32 %v1902, %v1922
      %v1943 = vsub.f32 %v1903, %v1925
      %v1944 = vsub.f32 %v1904, %v1928
      %v1945 = vsub.f32 %v1905, %v1931
      %v1946 = vsub.f32 %v1906, %v1934
      %v1947 = vsub.f32 %v1907, %v1937
      %v1948 = vmul.f32 %v1938, 1.442695
      %v1949 = vpow.pop %v1948
      %v1950 = vmul.f32 %v1939, 1.442695
      %v1951 = vpow.pop %v1950
      %v1952 = vmul.f32 %v1940, 1.442695
      %v1953 = vpow.pop %v1952
      %v1954 = vmul.f32 %v1941, 1.442695
      %v1955 = vpow.pop %v1954
      %v1956 = vmul.f32 %v1942, 1.442695
      %v1957 = vpow.pop %v1956
      %v1958 = vmul.f32 %v1943, 1.442695
      %v1959 = vpow.pop %v1958
      %v1960 = vmul.f32 %v1944, 1.442695
      %v1961 = vpow.pop %v1960
      %v1962 = vmul.f32 %v1945, 1.442695
      %v1963 = vpow.pop %v1962
      %v1964 = vmul.f32 %v1946, 1.442695
      %v1965 = vpow.pop %v1964
      %v1966 = vmul.f32 %v1947, 1.442695
      %v1967 = vpow.pop %v1966
      %v1968 = vsel %vm1573, %v1949, 0.0
      %1969 = vadd.xlane.f32.xlu0 %v1968
      %v1970 = vpop.xlane.xlu0 %1969
      %v1971 = vsel %vm1573, %v1951, 0.0
      %1972 = vadd.xlane.f32.xlu0 %v1971
      %v1973 = vpop.xlane.xlu0 %1972
      %v1974 = vsel %vm1573, %v1953, 0.0
      %1975 = vadd.xlane.f32.xlu0 %v1974
      %v1976 = vpop.xlane.xlu0 %1975
      %v1977 = vsel %vm1573, %v1955, 0.0
      %1978 = vadd.xlane.f32.xlu0 %v1977
      %v1979 = vpop.xlane.xlu0 %1978
      %v1980 = vsel %vm1573, %v1957, 0.0
      %1981 = vadd.xlane.f32.xlu0 %v1980
      %v1982 = vpop.xlane.xlu0 %1981
      %v1983 = vsel %vm1573, %v1959, 0.0
      %1984 = vadd.xlane.f32.xlu0 %v1983
      %v1985 = vpop.xlane.xlu0 %1984
      %v1986 = vsel %vm1573, %v1961, 0.0
      %1987 = vadd.xlane.f32.xlu0 %v1986
      %v1988 = vpop.xlane.xlu0 %1987
      %v1989 = vsel %vm1573, %v1963, 0.0
      %1990 = vadd.xlane.f32.xlu0 %v1989
      %v1991 = vpop.xlane.xlu0 %1990
      %v1992 = vsel %vm1573, %v1965, 0.0
      %1993 = vadd.xlane.f32.xlu0 %v1992
      %v1994 = vpop.xlane.xlu0 %1993
      %v1995 = vsel %vm1573, %v1967, 0.0
      %1996 = vadd.xlane.f32.xlu0 %v1995
      %v1997 = vpop.xlane.xlu0 %1996
      %v1998 = vrcp.pop %v1970
      %v1999 = vmul.f32 %v1949, %v1998
      %v2000 = vrcp.pop %v1973
      %v2001 = vmul.f32 %v1951, %v2000
      %v2002 = vrcp.pop %v1976
      %v2003 = vmul.f32 %v1953, %v2002
      %v2004 = vrcp.pop %v1979
      %v2005 = vmul.f32 %v1955, %v2004
      %v2006 = vrcp.pop %v1982
      %v2007 = vmul.f32 %v1957, %v2006
      %v2008 = vrcp.pop %v1985
      %v2009 = vmul.f32 %v1959, %v2008
      %v2010 = vrcp.pop %v1988
      %v2011 = vmul.f32 %v1961, %v2010
      %v2012 = vrcp.pop %v1991
      %v2013 = vmul.f32 %v1963, %v2012
      %v2014 = vrcp.pop %v1994
      %v2015 = vmul.f32 %v1965, %v2014
      %v2016 = vrcp.pop %v1997
      %v2017 = vmul.f32 %v1967, %v2016
      %v2018 = vmul.f32 %v1261, %v1698
      %v2019 = vmul.f32 %v1265, %v1698
      %v2020 = vmul.f32 %v1271, %v1698
      %v2021 = vmul.f32 %v1275, %v1698
      %v2022 = vmul.f32 %v1281, %v1698
      %v2023 = vmul.f32 %v1285, %v1698
      %v2024 = vmul.f32 %v1291, %v1698
      %v2025 = vmul.f32 %v1295, %v1698
      %v2026 = vmul.f32 %v1301, %v1698
      %v2027 = vmul.f32 %v1305, %v1698
      %v2029 = vsel %vm1573, %v1999, 0
      %v2032 = vsel %vm1573, %v2001, 0
      %v2035 = vsel %vm1573, %v2003, 0
      %v2038 = vsel %vm1573, %v2005, 0
      %v2041 = vsel %vm1573, %v2007, 0
      %v2044 = vsel %vm1573, %v2009, 0
      %v2047 = vsel %vm1573, %v2011, 0
      %v2050 = vsel %vm1573, %v2013, 0
      %v2053 = vsel %vm1573, %v2015, 0
      %v2056 = vsel %vm1573, %v2017, 0
      %2058 = vmatprep.subr.mxu0 0.0
      %2059 = vmatpush1.msra.mxu0 %v2018
      %2060 = vmatprep.subr.mxu0 0.0
      %2061 = vmatpush1.msra.mxu0 %v2019
      %2062 = vmatprep.subr.mxu0 0.0
      %2063 = vmatpush1.msra.mxu0 %v2020
      %2064 = vmatprep.subr.mxu0 0.0
      %2065 = vmatpush1.msra.mxu0 %v2021
      %2066 = vmatprep.subr.mxu0 0.0
      %2067 = vmatpush1.msra.mxu0 %v2022
      %2068 = vmatprep.subr.mxu0 0.0
      %2069 = vmatpush1.msra.mxu0 %v2023
      %2070 = vmatprep.subr.mxu0 0.0
      %2071 = vmatpush1.msra.mxu0 %v2024
      %2072 = vmatprep.subr.mxu0 0.0
      %2073 = vmatpush1.msra.mxu0 %v2025
      %2074 = vmatprep.subr.mxu0 0.0
      %2075 = vmatpush1.msra.mxu0 %v2026
      %2076 = vmatprep.subr.mxu0 0.0
      %2077 = vmatpush1.msra.mxu0 %v2027
      %2078 = vmatprep.subr.mxu0 0.0
      %2079 = vmatpush1.msra.mxu0 0.0
      %2080 = vmatprep.subr.mxu0 0.0
      %2081 = vmatpush1.msra.mxu0 0.0
      %2082 = vmatprep.subr.mxu0 0.0
      %2083 = vmatpush1.msra.mxu0 0.0
      %2084 = vmatprep.subr.mxu0 0.0
      %2085 = vmatpush1.msra.mxu0 0.0
      %2086 = vmatprep.subr.mxu0 0.0
      %2087 = vmatpush1.msra.mxu0 0.0
      %2088 = vmatprep.subr.mxu0 0.0
      %2089 = vmatpush1.msra.mxu0 0.0
      %2090 = vmatprep.subr.mxu0 0.0
      %2091 = vmatpush1.msra.mxu0 0.0
      %2092 = vmatprep.subr.mxu0 0.0
      %2093 = vmatpush1.msra.mxu0 0.0
      %2094 = vmatprep.subr.mxu0 0.0
      %2095 = vmatpush1.msra.mxu0 0.0
      %2096 = vmatprep.subr.mxu0 0.0
      %2097 = vmatpush1.msra.mxu0 0.0
      %2098 = vmatprep.subr.mxu0 0.0
      %2099 = vmatpush1.msra.mxu0 0.0
      %2100 = vmatprep.subr.mxu0 0.0
      %2101 = vmatpush1.msra.mxu0 0.0
      %2102 = vmatprep.subr.mxu0 0.0
      %2103 = vmatpush1.msra.mxu0 0.0
      %2104 = vmatprep.subr.mxu0 0.0
      %2105 = vmatpush1.msra.mxu0 0.0
      %2106 = vmatprep.subr.mxu0 0.0
      %2107 = vmatpush1.msra.mxu0 0.0
      %2108 = vmatprep.subr.mxu0 0.0
      %2109 = vmatpush1.msra.mxu0 0.0
      %2110 = vmatprep.subr.mxu0 0.0
      %2111 = vmatpush1.msra.mxu0 0.0
      %2112 = vmatprep.subr.mxu0 0.0
      %2113 = vmatpush1.msra.mxu0 0.0
      %2114 = vmatprep.subr.mxu0 0.0
      %2115 = vmatpush1.msra.mxu0 0.0
      %2116 = vmatprep.subr.mxu0 0.0
      %2117 = vmatpush1.msra.mxu0 0.0
      %2118 = vmatprep.subr.mxu0 0.0
      %2119 = vmatpush1.msra.mxu0 0.0
      %2120 = vmatprep.subr.mxu0 0.0
      %2121 = vmatpush1.msra.mxu0 0.0
      %2122 = vmatprep.mubr.f32.mxu0 0.0
      %2123 = vmatmul.mubr.f32.gmra.mrb[0].mxu0 %v2029
      %v2124 = vpop.f32.mrb[0].mxu0
      %v2125 = vadd.f32 0.0, %v2124
      %v2126 = vpop.f32.mrb[0].mxu0
      %2127 = vmatprep.mubr.f32.mxu0 0.0
      %2128 = vmatmul.mubr.f32.gmra.mrb[0].mxu0 %v2032
      %v2129 = vpop.f32.mrb[0].mxu0
      %v2130 = vadd.f32 0.0, %v2129
      %v2131 = vpop.f32.mrb[0].mxu0
      %2132 = vmatprep.mubr.f32.mxu0 0.0
      %2133 = vmatmul.mubr.f32.gmra.mrb[0].mxu0 %v2035
      %v2134 = vpop.f32.mrb[0].mxu0
      %v2135 = vadd.f32 0.0, %v2134
      %v2136 = vpop.f32.mrb[0].mxu0
      %2137 = vmatprep.mubr.f32.mxu0 0.0
      %2138 = vmatmul.mubr.f32.gmra.mrb[0].mxu0 %v2038
      %v2139 = vpop.f32.mrb[0].mxu0
      %v2140 = vadd.f32 0.0, %v2139
      %v2141 = vpop.f32.mrb[0].mxu0
      %2142 = vmatprep.mubr.f32.mxu0 0.0
      %2143 = vmatmul.mubr.f32.gmra.mrb[0].mxu0 %v2041
      %v2144 = vpop.f32.mrb[0].mxu0
      %v2145 = vadd.f32 0.0, %v2144
      %v2146 = vpop.f32.mrb[0].mxu0
      %2147 = vmatprep.mubr.f32.mxu0 0.0
      %2148 = vmatmul.mubr.f32.gmra.mrb[0].mxu0 %v2044
      %v2149 = vpop.f32.mrb[0].mxu0
      %v2150 = vadd.f32 0.0, %v2149
      %v2151 = vpop.f32.mrb[0].mxu0
      %2152 = vmatprep.mubr.f32.mxu0 0.0
      %2153 = vmatmul.mubr.f32.gmra.mrb[0].mxu0 %v2047
      %v2154 = vpop.f32.mrb[0].mxu0
      %v2155 = vadd.f32 0.0, %v2154
      %v2156 = vpop.f32.mrb[0].mxu0
      %2157 = vmatprep.mubr.f32.mxu0 0.0
      %2158 = vmatmul.mubr.f32.gmra.mrb[0].mxu0 %v2050
      %v2159 = vpop.f32.mrb[0].mxu0
      %v2160 = vadd.f32 0.0, %v2159
      %v2161 = vpop.f32.mrb[0].mxu0
      %2162 = vmatprep.mubr.f32.mxu0 0.0
      %2163 = vmatmul.mubr.f32.gmra.mrb[0].mxu0 %v2053
      %v2164 = vpop.f32.mrb[0].mxu0
      %v2165 = vadd.f32 0.0, %v2164
      %v2166 = vpop.f32.mrb[0].mxu0
      %2167 = vmatprep.mubr.f32.mxu0 0.0
      %2168 = vmatmul.mubr.f32.gmra.mrb[0].mxu0 %v2056
      %v2169 = vpop.f32.mrb[0].mxu0
      %v2170 = vadd.f32 0.0, %v2169
      %v2171 = vpop.f32.mrb[0].mxu0
      %2172 = vdwg.mxu0
      %v2174 = vsel %vm1573, %v1665, 0
      %v2177 = vsel %vm1573, %v1667, 0
      %v2180 = vsel %vm1573, %v1669, 0
      %v2183 = vsel %vm1573, %v1671, 0
      %v2186 = vsel %vm1573, %v1673, 0
      %v2189 = vsel %vm1573, %v1675, 0
      %v2192 = vsel %vm1573, %v1677, 0
      %v2195 = vsel %vm1573, %v1679, 0
      %v2198 = vsel %vm1573, %v1681, 0
      %v2201 = vsel %vm1573, %v1683, 0
      %2203 = vmatprep.subr.mxu0 0.0
      %2204 = vmatpush1.msra.mxu0 %v1684
      %2205 = vmatprep.subr.mxu0 0.0
      %2206 = vmatpush1.msra.mxu0 %v1685
      %2207 = vmatprep.subr.mxu0 0.0
      %2208 = vmatpush1.msra.mxu0 %v1686
      %2209 = vmatprep.subr.mxu0 0.0
      %2210 = vmatpush1.msra.mxu0 %v1687
      %2211 = vmatprep.subr.mxu0 0.0
      %2212 = vmatpush1.msra.mxu0 %v1688
      %2213 = vmatprep.subr.mxu0 0.0
      %2214 = vmatpush1.msra.mxu0 %v1689
      %2215 = vmatprep.subr.mxu0 0.0
      %2216 = vmatpush1.msra.mxu0 %v1690
      %2217 = vmatprep.subr.mxu0 0.0
      %2218 = vmatpush1.msra.mxu0 %v1691
      %2219 = vmatprep.subr.mxu0 0.0
      %2220 = vmatpush1.msra.mxu0 %v1692
      %2221 = vmatprep.subr.mxu0 0.0
      %2222 = vmatpush1.msra.mxu0 %v1693
      %2223 = vmatprep.subr.mxu0 0.0
      %2224 = vmatpush1.msra.mxu0 0.0
      %2225 = vmatprep.subr.mxu0 0.0
      %2226 = vmatpush1.msra.mxu0 0.0
      %2227 = vmatprep.subr.mxu0 0.0
      %2228 = vmatpush1.msra.mxu0 0.0
      %2229 = vmatprep.subr.mxu0 0.0
      %2230 = vmatpush1.msra.mxu0 0.0
      %2231 = vmatprep.subr.mxu0 0.0
      %2232 = vmatpush1.msra.mxu0 0.0
      %2233 = vmatprep.subr.mxu0 0.0
      %2234 = vmatpush1.msra.mxu0 0.0
      %2235 = vmatprep.subr.mxu0 0.0
      %2236 = vmatpush1.msra.mxu0 0.0
      %2237 = vmatprep.subr.mxu0 0.0
      %2238 = vmatpush1.msra.mxu0 0.0
      %2239 = vmatprep.subr.mxu0 0.0
      %2240 = vmatpush1.msra.mxu0 0.0
      %2241 = vmatprep.subr.mxu0 0.0
      %2242 = vmatpush1.msra.mxu0 0.0
      %2243 = vmatprep.subr.mxu0 0.0
      %2244 = vmatpush1.msra.mxu0 0.0
      %2245 = vmatprep.subr.mxu0 0.0
      %2246 = vmatpush1.msra.mxu0 0.0
      %2247 = vmatprep.subr.mxu0 0.0
      %2248 = vmatpush1.msra.mxu0 0.0
      %2249 = vmatprep.subr.mxu0 0.0
      %2250 = vmatpush1.msra.mxu0 0.0
      %2251 = vmatprep.subr.mxu0 0.0
      %2252 = vmatpush1.msra.mxu0 0.0
      %2253 = vmatprep.subr.mxu0 0.0
      %2254 = vmatpush1.msra.mxu0 0.0
      %2255 = vmatprep.subr.mxu0 0.0
      %2256 = vmatpush1.msra.mxu0 0.0
      %2257 = vmatprep.subr.mxu0 0.0
      %2258 = vmatpush1.msra.mxu0 0.0
      %2259 = vmatprep.subr.mxu0 0.0
      %2260 = vmatpush1.msra.mxu0 0.0
      %2261 = vmatprep.subr.mxu0 0.0
      %2262 = vmatpush1.msra.mxu0 0.0
      %2263 = vmatprep.subr.mxu0 0.0
      %2264 = vmatpush1.msra.mxu0 0.0
      %2265 = vmatprep.subr.mxu0 0.0
      %2266 = vmatpush1.msra.mxu0 0.0
      %2267 = vmatprep.mubr.f32.mxu0 0.0
      %2268 = vmatmul.mubr.f32.gmra.mrb[0].mxu0 %v2174
      %v2269 = vpop.f32.mrb[0].mxu0
      %v2270 = vadd.f32 %v2125, %v2269
      %v2271 = vpop.f32.mrb[0].mxu0
      %2272 = vmatprep.mubr.f32.mxu0 0.0
      %2273 = vmatmul.mubr.f32.gmra.mrb[0].mxu0 %v2177
      %v2274 = vpop.f32.mrb[0].mxu0
      %v2275 = vadd.f32 %v2130, %v2274
      %v2276 = vpop.f32.mrb[0].mxu0
      %2277 = vmatprep.mubr.f32.mxu0 0.0
      %2278 = vmatmul.mubr.f32.gmra.mrb[0].mxu0 %v2180
      %v2279 = vpop.f32.mrb[0].mxu0
      %v2280 = vadd.f32 %v2135, %v2279
      %v2281 = vpop.f32.mrb[0].mxu0
      %2282 = vmatprep.mubr.f32.mxu0 0.0
      %2283 = vmatmul.mubr.f32.gmra.mrb[0].mxu0 %v2183
      %v2284 = vpop.f32.mrb[0].mxu0
      %v2285 = vadd.f32 %v2140, %v2284
      %v2286 = vpop.f32.mrb[0].mxu0
      %2287 = vmatprep.mubr.f32.mxu0 0.0
      %2288 = vmatmul.mubr.f32.gmra.mrb[0].mxu0 %v2186
      %v2289 = vpop.f32.mrb[0].mxu0
      %v2290 = vadd.f32 %v2145, %v2289
      %v2291 = vpop.f32.mrb[0].mxu0
      %2292 = vmatprep.mubr.f32.mxu0 0.0
      %2293 = vmatmul.mubr.f32.gmra.mrb[0].mxu0 %v2189
      %v2294 = vpop.f32.mrb[0].mxu0
      %v2295 = vadd.f32 %v2150, %v2294
      %v2296 = vpop.f32.mrb[0].mxu0
      %2297 = vmatprep.mubr.f32.mxu0 0.0
      %2298 = vmatmul.mubr.f32.gmra.mrb[0].mxu0 %v2192
      %v2299 = vpop.f32.mrb[0].mxu0
      %v2300 = vadd.f32 %v2155, %v2299
      %v2301 = vpop.f32.mrb[0].mxu0
      %2302 = vmatprep.mubr.f32.mxu0 0.0
      %2303 = vmatmul.mubr.f32.gmra.mrb[0].mxu0 %v2195
      %v2304 = vpop.f32.mrb[0].mxu0
      %v2305 = vadd.f32 %v2160, %v2304
      %v2306 = vpop.f32.mrb[0].mxu0
      %2307 = vmatprep.mubr.f32.mxu0 0.0
      %2308 = vmatmul.mubr.f32.gmra.mrb[0].mxu0 %v2198
      %v2309 = vpop.f32.mrb[0].mxu0
      %v2310 = vadd.f32 %v2165, %v2309
      %v2311 = vpop.f32.mrb[0].mxu0
      %2312 = vmatprep.mubr.f32.mxu0 0.0
      %2313 = vmatmul.mubr.f32.gmra.mrb[0].mxu0 %v2201
      %v2314 = vpop.f32.mrb[0].mxu0
      %v2315 = vadd.f32 %v2170, %v2314
      %v2316 = vpop.f32.mrb[0].mxu0
      %2317 = vdwg.mxu0
      %vm2318 = vcmp.ge.s32.totalorder %v1308, 16
      %vm2319 = vcmp.lt.s32.totalorder %v1308, 24
      %vm2320 = vmand %vm2318, %vm2319
      %v2321 = vsel %vm2320, 1, 0
      %v2322 = vcvt.s32.f32 %v2321
      %2324 = vrot.lane.b32.xlu0 %v2322, 64
      %v2325 = vpop.permute.xlu0 %2324
      %v2327 = vmul.f32 %v1259, %v2325
      %v2328 = vmul.f32 %v1263, %v2325
      %v2329 = vmul.f32 %v1269, %v2325
      %v2330 = vmul.f32 %v1273, %v2325
      %v2331 = vmul.f32 %v1279, %v2325
      %v2332 = vmul.f32 %v1283, %v2325
      %v2333 = vmul.f32 %v1289, %v2325
      %v2334 = vmul.f32 %v1293, %v2325
      %v2335 = vmul.f32 %v1299, %v2325
      %v2336 = vmul.f32 %v1303, %v2325
      %2347 = vrot.lane.b32.xlu0 %v2327, 64
      %v2348 = vpop.permute.xlu0 %2347
      %2349 = vrot.lane.b32.xlu0 %v2328, 64
      %v2350 = vpop.permute.xlu0 %2349
      %2351 = vrot.lane.b32.xlu0 %v2329, 64
      %v2352 = vpop.permute.xlu0 %2351
      %2353 = vrot.lane.b32.xlu0 %v2330, 64
      %v2354 = vpop.permute.xlu0 %2353
      %2355 = vrot.lane.b32.xlu0 %v2331, 64
      %v2356 = vpop.permute.xlu0 %2355
      %2357 = vrot.lane.b32.xlu0 %v2332, 64
      %v2358 = vpop.permute.xlu0 %2357
      %2359 = vrot.lane.b32.xlu0 %v2333, 64
      %v2360 = vpop.permute.xlu0 %2359
      %2361 = vrot.lane.b32.xlu0 %v2334, 64
      %v2362 = vpop.permute.xlu0 %2361
      %2363 = vrot.lane.b32.xlu0 %v2335, 64
      %v2364 = vpop.permute.xlu0 %2363
      %2365 = vrot.lane.b32.xlu0 %v2336, 64
      %v2366 = vpop.permute.xlu0 %2365
      %v2367 = vsel %vm1208, %v2348, 0
      %v2369 = vsel %vm1208, %v2350, 0
      %v2371 = vsel %vm1208, %v2352, 0
      %v2373 = vsel %vm1208, %v2354, 0
      %v2375 = vsel %vm1208, %v2356, 0
      %v2377 = vsel %vm1208, %v2358, 0
      %v2379 = vsel %vm1208, %v2360, 0
      %v2381 = vsel %vm1208, %v2362, 0
      %v2383 = vsel %vm1208, %v2364, 0
      %v2385 = vsel %vm1208, %v2366, 0
      %2387 = vmatprep.subr.mxu0 0.0
      %2388 = vmatpush1.xpose.msra.mxu0 %v2367
      %2389 = vmatprep.subr.mxu0 0.0
      %2390 = vmatpush1.xpose.msra.mxu0 %v2369
      %2391 = vmatprep.subr.mxu0 0.0
      %2392 = vmatpush1.xpose.msra.mxu0 %v2371
      %2393 = vmatprep.subr.mxu0 0.0
      %2394 = vmatpush1.xpose.msra.mxu0 %v2373
      %2395 = vmatprep.subr.mxu0 0.0
      %2396 = vmatpush1.xpose.msra.mxu0 %v2375
      %2397 = vmatprep.subr.mxu0 0.0
      %2398 = vmatpush1.xpose.msra.mxu0 %v2377
      %2399 = vmatprep.subr.mxu0 0.0
      %2400 = vmatpush1.xpose.msra.mxu0 %v2379
      %2401 = vmatprep.subr.mxu0 0.0
      %2402 = vmatpush1.xpose.msra.mxu0 %v2381
      %2403 = vmatprep.subr.mxu0 0.0
      %2404 = vmatpush1.xpose.msra.mxu0 %v2383
      %2405 = vmatprep.subr.mxu0 0.0
      %2406 = vmatpush1.xpose.msra.mxu0 %v2385
      %2407 = vmatprep.subr.mxu0 0.0
      %2408 = vmatpush1.xpose.msra.mxu0 0.0
      %2409 = vmatprep.subr.mxu0 0.0
      %2410 = vmatpush1.xpose.msra.mxu0 0.0
      %2411 = vmatprep.subr.mxu0 0.0
      %2412 = vmatpush1.xpose.msra.mxu0 0.0
      %2413 = vmatprep.subr.mxu0 0.0
      %2414 = vmatpush1.xpose.msra.mxu0 0.0
      %2415 = vmatprep.subr.mxu0 0.0
      %2416 = vmatpush1.xpose.msra.mxu0 0.0
      %2417 = vmatprep.subr.mxu0 0.0
      %2418 = vmatpush1.xpose.msra.mxu0 0.0
      %2419 = vmatprep.subr.mxu0 0.0
      %2420 = vmatpush1.xpose.msra.mxu0 0.0
      %2421 = vmatprep.subr.mxu0 0.0
      %2422 = vmatpush1.xpose.msra.mxu0 0.0
      %2423 = vmatprep.subr.mxu0 0.0
      %2424 = vmatpush1.xpose.msra.mxu0 0.0
      %2425 = vmatprep.subr.mxu0 0.0
      %2426 = vmatpush1.xpose.msra.mxu0 0.0
      %2427 = vmatprep.subr.mxu0 0.0
      %2428 = vmatpush1.xpose.msra.mxu0 0.0
      %2429 = vmatprep.subr.mxu0 0.0
      %2430 = vmatpush1.xpose.msra.mxu0 0.0
      %2431 = vmatprep.subr.mxu0 0.0
      %2432 = vmatpush1.xpose.msra.mxu0 0.0
      %2433 = vmatprep.subr.mxu0 0.0
      %2434 = vmatpush1.xpose.msra.mxu0 0.0
      %2435 = vmatprep.subr.mxu0 0.0
      %2436 = vmatpush1.xpose.msra.mxu0 0.0
      %2437 = vmatprep.subr.mxu0 0.0
      %2438 = vmatpush1.xpose.msra.mxu0 0.0
      %2439 = vmatprep.subr.mxu0 0.0
      %2440 = vmatpush1.xpose.msra.mxu0 0.0
      %2441 = vmatprep.subr.mxu0 0.0
      %2442 = vmatpush1.xpose.msra.mxu0 0.0
      %2443 = vmatprep.subr.mxu0 0.0
      %2444 = vmatpush1.xpose.msra.mxu0 0.0
      %2445 = vmatprep.subr.mxu0 0.0
      %2446 = vmatpush1.xpose.msra.mxu0 0.0
      %2447 = vmatprep.subr.mxu0 0.0
      %2448 = vmatpush1.xpose.msra.mxu0 0.0
      %2449 = vmatprep.subr.mxu0 0.0
      %2450 = vmatpush1.xpose.msra.mxu0 0.0
      %2451 = vmatprep.mubr.f32.mxu0 0.0
      %2452 = vmatmul.mubr.f32.gmra.mrb[0].mxu0 %v1359
      %v2453 = vpop.f32.mrb[0].mxu0
      %v2454 = vadd.f32 0.0, %v2453
      %v2455 = vpop.f32.mrb[0].mxu0
      %2456 = vmatprep.mubr.f32.mxu0 0.0
      %2457 = vmatmul.mubr.f32.gmra.mrb[0].mxu0 %v1362
      %v2458 = vpop.f32.mrb[0].mxu0
      %v2459 = vadd.f32 0.0, %v2458
      %v2460 = vpop.f32.mrb[0].mxu0
      %2461 = vmatprep.mubr.f32.mxu0 0.0
      %2462 = vmatmul.mubr.f32.gmra.mrb[0].mxu0 %v1365
      %v2463 = vpop.f32.mrb[0].mxu0
      %v2464 = vadd.f32 0.0, %v2463
      %v2465 = vpop.f32.mrb[0].mxu0
      %2466 = vmatprep.mubr.f32.mxu0 0.0
      %2467 = vmatmul.mubr.f32.gmra.mrb[0].mxu0 %v1368
      %v2468 = vpop.f32.mrb[0].mxu0
      %v2469 = vadd.f32 0.0, %v2468
      %v2470 = vpop.f32.mrb[0].mxu0
      %2471 = vmatprep.mubr.f32.mxu0 0.0
      %2472 = vmatmul.mubr.f32.gmra.mrb[0].mxu0 %v1371
      %v2473 = vpop.f32.mrb[0].mxu0
      %v2474 = vadd.f32 0.0, %v2473
      %v2475 = vpop.f32.mrb[0].mxu0
      %2476 = vmatprep.mubr.f32.mxu0 0.0
      %2477 = vmatmul.mubr.f32.gmra.mrb[0].mxu0 %v1374
      %v2478 = vpop.f32.mrb[0].mxu0
      %v2479 = vadd.f32 0.0, %v2478
      %v2480 = vpop.f32.mrb[0].mxu0
      %2481 = vmatprep.mubr.f32.mxu0 0.0
      %2482 = vmatmul.mubr.f32.gmra.mrb[0].mxu0 %v1377
      %v2483 = vpop.f32.mrb[0].mxu0
      %v2484 = vadd.f32 0.0, %v2483
      %v2485 = vpop.f32.mrb[0].mxu0
      %2486 = vmatprep.mubr.f32.mxu0 0.0
      %2487 = vmatmul.mubr.f32.gmra.mrb[0].mxu0 %v1380
      %v2488 = vpop.f32.mrb[0].mxu0
      %v2489 = vadd.f32 0.0, %v2488
      %v2490 = vpop.f32.mrb[0].mxu0
      %2491 = vmatprep.mubr.f32.mxu0 0.0
      %2492 = vmatmul.mubr.f32.gmra.mrb[0].mxu0 %v1383
      %v2493 = vpop.f32.mrb[0].mxu0
      %v2494 = vadd.f32 0.0, %v2493
      %v2495 = vpop.f32.mrb[0].mxu0
      %2496 = vmatprep.mubr.f32.mxu0 0.0
      %2497 = vmatmul.mubr.f32.gmra.mrb[0].mxu0 %v1386
      %v2498 = vpop.f32.mrb[0].mxu0
      %v2499 = vadd.f32 0.0, %v2498
      %v2500 = vpop.f32.mrb[0].mxu0
      %2501 = vdwg.mxu0
      %v2502 = vmul.f32 %v2454, 0.35355338
      %v2503 = vmul.f32 %v2459, 0.35355338
      %v2504 = vmul.f32 %v2464, 0.35355338
      %v2505 = vmul.f32 %v2469, 0.35355338
      %v2506 = vmul.f32 %v2474, 0.35355338
      %v2507 = vmul.f32 %v2479, 0.35355338
      %v2508 = vmul.f32 %v2484, 0.35355338
      %v2509 = vmul.f32 %v2489, 0.35355338
      %v2510 = vmul.f32 %v2494, 0.35355338
      %v2511 = vmul.f32 %v2499, 0.35355338
      %v2512 = vsel %vm1543, -1e+09, %v2502
      %v2513 = vsel %vm1544, -1e+09, %v2503
      %v2514 = vsel %vm1545, -1e+09, %v2504
      %v2515 = vsel %vm1546, -1e+09, %v2505
      %v2516 = vsel %vm1547, -1e+09, %v2506
      %v2517 = vsel %vm1548, -1e+09, %v2507
      %v2518 = vsel %vm1549, -1e+09, %v2508
      %v2519 = vsel %vm1550, -1e+09, %v2509
      %v2520 = vsel %vm1551, -1e+09, %v2510
      %v2521 = vsel %vm1552, -1e+09, %v2511
      %v2522 = vsel %vm1533, -1e+30, %v2512
      %v2523 = vsel %vm1534, -1e+30, %v2513
      %v2524 = vsel %vm1535, -1e+30, %v2514
      %v2525 = vsel %vm1536, -1e+30, %v2515
      %v2526 = vsel %vm1537, -1e+30, %v2516
      %v2527 = vsel %vm1538, -1e+30, %v2517
      %v2528 = vsel %vm1539, -1e+30, %v2518
      %v2529 = vsel %vm1540, -1e+30, %v2519
      %v2530 = vsel %vm1541, -1e+30, %v2520
      %v2531 = vsel %vm1542, -1e+30, %v2521
      %v2532 = vsel %vm1573, %v2522, -inf
      %2533 = vmax.xlane.f32.xlu0 %v2532
      %v2534 = vpop.xlane.xlu0 %2533
      %v2535 = vsel %vm1573, %v2523, -inf
      %2536 = vmax.xlane.f32.xlu0 %v2535
      %v2537 = vpop.xlane.xlu0 %2536
      %v2538 = vsel %vm1573, %v2524, -inf
      %2539 = vmax.xlane.f32.xlu0 %v2538
      %v2540 = vpop.xlane.xlu0 %2539
      %v2541 = vsel %vm1573, %v2525, -inf
      %2542 = vmax.xlane.f32.xlu0 %v2541
      %v2543 = vpop.xlane.xlu0 %2542
      %v2544 = vsel %vm1573, %v2526, -inf
      %2545 = vmax.xlane.f32.xlu0 %v2544
      %v2546 = vpop.xlane.xlu0 %2545
      %v2547 = vsel %vm1573, %v2527, -inf
      %2548 = vmax.xlane.f32.xlu0 %v2547
      %v2549 = vpop.xlane.xlu0 %2548
      %v2550 = vsel %vm1573, %v2528, -inf
      %2551 = vmax.xlane.f32.xlu0 %v2550
      %v2552 = vpop.xlane.xlu0 %2551
      %v2553 = vsel %vm1573, %v2529, -inf
      %2554 = vmax.xlane.f32.xlu0 %v2553
      %v2555 = vpop.xlane.xlu0 %2554
      %v2556 = vsel %vm1573, %v2530, -inf
      %2557 = vmax.xlane.f32.xlu0 %v2556
      %v2558 = vpop.xlane.xlu0 %2557
      %v2559 = vsel %vm1573, %v2531, -inf
      %2560 = vmax.xlane.f32.xlu0 %v2559
      %v2561 = vpop.xlane.xlu0 %2560
      %v2562 = vsub.f32 %v2522, %v2534
      %v2563 = vsub.f32 %v2523, %v2537
      %v2564 = vsub.f32 %v2524, %v2540
      %v2565 = vsub.f32 %v2525, %v2543
      %v2566 = vsub.f32 %v2526, %v2546
      %v2567 = vsub.f32 %v2527, %v2549
      %v2568 = vsub.f32 %v2528, %v2552
      %v2569 = vsub.f32 %v2529, %v2555
      %v2570 = vsub.f32 %v2530, %v2558
      %v2571 = vsub.f32 %v2531, %v2561
      %v2572 = vmul.f32 %v2562, 1.442695
      %v2573 = vpow.pop %v2572
      %v2574 = vmul.f32 %v2563, 1.442695
      %v2575 = vpow.pop %v2574
      %v2576 = vmul.f32 %v2564, 1.442695
      %v2577 = vpow.pop %v2576
      %v2578 = vmul.f32 %v2565, 1.442695
      %v2579 = vpow.pop %v2578
      %v2580 = vmul.f32 %v2566, 1.442695
      %v2581 = vpow.pop %v2580
      %v2582 = vmul.f32 %v2567, 1.442695
      %v2583 = vpow.pop %v2582
      %v2584 = vmul.f32 %v2568, 1.442695
      %v2585 = vpow.pop %v2584
      %v2586 = vmul.f32 %v2569, 1.442695
      %v2587 = vpow.pop %v2586
      %v2588 = vmul.f32 %v2570, 1.442695
      %v2589 = vpow.pop %v2588
      %v2590 = vmul.f32 %v2571, 1.442695
      %v2591 = vpow.pop %v2590
      %v2592 = vsel %vm1573, %v2573, 0.0
      %2593 = vadd.xlane.f32.xlu0 %v2592
      %v2594 = vpop.xlane.xlu0 %2593
      %v2595 = vsel %vm1573, %v2575, 0.0
      %2596 = vadd.xlane.f32.xlu0 %v2595
      %v2597 = vpop.xlane.xlu0 %2596
      %v2598 = vsel %vm1573, %v2577, 0.0
      %2599 = vadd.xlane.f32.xlu0 %v2598
      %v2600 = vpop.xlane.xlu0 %2599
      %v2601 = vsel %vm1573, %v2579, 0.0
      %2602 = vadd.xlane.f32.xlu0 %v2601
      %v2603 = vpop.xlane.xlu0 %2602
      %v2604 = vsel %vm1573, %v2581, 0.0
      %2605 = vadd.xlane.f32.xlu0 %v2604
      %v2606 = vpop.xlane.xlu0 %2605
      %v2607 = vsel %vm1573, %v2583, 0.0
      %2608 = vadd.xlane.f32.xlu0 %v2607
      %v2609 = vpop.xlane.xlu0 %2608
      %v2610 = vsel %vm1573, %v2585, 0.0
      %2611 = vadd.xlane.f32.xlu0 %v2610
      %v2612 = vpop.xlane.xlu0 %2611
      %v2613 = vsel %vm1573, %v2587, 0.0
      %2614 = vadd.xlane.f32.xlu0 %v2613
      %v2615 = vpop.xlane.xlu0 %2614
      %v2616 = vsel %vm1573, %v2589, 0.0
      %2617 = vadd.xlane.f32.xlu0 %v2616
      %v2618 = vpop.xlane.xlu0 %2617
      %v2619 = vsel %vm1573, %v2591, 0.0
      %2620 = vadd.xlane.f32.xlu0 %v2619
      %v2621 = vpop.xlane.xlu0 %2620
      %v2622 = vrcp.pop %v2594
      %v2623 = vmul.f32 %v2573, %v2622
      %v2624 = vrcp.pop %v2597
      %v2625 = vmul.f32 %v2575, %v2624
      %v2626 = vrcp.pop %v2600
      %v2627 = vmul.f32 %v2577, %v2626
      %v2628 = vrcp.pop %v2603
      %v2629 = vmul.f32 %v2579, %v2628
      %v2630 = vrcp.pop %v2606
      %v2631 = vmul.f32 %v2581, %v2630
      %v2632 = vrcp.pop %v2609
      %v2633 = vmul.f32 %v2583, %v2632
      %v2634 = vrcp.pop %v2612
      %v2635 = vmul.f32 %v2585, %v2634
      %v2636 = vrcp.pop %v2615
      %v2637 = vmul.f32 %v2587, %v2636
      %v2638 = vrcp.pop %v2618
      %v2639 = vmul.f32 %v2589, %v2638
      %v2640 = vrcp.pop %v2621
      %v2641 = vmul.f32 %v2591, %v2640
      %v2642 = vmul.f32 %v1261, %v2322
      %v2643 = vmul.f32 %v1265, %v2322
      %v2644 = vmul.f32 %v1271, %v2322
      %v2645 = vmul.f32 %v1275, %v2322
      %v2646 = vmul.f32 %v1281, %v2322
      %v2647 = vmul.f32 %v1285, %v2322
      %v2648 = vmul.f32 %v1291, %v2322
      %v2649 = vmul.f32 %v1295, %v2322
      %v2650 = vmul.f32 %v1301, %v2322
      %v2651 = vmul.f32 %v1305, %v2322
      %v2653 = vsel %vm1573, %v2623, 0
      %v2656 = vsel %vm1573, %v2625, 0
      %v2659 = vsel %vm1573, %v2627, 0
      %v2662 = vsel %vm1573, %v2629, 0
      %v2665 = vsel %vm1573, %v2631, 0
      %v2668 = vsel %vm1573, %v2633, 0
      %v2671 = vsel %vm1573, %v2635, 0
      %v2674 = vsel %vm1573, %v2637, 0
      %v2677 = vsel %vm1573, %v2639, 0
      %v2680 = vsel %vm1573, %v2641, 0
      %2682 = vmatprep.subr.mxu0 0.0
      %2683 = vmatpush1.msra.mxu0 %v2642
      %2684 = vmatprep.subr.mxu0 0.0
      %2685 = vmatpush1.msra.mxu0 %v2643
      %2686 = vmatprep.subr.mxu0 0.0
      %2687 = vmatpush1.msra.mxu0 %v2644
      %2688 = vmatprep.subr.mxu0 0.0
      %2689 = vmatpush1.msra.mxu0 %v2645
      %2690 = vmatprep.subr.mxu0 0.0
      %2691 = vmatpush1.msra.mxu0 %v2646
      %2692 = vmatprep.subr.mxu0 0.0
      %2693 = vmatpush1.msra.mxu0 %v2647
      %2694 = vmatprep.subr.mxu0 0.0
      %2695 = vmatpush1.msra.mxu0 %v2648
      %2696 = vmatprep.subr.mxu0 0.0
      %2697 = vmatpush1.msra.mxu0 %v2649
      %2698 = vmatprep.subr.mxu0 0.0
      %2699 = vmatpush1.msra.mxu0 %v2650
      %2700 = vmatprep.subr.mxu0 0.0
      %2701 = vmatpush1.msra.mxu0 %v2651
      %2702 = vmatprep.subr.mxu0 0.0
      %2703 = vmatpush1.msra.mxu0 0.0
      %2704 = vmatprep.subr.mxu0 0.0
      %2705 = vmatpush1.msra.mxu0 0.0
      %2706 = vmatprep.subr.mxu0 0.0
      %2707 = vmatpush1.msra.mxu0 0.0
      %2708 = vmatprep.subr.mxu0 0.0
      %2709 = vmatpush1.msra.mxu0 0.0
      %2710 = vmatprep.subr.mxu0 0.0
      %2711 = vmatpush1.msra.mxu0 0.0
      %2712 = vmatprep.subr.mxu0 0.0
      %2713 = vmatpush1.msra.mxu0 0.0
      %2714 = vmatprep.subr.mxu0 0.0
      %2715 = vmatpush1.msra.mxu0 0.0
      %2716 = vmatprep.subr.mxu0 0.0
      %2717 = vmatpush1.msra.mxu0 0.0
      %2718 = vmatprep.subr.mxu0 0.0
      %2719 = vmatpush1.msra.mxu0 0.0
      %2720 = vmatprep.subr.mxu0 0.0
      %2721 = vmatpush1.msra.mxu0 0.0
      %2722 = vmatprep.subr.mxu0 0.0
      %2723 = vmatpush1.msra.mxu0 0.0
      %2724 = vmatprep.subr.mxu0 0.0
      %2725 = vmatpush1.msra.mxu0 0.0
      %2726 = vmatprep.subr.mxu0 0.0
      %2727 = vmatpush1.msra.mxu0 0.0
      %2728 = vmatprep.subr.mxu0 0.0
      %2729 = vmatpush1.msra.mxu0 0.0
      %2730 = vmatprep.subr.mxu0 0.0
      %2731 = vmatpush1.msra.mxu0 0.0
      %2732 = vmatprep.subr.mxu0 0.0
      %2733 = vmatpush1.msra.mxu0 0.0
      %2734 = vmatprep.subr.mxu0 0.0
      %2735 = vmatpush1.msra.mxu0 0.0
      %2736 = vmatprep.subr.mxu0 0.0
      %2737 = vmatpush1.msra.mxu0 0.0
      %2738 = vmatprep.subr.mxu0 0.0
      %2739 = vmatpush1.msra.mxu0 0.0
      %2740 = vmatprep.subr.mxu0 0.0
      %2741 = vmatpush1.msra.mxu0 0.0
      %2742 = vmatprep.subr.mxu0 0.0
      %2743 = vmatpush1.msra.mxu0 0.0
      %2744 = vmatprep.subr.mxu0 0.0
      %2745 = vmatpush1.msra.mxu0 0.0
      %2746 = vmatprep.mubr.f32.mxu0 0.0
      %2747 = vmatmul.mubr.f32.gmra.mrb[0].mxu0 %v2653
      %v2748 = vpop.f32.mrb[0].mxu0
      %v2749 = vadd.f32 0.0, %v2748
      %v2750 = vpop.f32.mrb[0].mxu0
      %2751 = vmatprep.mubr.f32.mxu0 0.0
      %2752 = vmatmul.mubr.f32.gmra.mrb[0].mxu0 %v2656
      %v2753 = vpop.f32.mrb[0].mxu0
      %v2754 = vadd.f32 0.0, %v2753
      %v2755 = vpop.f32.mrb[0].mxu0
      %2756 = vmatprep.mubr.f32.mxu0 0.0
      %2757 = vmatmul.mubr.f32.gmra.mrb[0].mxu0 %v2659
      %v2758 = vpop.f32.mrb[0].mxu0
      %v2759 = vadd.f32 0.0, %v2758
      %v2760 = vpop.f32.mrb[0].mxu0
      %2761 = vmatprep.mubr.f32.mxu0 0.0
      %2762 = vmatmul.mubr.f32.gmra.mrb[0].mxu0 %v2662
      %v2763 = vpop.f32.mrb[0].mxu0
      %v2764 = vadd.f32 0.0, %v2763
      %v2765 = vpop.f32.mrb[0].mxu0
      %2766 = vmatprep.mubr.f32.mxu0 0.0
      %2767 = vmatmul.mubr.f32.gmra.mrb[0].mxu0 %v2665
      %v2768 = vpop.f32.mrb[0].mxu0
      %v2769 = vadd.f32 0.0, %v2768
      %v2770 = vpop.f32.mrb[0].mxu0
      %2771 = vmatprep.mubr.f32.mxu0 0.0
      %2772 = vmatmul.mubr.f32.gmra.mrb[0].mxu0 %v2668
      %v2773 = vpop.f32.mrb[0].mxu0
      %v2774 = vadd.f32 0.0, %v2773
      %v2775 = vpop.f32.mrb[0].mxu0
      %2776 = vmatprep.mubr.f32.mxu0 0.0
      %2777 = vmatmul.mubr.f32.gmra.mrb[0].mxu0 %v2671
      %v2778 = vpop.f32.mrb[0].mxu0
      %v2779 = vadd.f32 0.0, %v2778
      %v2780 = vpop.f32.mrb[0].mxu0
      %2781 = vmatprep.mubr.f32.mxu0 0.0
      %2782 = vmatmul.mubr.f32.gmra.mrb[0].mxu0 %v2674
      %v2783 = vpop.f32.mrb[0].mxu0
      %v2784 = vadd.f32 0.0, %v2783
      %v2785 = vpop.f32.mrb[0].mxu0
      %2786 = vmatprep.mubr.f32.mxu0 0.0
      %2787 = vmatmul.mubr.f32.gmra.mrb[0].mxu0 %v2677
      %v2788 = vpop.f32.mrb[0].mxu0
      %v2789 = vadd.f32 0.0, %v2788
      %v2790 = vpop.f32.mrb[0].mxu0
      %2791 = vmatprep.mubr.f32.mxu0 0.0
      %2792 = vmatmul.mubr.f32.gmra.mrb[0].mxu0 %v2680
      %v2793 = vpop.f32.mrb[0].mxu0
      %v2794 = vadd.f32 0.0, %v2793
      %v2795 = vpop.f32.mrb[0].mxu0
      %2796 = vdwg.mxu0
      %v2797 = vadd.f32 %v2270, %v2749
      %v2798 = vadd.f32 %v2275, %v2754
      %v2799 = vadd.f32 %v2280, %v2759
      %v2800 = vadd.f32 %v2285, %v2764
      %v2801 = vadd.f32 %v2290, %v2769
      %v2802 = vadd.f32 %v2295, %v2774
      %v2803 = vadd.f32 %v2300, %v2779
      %v2804 = vadd.f32 %v2305, %v2784
      %v2805 = vadd.f32 %v2310, %v2789
      %v2806 = vadd.f32 %v2315, %v2794
      %vm2807 = vcmp.ge.s32.totalorder %v1308, 24
      %vm2808 = vcmp.lt.s32.totalorder %v1308, 32
      %vm2809 = vmand %vm2807, %vm2808
      %v2810 = vsel %vm2809, 1, 0
      %v2811 = vcvt.s32.f32 %v2810
      %2813 = vrot.lane.b32.xlu0 %v2811, 64
      %v2814 = vpop.permute.xlu0 %2813
      %v2816 = vmul.f32 %v1259, %v2814
      %v2817 = vmul.f32 %v1263, %v2814
      %v2818 = vmul.f32 %v1269, %v2814
      %v2819 = vmul.f32 %v1273, %v2814
      %v2820 = vmul.f32 %v1279, %v2814
      %v2821 = vmul.f32 %v1283, %v2814
      %v2822 = vmul.f32 %v1289, %v2814
      %v2823 = vmul.f32 %v1293, %v2814
      %v2824 = vmul.f32 %v1299, %v2814
      %v2825 = vmul.f32 %v1303, %v2814
      %2836 = vrot.lane.b32.xlu0 %v2816, 64
      %v2837 = vpop.permute.xlu0 %2836
      %2838 = vrot.lane.b32.xlu0 %v2817, 64
      %v2839 = vpop.permute.xlu0 %2838
      %2840 = vrot.lane.b32.xlu0 %v2818, 64
      %v2841 = vpop.permute.xlu0 %2840
      %2842 = vrot.lane.b32.xlu0 %v2819, 64
      %v2843 = vpop.permute.xlu0 %2842
      %2844 = vrot.lane.b32.xlu0 %v2820, 64
      %v2845 = vpop.permute.xlu0 %2844
      %2846 = vrot.lane.b32.xlu0 %v2821, 64
      %v2847 = vpop.permute.xlu0 %2846
      %2848 = vrot.lane.b32.xlu0 %v2822, 64
      %v2849 = vpop.permute.xlu0 %2848
      %2850 = vrot.lane.b32.xlu0 %v2823, 64
      %v2851 = vpop.permute.xlu0 %2850
      %2852 = vrot.lane.b32.xlu0 %v2824, 64
      %v2853 = vpop.permute.xlu0 %2852
      %2854 = vrot.lane.b32.xlu0 %v2825, 64
      %v2855 = vpop.permute.xlu0 %2854
      %v2856 = vsel %vm1208, %v2837, 0
      %v2858 = vsel %vm1208, %v2839, 0
      %v2860 = vsel %vm1208, %v2841, 0
      %v2862 = vsel %vm1208, %v2843, 0
      %v2864 = vsel %vm1208, %v2845, 0
      %v2866 = vsel %vm1208, %v2847, 0
      %v2868 = vsel %vm1208, %v2849, 0
      %v2870 = vsel %vm1208, %v2851, 0
      %v2872 = vsel %vm1208, %v2853, 0
      %v2874 = vsel %vm1208, %v2855, 0
      %2876 = vmatprep.subr.mxu0 0.0
      %2877 = vmatpush1.xpose.msra.mxu0 %v2856
      %2878 = vmatprep.subr.mxu0 0.0
      %2879 = vmatpush1.xpose.msra.mxu0 %v2858
      %2880 = vmatprep.subr.mxu0 0.0
      %2881 = vmatpush1.xpose.msra.mxu0 %v2860
      %2882 = vmatprep.subr.mxu0 0.0
      %2883 = vmatpush1.xpose.msra.mxu0 %v2862
      %2884 = vmatprep.subr.mxu0 0.0
      %2885 = vmatpush1.xpose.msra.mxu0 %v2864
      %2886 = vmatprep.subr.mxu0 0.0
      %2887 = vmatpush1.xpose.msra.mxu0 %v2866
      %2888 = vmatprep.subr.mxu0 0.0
      %2889 = vmatpush1.xpose.msra.mxu0 %v2868
      %2890 = vmatprep.subr.mxu0 0.0
      %2891 = vmatpush1.xpose.msra.mxu0 %v2870
      %2892 = vmatprep.subr.mxu0 0.0
      %2893 = vmatpush1.xpose.msra.mxu0 %v2872
      %2894 = vmatprep.subr.mxu0 0.0
      %2895 = vmatpush1.xpose.msra.mxu0 %v2874
      %2896 = vmatprep.subr.mxu0 0.0
      %2897 = vmatpush1.xpose.msra.mxu0 0.0
      %2898 = vmatprep.subr.mxu0 0.0
      %2899 = vmatpush1.xpose.msra.mxu0 0.0
      %2900 = vmatprep.subr.mxu0 0.0
      %2901 = vmatpush1.xpose.msra.mxu0 0.0
      %2902 = vmatprep.subr.mxu0 0.0
      %2903 = vmatpush1.xpose.msra.mxu0 0.0
      %2904 = vmatprep.subr.mxu0 0.0
      %2905 = vmatpush1.xpose.msra.mxu0 0.0
      %2906 = vmatprep.subr.mxu0 0.0
      %2907 = vmatpush1.xpose.msra.mxu0 0.0
      %2908 = vmatprep.subr.mxu0 0.0
      %2909 = vmatpush1.xpose.msra.mxu0 0.0
      %2910 = vmatprep.subr.mxu0 0.0
      %2911 = vmatpush1.xpose.msra.mxu0 0.0
      %2912 = vmatprep.subr.mxu0 0.0
      %2913 = vmatpush1.xpose.msra.mxu0 0.0
      %2914 = vmatprep.subr.mxu0 0.0
      %2915 = vmatpush1.xpose.msra.mxu0 0.0
      %2916 = vmatprep.subr.mxu0 0.0
      %2917 = vmatpush1.xpose.msra.mxu0 0.0
      %2918 = vmatprep.subr.mxu0 0.0
      %2919 = vmatpush1.xpose.msra.mxu0 0.0
      %2920 = vmatprep.subr.mxu0 0.0
      %2921 = vmatpush1.xpose.msra.mxu0 0.0
      %2922 = vmatprep.subr.mxu0 0.0
      %2923 = vmatpush1.xpose.msra.mxu0 0.0
      %2924 = vmatprep.subr.mxu0 0.0
      %2925 = vmatpush1.xpose.msra.mxu0 0.0
      %2926 = vmatprep.subr.mxu0 0.0
      %2927 = vmatpush1.xpose.msra.mxu0 0.0
      %2928 = vmatprep.subr.mxu0 0.0
      %2929 = vmatpush1.xpose.msra.mxu0 0.0
      %2930 = vmatprep.subr.mxu0 0.0
      %2931 = vmatpush1.xpose.msra.mxu0 0.0
      %2932 = vmatprep.subr.mxu0 0.0
      %2933 = vmatpush1.xpose.msra.mxu0 0.0
      %2934 = vmatprep.subr.mxu0 0.0
      %2935 = vmatpush1.xpose.msra.mxu0 0.0
      %2936 = vmatprep.subr.mxu0 0.0
      %2937 = vmatpush1.xpose.msra.mxu0 0.0
      %2938 = vmatprep.subr.mxu0 0.0
      %2939 = vmatpush1.xpose.msra.mxu0 0.0
      %2940 = vmatprep.mubr.f32.mxu0 0.0
      %2941 = vmatmul.mubr.f32.gmra.mrb[0].mxu0 %v1359
      %v2942 = vpop.f32.mrb[0].mxu0
      %v2943 = vadd.f32 0.0, %v2942
      %v2944 = vpop.f32.mrb[0].mxu0
      %2945 = vmatprep.mubr.f32.mxu0 0.0
      %2946 = vmatmul.mubr.f32.gmra.mrb[0].mxu0 %v1362
      %v2947 = vpop.f32.mrb[0].mxu0
      %v2948 = vadd.f32 0.0, %v2947
      %v2949 = vpop.f32.mrb[0].mxu0
      %2950 = vmatprep.mubr.f32.mxu0 0.0
      %2951 = vmatmul.mubr.f32.gmra.mrb[0].mxu0 %v1365
      %v2952 = vpop.f32.mrb[0].mxu0
      %v2953 = vadd.f32 0.0, %v2952
      %v2954 = vpop.f32.mrb[0].mxu0
      %2955 = vmatprep.mubr.f32.mxu0 0.0
      %2956 = vmatmul.mubr.f32.gmra.mrb[0].mxu0 %v1368
      %v2957 = vpop.f32.mrb[0].mxu0
      %v2958 = vadd.f32 0.0, %v2957
      %v2959 = vpop.f32.mrb[0].mxu0
      %2960 = vmatprep.mubr.f32.mxu0 0.0
      %2961 = vmatmul.mubr.f32.gmra.mrb[0].mxu0 %v1371
      %v2962 = vpop.f32.mrb[0].mxu0
      %v2963 = vadd.f32 0.0, %v2962
      %v2964 = vpop.f32.mrb[0].mxu0
      %2965 = vmatprep.mubr.f32.mxu0 0.0
      %2966 = vmatmul.mubr.f32.gmra.mrb[0].mxu0 %v1374
      %v2967 = vpop.f32.mrb[0].mxu0
      %v2968 = vadd.f32 0.0, %v2967
      %v2969 = vpop.f32.mrb[0].mxu0
      %2970 = vmatprep.mubr.f32.mxu0 0.0
      %2971 = vmatmul.mubr.f32.gmra.mrb[0].mxu0 %v1377
      %v2972 = vpop.f32.mrb[0].mxu0
      %v2973 = vadd.f32 0.0, %v2972
      %v2974 = vpop.f32.mrb[0].mxu0
      %2975 = vmatprep.mubr.f32.mxu0 0.0
      %2976 = vmatmul.mubr.f32.gmra.mrb[0].mxu0 %v1380
      %v2977 = vpop.f32.mrb[0].mxu0
      %v2978 = vadd.f32 0.0, %v2977
      %v2979 = vpop.f32.mrb[0].mxu0
      %2980 = vmatprep.mubr.f32.mxu0 0.0
      %2981 = vmatmul.mubr.f32.gmra.mrb[0].mxu0 %v1383
      %v2982 = vpop.f32.mrb[0].mxu0
      %v2983 = vadd.f32 0.0, %v2982
      %v2984 = vpop.f32.mrb[0].mxu0
      %2985 = vmatprep.mubr.f32.mxu0 0.0
      %2986 = vmatmul.mubr.f32.gmra.mrb[0].mxu0 %v1386
      %v2987 = vpop.f32.mrb[0].mxu0
      %v2988 = vadd.f32 0.0, %v2987
      %v2989 = vpop.f32.mrb[0].mxu0
      %2990 = vdwg.mxu0
      %v2991 = vmul.f32 %v2943, 0.35355338
      %v2992 = vmul.f32 %v2948, 0.35355338
      %v2993 = vmul.f32 %v2953, 0.35355338
      %v2994 = vmul.f32 %v2958, 0.35355338
      %v2995 = vmul.f32 %v2963, 0.35355338
      %v2996 = vmul.f32 %v2968, 0.35355338
      %v2997 = vmul.f32 %v2973, 0.35355338
      %v2998 = vmul.f32 %v2978, 0.35355338
      %v2999 = vmul.f32 %v2983, 0.35355338
      %v3000 = vmul.f32 %v2988, 0.35355338
      %v3001 = vsel %vm1543, -1e+09, %v2991
      %v3002 = vsel %vm1544, -1e+09, %v2992
      %v3003 = vsel %vm1545, -1e+09, %v2993
      %v3004 = vsel %vm1546, -1e+09, %v2994
      %v3005 = vsel %vm1547, -1e+09, %v2995
      %v3006 = vsel %vm1548, -1e+09, %v2996
      %v3007 = vsel %vm1549, -1e+09, %v2997
      %v3008 = vsel %vm1550, -1e+09, %v2998
      %v3009 = vsel %vm1551, -1e+09, %v2999
      %v3010 = vsel %vm1552, -1e+09, %v3000
      %v3011 = vsel %vm1533, -1e+30, %v3001
      %v3012 = vsel %vm1534, -1e+30, %v3002
      %v3013 = vsel %vm1535, -1e+30, %v3003
      %v3014 = vsel %vm1536, -1e+30, %v3004
      %v3015 = vsel %vm1537, -1e+30, %v3005
      %v3016 = vsel %vm1538, -1e+30, %v3006
      %v3017 = vsel %vm1539, -1e+30, %v3007
      %v3018 = vsel %vm1540, -1e+30, %v3008
      %v3019 = vsel %vm1541, -1e+30, %v3009
      %v3020 = vsel %vm1542, -1e+30, %v3010
      %v3021 = vsel %vm1573, %v3011, -inf
      %3022 = vmax.xlane.f32.xlu0 %v3021
      %v3023 = vpop.xlane.xlu0 %3022
      %v3024 = vsel %vm1573, %v3012, -inf
      %3025 = vmax.xlane.f32.xlu0 %v3024
      %v3026 = vpop.xlane.xlu0 %3025
      %v3027 = vsel %vm1573, %v3013, -inf
      %3028 = vmax.xlane.f32.xlu0 %v3027
      %v3029 = vpop.xlane.xlu0 %3028
      %v3030 = vsel %vm1573, %v3014, -inf
      %3031 = vmax.xlane.f32.xlu0 %v3030
      %v3032 = vpop.xlane.xlu0 %3031
      %v3033 = vsel %vm1573, %v3015, -inf
      %3034 = vmax.xlane.f32.xlu0 %v3033
      %v3035 = vpop.xlane.xlu0 %3034
      %v3036 = vsel %vm1573, %v3016, -inf
      %3037 = vmax.xlane.f32.xlu0 %v3036
      %v3038 = vpop.xlane.xlu0 %3037
      %v3039 = vsel %vm1573, %v3017, -inf
      %3040 = vmax.xlane.f32.xlu0 %v3039
      %v3041 = vpop.xlane.xlu0 %3040
      %v3042 = vsel %vm1573, %v3018, -inf
      %3043 = vmax.xlane.f32.xlu0 %v3042
      %v3044 = vpop.xlane.xlu0 %3043
      %v3045 = vsel %vm1573, %v3019, -inf
      %3046 = vmax.xlane.f32.xlu0 %v3045
      %v3047 = vpop.xlane.xlu0 %3046
      %v3048 = vsel %vm1573, %v3020, -inf
      %3049 = vmax.xlane.f32.xlu0 %v3048
      %v3050 = vpop.xlane.xlu0 %3049
      %v3051 = vsub.f32 %v3011, %v3023
      %v3052 = vsub.f32 %v3012, %v3026
      %v3053 = vsub.f32 %v3013, %v3029
      %v3054 = vsub.f32 %v3014, %v3032
      %v3055 = vsub.f32 %v3015, %v3035
      %v3056 = vsub.f32 %v3016, %v3038
      %v3057 = vsub.f32 %v3017, %v3041
      %v3058 = vsub.f32 %v3018, %v3044
      %v3059 = vsub.f32 %v3019, %v3047
      %v3060 = vsub.f32 %v3020, %v3050
      %v3061 = vmul.f32 %v3051, 1.442695
      %v3062 = vpow.pop %v3061
      %v3063 = vmul.f32 %v3052, 1.442695
      %v3064 = vpow.pop %v3063
      %v3065 = vmul.f32 %v3053, 1.442695
      %v3066 = vpow.pop %v3065
      %v3067 = vmul.f32 %v3054, 1.442695
      %v3068 = vpow.pop %v3067
      %v3069 = vmul.f32 %v3055, 1.442695
      %v3070 = vpow.pop %v3069
      %v3071 = vmul.f32 %v3056, 1.442695
      %v3072 = vpow.pop %v3071
      %v3073 = vmul.f32 %v3057, 1.442695
      %v3074 = vpow.pop %v3073
      %v3075 = vmul.f32 %v3058, 1.442695
      %v3076 = vpow.pop %v3075
      %v3077 = vmul.f32 %v3059, 1.442695
      %v3078 = vpow.pop %v3077
      %v3079 = vmul.f32 %v3060, 1.442695
      %v3080 = vpow.pop %v3079
      %v3081 = vsel %vm1573, %v3062, 0.0
      %3082 = vadd.xlane.f32.xlu0 %v3081
      %v3083 = vpop.xlane.xlu0 %3082
      %v3084 = vsel %vm1573, %v3064, 0.0
      %3085 = vadd.xlane.f32.xlu0 %v3084
      %v3086 = vpop.xlane.xlu0 %3085
      %v3087 = vsel %vm1573, %v3066, 0.0
      %3088 = vadd.xlane.f32.xlu0 %v3087
      %v3089 = vpop.xlane.xlu0 %3088
      %v3090 = vsel %vm1573, %v3068, 0.0
      %3091 = vadd.xlane.f32.xlu0 %v3090
      %v3092 = vpop.xlane.xlu0 %3091
      %v3093 = vsel %vm1573, %v3070, 0.0
      %3094 = vadd.xlane.f32.xlu0 %v3093
      %v3095 = vpop.xlane.xlu0 %3094
      %v3096 = vsel %vm1573, %v3072, 0.0
      %3097 = vadd.xlane.f32.xlu0 %v3096
      %v3098 = vpop.xlane.xlu0 %3097
      %v3099 = vsel %vm1573, %v3074, 0.0
      %3100 = vadd.xlane.f32.xlu0 %v3099
      %v3101 = vpop.xlane.xlu0 %3100
      %v3102 = vsel %vm1573, %v3076, 0.0
      %3103 = vadd.xlane.f32.xlu0 %v3102
      %v3104 = vpop.xlane.xlu0 %3103
      %v3105 = vsel %vm1573, %v3078, 0.0
      %3106 = vadd.xlane.f32.xlu0 %v3105
      %v3107 = vpop.xlane.xlu0 %3106
      %v3108 = vsel %vm1573, %v3080, 0.0
      %3109 = vadd.xlane.f32.xlu0 %v3108
      %v3110 = vpop.xlane.xlu0 %3109
      %v3111 = vrcp.pop %v3083
      %v3112 = vmul.f32 %v3062, %v3111
      %v3113 = vrcp.pop %v3086
      %v3114 = vmul.f32 %v3064, %v3113
      %v3115 = vrcp.pop %v3089
      %v3116 = vmul.f32 %v3066, %v3115
      %v3117 = vrcp.pop %v3092
      %v3118 = vmul.f32 %v3068, %v3117
      %v3119 = vrcp.pop %v3095
      %v3120 = vmul.f32 %v3070, %v3119
      %v3121 = vrcp.pop %v3098
      %v3122 = vmul.f32 %v3072, %v3121
      %v3123 = vrcp.pop %v3101
      %v3124 = vmul.f32 %v3074, %v3123
      %v3125 = vrcp.pop %v3104
      %v3126 = vmul.f32 %v3076, %v3125
      %v3127 = vrcp.pop %v3107
      %v3128 = vmul.f32 %v3078, %v3127
      %v3129 = vrcp.pop %v3110
      %v3130 = vmul.f32 %v3080, %v3129
      %v3131 = vmul.f32 %v1261, %v2811
      %v3132 = vmul.f32 %v1265, %v2811
      %v3133 = vmul.f32 %v1271, %v2811
      %v3134 = vmul.f32 %v1275, %v2811
      %v3135 = vmul.f32 %v1281, %v2811
      %v3136 = vmul.f32 %v1285, %v2811
      %v3137 = vmul.f32 %v1291, %v2811
      %v3138 = vmul.f32 %v1295, %v2811
      %v3139 = vmul.f32 %v1301, %v2811
      %v3140 = vmul.f32 %v1305, %v2811
      %v3142 = vsel %vm1573, %v3112, 0
      %v3145 = vsel %vm1573, %v3114, 0
      %v3148 = vsel %vm1573, %v3116, 0
      %v3151 = vsel %vm1573, %v3118, 0
      %v3154 = vsel %vm1573, %v3120, 0
      %v3157 = vsel %vm1573, %v3122, 0
      %v3160 = vsel %vm1573, %v3124, 0
      %v3163 = vsel %vm1573, %v3126, 0
      %v3166 = vsel %vm1573, %v3128, 0
      %v3169 = vsel %vm1573, %v3130, 0
      %3171 = vmatprep.subr.mxu0 0.0
      %3172 = vmatpush1.msra.mxu0 %v3131
      %3173 = vmatprep.subr.mxu0 0.0
      %3174 = vmatpush1.msra.mxu0 %v3132
      %3175 = vmatprep.subr.mxu0 0.0
      %3176 = vmatpush1.msra.mxu0 %v3133
      %3177 = vmatprep.subr.mxu0 0.0
      %3178 = vmatpush1.msra.mxu0 %v3134
      %3179 = vmatprep.subr.mxu0 0.0
      %3180 = vmatpush1.msra.mxu0 %v3135
      %3181 = vmatprep.subr.mxu0 0.0
      %3182 = vmatpush1.msra.mxu0 %v3136
      %3183 = vmatprep.subr.mxu0 0.0
      %3184 = vmatpush1.msra.mxu0 %v3137
      %3185 = vmatprep.subr.mxu0 0.0
      %3186 = vmatpush1.msra.mxu0 %v3138
      %3187 = vmatprep.subr.mxu0 0.0
      %3188 = vmatpush1.msra.mxu0 %v3139
      %3189 = vmatprep.subr.mxu0 0.0
      %3190 = vmatpush1.msra.mxu0 %v3140
      %3191 = vmatprep.subr.mxu0 0.0
      %3192 = vmatpush1.msra.mxu0 0.0
      %3193 = vmatprep.subr.mxu0 0.0
      %3194 = vmatpush1.msra.mxu0 0.0
      %3195 = vmatprep.subr.mxu0 0.0
      %3196 = vmatpush1.msra.mxu0 0.0
      %3197 = vmatprep.subr.mxu0 0.0
      %3198 = vmatpush1.msra.mxu0 0.0
      %3199 = vmatprep.subr.mxu0 0.0
      %3200 = vmatpush1.msra.mxu0 0.0
      %3201 = vmatprep.subr.mxu0 0.0
      %3202 = vmatpush1.msra.mxu0 0.0
      %3203 = vmatprep.subr.mxu0 0.0
      %3204 = vmatpush1.msra.mxu0 0.0
      %3205 = vmatprep.subr.mxu0 0.0
      %3206 = vmatpush1.msra.mxu0 0.0
      %3207 = vmatprep.subr.mxu0 0.0
      %3208 = vmatpush1.msra.mxu0 0.0
      %3209 = vmatprep.subr.mxu0 0.0
      %3210 = vmatpush1.msra.mxu0 0.0
      %3211 = vmatprep.subr.mxu0 0.0
      %3212 = vmatpush1.msra.mxu0 0.0
      %3213 = vmatprep.subr.mxu0 0.0
      %3214 = vmatpush1.msra.mxu0 0.0
      %3215 = vmatprep.subr.mxu0 0.0
      %3216 = vmatpush1.msra.mxu0 0.0
      %3217 = vmatprep.subr.mxu0 0.0
      %3218 = vmatpush1.msra.mxu0 0.0
      %3219 = vmatprep.subr.mxu0 0.0
      %3220 = vmatpush1.msra.mxu0 0.0
      %3221 = vmatprep.subr.mxu0 0.0
      %3222 = vmatpush1.msra.mxu0 0.0
      %3223 = vmatprep.subr.mxu0 0.0
      %3224 = vmatpush1.msra.mxu0 0.0
      %3225 = vmatprep.subr.mxu0 0.0
      %3226 = vmatpush1.msra.mxu0 0.0
      %3227 = vmatprep.subr.mxu0 0.0
      %3228 = vmatpush1.msra.mxu0 0.0
      %3229 = vmatprep.subr.mxu0 0.0
      %3230 = vmatpush1.msra.mxu0 0.0
      %3231 = vmatprep.subr.mxu0 0.0
      %3232 = vmatpush1.msra.mxu0 0.0
      %3233 = vmatprep.subr.mxu0 0.0
      %3234 = vmatpush1.msra.mxu0 0.0
      %3235 = vmatprep.mubr.f32.mxu0 0.0
      %3236 = vmatmul.mubr.f32.gmra.mrb[0].mxu0 %v3142
      %v3237 = vpop.f32.mrb[0].mxu0
      %v3238 = vadd.f32 0.0, %v3237
      %v3239 = vpop.f32.mrb[0].mxu0
      %3240 = vmatprep.mubr.f32.mxu0 0.0
      %3241 = vmatmul.mubr.f32.gmra.mrb[0].mxu0 %v3145
      %v3242 = vpop.f32.mrb[0].mxu0
      %v3243 = vadd.f32 0.0, %v3242
      %v3244 = vpop.f32.mrb[0].mxu0
      %3245 = vmatprep.mubr.f32.mxu0 0.0
      %3246 = vmatmul.mubr.f32.gmra.mrb[0].mxu0 %v3148
      %v3247 = vpop.f32.mrb[0].mxu0
      %v3248 = vadd.f32 0.0, %v3247
      %v3249 = vpop.f32.mrb[0].mxu0
      %3250 = vmatprep.mubr.f32.mxu0 0.0
      %3251 = vmatmul.mubr.f32.gmra.mrb[0].mxu0 %v3151
      %v3252 = vpop.f32.mrb[0].mxu0
      %v3253 = vadd.f32 0.0, %v3252
      %v3254 = vpop.f32.mrb[0].mxu0
      %3255 = vmatprep.mubr.f32.mxu0 0.0
      %3256 = vmatmul.mubr.f32.gmra.mrb[0].mxu0 %v3154
      %v3257 = vpop.f32.mrb[0].mxu0
      %v3258 = vadd.f32 0.0, %v3257
      %v3259 = vpop.f32.mrb[0].mxu0
      %3260 = vmatprep.mubr.f32.mxu0 0.0
      %3261 = vmatmul.mubr.f32.gmra.mrb[0].mxu0 %v3157
      %v3262 = vpop.f32.mrb[0].mxu0
      %v3263 = vadd.f32 0.0, %v3262
      %v3264 = vpop.f32.mrb[0].mxu0
      %3265 = vmatprep.mubr.f32.mxu0 0.0
      %3266 = vmatmul.mubr.f32.gmra.mrb[0].mxu0 %v3160
      %v3267 = vpop.f32.mrb[0].mxu0
      %v3268 = vadd.f32 0.0, %v3267
      %v3269 = vpop.f32.mrb[0].mxu0
      %3270 = vmatprep.mubr.f32.mxu0 0.0
      %3271 = vmatmul.mubr.f32.gmra.mrb[0].mxu0 %v3163
      %v3272 = vpop.f32.mrb[0].mxu0
      %v3273 = vadd.f32 0.0, %v3272
      %v3274 = vpop.f32.mrb[0].mxu0
      %3275 = vmatprep.mubr.f32.mxu0 0.0
      %3276 = vmatmul.mubr.f32.gmra.mrb[0].mxu0 %v3166
      %v3277 = vpop.f32.mrb[0].mxu0
      %v3278 = vadd.f32 0.0, %v3277
      %v3279 = vpop.f32.mrb[0].mxu0
      %3280 = vmatprep.mubr.f32.mxu0 0.0
      %3281 = vmatmul.mubr.f32.gmra.mrb[0].mxu0 %v3169
      %v3282 = vpop.f32.mrb[0].mxu0
      %v3283 = vadd.f32 0.0, %v3282
      %v3284 = vpop.f32.mrb[0].mxu0
      %3285 = vdwg.mxu0
      %v3286 = vadd.f32 %v2797, %v3238
      %v3287 = vadd.f32 %v2798, %v3243
      %v3288 = vadd.f32 %v2799, %v3248
      %v3289 = vadd.f32 %v2800, %v3253
      %v3290 = vadd.f32 %v2801, %v3258
      %v3291 = vadd.f32 %v2802, %v3263
      %v3292 = vadd.f32 %v2803, %v3268
      %v3293 = vadd.f32 %v2804, %v3273
      %v3294 = vadd.f32 %v2805, %v3278
      %v3295 = vadd.f32 %v2806, %v3283
      %vm3296 = vcmp.ge.s32.totalorder %v1308, 32
      %vm3297 = vcmp.lt.s32.totalorder %v1308, 40
      %vm3298 = vmand %vm3296, %vm3297
      %v3299 = vsel %vm3298, 1, 0
      %v3300 = vcvt.s32.f32 %v3299
      %3302 = vrot.lane.b32.xlu0 %v3300, 64
      %v3303 = vpop.permute.xlu0 %3302
      %v3305 = vmul.f32 %v1259, %v3303
      %v3306 = vmul.f32 %v1263, %v3303
      %v3307 = vmul.f32 %v1269, %v3303
      %v3308 = vmul.f32 %v1273, %v3303
      %v3309 = vmul.f32 %v1279, %v3303
      %v3310 = vmul.f32 %v1283, %v3303
      %v3311 = vmul.f32 %v1289, %v3303
      %v3312 = vmul.f32 %v1293, %v3303
      %v3313 = vmul.f32 %v1299, %v3303
      %v3314 = vmul.f32 %v1303, %v3303
      %3325 = vrot.lane.b32.xlu0 %v3305, 64
      %v3326 = vpop.permute.xlu0 %3325
      %3327 = vrot.lane.b32.xlu0 %v3306, 64
      %v3328 = vpop.permute.xlu0 %3327
      %3329 = vrot.lane.b32.xlu0 %v3307, 64
      %v3330 = vpop.permute.xlu0 %3329
      %3331 = vrot.lane.b32.xlu0 %v3308, 64
      %v3332 = vpop.permute.xlu0 %3331
      %3333 = vrot.lane.b32.xlu0 %v3309, 64
      %v3334 = vpop.permute.xlu0 %3333
      %3335 = vrot.lane.b32.xlu0 %v3310, 64
      %v3336 = vpop.permute.xlu0 %3335
      %3337 = vrot.lane.b32.xlu0 %v3311, 64
      %v3338 = vpop.permute.xlu0 %3337
      %3339 = vrot.lane.b32.xlu0 %v3312, 64
      %v3340 = vpop.permute.xlu0 %3339
      %3341 = vrot.lane.b32.xlu0 %v3313, 64
      %v3342 = vpop.permute.xlu0 %3341
      %3343 = vrot.lane.b32.xlu0 %v3314, 64
      %v3344 = vpop.permute.xlu0 %3343
      %v3345 = vsel %vm1208, %v3326, 0
      %v3347 = vsel %vm1208, %v3328, 0
      %v3349 = vsel %vm1208, %v3330, 0
      %v3351 = vsel %vm1208, %v3332, 0
      %v3353 = vsel %vm1208, %v3334, 0
      %v3355 = vsel %vm1208, %v3336, 0
      %v3357 = vsel %vm1208, %v3338, 0
      %v3359 = vsel %vm1208, %v3340, 0
      %v3361 = vsel %vm1208, %v3342, 0
      %v3363 = vsel %vm1208, %v3344, 0
      %3365 = vmatprep.subr.mxu0 0.0
      %3366 = vmatpush1.xpose.msra.mxu0 %v3345
      %3367 = vmatprep.subr.mxu0 0.0
      %3368 = vmatpush1.xpose.msra.mxu0 %v3347
      %3369 = vmatprep.subr.mxu0 0.0
      %3370 = vmatpush1.xpose.msra.mxu0 %v3349
      %3371 = vmatprep.subr.mxu0 0.0
      %3372 = vmatpush1.xpose.msra.mxu0 %v3351
      %3373 = vmatprep.subr.mxu0 0.0
      %3374 = vmatpush1.xpose.msra.mxu0 %v3353
      %3375 = vmatprep.subr.mxu0 0.0
      %3376 = vmatpush1.xpose.msra.mxu0 %v3355
      %3377 = vmatprep.subr.mxu0 0.0
      %3378 = vmatpush1.xpose.msra.mxu0 %v3357
      %3379 = vmatprep.subr.mxu0 0.0
      %3380 = vmatpush1.xpose.msra.mxu0 %v3359
      %3381 = vmatprep.subr.mxu0 0.0
      %3382 = vmatpush1.xpose.msra.mxu0 %v3361
      %3383 = vmatprep.subr.mxu0 0.0
      %3384 = vmatpush1.xpose.msra.mxu0 %v3363
      %3385 = vmatprep.subr.mxu0 0.0
      %3386 = vmatpush1.xpose.msra.mxu0 0.0
      %3387 = vmatprep.subr.mxu0 0.0
      %3388 = vmatpush1.xpose.msra.mxu0 0.0
      %3389 = vmatprep.subr.mxu0 0.0
      %3390 = vmatpush1.xpose.msra.mxu0 0.0
      %3391 = vmatprep.subr.mxu0 0.0
      %3392 = vmatpush1.xpose.msra.mxu0 0.0
      %3393 = vmatprep.subr.mxu0 0.0
      %3394 = vmatpush1.xpose.msra.mxu0 0.0
      %3395 = vmatprep.subr.mxu0 0.0
      %3396 = vmatpush1.xpose.msra.mxu0 0.0
      %3397 = vmatprep.subr.mxu0 0.0
      %3398 = vmatpush1.xpose.msra.mxu0 0.0
      %3399 = vmatprep.subr.mxu0 0.0
      %3400 = vmatpush1.xpose.msra.mxu0 0.0
      %3401 = vmatprep.subr.mxu0 0.0
      %3402 = vmatpush1.xpose.msra.mxu0 0.0
      %3403 = vmatprep.subr.mxu0 0.0
      %3404 = vmatpush1.xpose.msra.mxu0 0.0
      %3405 = vmatprep.subr.mxu0 0.0
      %3406 = vmatpush1.xpose.msra.mxu0 0.0
      %3407 = vmatprep.subr.mxu0 0.0
      %3408 = vmatpush1.xpose.msra.mxu0 0.0
      %3409 = vmatprep.subr.mxu0 0.0
      %3410 = vmatpush1.xpose.msra.mxu0 0.0
      %3411 = vmatprep.subr.mxu0 0.0
      %3412 = vmatpush1.xpose.msra.mxu0 0.0
      %3413 = vmatprep.subr.mxu0 0.0
      %3414 = vmatpush1.xpose.msra.mxu0 0.0
      %3415 = vmatprep.subr.mxu0 0.0
      %3416 = vmatpush1.xpose.msra.mxu0 0.0
      %3417 = vmatprep.subr.mxu0 0.0
      %3418 = vmatpush1.xpose.msra.mxu0 0.0
      %3419 = vmatprep.subr.mxu0 0.0
      %3420 = vmatpush1.xpose.msra.mxu0 0.0
      %3421 = vmatprep.subr.mxu0 0.0
      %3422 = vmatpush1.xpose.msra.mxu0 0.0
      %3423 = vmatprep.subr.mxu0 0.0
      %3424 = vmatpush1.xpose.msra.mxu0 0.0
      %3425 = vmatprep.subr.mxu0 0.0
      %3426 = vmatpush1.xpose.msra.mxu0 0.0
      %3427 = vmatprep.subr.mxu0 0.0
      %3428 = vmatpush1.xpose.msra.mxu0 0.0
      %3429 = vmatprep.mubr.f32.mxu0 0.0
      %3430 = vmatmul.mubr.f32.gmra.mrb[0].mxu0 %v1359
      %v3431 = vpop.f32.mrb[0].mxu0
      %v3432 = vadd.f32 0.0, %v3431
      %v3433 = vpop.f32.mrb[0].mxu0
      %3434 = vmatprep.mubr.f32.mxu0 0.0
      %3435 = vmatmul.mubr.f32.gmra.mrb[0].mxu0 %v1362
      %v3436 = vpop.f32.mrb[0].mxu0
      %v3437 = vadd.f32 0.0, %v3436
      %v3438 = vpop.f32.mrb[0].mxu0
      %3439 = vmatprep.mubr.f32.mxu0 0.0
      %3440 = vmatmul.mubr.f32.gmra.mrb[0].mxu0 %v1365
      %v3441 = vpop.f32.mrb[0].mxu0
      %v3442 = vadd.f32 0.0, %v3441
      %v3443 = vpop.f32.mrb[0].mxu0
      %3444 = vmatprep.mubr.f32.mxu0 0.0
      %3445 = vmatmul.mubr.f32.gmra.mrb[0].mxu0 %v1368
      %v3446 = vpop.f32.mrb[0].mxu0
      %v3447 = vadd.f32 0.0, %v3446
      %v3448 = vpop.f32.mrb[0].mxu0
      %3449 = vmatprep.mubr.f32.mxu0 0.0
      %3450 = vmatmul.mubr.f32.gmra.mrb[0].mxu0 %v1371
      %v3451 = vpop.f32.mrb[0].mxu0
      %v3452 = vadd.f32 0.0, %v3451
      %v3453 = vpop.f32.mrb[0].mxu0
      %3454 = vmatprep.mubr.f32.mxu0 0.0
      %3455 = vmatmul.mubr.f32.gmra.mrb[0].mxu0 %v1374
      %v3456 = vpop.f32.mrb[0].mxu0
      %v3457 = vadd.f32 0.0, %v3456
      %v3458 = vpop.f32.mrb[0].mxu0
      %3459 = vmatprep.mubr.f32.mxu0 0.0
      %3460 = vmatmul.mubr.f32.gmra.mrb[0].mxu0 %v1377
      %v3461 = vpop.f32.mrb[0].mxu0
      %v3462 = vadd.f32 0.0, %v3461
      %v3463 = vpop.f32.mrb[0].mxu0
      %3464 = vmatprep.mubr.f32.mxu0 0.0
      %3465 = vmatmul.mubr.f32.gmra.mrb[0].mxu0 %v1380
      %v3466 = vpop.f32.mrb[0].mxu0
      %v3467 = vadd.f32 0.0, %v3466
      %v3468 = vpop.f32.mrb[0].mxu0
      %3469 = vmatprep.mubr.f32.mxu0 0.0
      %3470 = vmatmul.mubr.f32.gmra.mrb[0].mxu0 %v1383
      %v3471 = vpop.f32.mrb[0].mxu0
      %v3472 = vadd.f32 0.0, %v3471
      %v3473 = vpop.f32.mrb[0].mxu0
      %3474 = vmatprep.mubr.f32.mxu0 0.0
      %3475 = vmatmul.mubr.f32.gmra.mrb[0].mxu0 %v1386
      %v3476 = vpop.f32.mrb[0].mxu0
      %v3477 = vadd.f32 0.0, %v3476
      %v3478 = vpop.f32.mrb[0].mxu0
      %3479 = vdwg.mxu0
      %v3480 = vmul.f32 %v3432, 0.35355338
      %v3481 = vmul.f32 %v3437, 0.35355338
      %v3482 = vmul.f32 %v3442, 0.35355338
      %v3483 = vmul.f32 %v3447, 0.35355338
      %v3484 = vmul.f32 %v3452, 0.35355338
      %v3485 = vmul.f32 %v3457, 0.35355338
      %v3486 = vmul.f32 %v3462, 0.35355338
      %v3487 = vmul.f32 %v3467, 0.35355338
      %v3488 = vmul.f32 %v3472, 0.35355338
      %v3489 = vmul.f32 %v3477, 0.35355338
      %v3490 = vsel %vm1543, -1e+09, %v3480
      %v3491 = vsel %vm1544, -1e+09, %v3481
      %v3492 = vsel %vm1545, -1e+09, %v3482
      %v3493 = vsel %vm1546, -1e+09, %v3483
      %v3494 = vsel %vm1547, -1e+09, %v3484
      %v3495 = vsel %vm1548, -1e+09, %v3485
      %v3496 = vsel %vm1549, -1e+09, %v3486
      %v3497 = vsel %vm1550, -1e+09, %v3487
      %v3498 = vsel %vm1551, -1e+09, %v3488
      %v3499 = vsel %vm1552, -1e+09, %v3489
      %v3500 = vsel %vm1533, -1e+30, %v3490
      %v3501 = vsel %vm1534, -1e+30, %v3491
      %v3502 = vsel %vm1535, -1e+30, %v3492
      %v3503 = vsel %vm1536, -1e+30, %v3493
      %v3504 = vsel %vm1537, -1e+30, %v3494
      %v3505 = vsel %vm1538, -1e+30, %v3495
      %v3506 = vsel %vm1539, -1e+30, %v3496
      %v3507 = vsel %vm1540, -1e+30, %v3497
      %v3508 = vsel %vm1541, -1e+30, %v3498
      %v3509 = vsel %vm1542, -1e+30, %v3499
      %v3510 = vsel %vm1573, %v3500, -inf
      %3511 = vmax.xlane.f32.xlu0 %v3510
      %v3512 = vpop.xlane.xlu0 %3511
      %v3513 = vsel %vm1573, %v3501, -inf
      %3514 = vmax.xlane.f32.xlu0 %v3513
      %v3515 = vpop.xlane.xlu0 %3514
      %v3516 = vsel %vm1573, %v3502, -inf
      %3517 = vmax.xlane.f32.xlu0 %v3516
      %v3518 = vpop.xlane.xlu0 %3517
      %v3519 = vsel %vm1573, %v3503, -inf
      %3520 = vmax.xlane.f32.xlu0 %v3519
      %v3521 = vpop.xlane.xlu0 %3520
      %v3522 = vsel %vm1573, %v3504, -inf
      %3523 = vmax.xlane.f32.xlu0 %v3522
      %v3524 = vpop.xlane.xlu0 %3523
      %v3525 = vsel %vm1573, %v3505, -inf
      %3526 = vmax.xlane.f32.xlu0 %v3525
      %v3527 = vpop.xlane.xlu0 %3526
      %v3528 = vsel %vm1573, %v3506, -inf
      %3529 = vmax.xlane.f32.xlu0 %v3528
      %v3530 = vpop.xlane.xlu0 %3529
      %v3531 = vsel %vm1573, %v3507, -inf
      %3532 = vmax.xlane.f32.xlu0 %v3531
      %v3533 = vpop.xlane.xlu0 %3532
      %v3534 = vsel %vm1573, %v3508, -inf
      %3535 = vmax.xlane.f32.xlu0 %v3534
      %v3536 = vpop.xlane.xlu0 %3535
      %v3537 = vsel %vm1573, %v3509, -inf
      %3538 = vmax.xlane.f32.xlu0 %v3537
      %v3539 = vpop.xlane.xlu0 %3538
      %v3540 = vsub.f32 %v3500, %v3512
      %v3541 = vsub.f32 %v3501, %v3515
      %v3542 = vsub.f32 %v3502, %v3518
      %v3543 = vsub.f32 %v3503, %v3521
      %v3544 = vsub.f32 %v3504, %v3524
      %v3545 = vsub.f32 %v3505, %v3527
      %v3546 = vsub.f32 %v3506, %v3530
      %v3547 = vsub.f32 %v3507, %v3533
      %v3548 = vsub.f32 %v3508, %v3536
      %v3549 = vsub.f32 %v3509, %v3539
      %v3550 = vmul.f32 %v3540, 1.442695
      %v3551 = vpow.pop %v3550
      %v3552 = vmul.f32 %v3541, 1.442695
      %v3553 = vpow.pop %v3552
      %v3554 = vmul.f32 %v3542, 1.442695
      %v3555 = vpow.pop %v3554
      %v3556 = vmul.f32 %v3543, 1.442695
      %v3557 = vpow.pop %v3556
      %v3558 = vmul.f32 %v3544, 1.442695
      %v3559 = vpow.pop %v3558
      %v3560 = vmul.f32 %v3545, 1.442695
      %v3561 = vpow.pop %v3560
      %v3562 = vmul.f32 %v3546, 1.442695
      %v3563 = vpow.pop %v3562
      %v3564 = vmul.f32 %v3547, 1.442695
      %v3565 = vpow.pop %v3564
      %v3566 = vmul.f32 %v3548, 1.442695
      %v3567 = vpow.pop %v3566
      %v3568 = vmul.f32 %v3549, 1.442695
      %v3569 = vpow.pop %v3568
      %v3570 = vsel %vm1573, %v3551, 0.0
      %3571 = vadd.xlane.f32.xlu0 %v3570
      %v3572 = vpop.xlane.xlu0 %3571
      %v3573 = vsel %vm1573, %v3553, 0.0
      %3574 = vadd.xlane.f32.xlu0 %v3573
      %v3575 = vpop.xlane.xlu0 %3574
      %v3576 = vsel %vm1573, %v3555, 0.0
      %3577 = vadd.xlane.f32.xlu0 %v3576
      %v3578 = vpop.xlane.xlu0 %3577
      %v3579 = vsel %vm1573, %v3557, 0.0
      %3580 = vadd.xlane.f32.xlu0 %v3579
      %v3581 = vpop.xlane.xlu0 %3580
      %v3582 = vsel %vm1573, %v3559, 0.0
      %3583 = vadd.xlane.f32.xlu0 %v3582
      %v3584 = vpop.xlane.xlu0 %3583
      %v3585 = vsel %vm1573, %v3561, 0.0
      %3586 = vadd.xlane.f32.xlu0 %v3585
      %v3587 = vpop.xlane.xlu0 %3586
      %v3588 = vsel %vm1573, %v3563, 0.0
      %3589 = vadd.xlane.f32.xlu0 %v3588
      %v3590 = vpop.xlane.xlu0 %3589
      %v3591 = vsel %vm1573, %v3565, 0.0
      %3592 = vadd.xlane.f32.xlu0 %v3591
      %v3593 = vpop.xlane.xlu0 %3592
      %v3594 = vsel %vm1573, %v3567, 0.0
      %3595 = vadd.xlane.f32.xlu0 %v3594
      %v3596 = vpop.xlane.xlu0 %3595
      %v3597 = vsel %vm1573, %v3569, 0.0
      %3598 = vadd.xlane.f32.xlu0 %v3597
      %v3599 = vpop.xlane.xlu0 %3598
      %v3600 = vrcp.pop %v3572
      %v3601 = vmul.f32 %v3551, %v3600
      %v3602 = vrcp.pop %v3575
      %v3603 = vmul.f32 %v3553, %v3602
      %v3604 = vrcp.pop %v3578
      %v3605 = vmul.f32 %v3555, %v3604
      %v3606 = vrcp.pop %v3581
      %v3607 = vmul.f32 %v3557, %v3606
      %v3608 = vrcp.pop %v3584
      %v3609 = vmul.f32 %v3559, %v3608
      %v3610 = vrcp.pop %v3587
      %v3611 = vmul.f32 %v3561, %v3610
      %v3612 = vrcp.pop %v3590
      %v3613 = vmul.f32 %v3563, %v3612
      %v3614 = vrcp.pop %v3593
      %v3615 = vmul.f32 %v3565, %v3614
      %v3616 = vrcp.pop %v3596
      %v3617 = vmul.f32 %v3567, %v3616
      %v3618 = vrcp.pop %v3599
      %v3619 = vmul.f32 %v3569, %v3618
      %v3620 = vmul.f32 %v1261, %v3300
      %v3621 = vmul.f32 %v1265, %v3300
      %v3622 = vmul.f32 %v1271, %v3300
      %v3623 = vmul.f32 %v1275, %v3300
      %v3624 = vmul.f32 %v1281, %v3300
      %v3625 = vmul.f32 %v1285, %v3300
      %v3626 = vmul.f32 %v1291, %v3300
      %v3627 = vmul.f32 %v1295, %v3300
      %v3628 = vmul.f32 %v1301, %v3300
      %v3629 = vmul.f32 %v1305, %v3300
      %v3631 = vsel %vm1573, %v3601, 0
      %v3634 = vsel %vm1573, %v3603, 0
      %v3637 = vsel %vm1573, %v3605, 0
      %v3640 = vsel %vm1573, %v3607, 0
      %v3643 = vsel %vm1573, %v3609, 0
      %v3646 = vsel %vm1573, %v3611, 0
      %v3649 = vsel %vm1573, %v3613, 0
      %v3652 = vsel %vm1573, %v3615, 0
      %v3655 = vsel %vm1573, %v3617, 0
      %v3658 = vsel %vm1573, %v3619, 0
      %3660 = vmatprep.subr.mxu0 0.0
      %3661 = vmatpush1.msra.mxu0 %v3620
      %3662 = vmatprep.subr.mxu0 0.0
      %3663 = vmatpush1.msra.mxu0 %v3621
      %3664 = vmatprep.subr.mxu0 0.0
      %3665 = vmatpush1.msra.mxu0 %v3622
      %3666 = vmatprep.subr.mxu0 0.0
      %3667 = vmatpush1.msra.mxu0 %v3623
      %3668 = vmatprep.subr.mxu0 0.0
      %3669 = vmatpush1.msra.mxu0 %v3624
      %3670 = vmatprep.subr.mxu0 0.0
      %3671 = vmatpush1.msra.mxu0 %v3625
      %3672 = vmatprep.subr.mxu0 0.0
      %3673 = vmatpush1.msra.mxu0 %v3626
      %3674 = vmatprep.subr.mxu0 0.0
      %3675 = vmatpush1.msra.mxu0 %v3627
      %3676 = vmatprep.subr.mxu0 0.0
      %3677 = vmatpush1.msra.mxu0 %v3628
      %3678 = vmatprep.subr.mxu0 0.0
      %3679 = vmatpush1.msra.mxu0 %v3629
      %3680 = vmatprep.subr.mxu0 0.0
      %3681 = vmatpush1.msra.mxu0 0.0
      %3682 = vmatprep.subr.mxu0 0.0
      %3683 = vmatpush1.msra.mxu0 0.0
      %3684 = vmatprep.subr.mxu0 0.0
      %3685 = vmatpush1.msra.mxu0 0.0
      %3686 = vmatprep.subr.mxu0 0.0
      %3687 = vmatpush1.msra.mxu0 0.0
      %3688 = vmatprep.subr.mxu0 0.0
      %3689 = vmatpush1.msra.mxu0 0.0
      %3690 = vmatprep.subr.mxu0 0.0
      %3691 = vmatpush1.msra.mxu0 0.0
      %3692 = vmatprep.subr.mxu0 0.0
      %3693 = vmatpush1.msra.mxu0 0.0
      %3694 = vmatprep.subr.mxu0 0.0
      %3695 = vmatpush1.msra.mxu0 0.0
      %3696 = vmatprep.subr.mxu0 0.0
      %3697 = vmatpush1.msra.mxu0 0.0
      %3698 = vmatprep.subr.mxu0 0.0
      %3699 = vmatpush1.msra.mxu0 0.0
      %3700 = vmatprep.subr.mxu0 0.0
      %3701 = vmatpush1.msra.mxu0 0.0
      %3702 = vmatprep.subr.mxu0 0.0
      %3703 = vmatpush1.msra.mxu0 0.0
      %3704 = vmatprep.subr.mxu0 0.0
      %3705 = vmatpush1.msra.mxu0 0.0
      %3706 = vmatprep.subr.mxu0 0.0
      %3707 = vmatpush1.msra.mxu0 0.0
      %3708 = vmatprep.subr.mxu0 0.0
      %3709 = vmatpush1.msra.mxu0 0.0
      %3710 = vmatprep.subr.mxu0 0.0
      %3711 = vmatpush1.msra.mxu0 0.0
      %3712 = vmatprep.subr.mxu0 0.0
      %3713 = vmatpush1.msra.mxu0 0.0
      %3714 = vmatprep.subr.mxu0 0.0
      %3715 = vmatpush1.msra.mxu0 0.0
      %3716 = vmatprep.subr.mxu0 0.0
      %3717 = vmatpush1.msra.mxu0 0.0
      %3718 = vmatprep.subr.mxu0 0.0
      %3719 = vmatpush1.msra.mxu0 0.0
      %3720 = vmatprep.subr.mxu0 0.0
      %3721 = vmatpush1.msra.mxu0 0.0
      %3722 = vmatprep.subr.mxu0 0.0
      %3723 = vmatpush1.msra.mxu0 0.0
      %3724 = vmatprep.mubr.f32.mxu0 0.0
      %3725 = vmatmul.mubr.f32.gmra.mrb[0].mxu0 %v3631
      %v3726 = vpop.f32.mrb[0].mxu0
      %v3727 = vadd.f32 0.0, %v3726
      %v3728 = vpop.f32.mrb[0].mxu0
      %3729 = vmatprep.mubr.f32.mxu0 0.0
      %3730 = vmatmul.mubr.f32.gmra.mrb[0].mxu0 %v3634
      %v3731 = vpop.f32.mrb[0].mxu0
      %v3732 = vadd.f32 0.0, %v3731
      %v3733 = vpop.f32.mrb[0].mxu0
      %3734 = vmatprep.mubr.f32.mxu0 0.0
      %3735 = vmatmul.mubr.f32.gmra.mrb[0].mxu0 %v3637
      %v3736 = vpop.f32.mrb[0].mxu0
      %v3737 = vadd.f32 0.0, %v3736
      %v3738 = vpop.f32.mrb[0].mxu0
      %3739 = vmatprep.mubr.f32.mxu0 0.0
      %3740 = vmatmul.mubr.f32.gmra.mrb[0].mxu0 %v3640
      %v3741 = vpop.f32.mrb[0].mxu0
      %v3742 = vadd.f32 0.0, %v3741
      %v3743 = vpop.f32.mrb[0].mxu0
      %3744 = vmatprep.mubr.f32.mxu0 0.0
      %3745 = vmatmul.mubr.f32.gmra.mrb[0].mxu0 %v3643
      %v3746 = vpop.f32.mrb[0].mxu0
      %v3747 = vadd.f32 0.0, %v3746
      %v3748 = vpop.f32.mrb[0].mxu0
      %3749 = vmatprep.mubr.f32.mxu0 0.0
      %3750 = vmatmul.mubr.f32.gmra.mrb[0].mxu0 %v3646
      %v3751 = vpop.f32.mrb[0].mxu0
      %v3752 = vadd.f32 0.0, %v3751
      %v3753 = vpop.f32.mrb[0].mxu0
      %3754 = vmatprep.mubr.f32.mxu0 0.0
      %3755 = vmatmul.mubr.f32.gmra.mrb[0].mxu0 %v3649
      %v3756 = vpop.f32.mrb[0].mxu0
      %v3757 = vadd.f32 0.0, %v3756
      %v3758 = vpop.f32.mrb[0].mxu0
      %3759 = vmatprep.mubr.f32.mxu0 0.0
      %3760 = vmatmul.mubr.f32.gmra.mrb[0].mxu0 %v3652
      %v3761 = vpop.f32.mrb[0].mxu0
      %v3762 = vadd.f32 0.0, %v3761
      %v3763 = vpop.f32.mrb[0].mxu0
      %3764 = vmatprep.mubr.f32.mxu0 0.0
      %3765 = vmatmul.mubr.f32.gmra.mrb[0].mxu0 %v3655
      %v3766 = vpop.f32.mrb[0].mxu0
      %v3767 = vadd.f32 0.0, %v3766
      %v3768 = vpop.f32.mrb[0].mxu0
      %3769 = vmatprep.mubr.f32.mxu0 0.0
      %3770 = vmatmul.mubr.f32.gmra.mrb[0].mxu0 %v3658
      %v3771 = vpop.f32.mrb[0].mxu0
      %v3772 = vadd.f32 0.0, %v3771
      %v3773 = vpop.f32.mrb[0].mxu0
      %3774 = vdwg.mxu0
      %v3775 = vadd.f32 %v3286, %v3727
      %v3776 = vadd.f32 %v3287, %v3732
      %v3777 = vadd.f32 %v3288, %v3737
      %v3778 = vadd.f32 %v3289, %v3742
      %v3779 = vadd.f32 %v3290, %v3747
      %v3780 = vadd.f32 %v3291, %v3752
      %v3781 = vadd.f32 %v3292, %v3757
      %v3782 = vadd.f32 %v3293, %v3762
      %v3783 = vadd.f32 %v3294, %v3767
      %v3784 = vadd.f32 %v3295, %v3772
      %vm3785 = vcmp.ge.s32.totalorder %v1308, 40
      %vm3786 = vcmp.lt.s32.totalorder %v1308, 48
      %vm3787 = vmand %vm3785, %vm3786
      %v3788 = vsel %vm3787, 1, 0
      %v3789 = vcvt.s32.f32 %v3788
      %3791 = vrot.lane.b32.xlu0 %v3789, 64
      %v3792 = vpop.permute.xlu0 %3791
      %v3794 = vmul.f32 %v1259, %v3792
      %v3795 = vmul.f32 %v1263, %v3792
      %v3796 = vmul.f32 %v1269, %v3792
      %v3797 = vmul.f32 %v1273, %v3792
      %v3798 = vmul.f32 %v1279, %v3792
      %v3799 = vmul.f32 %v1283, %v3792
      %v3800 = vmul.f32 %v1289, %v3792
      %v3801 = vmul.f32 %v1293, %v3792
      %v3802 = vmul.f32 %v1299, %v3792
      %v3803 = vmul.f32 %v1303, %v3792
      %3814 = vrot.lane.b32.xlu0 %v3794, 64
      %v3815 = vpop.permute.xlu0 %3814
      %3816 = vrot.lane.b32.xlu0 %v3795, 64
      %v3817 = vpop.permute.xlu0 %3816
      %3818 = vrot.lane.b32.xlu0 %v3796, 64
      %v3819 = vpop.permute.xlu0 %3818
      %3820 = vrot.lane.b32.xlu0 %v3797, 64
      %v3821 = vpop.permute.xlu0 %3820
      %3822 = vrot.lane.b32.xlu0 %v3798, 64
      %v3823 = vpop.permute.xlu0 %3822
      %3824 = vrot.lane.b32.xlu0 %v3799, 64
      %v3825 = vpop.permute.xlu0 %3824
      %3826 = vrot.lane.b32.xlu0 %v3800, 64
      %v3827 = vpop.permute.xlu0 %3826
      %3828 = vrot.lane.b32.xlu0 %v3801, 64
      %v3829 = vpop.permute.xlu0 %3828
      %3830 = vrot.lane.b32.xlu0 %v3802, 64
      %v3831 = vpop.permute.xlu0 %3830
      %3832 = vrot.lane.b32.xlu0 %v3803, 64
      %v3833 = vpop.permute.xlu0 %3832
      %v3834 = vsel %vm1208, %v3815, 0
      %v3836 = vsel %vm1208, %v3817, 0
      %v3838 = vsel %vm1208, %v3819, 0
      %v3840 = vsel %vm1208, %v3821, 0
      %v3842 = vsel %vm1208, %v3823, 0
      %v3844 = vsel %vm1208, %v3825, 0
      %v3846 = vsel %vm1208, %v3827, 0
      %v3848 = vsel %vm1208, %v3829, 0
      %v3850 = vsel %vm1208, %v3831, 0
      %v3852 = vsel %vm1208, %v3833, 0
      %3854 = vmatprep.subr.mxu0 0.0
      %3855 = vmatpush1.xpose.msra.mxu0 %v3834
      %3856 = vmatprep.subr.mxu0 0.0
      %3857 = vmatpush1.xpose.msra.mxu0 %v3836
      %3858 = vmatprep.subr.mxu0 0.0
      %3859 = vmatpush1.xpose.msra.mxu0 %v3838
      %3860 = vmatprep.subr.mxu0 0.0
      %3861 = vmatpush1.xpose.msra.mxu0 %v3840
      %3862 = vmatprep.subr.mxu0 0.0
      %3863 = vmatpush1.xpose.msra.mxu0 %v3842
      %3864 = vmatprep.subr.mxu0 0.0
      %3865 = vmatpush1.xpose.msra.mxu0 %v3844
      %3866 = vmatprep.subr.mxu0 0.0
      %3867 = vmatpush1.xpose.msra.mxu0 %v3846
      %3868 = vmatprep.subr.mxu0 0.0
      %3869 = vmatpush1.xpose.msra.mxu0 %v3848
      %3870 = vmatprep.subr.mxu0 0.0
      %3871 = vmatpush1.xpose.msra.mxu0 %v3850
      %3872 = vmatprep.subr.mxu0 0.0
      %3873 = vmatpush1.xpose.msra.mxu0 %v3852
      %3874 = vmatprep.subr.mxu0 0.0
      %3875 = vmatpush1.xpose.msra.mxu0 0.0
      %3876 = vmatprep.subr.mxu0 0.0
      %3877 = vmatpush1.xpose.msra.mxu0 0.0
      %3878 = vmatprep.subr.mxu0 0.0
      %3879 = vmatpush1.xpose.msra.mxu0 0.0
      %3880 = vmatprep.subr.mxu0 0.0
      %3881 = vmatpush1.xpose.msra.mxu0 0.0
      %3882 = vmatprep.subr.mxu0 0.0
      %3883 = vmatpush1.xpose.msra.mxu0 0.0
      %3884 = vmatprep.subr.mxu0 0.0
      %3885 = vmatpush1.xpose.msra.mxu0 0.0
      %3886 = vmatprep.subr.mxu0 0.0
      %3887 = vmatpush1.xpose.msra.mxu0 0.0
      %3888 = vmatprep.subr.mxu0 0.0
      %3889 = vmatpush1.xpose.msra.mxu0 0.0
      %3890 = vmatprep.subr.mxu0 0.0
      %3891 = vmatpush1.xpose.msra.mxu0 0.0
      %3892 = vmatprep.subr.mxu0 0.0
      %3893 = vmatpush1.xpose.msra.mxu0 0.0
      %3894 = vmatprep.subr.mxu0 0.0
      %3895 = vmatpush1.xpose.msra.mxu0 0.0
      %3896 = vmatprep.subr.mxu0 0.0
      %3897 = vmatpush1.xpose.msra.mxu0 0.0
      %3898 = vmatprep.subr.mxu0 0.0
      %3899 = vmatpush1.xpose.msra.mxu0 0.0
      %3900 = vmatprep.subr.mxu0 0.0
      %3901 = vmatpush1.xpose.msra.mxu0 0.0
      %3902 = vmatprep.subr.mxu0 0.0
      %3903 = vmatpush1.xpose.msra.mxu0 0.0
      %3904 = vmatprep.subr.mxu0 0.0
      %3905 = vmatpush1.xpose.msra.mxu0 0.0
      %3906 = vmatprep.subr.mxu0 0.0
      %3907 = vmatpush1.xpose.msra.mxu0 0.0
      %3908 = vmatprep.subr.mxu0 0.0
      %3909 = vmatpush1.xpose.msra.mxu0 0.0
      %3910 = vmatprep.subr.mxu0 0.0
      %3911 = vmatpush1.xpose.msra.mxu0 0.0
      %3912 = vmatprep.subr.mxu0 0.0
      %3913 = vmatpush1.xpose.msra.mxu0 0.0
      %3914 = vmatprep.subr.mxu0 0.0
      %3915 = vmatpush1.xpose.msra.mxu0 0.0
      %3916 = vmatprep.subr.mxu0 0.0
      %3917 = vmatpush1.xpose.msra.mxu0 0.0
      %3918 = vmatprep.mubr.f32.mxu0 0.0
      %3919 = vmatmul.mubr.f32.gmra.mrb[0].mxu0 %v1359
      %v3920 = vpop.f32.mrb[0].mxu0
      %v3921 = vadd.f32 0.0, %v3920
      %v3922 = vpop.f32.mrb[0].mxu0
      %3923 = vmatprep.mubr.f32.mxu0 0.0
      %3924 = vmatmul.mubr.f32.gmra.mrb[0].mxu0 %v1362
      %v3925 = vpop.f32.mrb[0].mxu0
      %v3926 = vadd.f32 0.0, %v3925
      %v3927 = vpop.f32.mrb[0].mxu0
      %3928 = vmatprep.mubr.f32.mxu0 0.0
      %3929 = vmatmul.mubr.f32.gmra.mrb[0].mxu0 %v1365
      %v3930 = vpop.f32.mrb[0].mxu0
      %v3931 = vadd.f32 0.0, %v3930
      %v3932 = vpop.f32.mrb[0].mxu0
      %3933 = vmatprep.mubr.f32.mxu0 0.0
      %3934 = vmatmul.mubr.f32.gmra.mrb[0].mxu0 %v1368
      %v3935 = vpop.f32.mrb[0].mxu0
      %v3936 = vadd.f32 0.0, %v3935
      %v3937 = vpop.f32.mrb[0].mxu0
      %3938 = vmatprep.mubr.f32.mxu0 0.0
      %3939 = vmatmul.mubr.f32.gmra.mrb[0].mxu0 %v1371
      %v3940 = vpop.f32.mrb[0].mxu0
      %v3941 = vadd.f32 0.0, %v3940
      %v3942 = vpop.f32.mrb[0].mxu0
      %3943 = vmatprep.mubr.f32.mxu0 0.0
      %3944 = vmatmul.mubr.f32.gmra.mrb[0].mxu0 %v1374
      %v3945 = vpop.f32.mrb[0].mxu0
      %v3946 = vadd.f32 0.0, %v3945
      %v3947 = vpop.f32.mrb[0].mxu0
      %3948 = vmatprep.mubr.f32.mxu0 0.0
      %3949 = vmatmul.mubr.f32.gmra.mrb[0].mxu0 %v1377
      %v3950 = vpop.f32.mrb[0].mxu0
      %v3951 = vadd.f32 0.0, %v3950
      %v3952 = vpop.f32.mrb[0].mxu0
      %3953 = vmatprep.mubr.f32.mxu0 0.0
      %3954 = vmatmul.mubr.f32.gmra.mrb[0].mxu0 %v1380
      %v3955 = vpop.f32.mrb[0].mxu0
      %v3956 = vadd.f32 0.0, %v3955
      %v3957 = vpop.f32.mrb[0].mxu0
      %3958 = vmatprep.mubr.f32.mxu0 0.0
      %3959 = vmatmul.mubr.f32.gmra.mrb[0].mxu0 %v1383
      %v3960 = vpop.f32.mrb[0].mxu0
      %v3961 = vadd.f32 0.0, %v3960
      %v3962 = vpop.f32.mrb[0].mxu0
      %3963 = vmatprep.mubr.f32.mxu0 0.0
      %3964 = vmatmul.mubr.f32.gmra.mrb[0].mxu0 %v1386
      %v3965 = vpop.f32.mrb[0].mxu0
      %v3966 = vadd.f32 0.0, %v3965
      %v3967 = vpop.f32.mrb[0].mxu0
      %3968 = vdwg.mxu0
      %v3969 = vmul.f32 %v3921, 0.35355338
      %v3970 = vmul.f32 %v3926, 0.35355338
      %v3971 = vmul.f32 %v3931, 0.35355338
      %v3972 = vmul.f32 %v3936, 0.35355338
      %v3973 = vmul.f32 %v3941, 0.35355338
      %v3974 = vmul.f32 %v3946, 0.35355338
      %v3975 = vmul.f32 %v3951, 0.35355338
      %v3976 = vmul.f32 %v3956, 0.35355338
      %v3977 = vmul.f32 %v3961, 0.35355338
      %v3978 = vmul.f32 %v3966, 0.35355338
      %v3979 = vsel %vm1543, -1e+09, %v3969
      %v3980 = vsel %vm1544, -1e+09, %v3970
      %v3981 = vsel %vm1545, -1e+09, %v3971
      %v3982 = vsel %vm1546, -1e+09, %v3972
      %v3983 = vsel %vm1547, -1e+09, %v3973
      %v3984 = vsel %vm1548, -1e+09, %v3974
      %v3985 = vsel %vm1549, -1e+09, %v3975
      %v3986 = vsel %vm1550, -1e+09, %v3976
      %v3987 = vsel %vm1551, -1e+09, %v3977
      %v3988 = vsel %vm1552, -1e+09, %v3978
      %v3989 = vsel %vm1533, -1e+30, %v3979
      %v3990 = vsel %vm1534, -1e+30, %v3980
      %v3991 = vsel %vm1535, -1e+30, %v3981
      %v3992 = vsel %vm1536, -1e+30, %v3982
      %v3993 = vsel %vm1537, -1e+30, %v3983
      %v3994 = vsel %vm1538, -1e+30, %v3984
      %v3995 = vsel %vm1539, -1e+30, %v3985
      %v3996 = vsel %vm1540, -1e+30, %v3986
      %v3997 = vsel %vm1541, -1e+30, %v3987
      %v3998 = vsel %vm1542, -1e+30, %v3988
      %v3999 = vsel %vm1573, %v3989, -inf
      %4000 = vmax.xlane.f32.xlu0 %v3999
      %v4001 = vpop.xlane.xlu0 %4000
      %v4002 = vsel %vm1573, %v3990, -inf
      %4003 = vmax.xlane.f32.xlu0 %v4002
      %v4004 = vpop.xlane.xlu0 %4003
      %v4005 = vsel %vm1573, %v3991, -inf
      %4006 = vmax.xlane.f32.xlu0 %v4005
      %v4007 = vpop.xlane.xlu0 %4006
      %v4008 = vsel %vm1573, %v3992, -inf
      %4009 = vmax.xlane.f32.xlu0 %v4008
      %v4010 = vpop.xlane.xlu0 %4009
      %v4011 = vsel %vm1573, %v3993, -inf
      %4012 = vmax.xlane.f32.xlu0 %v4011
      %v4013 = vpop.xlane.xlu0 %4012
      %v4014 = vsel %vm1573, %v3994, -inf
      %4015 = vmax.xlane.f32.xlu0 %v4014
      %v4016 = vpop.xlane.xlu0 %4015
      %v4017 = vsel %vm1573, %v3995, -inf
      %4018 = vmax.xlane.f32.xlu0 %v4017
      %v4019 = vpop.xlane.xlu0 %4018
      %v4020 = vsel %vm1573, %v3996, -inf
      %4021 = vmax.xlane.f32.xlu0 %v4020
      %v4022 = vpop.xlane.xlu0 %4021
      %v4023 = vsel %vm1573, %v3997, -inf
      %4024 = vmax.xlane.f32.xlu0 %v4023
      %v4025 = vpop.xlane.xlu0 %4024
      %v4026 = vsel %vm1573, %v3998, -inf
      %4027 = vmax.xlane.f32.xlu0 %v4026
      %v4028 = vpop.xlane.xlu0 %4027
      %v4029 = vsub.f32 %v3989, %v4001
      %v4030 = vsub.f32 %v3990, %v4004
      %v4031 = vsub.f32 %v3991, %v4007
      %v4032 = vsub.f32 %v3992, %v4010
      %v4033 = vsub.f32 %v3993, %v4013
      %v4034 = vsub.f32 %v3994, %v4016
      %v4035 = vsub.f32 %v3995, %v4019
      %v4036 = vsub.f32 %v3996, %v4022
      %v4037 = vsub.f32 %v3997, %v4025
      %v4038 = vsub.f32 %v3998, %v4028
      %v4039 = vmul.f32 %v4029, 1.442695
      %v4040 = vpow.pop %v4039
      %v4041 = vmul.f32 %v4030, 1.442695
      %v4042 = vpow.pop %v4041
      %v4043 = vmul.f32 %v4031, 1.442695
      %v4044 = vpow.pop %v4043
      %v4045 = vmul.f32 %v4032, 1.442695
      %v4046 = vpow.pop %v4045
      %v4047 = vmul.f32 %v4033, 1.442695
      %v4048 = vpow.pop %v4047
      %v4049 = vmul.f32 %v4034, 1.442695
      %v4050 = vpow.pop %v4049
      %v4051 = vmul.f32 %v4035, 1.442695
      %v4052 = vpow.pop %v4051
      %v4053 = vmul.f32 %v4036, 1.442695
      %v4054 = vpow.pop %v4053
      %v4055 = vmul.f32 %v4037, 1.442695
      %v4056 = vpow.pop %v4055
      %v4057 = vmul.f32 %v4038, 1.442695
      %v4058 = vpow.pop %v4057
      %v4059 = vsel %vm1573, %v4040, 0.0
      %4060 = vadd.xlane.f32.xlu0 %v4059
      %v4061 = vpop.xlane.xlu0 %4060
      %v4062 = vsel %vm1573, %v4042, 0.0
      %4063 = vadd.xlane.f32.xlu0 %v4062
      %v4064 = vpop.xlane.xlu0 %4063
      %v4065 = vsel %vm1573, %v4044, 0.0
      %4066 = vadd.xlane.f32.xlu0 %v4065
      %v4067 = vpop.xlane.xlu0 %4066
      %v4068 = vsel %vm1573, %v4046, 0.0
      %4069 = vadd.xlane.f32.xlu0 %v4068
      %v4070 = vpop.xlane.xlu0 %4069
      %v4071 = vsel %vm1573, %v4048, 0.0
      %4072 = vadd.xlane.f32.xlu0 %v4071
      %v4073 = vpop.xlane.xlu0 %4072
      %v4074 = vsel %vm1573, %v4050, 0.0
      %4075 = vadd.xlane.f32.xlu0 %v4074
      %v4076 = vpop.xlane.xlu0 %4075
      %v4077 = vsel %vm1573, %v4052, 0.0
      %4078 = vadd.xlane.f32.xlu0 %v4077
      %v4079 = vpop.xlane.xlu0 %4078
      %v4080 = vsel %vm1573, %v4054, 0.0
      %4081 = vadd.xlane.f32.xlu0 %v4080
      %v4082 = vpop.xlane.xlu0 %4081
      %v4083 = vsel %vm1573, %v4056, 0.0
      %4084 = vadd.xlane.f32.xlu0 %v4083
      %v4085 = vpop.xlane.xlu0 %4084
      %v4086 = vsel %vm1573, %v4058, 0.0
      %4087 = vadd.xlane.f32.xlu0 %v4086
      %v4088 = vpop.xlane.xlu0 %4087
      %v4089 = vrcp.pop %v4061
      %v4090 = vmul.f32 %v4040, %v4089
      %v4091 = vrcp.pop %v4064
      %v4092 = vmul.f32 %v4042, %v4091
      %v4093 = vrcp.pop %v4067
      %v4094 = vmul.f32 %v4044, %v4093
      %v4095 = vrcp.pop %v4070
      %v4096 = vmul.f32 %v4046, %v4095
      %v4097 = vrcp.pop %v4073
      %v4098 = vmul.f32 %v4048, %v4097
      %v4099 = vrcp.pop %v4076
      %v4100 = vmul.f32 %v4050, %v4099
      %v4101 = vrcp.pop %v4079
      %v4102 = vmul.f32 %v4052, %v4101
      %v4103 = vrcp.pop %v4082
      %v4104 = vmul.f32 %v4054, %v4103
      %v4105 = vrcp.pop %v4085
      %v4106 = vmul.f32 %v4056, %v4105
      %v4107 = vrcp.pop %v4088
      %v4108 = vmul.f32 %v4058, %v4107
      %v4109 = vmul.f32 %v1261, %v3789
      %v4110 = vmul.f32 %v1265, %v3789
      %v4111 = vmul.f32 %v1271, %v3789
      %v4112 = vmul.f32 %v1275, %v3789
      %v4113 = vmul.f32 %v1281, %v3789
      %v4114 = vmul.f32 %v1285, %v3789
      %v4115 = vmul.f32 %v1291, %v3789
      %v4116 = vmul.f32 %v1295, %v3789
      %v4117 = vmul.f32 %v1301, %v3789
      %v4118 = vmul.f32 %v1305, %v3789
      %v4120 = vsel %vm1573, %v4090, 0
      %v4123 = vsel %vm1573, %v4092, 0
      %v4126 = vsel %vm1573, %v4094, 0
      %v4129 = vsel %vm1573, %v4096, 0
      %v4132 = vsel %vm1573, %v4098, 0
      %v4135 = vsel %vm1573, %v4100, 0
      %v4138 = vsel %vm1573, %v4102, 0
      %v4141 = vsel %vm1573, %v4104, 0
      %v4144 = vsel %vm1573, %v4106, 0
      %v4147 = vsel %vm1573, %v4108, 0
      %4149 = vmatprep.subr.mxu0 0.0
      %4150 = vmatpush1.msra.mxu0 %v4109
      %4151 = vmatprep.subr.mxu0 0.0
      %4152 = vmatpush1.msra.mxu0 %v4110
      %4153 = vmatprep.subr.mxu0 0.0
      %4154 = vmatpush1.msra.mxu0 %v4111
      %4155 = vmatprep.subr.mxu0 0.0
      %4156 = vmatpush1.msra.mxu0 %v4112
      %4157 = vmatprep.subr.mxu0 0.0
      %4158 = vmatpush1.msra.mxu0 %v4113
      %4159 = vmatprep.subr.mxu0 0.0
      %4160 = vmatpush1.msra.mxu0 %v4114
      %4161 = vmatprep.subr.mxu0 0.0
      %4162 = vmatpush1.msra.mxu0 %v4115
      %4163 = vmatprep.subr.mxu0 0.0
      %4164 = vmatpush1.msra.mxu0 %v4116
      %4165 = vmatprep.subr.mxu0 0.0
      %4166 = vmatpush1.msra.mxu0 %v4117
      %4167 = vmatprep.subr.mxu0 0.0
      %4168 = vmatpush1.msra.mxu0 %v4118
      %4169 = vmatprep.subr.mxu0 0.0
      %4170 = vmatpush1.msra.mxu0 0.0
      %4171 = vmatprep.subr.mxu0 0.0
      %4172 = vmatpush1.msra.mxu0 0.0
      %4173 = vmatprep.subr.mxu0 0.0
      %4174 = vmatpush1.msra.mxu0 0.0
      %4175 = vmatprep.subr.mxu0 0.0
      %4176 = vmatpush1.msra.mxu0 0.0
      %4177 = vmatprep.subr.mxu0 0.0
      %4178 = vmatpush1.msra.mxu0 0.0
      %4179 = vmatprep.subr.mxu0 0.0
      %4180 = vmatpush1.msra.mxu0 0.0
      %4181 = vmatprep.subr.mxu0 0.0
      %4182 = vmatpush1.msra.mxu0 0.0
      %4183 = vmatprep.subr.mxu0 0.0
      %4184 = vmatpush1.msra.mxu0 0.0
      %4185 = vmatprep.subr.mxu0 0.0
      %4186 = vmatpush1.msra.mxu0 0.0
      %4187 = vmatprep.subr.mxu0 0.0
      %4188 = vmatpush1.msra.mxu0 0.0
      %4189 = vmatprep.subr.mxu0 0.0
      %4190 = vmatpush1.msra.mxu0 0.0
      %4191 = vmatprep.subr.mxu0 0.0
      %4192 = vmatpush1.msra.mxu0 0.0
      %4193 = vmatprep.subr.mxu0 0.0
      %4194 = vmatpush1.msra.mxu0 0.0
      %4195 = vmatprep.subr.mxu0 0.0
      %4196 = vmatpush1.msra.mxu0 0.0
      %4197 = vmatprep.subr.mxu0 0.0
      %4198 = vmatpush1.msra.mxu0 0.0
      %4199 = vmatprep.subr.mxu0 0.0
      %4200 = vmatpush1.msra.mxu0 0.0
      %4201 = vmatprep.subr.mxu0 0.0
      %4202 = vmatpush1.msra.mxu0 0.0
      %4203 = vmatprep.subr.mxu0 0.0
      %4204 = vmatpush1.msra.mxu0 0.0
      %4205 = vmatprep.subr.mxu0 0.0
      %4206 = vmatpush1.msra.mxu0 0.0
      %4207 = vmatprep.subr.mxu0 0.0
      %4208 = vmatpush1.msra.mxu0 0.0
      %4209 = vmatprep.subr.mxu0 0.0
      %4210 = vmatpush1.msra.mxu0 0.0
      %4211 = vmatprep.subr.mxu0 0.0
      %4212 = vmatpush1.msra.mxu0 0.0
      %4213 = vmatprep.mubr.f32.mxu0 0.0
      %4214 = vmatmul.mubr.f32.gmra.mrb[0].mxu0 %v4120
      %v4215 = vpop.f32.mrb[0].mxu0
      %v4216 = vadd.f32 0.0, %v4215
      %v4217 = vpop.f32.mrb[0].mxu0
      %4218 = vmatprep.mubr.f32.mxu0 0.0
      %4219 = vmatmul.mubr.f32.gmra.mrb[0].mxu0 %v4123
      %v4220 = vpop.f32.mrb[0].mxu0
      %v4221 = vadd.f32 0.0, %v4220
      %v4222 = vpop.f32.mrb[0].mxu0
      %4223 = vmatprep.mubr.f32.mxu0 0.0
      %4224 = vmatmul.mubr.f32.gmra.mrb[0].mxu0 %v4126
      %v4225 = vpop.f32.mrb[0].mxu0
      %v4226 = vadd.f32 0.0, %v4225
      %v4227 = vpop.f32.mrb[0].mxu0
      %4228 = vmatprep.mubr.f32.mxu0 0.0
      %4229 = vmatmul.mubr.f32.gmra.mrb[0].mxu0 %v4129
      %v4230 = vpop.f32.mrb[0].mxu0
      %v4231 = vadd.f32 0.0, %v4230
      %v4232 = vpop.f32.mrb[0].mxu0
      %4233 = vmatprep.mubr.f32.mxu0 0.0
      %4234 = vmatmul.mubr.f32.gmra.mrb[0].mxu0 %v4132
      %v4235 = vpop.f32.mrb[0].mxu0
      %v4236 = vadd.f32 0.0, %v4235
      %v4237 = vpop.f32.mrb[0].mxu0
      %4238 = vmatprep.mubr.f32.mxu0 0.0
      %4239 = vmatmul.mubr.f32.gmra.mrb[0].mxu0 %v4135
      %v4240 = vpop.f32.mrb[0].mxu0
      %v4241 = vadd.f32 0.0, %v4240
      %v4242 = vpop.f32.mrb[0].mxu0
      %4243 = vmatprep.mubr.f32.mxu0 0.0
      %4244 = vmatmul.mubr.f32.gmra.mrb[0].mxu0 %v4138
      %v4245 = vpop.f32.mrb[0].mxu0
      %v4246 = vadd.f32 0.0, %v4245
      %v4247 = vpop.f32.mrb[0].mxu0
      %4248 = vmatprep.mubr.f32.mxu0 0.0
      %4249 = vmatmul.mubr.f32.gmra.mrb[0].mxu0 %v4141
      %v4250 = vpop.f32.mrb[0].mxu0
      %v4251 = vadd.f32 0.0, %v4250
      %v4252 = vpop.f32.mrb[0].mxu0
      %4253 = vmatprep.mubr.f32.mxu0 0.0
      %4254 = vmatmul.mubr.f32.gmra.mrb[0].mxu0 %v4144
      %v4255 = vpop.f32.mrb[0].mxu0
      %v4256 = vadd.f32 0.0, %v4255
      %v4257 = vpop.f32.mrb[0].mxu0
      %4258 = vmatprep.mubr.f32.mxu0 0.0
      %4259 = vmatmul.mubr.f32.gmra.mrb[0].mxu0 %v4147
      %v4260 = vpop.f32.mrb[0].mxu0
      %v4261 = vadd.f32 0.0, %v4260
      %v4262 = vpop.f32.mrb[0].mxu0
      %4263 = vdwg.mxu0
      %v4264 = vadd.f32 %v3775, %v4216
      %v4265 = vadd.f32 %v3776, %v4221
      %v4266 = vadd.f32 %v3777, %v4226
      %v4267 = vadd.f32 %v3778, %v4231
      %v4268 = vadd.f32 %v3779, %v4236
      %v4269 = vadd.f32 %v3780, %v4241
      %v4270 = vadd.f32 %v3781, %v4246
      %v4271 = vadd.f32 %v3782, %v4251
      %v4272 = vadd.f32 %v3783, %v4256
      %v4273 = vadd.f32 %v3784, %v4261
      %vm4274 = vcmp.ge.s32.totalorder %v1308, 48
      %vm4275 = vcmp.lt.s32.totalorder %v1308, 56
      %vm4276 = vmand %vm4274, %vm4275
      %v4277 = vsel %vm4276, 1, 0
      %v4278 = vcvt.s32.f32 %v4277
      %4280 = vrot.lane.b32.xlu0 %v4278, 64
      %v4281 = vpop.permute.xlu0 %4280
      %v4283 = vmul.f32 %v1259, %v4281
      %v4284 = vmul.f32 %v1263, %v4281
      %v4285 = vmul.f32 %v1269, %v4281
      %v4286 = vmul.f32 %v1273, %v4281
      %v4287 = vmul.f32 %v1279, %v4281
      %v4288 = vmul.f32 %v1283, %v4281
      %v4289 = vmul.f32 %v1289, %v4281
      %v4290 = vmul.f32 %v1293, %v4281
      %v4291 = vmul.f32 %v1299, %v4281
      %v4292 = vmul.f32 %v1303, %v4281
      %4303 = vrot.lane.b32.xlu0 %v4283, 64
      %v4304 = vpop.permute.xlu0 %4303
      %4305 = vrot.lane.b32.xlu0 %v4284, 64
      %v4306 = vpop.permute.xlu0 %4305
      %4307 = vrot.lane.b32.xlu0 %v4285, 64
      %v4308 = vpop.permute.xlu0 %4307
      %4309 = vrot.lane.b32.xlu0 %v4286, 64
      %v4310 = vpop.permute.xlu0 %4309
      %4311 = vrot.lane.b32.xlu0 %v4287, 64
      %v4312 = vpop.permute.xlu0 %4311
      %4313 = vrot.lane.b32.xlu0 %v4288, 64
      %v4314 = vpop.permute.xlu0 %4313
      %4315 = vrot.lane.b32.xlu0 %v4289, 64
      %v4316 = vpop.permute.xlu0 %4315
      %4317 = vrot.lane.b32.xlu0 %v4290, 64
      %v4318 = vpop.permute.xlu0 %4317
      %4319 = vrot.lane.b32.xlu0 %v4291, 64
      %v4320 = vpop.permute.xlu0 %4319
      %4321 = vrot.lane.b32.xlu0 %v4292, 64
      %v4322 = vpop.permute.xlu0 %4321
      %v4323 = vsel %vm1208, %v4304, 0
      %v4325 = vsel %vm1208, %v4306, 0
      %v4327 = vsel %vm1208, %v4308, 0
      %v4329 = vsel %vm1208, %v4310, 0
      %v4331 = vsel %vm1208, %v4312, 0
      %v4333 = vsel %vm1208, %v4314, 0
      %v4335 = vsel %vm1208, %v4316, 0
      %v4337 = vsel %vm1208, %v4318, 0
      %v4339 = vsel %vm1208, %v4320, 0
      %v4341 = vsel %vm1208, %v4322, 0
      %4343 = vmatprep.subr.mxu0 0.0
      %4344 = vmatpush1.xpose.msra.mxu0 %v4323
      %4345 = vmatprep.subr.mxu0 0.0
      %4346 = vmatpush1.xpose.msra.mxu0 %v4325
      %4347 = vmatprep.subr.mxu0 0.0
      %4348 = vmatpush1.xpose.msra.mxu0 %v4327
      %4349 = vmatprep.subr.mxu0 0.0
      %4350 = vmatpush1.xpose.msra.mxu0 %v4329
      %4351 = vmatprep.subr.mxu0 0.0
      %4352 = vmatpush1.xpose.msra.mxu0 %v4331
      %4353 = vmatprep.subr.mxu0 0.0
      %4354 = vmatpush1.xpose.msra.mxu0 %v4333
      %4355 = vmatprep.subr.mxu0 0.0
      %4356 = vmatpush1.xpose.msra.mxu0 %v4335
      %4357 = vmatprep.subr.mxu0 0.0
      %4358 = vmatpush1.xpose.msra.mxu0 %v4337
      %4359 = vmatprep.subr.mxu0 0.0
      %4360 = vmatpush1.xpose.msra.mxu0 %v4339
      %4361 = vmatprep.subr.mxu0 0.0
      %4362 = vmatpush1.xpose.msra.mxu0 %v4341
      %4363 = vmatprep.subr.mxu0 0.0
      %4364 = vmatpush1.xpose.msra.mxu0 0.0
      %4365 = vmatprep.subr.mxu0 0.0
      %4366 = vmatpush1.xpose.msra.mxu0 0.0
      %4367 = vmatprep.subr.mxu0 0.0
      %4368 = vmatpush1.xpose.msra.mxu0 0.0
      %4369 = vmatprep.subr.mxu0 0.0
      %4370 = vmatpush1.xpose.msra.mxu0 0.0
      %4371 = vmatprep.subr.mxu0 0.0
      %4372 = vmatpush1.xpose.msra.mxu0 0.0
      %4373 = vmatprep.subr.mxu0 0.0
      %4374 = vmatpush1.xpose.msra.mxu0 0.0
      %4375 = vmatprep.subr.mxu0 0.0
      %4376 = vmatpush1.xpose.msra.mxu0 0.0
      %4377 = vmatprep.subr.mxu0 0.0
      %4378 = vmatpush1.xpose.msra.mxu0 0.0
      %4379 = vmatprep.subr.mxu0 0.0
      %4380 = vmatpush1.xpose.msra.mxu0 0.0
      %4381 = vmatprep.subr.mxu0 0.0
      %4382 = vmatpush1.xpose.msra.mxu0 0.0
      %4383 = vmatprep.subr.mxu0 0.0
      %4384 = vmatpush1.xpose.msra.mxu0 0.0
      %4385 = vmatprep.subr.mxu0 0.0
      %4386 = vmatpush1.xpose.msra.mxu0 0.0
      %4387 = vmatprep.subr.mxu0 0.0
      %4388 = vmatpush1.xpose.msra.mxu0 0.0
      %4389 = vmatprep.subr.mxu0 0.0
      %4390 = vmatpush1.xpose.msra.mxu0 0.0
      %4391 = vmatprep.subr.mxu0 0.0
      %4392 = vmatpush1.xpose.msra.mxu0 0.0
      %4393 = vmatprep.subr.mxu0 0.0
      %4394 = vmatpush1.xpose.msra.mxu0 0.0
      %4395 = vmatprep.subr.mxu0 0.0
      %4396 = vmatpush1.xpose.msra.mxu0 0.0
      %4397 = vmatprep.subr.mxu0 0.0
      %4398 = vmatpush1.xpose.msra.mxu0 0.0
      %4399 = vmatprep.subr.mxu0 0.0
      %4400 = vmatpush1.xpose.msra.mxu0 0.0
      %4401 = vmatprep.subr.mxu0 0.0
      %4402 = vmatpush1.xpose.msra.mxu0 0.0
      %4403 = vmatprep.subr.mxu0 0.0
      %4404 = vmatpush1.xpose.msra.mxu0 0.0
      %4405 = vmatprep.subr.mxu0 0.0
      %4406 = vmatpush1.xpose.msra.mxu0 0.0
      %4407 = vmatprep.mubr.f32.mxu0 0.0
      %4408 = vmatmul.mubr.f32.gmra.mrb[0].mxu0 %v1359
      %v4409 = vpop.f32.mrb[0].mxu0
      %v4410 = vadd.f32 0.0, %v4409
      %v4411 = vpop.f32.mrb[0].mxu0
      %4412 = vmatprep.mubr.f32.mxu0 0.0
      %4413 = vmatmul.mubr.f32.gmra.mrb[0].mxu0 %v1362
      %v4414 = vpop.f32.mrb[0].mxu0
      %v4415 = vadd.f32 0.0, %v4414
      %v4416 = vpop.f32.mrb[0].mxu0
      %4417 = vmatprep.mubr.f32.mxu0 0.0
      %4418 = vmatmul.mubr.f32.gmra.mrb[0].mxu0 %v1365
      %v4419 = vpop.f32.mrb[0].mxu0
      %v4420 = vadd.f32 0.0, %v4419
      %v4421 = vpop.f32.mrb[0].mxu0
      %4422 = vmatprep.mubr.f32.mxu0 0.0
      %4423 = vmatmul.mubr.f32.gmra.mrb[0].mxu0 %v1368
      %v4424 = vpop.f32.mrb[0].mxu0
      %v4425 = vadd.f32 0.0, %v4424
      %v4426 = vpop.f32.mrb[0].mxu0
      %4427 = vmatprep.mubr.f32.mxu0 0.0
      %4428 = vmatmul.mubr.f32.gmra.mrb[0].mxu0 %v1371
      %v4429 = vpop.f32.mrb[0].mxu0
      %v4430 = vadd.f32 0.0, %v4429
      %v4431 = vpop.f32.mrb[0].mxu0
      %4432 = vmatprep.mubr.f32.mxu0 0.0
      %4433 = vmatmul.mubr.f32.gmra.mrb[0].mxu0 %v1374
      %v4434 = vpop.f32.mrb[0].mxu0
      %v4435 = vadd.f32 0.0, %v4434
      %v4436 = vpop.f32.mrb[0].mxu0
      %4437 = vmatprep.mubr.f32.mxu0 0.0
      %4438 = vmatmul.mubr.f32.gmra.mrb[0].mxu0 %v1377
      %v4439 = vpop.f32.mrb[0].mxu0
      %v4440 = vadd.f32 0.0, %v4439
      %v4441 = vpop.f32.mrb[0].mxu0
      %4442 = vmatprep.mubr.f32.mxu0 0.0
      %4443 = vmatmul.mubr.f32.gmra.mrb[0].mxu0 %v1380
      %v4444 = vpop.f32.mrb[0].mxu0
      %v4445 = vadd.f32 0.0, %v4444
      %v4446 = vpop.f32.mrb[0].mxu0
      %4447 = vmatprep.mubr.f32.mxu0 0.0
      %4448 = vmatmul.mubr.f32.gmra.mrb[0].mxu0 %v1383
      %v4449 = vpop.f32.mrb[0].mxu0
      %v4450 = vadd.f32 0.0, %v4449
      %v4451 = vpop.f32.mrb[0].mxu0
      %4452 = vmatprep.mubr.f32.mxu0 0.0
      %4453 = vmatmul.mubr.f32.gmra.mrb[0].mxu0 %v1386
      %v4454 = vpop.f32.mrb[0].mxu0
      %v4455 = vadd.f32 0.0, %v4454
      %v4456 = vpop.f32.mrb[0].mxu0
      %4457 = vdwg.mxu0
      %v4458 = vmul.f32 %v4410, 0.35355338
      %v4459 = vmul.f32 %v4415, 0.35355338
      %v4460 = vmul.f32 %v4420, 0.35355338
      %v4461 = vmul.f32 %v4425, 0.35355338
      %v4462 = vmul.f32 %v4430, 0.35355338
      %v4463 = vmul.f32 %v4435, 0.35355338
      %v4464 = vmul.f32 %v4440, 0.35355338
      %v4465 = vmul.f32 %v4445, 0.35355338
      %v4466 = vmul.f32 %v4450, 0.35355338
      %v4467 = vmul.f32 %v4455, 0.35355338
      %v4468 = vsel %vm1543, -1e+09, %v4458
      %v4469 = vsel %vm1544, -1e+09, %v4459
      %v4470 = vsel %vm1545, -1e+09, %v4460
      %v4471 = vsel %vm1546, -1e+09, %v4461
      %v4472 = vsel %vm1547, -1e+09, %v4462
      %v4473 = vsel %vm1548, -1e+09, %v4463
      %v4474 = vsel %vm1549, -1e+09, %v4464
      %v4475 = vsel %vm1550, -1e+09, %v4465
      %v4476 = vsel %vm1551, -1e+09, %v4466
      %v4477 = vsel %vm1552, -1e+09, %v4467
      %v4478 = vsel %vm1533, -1e+30, %v4468
      %v4479 = vsel %vm1534, -1e+30, %v4469
      %v4480 = vsel %vm1535, -1e+30, %v4470
      %v4481 = vsel %vm1536, -1e+30, %v4471
      %v4482 = vsel %vm1537, -1e+30, %v4472
      %v4483 = vsel %vm1538, -1e+30, %v4473
      %v4484 = vsel %vm1539, -1e+30, %v4474
      %v4485 = vsel %vm1540, -1e+30, %v4475
      %v4486 = vsel %vm1541, -1e+30, %v4476
      %v4487 = vsel %vm1542, -1e+30, %v4477
      %v4488 = vsel %vm1573, %v4478, -inf
      %4489 = vmax.xlane.f32.xlu0 %v4488
      %v4490 = vpop.xlane.xlu0 %4489
      %v4491 = vsel %vm1573, %v4479, -inf
      %4492 = vmax.xlane.f32.xlu0 %v4491
      %v4493 = vpop.xlane.xlu0 %4492
      %v4494 = vsel %vm1573, %v4480, -inf
      %4495 = vmax.xlane.f32.xlu0 %v4494
      %v4496 = vpop.xlane.xlu0 %4495
      %v4497 = vsel %vm1573, %v4481, -inf
      %4498 = vmax.xlane.f32.xlu0 %v4497
      %v4499 = vpop.xlane.xlu0 %4498
      %v4500 = vsel %vm1573, %v4482, -inf
      %4501 = vmax.xlane.f32.xlu0 %v4500
      %v4502 = vpop.xlane.xlu0 %4501
      %v4503 = vsel %vm1573, %v4483, -inf
      %4504 = vmax.xlane.f32.xlu0 %v4503
      %v4505 = vpop.xlane.xlu0 %4504
      %v4506 = vsel %vm1573, %v4484, -inf
      %4507 = vmax.xlane.f32.xlu0 %v4506
      %v4508 = vpop.xlane.xlu0 %4507
      %v4509 = vsel %vm1573, %v4485, -inf
      %4510 = vmax.xlane.f32.xlu0 %v4509
      %v4511 = vpop.xlane.xlu0 %4510
      %v4512 = vsel %vm1573, %v4486, -inf
      %4513 = vmax.xlane.f32.xlu0 %v4512
      %v4514 = vpop.xlane.xlu0 %4513
      %v4515 = vsel %vm1573, %v4487, -inf
      %4516 = vmax.xlane.f32.xlu0 %v4515
      %v4517 = vpop.xlane.xlu0 %4516
      %v4518 = vsub.f32 %v4478, %v4490
      %v4519 = vsub.f32 %v4479, %v4493
      %v4520 = vsub.f32 %v4480, %v4496
      %v4521 = vsub.f32 %v4481, %v4499
      %v4522 = vsub.f32 %v4482, %v4502
      %v4523 = vsub.f32 %v4483, %v4505
      %v4524 = vsub.f32 %v4484, %v4508
      %v4525 = vsub.f32 %v4485, %v4511
      %v4526 = vsub.f32 %v4486, %v4514
      %v4527 = vsub.f32 %v4487, %v4517
      %v4528 = vmul.f32 %v4518, 1.442695
      %v4529 = vpow.pop %v4528
      %v4530 = vmul.f32 %v4519, 1.442695
      %v4531 = vpow.pop %v4530
      %v4532 = vmul.f32 %v4520, 1.442695
      %v4533 = vpow.pop %v4532
      %v4534 = vmul.f32 %v4521, 1.442695
      %v4535 = vpow.pop %v4534
      %v4536 = vmul.f32 %v4522, 1.442695
      %v4537 = vpow.pop %v4536
      %v4538 = vmul.f32 %v4523, 1.442695
      %v4539 = vpow.pop %v4538
      %v4540 = vmul.f32 %v4524, 1.442695
      %v4541 = vpow.pop %v4540
      %v4542 = vmul.f32 %v4525, 1.442695
      %v4543 = vpow.pop %v4542
      %v4544 = vmul.f32 %v4526, 1.442695
      %v4545 = vpow.pop %v4544
      %v4546 = vmul.f32 %v4527, 1.442695
      %v4547 = vpow.pop %v4546
      %v4548 = vsel %vm1573, %v4529, 0.0
      %4549 = vadd.xlane.f32.xlu0 %v4548
      %v4550 = vpop.xlane.xlu0 %4549
      %v4551 = vsel %vm1573, %v4531, 0.0
      %4552 = vadd.xlane.f32.xlu0 %v4551
      %v4553 = vpop.xlane.xlu0 %4552
      %v4554 = vsel %vm1573, %v4533, 0.0
      %4555 = vadd.xlane.f32.xlu0 %v4554
      %v4556 = vpop.xlane.xlu0 %4555
      %v4557 = vsel %vm1573, %v4535, 0.0
      %4558 = vadd.xlane.f32.xlu0 %v4557
      %v4559 = vpop.xlane.xlu0 %4558
      %v4560 = vsel %vm1573, %v4537, 0.0
      %4561 = vadd.xlane.f32.xlu0 %v4560
      %v4562 = vpop.xlane.xlu0 %4561
      %v4563 = vsel %vm1573, %v4539, 0.0
      %4564 = vadd.xlane.f32.xlu0 %v4563
      %v4565 = vpop.xlane.xlu0 %4564
      %v4566 = vsel %vm1573, %v4541, 0.0
      %4567 = vadd.xlane.f32.xlu0 %v4566
      %v4568 = vpop.xlane.xlu0 %4567
      %v4569 = vsel %vm1573, %v4543, 0.0
      %4570 = vadd.xlane.f32.xlu0 %v4569
      %v4571 = vpop.xlane.xlu0 %4570
      %v4572 = vsel %vm1573, %v4545, 0.0
      %4573 = vadd.xlane.f32.xlu0 %v4572
      %v4574 = vpop.xlane.xlu0 %4573
      %v4575 = vsel %vm1573, %v4547, 0.0
      %4576 = vadd.xlane.f32.xlu0 %v4575
      %v4577 = vpop.xlane.xlu0 %4576
      %v4578 = vrcp.pop %v4550
      %v4579 = vmul.f32 %v4529, %v4578
      %v4580 = vrcp.pop %v4553
      %v4581 = vmul.f32 %v4531, %v4580
      %v4582 = vrcp.pop %v4556
      %v4583 = vmul.f32 %v4533, %v4582
      %v4584 = vrcp.pop %v4559
      %v4585 = vmul.f32 %v4535, %v4584
      %v4586 = vrcp.pop %v4562
      %v4587 = vmul.f32 %v4537, %v4586
      %v4588 = vrcp.pop %v4565
      %v4589 = vmul.f32 %v4539, %v4588
      %v4590 = vrcp.pop %v4568
      %v4591 = vmul.f32 %v4541, %v4590
      %v4592 = vrcp.pop %v4571
      %v4593 = vmul.f32 %v4543, %v4592
      %v4594 = vrcp.pop %v4574
      %v4595 = vmul.f32 %v4545, %v4594
      %v4596 = vrcp.pop %v4577
      %v4597 = vmul.f32 %v4547, %v4596
      %v4598 = vmul.f32 %v1261, %v4278
      %v4599 = vmul.f32 %v1265, %v4278
      %v4600 = vmul.f32 %v1271, %v4278
      %v4601 = vmul.f32 %v1275, %v4278
      %v4602 = vmul.f32 %v1281, %v4278
      %v4603 = vmul.f32 %v1285, %v4278
      %v4604 = vmul.f32 %v1291, %v4278
      %v4605 = vmul.f32 %v1295, %v4278
      %v4606 = vmul.f32 %v1301, %v4278
      %v4607 = vmul.f32 %v1305, %v4278
      %v4609 = vsel %vm1573, %v4579, 0
      %v4612 = vsel %vm1573, %v4581, 0
      %v4615 = vsel %vm1573, %v4583, 0
      %v4618 = vsel %vm1573, %v4585, 0
      %v4621 = vsel %vm1573, %v4587, 0
      %v4624 = vsel %vm1573, %v4589, 0
      %v4627 = vsel %vm1573, %v4591, 0
      %v4630 = vsel %vm1573, %v4593, 0
      %v4633 = vsel %vm1573, %v4595, 0
      %v4636 = vsel %vm1573, %v4597, 0
      %4638 = vmatprep.subr.mxu0 0.0
      %4639 = vmatpush1.msra.mxu0 %v4598
      %4640 = vmatprep.subr.mxu0 0.0
      %4641 = vmatpush1.msra.mxu0 %v4599
      %4642 = vmatprep.subr.mxu0 0.0
      %4643 = vmatpush1.msra.mxu0 %v4600
      %4644 = vmatprep.subr.mxu0 0.0
      %4645 = vmatpush1.msra.mxu0 %v4601
      %4646 = vmatprep.subr.mxu0 0.0
      %4647 = vmatpush1.msra.mxu0 %v4602
      %4648 = vmatprep.subr.mxu0 0.0
      %4649 = vmatpush1.msra.mxu0 %v4603
      %4650 = vmatprep.subr.mxu0 0.0
      %4651 = vmatpush1.msra.mxu0 %v4604
      %4652 = vmatprep.subr.mxu0 0.0
      %4653 = vmatpush1.msra.mxu0 %v4605
      %4654 = vmatprep.subr.mxu0 0.0
      %4655 = vmatpush1.msra.mxu0 %v4606
      %4656 = vmatprep.subr.mxu0 0.0
      %4657 = vmatpush1.msra.mxu0 %v4607
      %4658 = vmatprep.subr.mxu0 0.0
      %4659 = vmatpush1.msra.mxu0 0.0
      %4660 = vmatprep.subr.mxu0 0.0
      %4661 = vmatpush1.msra.mxu0 0.0
      %4662 = vmatprep.subr.mxu0 0.0
      %4663 = vmatpush1.msra.mxu0 0.0
      %4664 = vmatprep.subr.mxu0 0.0
      %4665 = vmatpush1.msra.mxu0 0.0
      %4666 = vmatprep.subr.mxu0 0.0
      %4667 = vmatpush1.msra.mxu0 0.0
      %4668 = vmatprep.subr.mxu0 0.0
      %4669 = vmatpush1.msra.mxu0 0.0
      %4670 = vmatprep.subr.mxu0 0.0
      %4671 = vmatpush1.msra.mxu0 0.0
      %4672 = vmatprep.subr.mxu0 0.0
      %4673 = vmatpush1.msra.mxu0 0.0
      %4674 = vmatprep.subr.mxu0 0.0
      %4675 = vmatpush1.msra.mxu0 0.0
      %4676 = vmatprep.subr.mxu0 0.0
      %4677 = vmatpush1.msra.mxu0 0.0
      %4678 = vmatprep.subr.mxu0 0.0
      %4679 = vmatpush1.msra.mxu0 0.0
      %4680 = vmatprep.subr.mxu0 0.0
      %4681 = vmatpush1.msra.mxu0 0.0
      %4682 = vmatprep.subr.mxu0 0.0
      %4683 = vmatpush1.msra.mxu0 0.0
      %4684 = vmatprep.subr.mxu0 0.0
      %4685 = vmatpush1.msra.mxu0 0.0
      %4686 = vmatprep.subr.mxu0 0.0
      %4687 = vmatpush1.msra.mxu0 0.0
      %4688 = vmatprep.subr.mxu0 0.0
      %4689 = vmatpush1.msra.mxu0 0.0
      %4690 = vmatprep.subr.mxu0 0.0
      %4691 = vmatpush1.msra.mxu0 0.0
      %4692 = vmatprep.subr.mxu0 0.0
      %4693 = vmatpush1.msra.mxu0 0.0
      %4694 = vmatprep.subr.mxu0 0.0
      %4695 = vmatpush1.msra.mxu0 0.0
      %4696 = vmatprep.subr.mxu0 0.0
      %4697 = vmatpush1.msra.mxu0 0.0
      %4698 = vmatprep.subr.mxu0 0.0
      %4699 = vmatpush1.msra.mxu0 0.0
      %4700 = vmatprep.subr.mxu0 0.0
      %4701 = vmatpush1.msra.mxu0 0.0
      %4702 = vmatprep.mubr.f32.mxu0 0.0
      %4703 = vmatmul.mubr.f32.gmra.mrb[0].mxu0 %v4609
      %v4704 = vpop.f32.mrb[0].mxu0
      %v4705 = vadd.f32 0.0, %v4704
      %v4706 = vpop.f32.mrb[0].mxu0
      %4707 = vmatprep.mubr.f32.mxu0 0.0
      %4708 = vmatmul.mubr.f32.gmra.mrb[0].mxu0 %v4612
      %v4709 = vpop.f32.mrb[0].mxu0
      %v4710 = vadd.f32 0.0, %v4709
      %v4711 = vpop.f32.mrb[0].mxu0
      %4712 = vmatprep.mubr.f32.mxu0 0.0
      %4713 = vmatmul.mubr.f32.gmra.mrb[0].mxu0 %v4615
      %v4714 = vpop.f32.mrb[0].mxu0
      %v4715 = vadd.f32 0.0, %v4714
      %v4716 = vpop.f32.mrb[0].mxu0
      %4717 = vmatprep.mubr.f32.mxu0 0.0
      %4718 = vmatmul.mubr.f32.gmra.mrb[0].mxu0 %v4618
      %v4719 = vpop.f32.mrb[0].mxu0
      %v4720 = vadd.f32 0.0, %v4719
      %v4721 = vpop.f32.mrb[0].mxu0
      %4722 = vmatprep.mubr.f32.mxu0 0.0
      %4723 = vmatmul.mubr.f32.gmra.mrb[0].mxu0 %v4621
      %v4724 = vpop.f32.mrb[0].mxu0
      %v4725 = vadd.f32 0.0, %v4724
      %v4726 = vpop.f32.mrb[0].mxu0
      %4727 = vmatprep.mubr.f32.mxu0 0.0
      %4728 = vmatmul.mubr.f32.gmra.mrb[0].mxu0 %v4624
      %v4729 = vpop.f32.mrb[0].mxu0
      %v4730 = vadd.f32 0.0, %v4729
      %v4731 = vpop.f32.mrb[0].mxu0
      %4732 = vmatprep.mubr.f32.mxu0 0.0
      %4733 = vmatmul.mubr.f32.gmra.mrb[0].mxu0 %v4627
      %v4734 = vpop.f32.mrb[0].mxu0
      %v4735 = vadd.f32 0.0, %v4734
      %v4736 = vpop.f32.mrb[0].mxu0
      %4737 = vmatprep.mubr.f32.mxu0 0.0
      %4738 = vmatmul.mubr.f32.gmra.mrb[0].mxu0 %v4630
      %v4739 = vpop.f32.mrb[0].mxu0
      %v4740 = vadd.f32 0.0, %v4739
      %v4741 = vpop.f32.mrb[0].mxu0
      %4742 = vmatprep.mubr.f32.mxu0 0.0
      %4743 = vmatmul.mubr.f32.gmra.mrb[0].mxu0 %v4633
      %v4744 = vpop.f32.mrb[0].mxu0
      %v4745 = vadd.f32 0.0, %v4744
      %v4746 = vpop.f32.mrb[0].mxu0
      %4747 = vmatprep.mubr.f32.mxu0 0.0
      %4748 = vmatmul.mubr.f32.gmra.mrb[0].mxu0 %v4636
      %v4749 = vpop.f32.mrb[0].mxu0
      %v4750 = vadd.f32 0.0, %v4749
      %v4751 = vpop.f32.mrb[0].mxu0
      %4752 = vdwg.mxu0
      %v4753 = vadd.f32 %v4264, %v4705
      %v4754 = vadd.f32 %v4265, %v4710
      %v4755 = vadd.f32 %v4266, %v4715
      %v4756 = vadd.f32 %v4267, %v4720
      %v4757 = vadd.f32 %v4268, %v4725
      %v4758 = vadd.f32 %v4269, %v4730
      %v4759 = vadd.f32 %v4270, %v4735
      %v4760 = vadd.f32 %v4271, %v4740
      %v4761 = vadd.f32 %v4272, %v4745
      %v4762 = vadd.f32 %v4273, %v4750
      %vm4763 = vcmp.ge.s32.totalorder %v1308, 56
      %vm4764 = vcmp.lt.s32.totalorder %v1308, 64
      %vm4765 = vmand %vm4763, %vm4764
      %v4766 = vsel %vm4765, 1, 0
      %v4767 = vcvt.s32.f32 %v4766
      %4769 = vrot.lane.b32.xlu0 %v4767, 64
      %v4770 = vpop.permute.xlu0 %4769
      %v4772 = vmul.f32 %v1259, %v4770
      %v4773 = vmul.f32 %v1263, %v4770
      %v4774 = vmul.f32 %v1269, %v4770
      %v4775 = vmul.f32 %v1273, %v4770
      %v4776 = vmul.f32 %v1279, %v4770
      %v4777 = vmul.f32 %v1283, %v4770
      %v4778 = vmul.f32 %v1289, %v4770
      %v4779 = vmul.f32 %v1293, %v4770
      %v4780 = vmul.f32 %v1299, %v4770
      %v4781 = vmul.f32 %v1303, %v4770
      %4792 = vrot.lane.b32.xlu0 %v4772, 64
      %v4793 = vpop.permute.xlu0 %4792
      %4794 = vrot.lane.b32.xlu0 %v4773, 64
      %v4795 = vpop.permute.xlu0 %4794
      %4796 = vrot.lane.b32.xlu0 %v4774, 64
      %v4797 = vpop.permute.xlu0 %4796
      %4798 = vrot.lane.b32.xlu0 %v4775, 64
      %v4799 = vpop.permute.xlu0 %4798
      %4800 = vrot.lane.b32.xlu0 %v4776, 64
      %v4801 = vpop.permute.xlu0 %4800
      %4802 = vrot.lane.b32.xlu0 %v4777, 64
      %v4803 = vpop.permute.xlu0 %4802
      %4804 = vrot.lane.b32.xlu0 %v4778, 64
      %v4805 = vpop.permute.xlu0 %4804
      %4806 = vrot.lane.b32.xlu0 %v4779, 64
      %v4807 = vpop.permute.xlu0 %4806
      %4808 = vrot.lane.b32.xlu0 %v4780, 64
      %v4809 = vpop.permute.xlu0 %4808
      %4810 = vrot.lane.b32.xlu0 %v4781, 64
      %v4811 = vpop.permute.xlu0 %4810
      %v4812 = vsel %vm1208, %v4793, 0
      %v4814 = vsel %vm1208, %v4795, 0
      %v4816 = vsel %vm1208, %v4797, 0
      %v4818 = vsel %vm1208, %v4799, 0
      %v4820 = vsel %vm1208, %v4801, 0
      %v4822 = vsel %vm1208, %v4803, 0
      %v4824 = vsel %vm1208, %v4805, 0
      %v4826 = vsel %vm1208, %v4807, 0
      %v4828 = vsel %vm1208, %v4809, 0
      %v4830 = vsel %vm1208, %v4811, 0
      %4832 = vmatprep.subr.mxu0 0.0
      %4833 = vmatpush1.xpose.msra.mxu0 %v4812
      %4834 = vmatprep.subr.mxu0 0.0
      %4835 = vmatpush1.xpose.msra.mxu0 %v4814
      %4836 = vmatprep.subr.mxu0 0.0
      %4837 = vmatpush1.xpose.msra.mxu0 %v4816
      %4838 = vmatprep.subr.mxu0 0.0
      %4839 = vmatpush1.xpose.msra.mxu0 %v4818
      %4840 = vmatprep.subr.mxu0 0.0
      %4841 = vmatpush1.xpose.msra.mxu0 %v4820
      %4842 = vmatprep.subr.mxu0 0.0
      %4843 = vmatpush1.xpose.msra.mxu0 %v4822
      %4844 = vmatprep.subr.mxu0 0.0
      %4845 = vmatpush1.xpose.msra.mxu0 %v4824
      %4846 = vmatprep.subr.mxu0 0.0
      %4847 = vmatpush1.xpose.msra.mxu0 %v4826
      %4848 = vmatprep.subr.mxu0 0.0
      %4849 = vmatpush1.xpose.msra.mxu0 %v4828
      %4850 = vmatprep.subr.mxu0 0.0
      %4851 = vmatpush1.xpose.msra.mxu0 %v4830
      %4852 = vmatprep.subr.mxu0 0.0
      %4853 = vmatpush1.xpose.msra.mxu0 0.0
      %4854 = vmatprep.subr.mxu0 0.0
      %4855 = vmatpush1.xpose.msra.mxu0 0.0
      %4856 = vmatprep.subr.mxu0 0.0
      %4857 = vmatpush1.xpose.msra.mxu0 0.0
      %4858 = vmatprep.subr.mxu0 0.0
      %4859 = vmatpush1.xpose.msra.mxu0 0.0
      %4860 = vmatprep.subr.mxu0 0.0
      %4861 = vmatpush1.xpose.msra.mxu0 0.0
      %4862 = vmatprep.subr.mxu0 0.0
      %4863 = vmatpush1.xpose.msra.mxu0 0.0
      %4864 = vmatprep.subr.mxu0 0.0
      %4865 = vmatpush1.xpose.msra.mxu0 0.0
      %4866 = vmatprep.subr.mxu0 0.0
      %4867 = vmatpush1.xpose.msra.mxu0 0.0
      %4868 = vmatprep.subr.mxu0 0.0
      %4869 = vmatpush1.xpose.msra.mxu0 0.0
      %4870 = vmatprep.subr.mxu0 0.0
      %4871 = vmatpush1.xpose.msra.mxu0 0.0
      %4872 = vmatprep.subr.mxu0 0.0
      %4873 = vmatpush1.xpose.msra.mxu0 0.0
      %4874 = vmatprep.subr.mxu0 0.0
      %4875 = vmatpush1.xpose.msra.mxu0 0.0
      %4876 = vmatprep.subr.mxu0 0.0
      %4877 = vmatpush1.xpose.msra.mxu0 0.0
      %4878 = vmatprep.subr.mxu0 0.0
      %4879 = vmatpush1.xpose.msra.mxu0 0.0
      %4880 = vmatprep.subr.mxu0 0.0
      %4881 = vmatpush1.xpose.msra.mxu0 0.0
      %4882 = vmatprep.subr.mxu0 0.0
      %4883 = vmatpush1.xpose.msra.mxu0 0.0
      %4884 = vmatprep.subr.mxu0 0.0
      %4885 = vmatpush1.xpose.msra.mxu0 0.0
      %4886 = vmatprep.subr.mxu0 0.0
      %4887 = vmatpush1.xpose.msra.mxu0 0.0
      %4888 = vmatprep.subr.mxu0 0.0
      %4889 = vmatpush1.xpose.msra.mxu0 0.0
      %4890 = vmatprep.subr.mxu0 0.0
      %4891 = vmatpush1.xpose.msra.mxu0 0.0
      %4892 = vmatprep.subr.mxu0 0.0
      %4893 = vmatpush1.xpose.msra.mxu0 0.0
      %4894 = vmatprep.subr.mxu0 0.0
      %4895 = vmatpush1.xpose.msra.mxu0 0.0
      %4896 = vmatprep.mubr.f32.mxu0 0.0
      %4897 = vmatmul.mubr.f32.gmra.mrb[0].mxu0 %v1359
      %v4898 = vpop.f32.mrb[0].mxu0
      %v4899 = vadd.f32 0.0, %v4898
      %v4900 = vpop.f32.mrb[0].mxu0
      %4901 = vmatprep.mubr.f32.mxu0 0.0
      %4902 = vmatmul.mubr.f32.gmra.mrb[0].mxu0 %v1362
      %v4903 = vpop.f32.mrb[0].mxu0
      %v4904 = vadd.f32 0.0, %v4903
      %v4905 = vpop.f32.mrb[0].mxu0
      %4906 = vmatprep.mubr.f32.mxu0 0.0
      %4907 = vmatmul.mubr.f32.gmra.mrb[0].mxu0 %v1365
      %v4908 = vpop.f32.mrb[0].mxu0
      %v4909 = vadd.f32 0.0, %v4908
      %v4910 = vpop.f32.mrb[0].mxu0
      %4911 = vmatprep.mubr.f32.mxu0 0.0
      %4912 = vmatmul.mubr.f32.gmra.mrb[0].mxu0 %v1368
      %v4913 = vpop.f32.mrb[0].mxu0
      %v4914 = vadd.f32 0.0, %v4913
      %v4915 = vpop.f32.mrb[0].mxu0
      %4916 = vmatprep.mubr.f32.mxu0 0.0
      %4917 = vmatmul.mubr.f32.gmra.mrb[0].mxu0 %v1371
      %v4918 = vpop.f32.mrb[0].mxu0
      %v4919 = vadd.f32 0.0, %v4918
      %v4920 = vpop.f32.mrb[0].mxu0
      %4921 = vmatprep.mubr.f32.mxu0 0.0
      %4922 = vmatmul.mubr.f32.gmra.mrb[0].mxu0 %v1374
      %v4923 = vpop.f32.mrb[0].mxu0
      %v4924 = vadd.f32 0.0, %v4923
      %v4925 = vpop.f32.mrb[0].mxu0
      %4926 = vmatprep.mubr.f32.mxu0 0.0
      %4927 = vmatmul.mubr.f32.gmra.mrb[0].mxu0 %v1377
      %v4928 = vpop.f32.mrb[0].mxu0
      %v4929 = vadd.f32 0.0, %v4928
      %v4930 = vpop.f32.mrb[0].mxu0
      %4931 = vmatprep.mubr.f32.mxu0 0.0
      %4932 = vmatmul.mubr.f32.gmra.mrb[0].mxu0 %v1380
      %v4933 = vpop.f32.mrb[0].mxu0
      %v4934 = vadd.f32 0.0, %v4933
      %v4935 = vpop.f32.mrb[0].mxu0
      %4936 = vmatprep.mubr.f32.mxu0 0.0
      %4937 = vmatmul.mubr.f32.gmra.mrb[0].mxu0 %v1383
      %v4938 = vpop.f32.mrb[0].mxu0
      %v4939 = vadd.f32 0.0, %v4938
      %v4940 = vpop.f32.mrb[0].mxu0
      %4941 = vmatprep.mubr.f32.mxu0 0.0
      %4942 = vmatmul.mubr.f32.gmra.mrb[0].mxu0 %v1386
      %v4943 = vpop.f32.mrb[0].mxu0
      %v4944 = vadd.f32 0.0, %v4943
      %v4945 = vpop.f32.mrb[0].mxu0
      %4946 = vdwg.mxu0
      %v4947 = vmul.f32 %v4899, 0.35355338
      %v4948 = vmul.f32 %v4904, 0.35355338
      %v4949 = vmul.f32 %v4909, 0.35355338
      %v4950 = vmul.f32 %v4914, 0.35355338
      %v4951 = vmul.f32 %v4919, 0.35355338
      %v4952 = vmul.f32 %v4924, 0.35355338
      %v4953 = vmul.f32 %v4929, 0.35355338
      %v4954 = vmul.f32 %v4934, 0.35355338
      %v4955 = vmul.f32 %v4939, 0.35355338
      %v4956 = vmul.f32 %v4944, 0.35355338
      %v4957 = vsel %vm1543, -1e+09, %v4947
      %v4958 = vsel %vm1544, -1e+09, %v4948
      %v4959 = vsel %vm1545, -1e+09, %v4949
      %v4960 = vsel %vm1546, -1e+09, %v4950
      %v4961 = vsel %vm1547, -1e+09, %v4951
      %v4962 = vsel %vm1548, -1e+09, %v4952
      %v4963 = vsel %vm1549, -1e+09, %v4953
      %v4964 = vsel %vm1550, -1e+09, %v4954
      %v4965 = vsel %vm1551, -1e+09, %v4955
      %v4966 = vsel %vm1552, -1e+09, %v4956
      %v4967 = vsel %vm1533, -1e+30, %v4957
      %v4968 = vsel %vm1534, -1e+30, %v4958
      %v4969 = vsel %vm1535, -1e+30, %v4959
      %v4970 = vsel %vm1536, -1e+30, %v4960
      %v4971 = vsel %vm1537, -1e+30, %v4961
      %v4972 = vsel %vm1538, -1e+30, %v4962
      %v4973 = vsel %vm1539, -1e+30, %v4963
      %v4974 = vsel %vm1540, -1e+30, %v4964
      %v4975 = vsel %vm1541, -1e+30, %v4965
      %v4976 = vsel %vm1542, -1e+30, %v4966
      %v4977 = vsel %vm1573, %v4967, -inf
      %4978 = vmax.xlane.f32.xlu0 %v4977
      %v4979 = vpop.xlane.xlu0 %4978
      %v4980 = vsel %vm1573, %v4968, -inf
      %4981 = vmax.xlane.f32.xlu0 %v4980
      %v4982 = vpop.xlane.xlu0 %4981
      %v4983 = vsel %vm1573, %v4969, -inf
      %4984 = vmax.xlane.f32.xlu0 %v4983
      %v4985 = vpop.xlane.xlu0 %4984
      %v4986 = vsel %vm1573, %v4970, -inf
      %4987 = vmax.xlane.f32.xlu0 %v4986
      %v4988 = vpop.xlane.xlu0 %4987
      %v4989 = vsel %vm1573, %v4971, -inf
      %4990 = vmax.xlane.f32.xlu0 %v4989
      %v4991 = vpop.xlane.xlu0 %4990
      %v4992 = vsel %vm1573, %v4972, -inf
      %4993 = vmax.xlane.f32.xlu0 %v4992
      %v4994 = vpop.xlane.xlu0 %4993
      %v4995 = vsel %vm1573, %v4973, -inf
      %4996 = vmax.xlane.f32.xlu0 %v4995
      %v4997 = vpop.xlane.xlu0 %4996
      %v4998 = vsel %vm1573, %v4974, -inf
      %4999 = vmax.xlane.f32.xlu0 %v4998
      %v5000 = vpop.xlane.xlu0 %4999
      %v5001 = vsel %vm1573, %v4975, -inf
      %5002 = vmax.xlane.f32.xlu0 %v5001
      %v5003 = vpop.xlane.xlu0 %5002
      %v5004 = vsel %vm1573, %v4976, -inf
      %5005 = vmax.xlane.f32.xlu0 %v5004
      %v5006 = vpop.xlane.xlu0 %5005
      %v5007 = vsub.f32 %v4967, %v4979
      %v5008 = vsub.f32 %v4968, %v4982
      %v5009 = vsub.f32 %v4969, %v4985
      %v5010 = vsub.f32 %v4970, %v4988
      %v5011 = vsub.f32 %v4971, %v4991
      %v5012 = vsub.f32 %v4972, %v4994
      %v5013 = vsub.f32 %v4973, %v4997
      %v5014 = vsub.f32 %v4974, %v5000
      %v5015 = vsub.f32 %v4975, %v5003
      %v5016 = vsub.f32 %v4976, %v5006
      %v5017 = vmul.f32 %v5007, 1.442695
      %v5018 = vpow.pop %v5017
      %v5019 = vmul.f32 %v5008, 1.442695
      %v5020 = vpow.pop %v5019
      %v5021 = vmul.f32 %v5009, 1.442695
      %v5022 = vpow.pop %v5021
      %v5023 = vmul.f32 %v5010, 1.442695
      %v5024 = vpow.pop %v5023
      %v5025 = vmul.f32 %v5011, 1.442695
      %v5026 = vpow.pop %v5025
      %v5027 = vmul.f32 %v5012, 1.442695
      %v5028 = vpow.pop %v5027
      %v5029 = vmul.f32 %v5013, 1.442695
      %v5030 = vpow.pop %v5029
      %v5031 = vmul.f32 %v5014, 1.442695
      %v5032 = vpow.pop %v5031
      %v5033 = vmul.f32 %v5015, 1.442695
      %v5034 = vpow.pop %v5033
      %v5035 = vmul.f32 %v5016, 1.442695
      %v5036 = vpow.pop %v5035
      %v5037 = vsel %vm1573, %v5018, 0.0
      %5038 = vadd.xlane.f32.xlu0 %v5037
      %v5039 = vpop.xlane.xlu0 %5038
      %v5040 = vsel %vm1573, %v5020, 0.0
      %5041 = vadd.xlane.f32.xlu0 %v5040
      %v5042 = vpop.xlane.xlu0 %5041
      %v5043 = vsel %vm1573, %v5022, 0.0
      %5044 = vadd.xlane.f32.xlu0 %v5043
      %v5045 = vpop.xlane.xlu0 %5044
      %v5046 = vsel %vm1573, %v5024, 0.0
      %5047 = vadd.xlane.f32.xlu0 %v5046
      %v5048 = vpop.xlane.xlu0 %5047
      %v5049 = vsel %vm1573, %v5026, 0.0
      %5050 = vadd.xlane.f32.xlu0 %v5049
      %v5051 = vpop.xlane.xlu0 %5050
      %v5052 = vsel %vm1573, %v5028, 0.0
      %5053 = vadd.xlane.f32.xlu0 %v5052
      %v5054 = vpop.xlane.xlu0 %5053
      %v5055 = vsel %vm1573, %v5030, 0.0
      %5056 = vadd.xlane.f32.xlu0 %v5055
      %v5057 = vpop.xlane.xlu0 %5056
      %v5058 = vsel %vm1573, %v5032, 0.0
      %5059 = vadd.xlane.f32.xlu0 %v5058
      %v5060 = vpop.xlane.xlu0 %5059
      %v5061 = vsel %vm1573, %v5034, 0.0
      %5062 = vadd.xlane.f32.xlu0 %v5061
      %v5063 = vpop.xlane.xlu0 %5062
      %v5064 = vsel %vm1573, %v5036, 0.0
      %5065 = vadd.xlane.f32.xlu0 %v5064
      %v5066 = vpop.xlane.xlu0 %5065
      %v5067 = vrcp.pop %v5039
      %v5068 = vmul.f32 %v5018, %v5067
      %v5069 = vrcp.pop %v5042
      %v5070 = vmul.f32 %v5020, %v5069
      %v5071 = vrcp.pop %v5045
      %v5072 = vmul.f32 %v5022, %v5071
      %v5073 = vrcp.pop %v5048
      %v5074 = vmul.f32 %v5024, %v5073
      %v5075 = vrcp.pop %v5051
      %v5076 = vmul.f32 %v5026, %v5075
      %v5077 = vrcp.pop %v5054
      %v5078 = vmul.f32 %v5028, %v5077
      %v5079 = vrcp.pop %v5057
      %v5080 = vmul.f32 %v5030, %v5079
      %v5081 = vrcp.pop %v5060
      %v5082 = vmul.f32 %v5032, %v5081
      %v5083 = vrcp.pop %v5063
      %v5084 = vmul.f32 %v5034, %v5083
      %v5085 = vrcp.pop %v5066
      %v5086 = vmul.f32 %v5036, %v5085
      %v5087 = vmul.f32 %v1261, %v4767
      %v5088 = vmul.f32 %v1265, %v4767
      %v5089 = vmul.f32 %v1271, %v4767
      %v5090 = vmul.f32 %v1275, %v4767
      %v5091 = vmul.f32 %v1281, %v4767
      %v5092 = vmul.f32 %v1285, %v4767
      %v5093 = vmul.f32 %v1291, %v4767
      %v5094 = vmul.f32 %v1295, %v4767
      %v5095 = vmul.f32 %v1301, %v4767
      %v5096 = vmul.f32 %v1305, %v4767
      %v5098 = vsel %vm1573, %v5068, 0
      %v5101 = vsel %vm1573, %v5070, 0
      %v5104 = vsel %vm1573, %v5072, 0
      %v5107 = vsel %vm1573, %v5074, 0
      %v5110 = vsel %vm1573, %v5076, 0
      %v5113 = vsel %vm1573, %v5078, 0
      %v5116 = vsel %vm1573, %v5080, 0
      %v5119 = vsel %vm1573, %v5082, 0
      %v5122 = vsel %vm1573, %v5084, 0
      %v5125 = vsel %vm1573, %v5086, 0
      %5127 = vmatprep.subr.mxu0 0.0
      %5128 = vmatpush1.msra.mxu0 %v5087
      %5129 = vmatprep.subr.mxu0 0.0
      %5130 = vmatpush1.msra.mxu0 %v5088
      %5131 = vmatprep.subr.mxu0 0.0
      %5132 = vmatpush1.msra.mxu0 %v5089
      %5133 = vmatprep.subr.mxu0 0.0
      %5134 = vmatpush1.msra.mxu0 %v5090
      %5135 = vmatprep.subr.mxu0 0.0
      %5136 = vmatpush1.msra.mxu0 %v5091
      %5137 = vmatprep.subr.mxu0 0.0
      %5138 = vmatpush1.msra.mxu0 %v5092
      %5139 = vmatprep.subr.mxu0 0.0
      %5140 = vmatpush1.msra.mxu0 %v5093
      %5141 = vmatprep.subr.mxu0 0.0
      %5142 = vmatpush1.msra.mxu0 %v5094
      %5143 = vmatprep.subr.mxu0 0.0
      %5144 = vmatpush1.msra.mxu0 %v5095
      %5145 = vmatprep.subr.mxu0 0.0
      %5146 = vmatpush1.msra.mxu0 %v5096
      %5147 = vmatprep.subr.mxu0 0.0
      %5148 = vmatpush1.msra.mxu0 0.0
      %5149 = vmatprep.subr.mxu0 0.0
      %5150 = vmatpush1.msra.mxu0 0.0
      %5151 = vmatprep.subr.mxu0 0.0
      %5152 = vmatpush1.msra.mxu0 0.0
      %5153 = vmatprep.subr.mxu0 0.0
      %5154 = vmatpush1.msra.mxu0 0.0
      %5155 = vmatprep.subr.mxu0 0.0
      %5156 = vmatpush1.msra.mxu0 0.0
      %5157 = vmatprep.subr.mxu0 0.0
      %5158 = vmatpush1.msra.mxu0 0.0
      %5159 = vmatprep.subr.mxu0 0.0
      %5160 = vmatpush1.msra.mxu0 0.0
      %5161 = vmatprep.subr.mxu0 0.0
      %5162 = vmatpush1.msra.mxu0 0.0
      %5163 = vmatprep.subr.mxu0 0.0
      %5164 = vmatpush1.msra.mxu0 0.0
      %5165 = vmatprep.subr.mxu0 0.0
      %5166 = vmatpush1.msra.mxu0 0.0
      %5167 = vmatprep.subr.mxu0 0.0
      %5168 = vmatpush1.msra.mxu0 0.0
      %5169 = vmatprep.subr.mxu0 0.0
      %5170 = vmatpush1.msra.mxu0 0.0
      %5171 = vmatprep.subr.mxu0 0.0
      %5172 = vmatpush1.msra.mxu0 0.0
      %5173 = vmatprep.subr.mxu0 0.0
      %5174 = vmatpush1.msra.mxu0 0.0
      %5175 = vmatprep.subr.mxu0 0.0
      %5176 = vmatpush1.msra.mxu0 0.0
      %5177 = vmatprep.subr.mxu0 0.0
      %5178 = vmatpush1.msra.mxu0 0.0
      %5179 = vmatprep.subr.mxu0 0.0
      %5180 = vmatpush1.msra.mxu0 0.0
      %5181 = vmatprep.subr.mxu0 0.0
      %5182 = vmatpush1.msra.mxu0 0.0
      %5183 = vmatprep.subr.mxu0 0.0
      %5184 = vmatpush1.msra.mxu0 0.0
      %5185 = vmatprep.subr.mxu0 0.0
      %5186 = vmatpush1.msra.mxu0 0.0
      %5187 = vmatprep.subr.mxu0 0.0
      %5188 = vmatpush1.msra.mxu0 0.0
      %5189 = vmatprep.subr.mxu0 0.0
      %5190 = vmatpush1.msra.mxu0 0.0
      %5191 = vmatprep.mubr.f32.mxu0 0.0
      %5192 = vmatmul.mubr.f32.gmra.mrb[0].mxu0 %v5098
      %v5193 = vpop.f32.mrb[0].mxu0
      %v5194 = vadd.f32 0.0, %v5193
      %v5195 = vpop.f32.mrb[0].mxu0
      %5196 = vmatprep.mubr.f32.mxu0 0.0
      %5197 = vmatmul.mubr.f32.gmra.mrb[0].mxu0 %v5101
      %v5198 = vpop.f32.mrb[0].mxu0
      %v5199 = vadd.f32 0.0, %v5198
      %v5200 = vpop.f32.mrb[0].mxu0
      %5201 = vmatprep.mubr.f32.mxu0 0.0
      %5202 = vmatmul.mubr.f32.gmra.mrb[0].mxu0 %v5104
      %v5203 = vpop.f32.mrb[0].mxu0
      %v5204 = vadd.f32 0.0, %v5203
      %v5205 = vpop.f32.mrb[0].mxu0
      %5206 = vmatprep.mubr.f32.mxu0 0.0
      %5207 = vmatmul.mubr.f32.gmra.mrb[0].mxu0 %v5107
      %v5208 = vpop.f32.mrb[0].mxu0
      %v5209 = vadd.f32 0.0, %v5208
      %v5210 = vpop.f32.mrb[0].mxu0
      %5211 = vmatprep.mubr.f32.mxu0 0.0
      %5212 = vmatmul.mubr.f32.gmra.mrb[0].mxu0 %v5110
      %v5213 = vpop.f32.mrb[0].mxu0
      %v5214 = vadd.f32 0.0, %v5213
      %v5215 = vpop.f32.mrb[0].mxu0
      %5216 = vmatprep.mubr.f32.mxu0 0.0
      %5217 = vmatmul.mubr.f32.gmra.mrb[0].mxu0 %v5113
      %v5218 = vpop.f32.mrb[0].mxu0
      %v5219 = vadd.f32 0.0, %v5218
      %v5220 = vpop.f32.mrb[0].mxu0
      %5221 = vmatprep.mubr.f32.mxu0 0.0
      %5222 = vmatmul.mubr.f32.gmra.mrb[0].mxu0 %v5116
      %v5223 = vpop.f32.mrb[0].mxu0
      %v5224 = vadd.f32 0.0, %v5223
      %v5225 = vpop.f32.mrb[0].mxu0
      %5226 = vmatprep.mubr.f32.mxu0 0.0
      %5227 = vmatmul.mubr.f32.gmra.mrb[0].mxu0 %v5119
      %v5228 = vpop.f32.mrb[0].mxu0
      %v5229 = vadd.f32 0.0, %v5228
      %v5230 = vpop.f32.mrb[0].mxu0
      %5231 = vmatprep.mubr.f32.mxu0 0.0
      %5232 = vmatmul.mubr.f32.gmra.mrb[0].mxu0 %v5122
      %v5233 = vpop.f32.mrb[0].mxu0
      %v5234 = vadd.f32 0.0, %v5233
      %v5235 = vpop.f32.mrb[0].mxu0
      %5236 = vmatprep.mubr.f32.mxu0 0.0
      %5237 = vmatmul.mubr.f32.gmra.mrb[0].mxu0 %v5125
      %v5238 = vpop.f32.mrb[0].mxu0
      %v5239 = vadd.f32 0.0, %v5238
      %v5240 = vpop.f32.mrb[0].mxu0
      %5241 = vdwg.mxu0
      %v5242 = vadd.f32 %v4753, %v5194
      %v5243 = vadd.f32 %v4754, %v5199
      %v5244 = vadd.f32 %v4755, %v5204
      %v5245 = vadd.f32 %v4756, %v5209
      %v5246 = vadd.f32 %v4757, %v5214
      %v5247 = vadd.f32 %v4758, %v5219
      %v5248 = vadd.f32 %v4759, %v5224
      %v5249 = vadd.f32 %v4760, %v5229
      %v5250 = vadd.f32 %v4761, %v5234
      %v5251 = vadd.f32 %v4762, %v5239
      %v5252 = vpack.c.bf16 %v5243, %v5242
      %v5253 = vpack.c.bf16 %v5245, %v5244
      %v5254 = vpack.c.bf16 %v5247, %v5246
      %v5255 = vpack.c.bf16 %v5249, %v5248
      %v5256 = vpack.c.bf16 %v5251, %v5250
      %v5257 = vld [vmem:[%s877] sm:$0xf]
      %v5258 = vld [vmem:[%s877 + $0x4] sm:$0xf]
      %v5259 = vld [vmem:[%s877 + $0x8] sm:$0xf]
      %v5260 = vld [vmem:[%s877 + $0xc] sm:$0xf]
      %v5261 = vld [vmem:[%s877 + $0x10] sm:$0xf]
      %v5262 = vld [vmem:[%s877 + $0x14] sm:$0xf]
      %v5263 = vld [vmem:[%s877 + $0x18] sm:$0xf]
      %v5264 = vld [vmem:[%s877 + $0x1c] sm:$0xf]
      %v5265 = vld [vmem:[%s884] sm:$0x1]
      %v5267 = vlaneseq
      %v5268 = vshrl.u32 %v5267, 7
      %v5269 = vsub.s32 0, %v5268
      %v5270 = vrot.slane %v5265, %v5269
      %v5280 = vunpack.c.l.b16 %v5257
      %v5281 = vunpack.c.l.b16 %v5258
      %v5282 = vunpack.c.l.b16 %v5259
      %v5283 = vunpack.c.l.b16 %v5260
      %v5284 = vunpack.c.l.b16 %v5261
      %v5285 = vunpack.c.l.b16 %v5262
      %v5286 = vunpack.c.l.b16 %v5263
      %v5287 = vunpack.c.l.b16 %v5264
      %v5288 = vpack.c.b16 %v5281, %v5280
      %v5289 = vpack.c.b16 %v5283, %v5282
      %v5290 = vpack.c.b16 %v5285, %v5284
      %v5291 = vpack.c.b16 %v5287, %v5286
      %v5297 = vsel %vm1208, %v5252, 0
      %v5300 = vsel %vm1208, %v5253, 0
      %v5303 = vsel %vm1208, %v5254, 0
      %v5306 = vsel %vm1208, %v5255, 0
      %v5309 = vsel %vm1208, %v5256, 0
      %5311 = vmatprep.subr.bf16.mxu0 0
      %5312 = vmatpush1.bf16.msra.mxu0 %v5288
      %5313 = vmatprep.subr.bf16.mxu0 0
      %5314 = vmatpush1.bf16.msra.mxu0 %v5289
      %5315 = vmatprep.subr.bf16.mxu0 0
      %5316 = vmatpush1.bf16.msra.mxu0 %v5290
      %5317 = vmatprep.subr.bf16.mxu0 0
      %5318 = vmatpush1.bf16.msra.mxu0 %v5291
      %5319 = vmatprep.subr.bf16.mxu0 0
      %5320 = vmatpush1.bf16.msra.mxu0 0
      %5321 = vmatprep.subr.bf16.mxu0 0
      %5322 = vmatpush1.bf16.msra.mxu0 0
      %5323 = vmatprep.subr.bf16.mxu0 0
      %5324 = vmatpush1.bf16.msra.mxu0 0
      %5325 = vmatprep.subr.bf16.mxu0 0
      %5326 = vmatpush1.bf16.msra.mxu0 0
      %5327 = vmatprep.subr.bf16.mxu0 0
      %5328 = vmatpush1.bf16.msra.mxu0 0
      %5329 = vmatprep.subr.bf16.mxu0 0
      %5330 = vmatpush1.bf16.msra.mxu0 0
      %5331 = vmatprep.subr.bf16.mxu0 0
      %5332 = vmatpush1.bf16.msra.mxu0 0
      %5333 = vmatprep.subr.bf16.mxu0 0
      %5334 = vmatpush1.bf16.msra.mxu0 0
      %5335 = vmatprep.subr.bf16.mxu0 0
      %5336 = vmatpush1.bf16.msra.mxu0 0
      %5337 = vmatprep.subr.bf16.mxu0 0
      %5338 = vmatpush1.bf16.msra.mxu0 0
      %5339 = vmatprep.subr.bf16.mxu0 0
      %5340 = vmatpush1.bf16.msra.mxu0 0
      %5341 = vmatprep.subr.bf16.mxu0 0
      %5342 = vmatpush1.bf16.msra.mxu0 0
      %5343 = vmatprep.mubr.bf16.mxu0 0
      %5344 = vmatmul.mubr.bf16.gmra.mrb[0].mxu0 %v5297
      %v5345 = vpop.f32.mrb[0].mxu0
      %v5346 = vadd.f32 %v5270, %v5345
      %v5347 = vpop.f32.mrb[0].mxu0
      %v5348 = vpop.f32.mrb[0].mxu0
      %v5349 = vadd.f32 %v5270, %v5348
      %v5350 = vpop.f32.mrb[0].mxu0
      %5351 = vmatprep.mubr.bf16.mxu0 0
      %5352 = vmatmul.mubr.bf16.gmra.mrb[0].mxu0 %v5300
      %v5353 = vpop.f32.mrb[0].mxu0
      %v5354 = vadd.f32 %v5270, %v5353
      %v5355 = vpop.f32.mrb[0].mxu0
      %v5356 = vpop.f32.mrb[0].mxu0
      %v5357 = vadd.f32 %v5270, %v5356
      %v5358 = vpop.f32.mrb[0].mxu0
      %5359 = vmatprep.mubr.bf16.mxu0 0
      %5360 = vmatmul.mubr.bf16.gmra.mrb[0].mxu0 %v5303
      %v5361 = vpop.f32.mrb[0].mxu0
      %v5362 = vadd.f32 %v5270, %v5361
      %v5363 = vpop.f32.mrb[0].mxu0
      %v5364 = vpop.f32.mrb[0].mxu0
      %v5365 = vadd.f32 %v5270, %v5364
      %v5366 = vpop.f32.mrb[0].mxu0
      %5367 = vmatprep.mubr.bf16.mxu0 0
      %5368 = vmatmul.mubr.bf16.gmra.mrb[0].mxu0 %v5306
      %v5369 = vpop.f32.mrb[0].mxu0
      %v5370 = vadd.f32 %v5270, %v5369
      %v5371 = vpop.f32.mrb[0].mxu0
      %v5372 = vpop.f32.mrb[0].mxu0
      %v5373 = vadd.f32 %v5270, %v5372
      %v5374 = vpop.f32.mrb[0].mxu0
      %5375 = vmatprep.mubr.bf16.mxu0 0
      %5376 = vmatmul.mubr.bf16.gmra.mrb[0].mxu0 %v5309
      %v5377 = vpop.f32.mrb[0].mxu0
      %v5378 = vadd.f32 %v5270, %v5377
      %v5379 = vpop.f32.mrb[0].mxu0
      %v5380 = vpop.f32.mrb[0].mxu0
      %v5381 = vadd.f32 %v5270, %v5380
      %v5382 = vpop.f32.mrb[0].mxu0
      %5383 = vdwg.mxu0
      %v5384 = vadd.f32 %v1123, %v5346
      %v5385 = vadd.f32 %v1124, %v5349
      %v5386 = vadd.f32 %v1125, %v5354
      %v5387 = vadd.f32 %v1126, %v5357
      %v5388 = vadd.f32 %v1127, %v5362
      %v5389 = vadd.f32 %v1128, %v5365
      %v5390 = vadd.f32 %v1129, %v5370
      %v5391 = vadd.f32 %v1130, %v5373
      %v5392 = vadd.f32 %v1131, %v5378
      %v5393 = vadd.f32 %v1132, %v5381
      %v5394 = vsel %vm1208, %v5384, 0.0
      %5395 = vadd.xlane.f32.xlu0 %v5394
      %v5396 = vpop.xlane.xlu0 %5395
      %v5397 = vsel %vm1208, %v5385, 0.0
      %5398 = vadd.xlane.f32.xlu0 %v5397
      %v5399 = vpop.xlane.xlu0 %5398
      %v5400 = vsel %vm1208, %v5386, 0.0
      %5401 = vadd.xlane.f32.xlu0 %v5400
      %v5402 = vpop.xlane.xlu0 %5401
      %v5403 = vsel %vm1208, %v5387, 0.0
      %5404 = vadd.xlane.f32.xlu0 %v5403
      %v5405 = vpop.xlane.xlu0 %5404
      %v5406 = vsel %vm1208, %v5388, 0.0
      %5407 = vadd.xlane.f32.xlu0 %v5406
      %v5408 = vpop.xlane.xlu0 %5407
      %v5409 = vsel %vm1208, %v5389, 0.0
      %5410 = vadd.xlane.f32.xlu0 %v5409
      %v5411 = vpop.xlane.xlu0 %5410
      %v5412 = vsel %vm1208, %v5390, 0.0
      %5413 = vadd.xlane.f32.xlu0 %v5412
      %v5414 = vpop.xlane.xlu0 %5413
      %v5415 = vsel %vm1208, %v5391, 0.0
      %5416 = vadd.xlane.f32.xlu0 %v5415
      %v5417 = vpop.xlane.xlu0 %5416
      %v5418 = vsel %vm1208, %v5392, 0.0
      %5419 = vadd.xlane.f32.xlu0 %v5418
      %v5420 = vpop.xlane.xlu0 %5419
      %v5421 = vsel %vm1208, %v5393, 0.0
      %5422 = vadd.xlane.f32.xlu0 %v5421
      %v5423 = vpop.xlane.xlu0 %5422
      %v5424 = vrcp.pop 64.0
      %v5425 = vmul.f32 %v5396, %v5424
      %v5426 = vmul.f32 %v5399, %v5424
      %v5427 = vmul.f32 %v5402, %v5424
      %v5428 = vmul.f32 %v5405, %v5424
      %v5429 = vmul.f32 %v5408, %v5424
      %v5430 = vmul.f32 %v5411, %v5424
      %v5431 = vmul.f32 %v5414, %v5424
      %v5432 = vmul.f32 %v5417, %v5424
      %v5433 = vmul.f32 %v5420, %v5424
      %v5434 = vmul.f32 %v5423, %v5424
      %v5435 = vsub.f32 %v5384, %v5425
      %v5436 = vsub.f32 %v5385, %v5426
      %v5437 = vsub.f32 %v5386, %v5427
      %v5438 = vsub.f32 %v5387, %v5428
      %v5439 = vsub.f32 %v5388, %v5429
      %v5440 = vsub.f32 %v5389, %v5430
      %v5441 = vsub.f32 %v5390, %v5431
      %v5442 = vsub.f32 %v5391, %v5432
      %v5443 = vsub.f32 %v5392, %v5433
      %v5444 = vsub.f32 %v5393, %v5434
      %v5445 = vmul.f32 %v5435, %v5435
      %v5446 = vmul.f32 %v5436, %v5436
      %v5447 = vmul.f32 %v5437, %v5437
      %v5448 = vmul.f32 %v5438, %v5438
      %v5449 = vmul.f32 %v5439, %v5439
      %v5450 = vmul.f32 %v5440, %v5440
      %v5451 = vmul.f32 %v5441, %v5441
      %v5452 = vmul.f32 %v5442, %v5442
      %v5453 = vmul.f32 %v5443, %v5443
      %v5454 = vmul.f32 %v5444, %v5444
      %v5455 = vsel %vm1208, %v5445, 0.0
      %5456 = vadd.xlane.f32.xlu0 %v5455
      %v5457 = vpop.xlane.xlu0 %5456
      %v5458 = vsel %vm1208, %v5446, 0.0
      %5459 = vadd.xlane.f32.xlu0 %v5458
      %v5460 = vpop.xlane.xlu0 %5459
      %v5461 = vsel %vm1208, %v5447, 0.0
      %5462 = vadd.xlane.f32.xlu0 %v5461
      %v5463 = vpop.xlane.xlu0 %5462
      %v5464 = vsel %vm1208, %v5448, 0.0
      %5465 = vadd.xlane.f32.xlu0 %v5464
      %v5466 = vpop.xlane.xlu0 %5465
      %v5467 = vsel %vm1208, %v5449, 0.0
      %5468 = vadd.xlane.f32.xlu0 %v5467
      %v5469 = vpop.xlane.xlu0 %5468
      %v5470 = vsel %vm1208, %v5450, 0.0
      %5471 = vadd.xlane.f32.xlu0 %v5470
      %v5472 = vpop.xlane.xlu0 %5471
      %v5473 = vsel %vm1208, %v5451, 0.0
      %5474 = vadd.xlane.f32.xlu0 %v5473
      %v5475 = vpop.xlane.xlu0 %5474
      %v5476 = vsel %vm1208, %v5452, 0.0
      %5477 = vadd.xlane.f32.xlu0 %v5476
      %v5478 = vpop.xlane.xlu0 %5477
      %v5479 = vsel %vm1208, %v5453, 0.0
      %5480 = vadd.xlane.f32.xlu0 %v5479
      %v5481 = vpop.xlane.xlu0 %5480
      %v5482 = vsel %vm1208, %v5454, 0.0
      %5483 = vadd.xlane.f32.xlu0 %v5482
      %v5484 = vpop.xlane.xlu0 %5483
      %v5485 = vmul.f32 %v5457, %v5424
      %v5486 = vmul.f32 %v5460, %v5424
      %v5487 = vmul.f32 %v5463, %v5424
      %v5488 = vmul.f32 %v5466, %v5424
      %v5489 = vmul.f32 %v5469, %v5424
      %v5490 = vmul.f32 %v5472, %v5424
      %v5491 = vmul.f32 %v5475, %v5424
      %v5492 = vmul.f32 %v5478, %v5424
      %v5493 = vmul.f32 %v5481, %v5424
      %v5494 = vmul.f32 %v5484, %v5424
      %v5495 = vadd.f32 %v5485, 1e-05
      %v5496 = vadd.f32 %v5486, 1e-05
      %v5497 = vadd.f32 %v5487, 1e-05
      %v5498 = vadd.f32 %v5488, 1e-05
      %v5499 = vadd.f32 %v5489, 1e-05
      %v5500 = vadd.f32 %v5490, 1e-05
      %v5501 = vadd.f32 %v5491, 1e-05
      %v5502 = vadd.f32 %v5492, 1e-05
      %v5503 = vadd.f32 %v5493, 1e-05
      %v5504 = vadd.f32 %v5494, 1e-05
      %v5505 = vrsqrt.pop %v5495
      %v5506 = vrsqrt.pop %v5496
      %v5507 = vrsqrt.pop %v5497
      %v5508 = vrsqrt.pop %v5498
      %v5509 = vrsqrt.pop %v5499
      %v5510 = vrsqrt.pop %v5500
      %v5511 = vrsqrt.pop %v5501
      %v5512 = vrsqrt.pop %v5502
      %v5513 = vrsqrt.pop %v5503
      %v5514 = vrsqrt.pop %v5504
      %v5515 = vmul.f32 %v5435, %v5505
      %v5516 = vmul.f32 %v5436, %v5506
      %v5517 = vmul.f32 %v5437, %v5507
      %v5518 = vmul.f32 %v5438, %v5508
      %v5519 = vmul.f32 %v5439, %v5509
      %v5520 = vmul.f32 %v5440, %v5510
      %v5521 = vmul.f32 %v5441, %v5511
      %v5522 = vmul.f32 %v5442, %v5512
      %v5523 = vmul.f32 %v5443, %v5513
      %v5524 = vmul.f32 %v5444, %v5514
      %v5525 = vld [vmem:[%s924] sm:$0x1]
      %v5527 = vlaneseq
      %v5528 = vshrl.u32 %v5527, 7
      %v5529 = vsub.s32 0, %v5528
      %v5530 = vrot.slane %v5525, %v5529
      %v5532 = vmul.f32 %v5515, %v5530
      %v5533 = vmul.f32 %v5516, %v5530
      %v5534 = vmul.f32 %v5517, %v5530
      %v5535 = vmul.f32 %v5518, %v5530
      %v5536 = vmul.f32 %v5519, %v5530
      %v5537 = vmul.f32 %v5520, %v5530
      %v5538 = vmul.f32 %v5521, %v5530
      %v5539 = vmul.f32 %v5522, %v5530
      %v5540 = vmul.f32 %v5523, %v5530
      %v5541 = vmul.f32 %v5524, %v5530
      %v5542 = vld [vmem:[%s931] sm:$0x1]
      %v5544 = vlaneseq
      %v5545 = vshrl.u32 %v5544, 7
      %v5546 = vsub.s32 0, %v5545
      %v5547 = vrot.slane %v5542, %v5546
      %v5549 = vadd.f32 %v5532, %v5547
      %v5550 = vadd.f32 %v5533, %v5547
      %v5551 = vadd.f32 %v5534, %v5547
      %v5552 = vadd.f32 %v5535, %v5547
      %v5553 = vadd.f32 %v5536, %v5547
      %v5554 = vadd.f32 %v5537, %v5547
      %v5555 = vadd.f32 %v5538, %v5547
      %v5556 = vadd.f32 %v5539, %v5547
      %v5557 = vadd.f32 %v5540, %v5547
      %v5558 = vadd.f32 %v5541, %v5547
      %v5559 = vpack.c.bf16 %v5550, %v5549
      %v5560 = vpack.c.bf16 %v5552, %v5551
      %v5561 = vpack.c.bf16 %v5554, %v5553
      %v5562 = vpack.c.bf16 %v5556, %v5555
      %v5563 = vpack.c.bf16 %v5558, %v5557
      %v5564 = vld [vmem:[%s893] sm:$0xff]
      %v5565 = vld [vmem:[%s893 + $0x8] sm:$0xff]
      %v5566 = vld [vmem:[%s893 + $0x10] sm:$0xff]
      %v5567 = vld [vmem:[%s893 + $0x18] sm:$0xff]
      %v5568 = vld [vmem:[%s893 + $0x20] sm:$0xff]
      %v5569 = vld [vmem:[%s893 + $0x28] sm:$0xff]
      %v5570 = vld [vmem:[%s893 + $0x30] sm:$0xff]
      %v5571 = vld [vmem:[%s893 + $0x38] sm:$0xff]
      %v5572 = vld [vmem:[%s893 + $0x40] sm:$0xff]
      %v5573 = vld [vmem:[%s893 + $0x48] sm:$0xff]
      %v5574 = vld [vmem:[%s893 + $0x50] sm:$0xff]
      %v5575 = vld [vmem:[%s893 + $0x58] sm:$0xff]
      %v5576 = vld [vmem:[%s893 + $0x60] sm:$0xff]
      %v5577 = vld [vmem:[%s893 + $0x68] sm:$0xff]
      %v5578 = vld [vmem:[%s893 + $0x70] sm:$0xff]
      %v5579 = vld [vmem:[%s893 + $0x78] sm:$0xff]
      %v5580 = vld [vmem:[%s893 + $0x80] sm:$0xff]
      %v5581 = vld [vmem:[%s893 + $0x88] sm:$0xff]
      %v5582 = vld [vmem:[%s893 + $0x90] sm:$0xff]
      %v5583 = vld [vmem:[%s893 + $0x98] sm:$0xff]
      %v5584 = vld [vmem:[%s893 + $0xa0] sm:$0xff]
      %v5585 = vld [vmem:[%s893 + $0xa8] sm:$0xff]
      %v5586 = vld [vmem:[%s893 + $0xb0] sm:$0xff]
      %v5587 = vld [vmem:[%s893 + $0xb8] sm:$0xff]
      %v5588 = vld [vmem:[%s893 + $0xc0] sm:$0xff]
      %v5589 = vld [vmem:[%s893 + $0xc8] sm:$0xff]
      %v5590 = vld [vmem:[%s893 + $0xd0] sm:$0xff]
      %v5591 = vld [vmem:[%s893 + $0xd8] sm:$0xff]
      %v5592 = vld [vmem:[%s893 + $0xe0] sm:$0xff]
      %v5593 = vld [vmem:[%s893 + $0xe8] sm:$0xff]
      %v5594 = vld [vmem:[%s893 + $0xf0] sm:$0xff]
      %v5595 = vld [vmem:[%s893 + $0xf8] sm:$0xff]
      %v5596 = vld [vmem:[%s893 + $0x100] sm:$0xff]
      %v5597 = vld [vmem:[%s893 + $0x108] sm:$0xff]
      %v5598 = vld [vmem:[%s893 + $0x110] sm:$0xff]
      %v5599 = vld [vmem:[%s893 + $0x118] sm:$0xff]
      %v5600 = vld [vmem:[%s893 + $0x120] sm:$0xff]
      %v5601 = vld [vmem:[%s893 + $0x128] sm:$0xff]
      %v5602 = vld [vmem:[%s893 + $0x130] sm:$0xff]
      %v5603 = vld [vmem:[%s893 + $0x138] sm:$0xff]
      %v5604 = vld [vmem:[%s893 + $0x140] sm:$0xff]
      %v5605 = vld [vmem:[%s893 + $0x148] sm:$0xff]
      %v5606 = vld [vmem:[%s893 + $0x150] sm:$0xff]
      %v5607 = vld [vmem:[%s893 + $0x158] sm:$0xff]
      %v5608 = vld [vmem:[%s893 + $0x160] sm:$0xff]
      %v5609 = vld [vmem:[%s893 + $0x168] sm:$0xff]
      %v5610 = vld [vmem:[%s893 + $0x170] sm:$0xff]
      %v5611 = vld [vmem:[%s893 + $0x178] sm:$0xff]
      %v5612 = vld [vmem:[%s893 + $0x180] sm:$0xff]
      %v5613 = vld [vmem:[%s893 + $0x188] sm:$0xff]
      %v5614 = vld [vmem:[%s893 + $0x190] sm:$0xff]
      %v5615 = vld [vmem:[%s893 + $0x198] sm:$0xff]
      %v5616 = vld [vmem:[%s893 + $0x1a0] sm:$0xff]
      %v5617 = vld [vmem:[%s893 + $0x1a8] sm:$0xff]
      %v5618 = vld [vmem:[%s893 + $0x1b0] sm:$0xff]
      %v5619 = vld [vmem:[%s893 + $0x1b8] sm:$0xff]
      %v5620 = vld [vmem:[%s893 + $0x1c0] sm:$0xff]
      %v5621 = vld [vmem:[%s893 + $0x1c8] sm:$0xff]
      %v5622 = vld [vmem:[%s893 + $0x1d0] sm:$0xff]
      %v5623 = vld [vmem:[%s893 + $0x1d8] sm:$0xff]
      %v5624 = vld [vmem:[%s893 + $0x1e0] sm:$0xff]
      %v5625 = vld [vmem:[%s893 + $0x1e8] sm:$0xff]
      %v5626 = vld [vmem:[%s893 + $0x1f0] sm:$0xff]
      %v5627 = vld [vmem:[%s893 + $0x1f8] sm:$0xff]
      %v5628 = vld [vmem:[%s901] sm:$0xff]
      %v5629 = vld [vmem:[%s901 + $0x8] sm:$0xff]
      %v5632 = vlaneseq
      %v5633 = vshrl.u32 %v5632, 7
      %v5634 = vsub.s32 0, %v5633
      %v5635 = vrot.slane %v5628, %v5634
      %v5636 = vlaneseq
      %v5637 = vshrl.u32 %v5636, 7
      %v5638 = vsub.s32 1, %v5637
      %v5639 = vrot.slane %v5628, %v5638
      %v5640 = vlaneseq
      %v5641 = vshrl.u32 %v5640, 7
      %v5642 = vsub.s32 2, %v5641
      %v5643 = vrot.slane %v5628, %v5642
      %v5644 = vlaneseq
      %v5645 = vshrl.u32 %v5644, 7
      %v5646 = vsub.s32 3, %v5645
      %v5647 = vrot.slane %v5628, %v5646
      %v5648 = vlaneseq
      %v5649 = vshrl.u32 %v5648, 7
      %v5650 = vsub.s32 4, %v5649
      %v5651 = vrot.slane %v5628, %v5650
      %v5652 = vlaneseq
      %v5653 = vshrl.u32 %v5652, 7
      %v5654 = vsub.s32 5, %v5653
      %v5655 = vrot.slane %v5628, %v5654
      %v5656 = vlaneseq
      %v5657 = vshrl.u32 %v5656, 7
      %v5658 = vsub.s32 6, %v5657
      %v5659 = vrot.slane %v5628, %v5658
      %v5660 = vlaneseq
      %v5661 = vshrl.u32 %v5660, 7
      %v5662 = vsub.s32 7, %v5661
      %v5663 = vrot.slane %v5628, %v5662
      %v5664 = vlaneseq
      %v5665 = vshrl.u32 %v5664, 7
      %v5666 = vsub.s32 0, %v5665
      %v5667 = vrot.slane %v5629, %v5666
      %v5668 = vlaneseq
      %v5669 = vshrl.u32 %v5668, 7
      %v5670 = vsub.s32 1, %v5669
      %v5671 = vrot.slane %v5629, %v5670
      %v5672 = vlaneseq
      %v5673 = vshrl.u32 %v5672, 7
      %v5674 = vsub.s32 2, %v5673
      %v5675 = vrot.slane %v5629, %v5674
      %v5676 = vlaneseq
      %v5677 = vshrl.u32 %v5676, 7
      %v5678 = vsub.s32 3, %v5677
      %v5679 = vrot.slane %v5629, %v5678
      %v5680 = vlaneseq
      %v5681 = vshrl.u32 %v5680, 7
      %v5682 = vsub.s32 4, %v5681
      %v5683 = vrot.slane %v5629, %v5682
      %v5684 = vlaneseq
      %v5685 = vshrl.u32 %v5684, 7
      %v5686 = vsub.s32 5, %v5685
      %v5687 = vrot.slane %v5629, %v5686
      %v5688 = vlaneseq
      %v5689 = vshrl.u32 %v5688, 7
      %v5690 = vsub.s32 6, %v5689
      %v5691 = vrot.slane %v5629, %v5690
      %v5692 = vlaneseq
      %v5693 = vshrl.u32 %v5692, 7
      %v5694 = vsub.s32 7, %v5693
      %v5695 = vrot.slane %v5629, %v5694
      %v5776 = vunpack.c.l.b16 %v5564
      %v5777 = vunpack.c.h.b16 %v5564
      %v5778 = vunpack.c.l.b16 %v5565
      %v5779 = vunpack.c.h.b16 %v5565
      %v5780 = vunpack.c.l.b16 %v5566
      %v5781 = vunpack.c.h.b16 %v5566
      %v5782 = vunpack.c.l.b16 %v5567
      %v5783 = vunpack.c.h.b16 %v5567
      %v5784 = vunpack.c.l.b16 %v5568
      %v5785 = vunpack.c.h.b16 %v5568
      %v5786 = vunpack.c.l.b16 %v5569
      %v5787 = vunpack.c.h.b16 %v5569
      %v5788 = vunpack.c.l.b16 %v5570
      %v5789 = vunpack.c.h.b16 %v5570
      %v5790 = vunpack.c.l.b16 %v5571
      %v5791 = vunpack.c.h.b16 %v5571
      %v5792 = vunpack.c.l.b16 %v5572
      %v5793 = vunpack.c.h.b16 %v5572
      %v5794 = vunpack.c.l.b16 %v5573
      %v5795 = vunpack.c.h.b16 %v5573
      %v5796 = vunpack.c.l.b16 %v5574
      %v5797 = vunpack.c.h.b16 %v5574
      %v5798 = vunpack.c.l.b16 %v5575
      %v5799 = vunpack.c.h.b16 %v5575
      %v5800 = vunpack.c.l.b16 %v5576
      %v5801 = vunpack.c.h.b16 %v5576
      %v5802 = vunpack.c.l.b16 %v5577
      %v5803 = vunpack.c.h.b16 %v5577
      %v5804 = vunpack.c.l.b16 %v5578
      %v5805 = vunpack.c.h.b16 %v5578
      %v5806 = vunpack.c.l.b16 %v5579
      %v5807 = vunpack.c.h.b16 %v5579
      %v5808 = vunpack.c.l.b16 %v5580
      %v5809 = vunpack.c.h.b16 %v5580
      %v5810 = vunpack.c.l.b16 %v5581
      %v5811 = vunpack.c.h.b16 %v5581
      %v5812 = vunpack.c.l.b16 %v5582
      %v5813 = vunpack.c.h.b16 %v5582
      %v5814 = vunpack.c.l.b16 %v5583
      %v5815 = vunpack.c.h.b16 %v5583
      %v5816 = vunpack.c.l.b16 %v5584
      %v5817 = vunpack.c.h.b16 %v5584
      %v5818 = vunpack.c.l.b16 %v5585
      %v5819 = vunpack.c.h.b16 %v5585
      %v5820 = vunpack.c.l.b16 %v5586
      %v5821 = vunpack.c.h.b16 %v5586
      %v5822 = vunpack.c.l.b16 %v5587
      %v5823 = vunpack.c.h.b16 %v5587
      %v5824 = vunpack.c.l.b16 %v5588
      %v5825 = vunpack.c.h.b16 %v5588
      %v5826 = vunpack.c.l.b16 %v5589
      %v5827 = vunpack.c.h.b16 %v5589
      %v5828 = vunpack.c.l.b16 %v5590
      %v5829 = vunpack.c.h.b16 %v5590
      %v5830 = vunpack.c.l.b16 %v5591
      %v5831 = vunpack.c.h.b16 %v5591
      %v5832 = vunpack.c.l.b16 %v5592
      %v5833 = vunpack.c.h.b16 %v5592
      %v5834 = vunpack.c.l.b16 %v5593
      %v5835 = vunpack.c.h.b16 %v5593
      %v5836 = vunpack.c.l.b16 %v5594
      %v5837 = vunpack.c.h.b16 %v5594
      %v5838 = vunpack.c.l.b16 %v5595
      %v5839 = vunpack.c.h.b16 %v5595
      %v5840 = vunpack.c.l.b16 %v5596
      %v5841 = vunpack.c.h.b16 %v5596
      %v5842 = vunpack.c.l.b16 %v5597
      %v5843 = vunpack.c.h.b16 %v5597
      %v5844 = vunpack.c.l.b16 %v5598
      %v5845 = vunpack.c.h.b16 %v5598
      %v5846 = vunpack.c.l.b16 %v5599
      %v5847 = vunpack.c.h.b16 %v5599
      %v5848 = vunpack.c.l.b16 %v5600
      %v5849 = vunpack.c.h.b16 %v5600
      %v5850 = vunpack.c.l.b16 %v5601
      %v5851 = vunpack.c.h.b16 %v5601
      %v5852 = vunpack.c.l.b16 %v5602
      %v5853 = vunpack.c.h.b16 %v5602
      %v5854 = vunpack.c.l.b16 %v5603
      %v5855 = vunpack.c.h.b16 %v5603
      %v5856 = vunpack.c.l.b16 %v5604
      %v5857 = vunpack.c.h.b16 %v5604
      %v5858 = vunpack.c.l.b16 %v5605
      %v5859 = vunpack.c.h.b16 %v5605
      %v5860 = vunpack.c.l.b16 %v5606
      %v5861 = vunpack.c.h.b16 %v5606
      %v5862 = vunpack.c.l.b16 %v5607
      %v5863 = vunpack.c.h.b16 %v5607
      %v5864 = vunpack.c.l.b16 %v5608
      %v5865 = vunpack.c.h.b16 %v5608
      %v5866 = vunpack.c.l.b16 %v5609
      %v5867 = vunpack.c.h.b16 %v5609
      %v5868 = vunpack.c.l.b16 %v5610
      %v5869 = vunpack.c.h.b16 %v5610
      %v5870 = vunpack.c.l.b16 %v5611
      %v5871 = vunpack.c.h.b16 %v5611
      %v5872 = vunpack.c.l.b16 %v5612
      %v5873 = vunpack.c.h.b16 %v5612
      %v5874 = vunpack.c.l.b16 %v5613
      %v5875 = vunpack.c.h.b16 %v5613
      %v5876 = vunpack.c.l.b16 %v5614
      %v5877 = vunpack.c.h.b16 %v5614
      %v5878 = vunpack.c.l.b16 %v5615
      %v5879 = vunpack.c.h.b16 %v5615
      %v5880 = vunpack.c.l.b16 %v5616
      %v5881 = vunpack.c.h.b16 %v5616
      %v5882 = vunpack.c.l.b16 %v5617
      %v5883 = vunpack.c.h.b16 %v5617
      %v5884 = vunpack.c.l.b16 %v5618
      %v5885 = vunpack.c.h.b16 %v5618
      %v5886 = vunpack.c.l.b16 %v5619
      %v5887 = vunpack.c.h.b16 %v5619
      %v5888 = vunpack.c.l.b16 %v5620
      %v5889 = vunpack.c.h.b16 %v5620
      %v5890 = vunpack.c.l.b16 %v5621
      %v5891 = vunpack.c.h.b16 %v5621
      %v5892 = vunpack.c.l.b16 %v5622
      %v5893 = vunpack.c.h.b16 %v5622
      %v5894 = vunpack.c.l.b16 %v5623
      %v5895 = vunpack.c.h.b16 %v5623
      %v5896 = vunpack.c.l.b16 %v5624
      %v5897 = vunpack.c.h.b16 %v5624
      %v5898 = vunpack.c.l.b16 %v5625
      %v5899 = vunpack.c.h.b16 %v5625
      %v5900 = vunpack.c.l.b16 %v5626
      %v5901 = vunpack.c.h.b16 %v5626
      %v5902 = vunpack.c.l.b16 %v5627
      %v5903 = vunpack.c.h.b16 %v5627
      %v5904 = vpack.c.b16 %v5792, %v5776
      %v5905 = vpack.c.b16 %v5793, %v5777
      %v5906 = vpack.c.b16 %v5794, %v5778
      %v5907 = vpack.c.b16 %v5795, %v5779
      %v5908 = vpack.c.b16 %v5796, %v5780
      %v5909 = vpack.c.b16 %v5797, %v5781
      %v5910 = vpack.c.b16 %v5798, %v5782
      %v5911 = vpack.c.b16 %v5799, %v5783
      %v5912 = vpack.c.b16 %v5800, %v5784
      %v5913 = vpack.c.b16 %v5801, %v5785
      %v5914 = vpack.c.b16 %v5802, %v5786
      %v5915 = vpack.c.b16 %v5803, %v5787
      %v5916 = vpack.c.b16 %v5804, %v5788
      %v5917 = vpack.c.b16 %v5805, %v5789
      %v5918 = vpack.c.b16 %v5806, %v5790
      %v5919 = vpack.c.b16 %v5807, %v5791
      %v5920 = vpack.c.b16 %v5824, %v5808
      %v5921 = vpack.c.b16 %v5825, %v5809
      %v5922 = vpack.c.b16 %v5826, %v5810
      %v5923 = vpack.c.b16 %v5827, %v5811
      %v5924 = vpack.c.b16 %v5828, %v5812
      %v5925 = vpack.c.b16 %v5829, %v5813
      %v5926 = vpack.c.b16 %v5830, %v5814
      %v5927 = vpack.c.b16 %v5831, %v5815
      %v5928 = vpack.c.b16 %v5832, %v5816
      %v5929 = vpack.c.b16 %v5833, %v5817
      %v5930 = vpack.c.b16 %v5834, %v5818
      %v5931 = vpack.c.b16 %v5835, %v5819
      %v5932 = vpack.c.b16 %v5836, %v5820
      %v5933 = vpack.c.b16 %v5837, %v5821
      %v5934 = vpack.c.b16 %v5838, %v5822
      %v5935 = vpack.c.b16 %v5839, %v5823
      %v5936 = vpack.c.b16 %v5856, %v5840
      %v5937 = vpack.c.b16 %v5857, %v5841
      %v5938 = vpack.c.b16 %v5858, %v5842
      %v5939 = vpack.c.b16 %v5859, %v5843
      %v5940 = vpack.c.b16 %v5860, %v5844
      %v5941 = vpack.c.b16 %v5861, %v5845
      %v5942 = vpack.c.b16 %v5862, %v5846
      %v5943 = vpack.c.b16 %v5863, %v5847
      %v5944 = vpack.c.b16 %v5864, %v5848
      %v5945 = vpack.c.b16 %v5865, %v5849
      %v5946 = vpack.c.b16 %v5866, %v5850
      %v5947 = vpack.c.b16 %v5867, %v5851
      %v5948 = vpack.c.b16 %v5868, %v5852
      %v5949 = vpack.c.b16 %v5869, %v5853
      %v5950 = vpack.c.b16 %v5870, %v5854
      %v5951 = vpack.c.b16 %v5871, %v5855
      %v5952 = vpack.c.b16 %v5888, %v5872
      %v5953 = vpack.c.b16 %v5889, %v5873
      %v5954 = vpack.c.b16 %v5890, %v5874
      %v5955 = vpack.c.b16 %v5891, %v5875
      %v5956 = vpack.c.b16 %v5892, %v5876
      %v5957 = vpack.c.b16 %v5893, %v5877
      %v5958 = vpack.c.b16 %v5894, %v5878
      %v5959 = vpack.c.b16 %v5895, %v5879
      %v5960 = vpack.c.b16 %v5896, %v5880
      %v5961 = vpack.c.b16 %v5897, %v5881
      %v5962 = vpack.c.b16 %v5898, %v5882
      %v5963 = vpack.c.b16 %v5899, %v5883
      %v5964 = vpack.c.b16 %v5900, %v5884
      %v5965 = vpack.c.b16 %v5901, %v5885
      %v5966 = vpack.c.b16 %v5902, %v5886
      %v5967 = vpack.c.b16 %v5903, %v5887
      %v6033 = vsel %vm1208, %v5559, 0
      %v6036 = vsel %vm1208, %v5560, 0
      %v6039 = vsel %vm1208, %v5561, 0
      %v6042 = vsel %vm1208, %v5562, 0
      %v6045 = vsel %vm1208, %v5563, 0
      %6047 = vmatprep.subr.bf16.mxu0 %v5905
      %6048 = vmatpush1.bf16.msra.mxu0 %v5904
      %6049 = vmatprep.subr.bf16.mxu0 %v5921
      %6050 = vmatpush1.bf16.msra.mxu0 %v5920
      %6051 = vmatprep.subr.bf16.mxu0 %v5937
      %6052 = vmatpush1.bf16.msra.mxu0 %v5936
      %6053 = vmatprep.subr.bf16.mxu0 %v5953
      %6054 = vmatpush1.bf16.msra.mxu0 %v5952
      %6055 = vmatprep.subr.bf16.mxu0 0
      %6056 = vmatpush1.bf16.msra.mxu0 0
      %6057 = vmatprep.subr.bf16.mxu0 0
      %6058 = vmatpush1.bf16.msra.mxu0 0
      %6059 = vmatprep.subr.bf16.mxu0 0
      %6060 = vmatpush1.bf16.msra.mxu0 0
      %6061 = vmatprep.subr.bf16.mxu0 0
      %6062 = vmatpush1.bf16.msra.mxu0 0
      %6063 = vmatprep.subr.bf16.mxu0 0
      %6064 = vmatpush1.bf16.msra.mxu0 0
      %6065 = vmatprep.subr.bf16.mxu0 0
      %6066 = vmatpush1.bf16.msra.mxu0 0
      %6067 = vmatprep.subr.bf16.mxu0 0
      %6068 = vmatpush1.bf16.msra.mxu0 0
      %6069 = vmatprep.subr.bf16.mxu0 0
      %6070 = vmatpush1.bf16.msra.mxu0 0
      %6071 = vmatprep.subr.bf16.mxu0 0
      %6072 = vmatpush1.bf16.msra.mxu0 0
      %6073 = vmatprep.subr.bf16.mxu0 0
      %6074 = vmatpush1.bf16.msra.mxu0 0
      %6075 = vmatprep.subr.bf16.mxu0 0
      %6076 = vmatpush1.bf16.msra.mxu0 0
      %6077 = vmatprep.subr.bf16.mxu0 0
      %6078 = vmatpush1.bf16.msra.mxu0 0
      %6079 = vmatprep.mubr.bf16.mxu0 0
      %6080 = vmatmul.mubr.bf16.gmra.mrb[0].mxu0 %v6033
      %v6081 = vpop.f32.mrb[0].mxu0
      %v6082 = vadd.f32 %v5635, %v6081
      %v6083 = vpop.f32.mrb[0].mxu0
      %v6084 = vadd.f32 %v5639, %v6083
      %v6085 = vpop.f32.mrb[0].mxu0
      %v6086 = vadd.f32 %v5635, %v6085
      %v6087 = vpop.f32.mrb[0].mxu0
      %v6088 = vadd.f32 %v5639, %v6087
      %6089 = vmatprep.mubr.bf16.mxu0 0
      %6090 = vmatmul.mubr.bf16.gmra.mrb[0].mxu0 %v6036
      %v6091 = vpop.f32.mrb[0].mxu0
      %v6092 = vadd.f32 %v5635, %v6091
      %v6093 = vpop.f32.mrb[0].mxu0
      %v6094 = vadd.f32 %v5639, %v6093
      %v6095 = vpop.f32.mrb[0].mxu0
      %v6096 = vadd.f32 %v5635, %v6095
      %v6097 = vpop.f32.mrb[0].mxu0
      %v6098 = vadd.f32 %v5639, %v6097
      %6099 = vmatprep.mubr.bf16.mxu0 0
      %6100 = vmatmul.mubr.bf16.gmra.mrb[0].mxu0 %v6039
      %v6101 = vpop.f32.mrb[0].mxu0
      %v6102 = vadd.f32 %v5635, %v6101
      %v6103 = vpop.f32.mrb[0].mxu0
      %v6104 = vadd.f32 %v5639, %v6103
      %v6105 = vpop.f32.mrb[0].mxu0
      %v6106 = vadd.f32 %v5635, %v6105
      %v6107 = vpop.f32.mrb[0].mxu0
      %v6108 = vadd.f32 %v5639, %v6107
      %6109 = vmatprep.mubr.bf16.mxu0 0
      %6110 = vmatmul.mubr.bf16.gmra.mrb[0].mxu0 %v6042
      %v6111 = vpop.f32.mrb[0].mxu0
      %v6112 = vadd.f32 %v5635, %v6111
      %v6113 = vpop.f32.mrb[0].mxu0
      %v6114 = vadd.f32 %v5639, %v6113
      %v6115 = vpop.f32.mrb[0].mxu0
      %v6116 = vadd.f32 %v5635, %v6115
      %v6117 = vpop.f32.mrb[0].mxu0
      %v6118 = vadd.f32 %v5639, %v6117
      %6119 = vmatprep.mubr.bf16.mxu0 0
      %6120 = vmatmul.mubr.bf16.gmra.mrb[0].mxu0 %v6045
      %v6121 = vpop.f32.mrb[0].mxu0
      %v6122 = vadd.f32 %v5635, %v6121
      %v6123 = vpop.f32.mrb[0].mxu0
      %v6124 = vadd.f32 %v5639, %v6123
      %v6125 = vpop.f32.mrb[0].mxu0
      %v6126 = vadd.f32 %v5635, %v6125
      %v6127 = vpop.f32.mrb[0].mxu0
      %v6128 = vadd.f32 %v5639, %v6127
      %6129 = vdwg.mxu0
      %6130 = vmatprep.subr.bf16.mxu0 %v5907
      %6131 = vmatpush1.bf16.msra.mxu0 %v5906
      %6132 = vmatprep.subr.bf16.mxu0 %v5923
      %6133 = vmatpush1.bf16.msra.mxu0 %v5922
      %6134 = vmatprep.subr.bf16.mxu0 %v5939
      %6135 = vmatpush1.bf16.msra.mxu0 %v5938
      %6136 = vmatprep.subr.bf16.mxu0 %v5955
      %6137 = vmatpush1.bf16.msra.mxu0 %v5954
      %6138 = vmatprep.subr.bf16.mxu0 0
      %6139 = vmatpush1.bf16.msra.mxu0 0
      %6140 = vmatprep.subr.bf16.mxu0 0
      %6141 = vmatpush1.bf16.msra.mxu0 0
      %6142 = vmatprep.subr.bf16.mxu0 0
      %6143 = vmatpush1.bf16.msra.mxu0 0
      %6144 = vmatprep.subr.bf16.mxu0 0
      %6145 = vmatpush1.bf16.msra.mxu0 0
      %6146 = vmatprep.subr.bf16.mxu0 0
      %6147 = vmatpush1.bf16.msra.mxu0 0
      %6148 = vmatprep.subr.bf16.mxu0 0
      %6149 = vmatpush1.bf16.msra.mxu0 0
      %6150 = vmatprep.subr.bf16.mxu0 0
      %6151 = vmatpush1.bf16.msra.mxu0 0
      %6152 = vmatprep.subr.bf16.mxu0 0
      %6153 = vmatpush1.bf16.msra.mxu0 0
      %6154 = vmatprep.subr.bf16.mxu0 0
      %6155 = vmatpush1.bf16.msra.mxu0 0
      %6156 = vmatprep.subr.bf16.mxu0 0
      %6157 = vmatpush1.bf16.msra.mxu0 0
      %6158 = vmatprep.subr.bf16.mxu0 0
      %6159 = vmatpush1.bf16.msra.mxu0 0
      %6160 = vmatprep.subr.bf16.mxu0 0
      %6161 = vmatpush1.bf16.msra.mxu0 0
      %6162 = vmatprep.mubr.bf16.mxu0 0
      %6163 = vmatmul.mubr.bf16.gmra.mrb[0].mxu0 %v6033
      %v6164 = vpop.f32.mrb[0].mxu0
      %v6165 = vadd.f32 %v5643, %v6164
      %v6166 = vpop.f32.mrb[0].mxu0
      %v6167 = vadd.f32 %v5647, %v6166
      %v6168 = vpop.f32.mrb[0].mxu0
      %v6169 = vadd.f32 %v5643, %v6168
      %v6170 = vpop.f32.mrb[0].mxu0
      %v6171 = vadd.f32 %v5647, %v6170
      %6172 = vmatprep.mubr.bf16.mxu0 0
      %6173 = vmatmul.mubr.bf16.gmra.mrb[0].mxu0 %v6036
      %v6174 = vpop.f32.mrb[0].mxu0
      %v6175 = vadd.f32 %v5643, %v6174
      %v6176 = vpop.f32.mrb[0].mxu0
      %v6177 = vadd.f32 %v5647, %v6176
      %v6178 = vpop.f32.mrb[0].mxu0
      %v6179 = vadd.f32 %v5643, %v6178
      %v6180 = vpop.f32.mrb[0].mxu0
      %v6181 = vadd.f32 %v5647, %v6180
      %6182 = vmatprep.mubr.bf16.mxu0 0
      %6183 = vmatmul.mubr.bf16.gmra.mrb[0].mxu0 %v6039
      %v6184 = vpop.f32.mrb[0].mxu0
      %v6185 = vadd.f32 %v5643, %v6184
      %v6186 = vpop.f32.mrb[0].mxu0
      %v6187 = vadd.f32 %v5647, %v6186
      %v6188 = vpop.f32.mrb[0].mxu0
      %v6189 = vadd.f32 %v5643, %v6188
      %v6190 = vpop.f32.mrb[0].mxu0
      %v6191 = vadd.f32 %v5647, %v6190
      %6192 = vmatprep.mubr.bf16.mxu0 0
      %6193 = vmatmul.mubr.bf16.gmra.mrb[0].mxu0 %v6042
      %v6194 = vpop.f32.mrb[0].mxu0
      %v6195 = vadd.f32 %v5643, %v6194
      %v6196 = vpop.f32.mrb[0].mxu0
      %v6197 = vadd.f32 %v5647, %v6196
      %v6198 = vpop.f32.mrb[0].mxu0
      %v6199 = vadd.f32 %v5643, %v6198
      %v6200 = vpop.f32.mrb[0].mxu0
      %v6201 = vadd.f32 %v5647, %v6200
      %6202 = vmatprep.mubr.bf16.mxu0 0
      %6203 = vmatmul.mubr.bf16.gmra.mrb[0].mxu0 %v6045
      %v6204 = vpop.f32.mrb[0].mxu0
      %v6205 = vadd.f32 %v5643, %v6204
      %v6206 = vpop.f32.mrb[0].mxu0
      %v6207 = vadd.f32 %v5647, %v6206
      %v6208 = vpop.f32.mrb[0].mxu0
      %v6209 = vadd.f32 %v5643, %v6208
      %v6210 = vpop.f32.mrb[0].mxu0
      %v6211 = vadd.f32 %v5647, %v6210
      %6212 = vdwg.mxu0
      %6213 = vmatprep.subr.bf16.mxu0 %v5909
      %6214 = vmatpush1.bf16.msra.mxu0 %v5908
      %6215 = vmatprep.subr.bf16.mxu0 %v5925
      %6216 = vmatpush1.bf16.msra.mxu0 %v5924
      %6217 = vmatprep.subr.bf16.mxu0 %v5941
      %6218 = vmatpush1.bf16.msra.mxu0 %v5940
      %6219 = vmatprep.subr.bf16.mxu0 %v5957
      %6220 = vmatpush1.bf16.msra.mxu0 %v5956
      %6221 = vmatprep.subr.bf16.mxu0 0
      %6222 = vmatpush1.bf16.msra.mxu0 0
      %6223 = vmatprep.subr.bf16.mxu0 0
      %6224 = vmatpush1.bf16.msra.mxu0 0
      %6225 = vmatprep.subr.bf16.mxu0 0
      %6226 = vmatpush1.bf16.msra.mxu0 0
      %6227 = vmatprep.subr.bf16.mxu0 0
      %6228 = vmatpush1.bf16.msra.mxu0 0
      %6229 = vmatprep.subr.bf16.mxu0 0
      %6230 = vmatpush1.bf16.msra.mxu0 0
      %6231 = vmatprep.subr.bf16.mxu0 0
      %6232 = vmatpush1.bf16.msra.mxu0 0
      %6233 = vmatprep.subr.bf16.mxu0 0
      %6234 = vmatpush1.bf16.msra.mxu0 0
      %6235 = vmatprep.subr.bf16.mxu0 0
      %6236 = vmatpush1.bf16.msra.mxu0 0
      %6237 = vmatprep.subr.bf16.mxu0 0
      %6238 = vmatpush1.bf16.msra.mxu0 0
      %6239 = vmatprep.subr.bf16.mxu0 0
      %6240 = vmatpush1.bf16.msra.mxu0 0
      %6241 = vmatprep.subr.bf16.mxu0 0
      %6242 = vmatpush1.bf16.msra.mxu0 0
      %6243 = vmatprep.subr.bf16.mxu0 0
      %6244 = vmatpush1.bf16.msra.mxu0 0
      %6245 = vmatprep.mubr.bf16.mxu0 0
      %6246 = vmatmul.mubr.bf16.gmra.mrb[0].mxu0 %v6033
      %v6247 = vpop.f32.mrb[0].mxu0
      %v6248 = vadd.f32 %v5651, %v6247
      %v6249 = vpop.f32.mrb[0].mxu0
      %v6250 = vadd.f32 %v5655, %v6249
      %v6251 = vpop.f32.mrb[0].mxu0
      %v6252 = vadd.f32 %v5651, %v6251
      %v6253 = vpop.f32.mrb[0].mxu0
      %v6254 = vadd.f32 %v5655, %v6253
      %6255 = vmatprep.mubr.bf16.mxu0 0
      %6256 = vmatmul.mubr.bf16.gmra.mrb[0].mxu0 %v6036
      %v6257 = vpop.f32.mrb[0].mxu0
      %v6258 = vadd.f32 %v5651, %v6257
      %v6259 = vpop.f32.mrb[0].mxu0
      %v6260 = vadd.f32 %v5655, %v6259
      %v6261 = vpop.f32.mrb[0].mxu0
      %v6262 = vadd.f32 %v5651, %v6261
      %v6263 = vpop.f32.mrb[0].mxu0
      %v6264 = vadd.f32 %v5655, %v6263
      %6265 = vmatprep.mubr.bf16.mxu0 0
      %6266 = vmatmul.mubr.bf16.gmra.mrb[0].mxu0 %v6039
      %v6267 = vpop.f32.mrb[0].mxu0
      %v6268 = vadd.f32 %v5651, %v6267
      %v6269 = vpop.f32.mrb[0].mxu0
      %v6270 = vadd.f32 %v5655, %v6269
      %v6271 = vpop.f32.mrb[0].mxu0
      %v6272 = vadd.f32 %v5651, %v6271
      %v6273 = vpop.f32.mrb[0].mxu0
      %v6274 = vadd.f32 %v5655, %v6273
      %6275 = vmatprep.mubr.bf16.mxu0 0
      %6276 = vmatmul.mubr.bf16.gmra.mrb[0].mxu0 %v6042
      %v6277 = vpop.f32.mrb[0].mxu0
      %v6278 = vadd.f32 %v5651, %v6277
      %v6279 = vpop.f32.mrb[0].mxu0
      %v6280 = vadd.f32 %v5655, %v6279
      %v6281 = vpop.f32.mrb[0].mxu0
      %v6282 = vadd.f32 %v5651, %v6281
      %v6283 = vpop.f32.mrb[0].mxu0
      %v6284 = vadd.f32 %v5655, %v6283
      %6285 = vmatprep.mubr.bf16.mxu0 0
      %6286 = vmatmul.mubr.bf16.gmra.mrb[0].mxu0 %v6045
      %v6287 = vpop.f32.mrb[0].mxu0
      %v6288 = vadd.f32 %v5651, %v6287
      %v6289 = vpop.f32.mrb[0].mxu0
      %v6290 = vadd.f32 %v5655, %v6289
      %v6291 = vpop.f32.mrb[0].mxu0
      %v6292 = vadd.f32 %v5651, %v6291
      %v6293 = vpop.f32.mrb[0].mxu0
      %v6294 = vadd.f32 %v5655, %v6293
      %6295 = vdwg.mxu0
      %6296 = vmatprep.subr.bf16.mxu0 %v5911
      %6297 = vmatpush1.bf16.msra.mxu0 %v5910
      %6298 = vmatprep.subr.bf16.mxu0 %v5927
      %6299 = vmatpush1.bf16.msra.mxu0 %v5926
      %6300 = vmatprep.subr.bf16.mxu0 %v5943
      %6301 = vmatpush1.bf16.msra.mxu0 %v5942
      %6302 = vmatprep.subr.bf16.mxu0 %v5959
      %6303 = vmatpush1.bf16.msra.mxu0 %v5958
      %6304 = vmatprep.subr.bf16.mxu0 0
      %6305 = vmatpush1.bf16.msra.mxu0 0
      %6306 = vmatprep.subr.bf16.mxu0 0
      %6307 = vmatpush1.bf16.msra.mxu0 0
      %6308 = vmatprep.subr.bf16.mxu0 0
      %6309 = vmatpush1.bf16.msra.mxu0 0
      %6310 = vmatprep.subr.bf16.mxu0 0
      %6311 = vmatpush1.bf16.msra.mxu0 0
      %6312 = vmatprep.subr.bf16.mxu0 0
      %6313 = vmatpush1.bf16.msra.mxu0 0
      %6314 = vmatprep.subr.bf16.mxu0 0
      %6315 = vmatpush1.bf16.msra.mxu0 0
      %6316 = vmatprep.subr.bf16.mxu0 0
      %6317 = vmatpush1.bf16.msra.mxu0 0
      %6318 = vmatprep.subr.bf16.mxu0 0
      %6319 = vmatpush1.bf16.msra.mxu0 0
      %6320 = vmatprep.subr.bf16.mxu0 0
      %6321 = vmatpush1.bf16.msra.mxu0 0
      %6322 = vmatprep.subr.bf16.mxu0 0
      %6323 = vmatpush1.bf16.msra.mxu0 0
      %6324 = vmatprep.subr.bf16.mxu0 0
      %6325 = vmatpush1.bf16.msra.mxu0 0
      %6326 = vmatprep.subr.bf16.mxu0 0
      %6327 = vmatpush1.bf16.msra.mxu0 0
      %6328 = vmatprep.mubr.bf16.mxu0 0
      %6329 = vmatmul.mubr.bf16.gmra.mrb[0].mxu0 %v6033
      %v6330 = vpop.f32.mrb[0].mxu0
      %v6331 = vadd.f32 %v5659, %v6330
      %v6332 = vpop.f32.mrb[0].mxu0
      %v6333 = vadd.f32 %v5663, %v6332
      %v6334 = vpop.f32.mrb[0].mxu0
      %v6335 = vadd.f32 %v5659, %v6334
      %v6336 = vpop.f32.mrb[0].mxu0
      %v6337 = vadd.f32 %v5663, %v6336
      %6338 = vmatprep.mubr.bf16.mxu0 0
      %6339 = vmatmul.mubr.bf16.gmra.mrb[0].mxu0 %v6036
      %v6340 = vpop.f32.mrb[0].mxu0
      %v6341 = vadd.f32 %v5659, %v6340
      %v6342 = vpop.f32.mrb[0].mxu0
      %v6343 = vadd.f32 %v5663, %v6342
      %v6344 = vpop.f32.mrb[0].mxu0
      %v6345 = vadd.f32 %v5659, %v6344
      %v6346 = vpop.f32.mrb[0].mxu0
      %v6347 = vadd.f32 %v5663, %v6346
      %6348 = vmatprep.mubr.bf16.mxu0 0
      %6349 = vmatmul.mubr.bf16.gmra.mrb[0].mxu0 %v6039
      %v6350 = vpop.f32.mrb[0].mxu0
      %v6351 = vadd.f32 %v5659, %v6350
      %v6352 = vpop.f32.mrb[0].mxu0
      %v6353 = vadd.f32 %v5663, %v6352
      %v6354 = vpop.f32.mrb[0].mxu0
      %v6355 = vadd.f32 %v5659, %v6354
      %v6356 = vpop.f32.mrb[0].mxu0
      %v6357 = vadd.f32 %v5663, %v6356
      %6358 = vmatprep.mubr.bf16.mxu0 0
      %6359 = vmatmul.mubr.bf16.gmra.mrb[0].mxu0 %v6042
      %v6360 = vpop.f32.mrb[0].mxu0
      %v6361 = vadd.f32 %v5659, %v6360
      %v6362 = vpop.f32.mrb[0].mxu0
      %v6363 = vadd.f32 %v5663, %v6362
      %v6364 = vpop.f32.mrb[0].mxu0
      %v6365 = vadd.f32 %v5659, %v6364
      %v6366 = vpop.f32.mrb[0].mxu0
      %v6367 = vadd.f32 %v5663, %v6366
      %6368 = vmatprep.mubr.bf16.mxu0 0
      %6369 = vmatmul.mubr.bf16.gmra.mrb[0].mxu0 %v6045
      %v6370 = vpop.f32.mrb[0].mxu0
      %v6371 = vadd.f32 %v5659, %v6370
      %v6372 = vpop.f32.mrb[0].mxu0
      %v6373 = vadd.f32 %v5663, %v6372
      %v6374 = vpop.f32.mrb[0].mxu0
      %v6375 = vadd.f32 %v5659, %v6374
      %v6376 = vpop.f32.mrb[0].mxu0
      %v6377 = vadd.f32 %v5663, %v6376
      %6378 = vdwg.mxu0
      %6379 = vmatprep.subr.bf16.mxu0 %v5913
      %6380 = vmatpush1.bf16.msra.mxu0 %v5912
      %6381 = vmatprep.subr.bf16.mxu0 %v5929
      %6382 = vmatpush1.bf16.msra.mxu0 %v5928
      %6383 = vmatprep.subr.bf16.mxu0 %v5945
      %6384 = vmatpush1.bf16.msra.mxu0 %v5944
      %6385 = vmatprep.subr.bf16.mxu0 %v5961
      %6386 = vmatpush1.bf16.msra.mxu0 %v5960
      %6387 = vmatprep.subr.bf16.mxu0 0
      %6388 = vmatpush1.bf16.msra.mxu0 0
      %6389 = vmatprep.subr.bf16.mxu0 0
      %6390 = vmatpush1.bf16.msra.mxu0 0
      %6391 = vmatprep.subr.bf16.mxu0 0
      %6392 = vmatpush1.bf16.msra.mxu0 0
      %6393 = vmatprep.subr.bf16.mxu0 0
      %6394 = vmatpush1.bf16.msra.mxu0 0
      %6395 = vmatprep.subr.bf16.mxu0 0
      %6396 = vmatpush1.bf16.msra.mxu0 0
      %6397 = vmatprep.subr.bf16.mxu0 0
      %6398 = vmatpush1.bf16.msra.mxu0 0
      %6399 = vmatprep.subr.bf16.mxu0 0
      %6400 = vmatpush1.bf16.msra.mxu0 0
      %6401 = vmatprep.subr.bf16.mxu0 0
      %6402 = vmatpush1.bf16.msra.mxu0 0
      %6403 = vmatprep.subr.bf16.mxu0 0
      %6404 = vmatpush1.bf16.msra.mxu0 0
      %6405 = vmatprep.subr.bf16.mxu0 0
      %6406 = vmatpush1.bf16.msra.mxu0 0
      %6407 = vmatprep.subr.bf16.mxu0 0
      %6408 = vmatpush1.bf16.msra.mxu0 0
      %6409 = vmatprep.subr.bf16.mxu0 0
      %6410 = vmatpush1.bf16.msra.mxu0 0
      %6411 = vmatprep.mubr.bf16.mxu0 0
      %6412 = vmatmul.mubr.bf16.gmra.mrb[0].mxu0 %v6033
      %v6413 = vpop.f32.mrb[0].mxu0
      %v6414 = vadd.f32 %v5667, %v6413
      %v6415 = vpop.f32.mrb[0].mxu0
      %v6416 = vadd.f32 %v5671, %v6415
      %v6417 = vpop.f32.mrb[0].mxu0
      %v6418 = vadd.f32 %v5667, %v6417
      %v6419 = vpop.f32.mrb[0].mxu0
      %v6420 = vadd.f32 %v5671, %v6419
      %6421 = vmatprep.mubr.bf16.mxu0 0
      %6422 = vmatmul.mubr.bf16.gmra.mrb[0].mxu0 %v6036
      %v6423 = vpop.f32.mrb[0].mxu0
      %v6424 = vadd.f32 %v5667, %v6423
      %v6425 = vpop.f32.mrb[0].mxu0
      %v6426 = vadd.f32 %v5671, %v6425
      %v6427 = vpop.f32.mrb[0].mxu0
      %v6428 = vadd.f32 %v5667, %v6427
      %v6429 = vpop.f32.mrb[0].mxu0
      %v6430 = vadd.f32 %v5671, %v6429
      %6431 = vmatprep.mubr.bf16.mxu0 0
      %6432 = vmatmul.mubr.bf16.gmra.mrb[0].mxu0 %v6039
      %v6433 = vpop.f32.mrb[0].mxu0
      %v6434 = vadd.f32 %v5667, %v6433
      %v6435 = vpop.f32.mrb[0].mxu0
      %v6436 = vadd.f32 %v5671, %v6435
      %v6437 = vpop.f32.mrb[0].mxu0
      %v6438 = vadd.f32 %v5667, %v6437
      %v6439 = vpop.f32.mrb[0].mxu0
      %v6440 = vadd.f32 %v5671, %v6439
      %6441 = vmatprep.mubr.bf16.mxu0 0
      %6442 = vmatmul.mubr.bf16.gmra.mrb[0].mxu0 %v6042
      %v6443 = vpop.f32.mrb[0].mxu0
      %v6444 = vadd.f32 %v5667, %v6443
      %v6445 = vpop.f32.mrb[0].mxu0
      %v6446 = vadd.f32 %v5671, %v6445
      %v6447 = vpop.f32.mrb[0].mxu0
      %v6448 = vadd.f32 %v5667, %v6447
      %v6449 = vpop.f32.mrb[0].mxu0
      %v6450 = vadd.f32 %v5671, %v6449
      %6451 = vmatprep.mubr.bf16.mxu0 0
      %6452 = vmatmul.mubr.bf16.gmra.mrb[0].mxu0 %v6045
      %v6453 = vpop.f32.mrb[0].mxu0
      %v6454 = vadd.f32 %v5667, %v6453
      %v6455 = vpop.f32.mrb[0].mxu0
      %v6456 = vadd.f32 %v5671, %v6455
      %v6457 = vpop.f32.mrb[0].mxu0
      %v6458 = vadd.f32 %v5667, %v6457
      %v6459 = vpop.f32.mrb[0].mxu0
      %v6460 = vadd.f32 %v5671, %v6459
      %6461 = vdwg.mxu0
      %6462 = vmatprep.subr.bf16.mxu0 %v5915
      %6463 = vmatpush1.bf16.msra.mxu0 %v5914
      %6464 = vmatprep.subr.bf16.mxu0 %v5931
      %6465 = vmatpush1.bf16.msra.mxu0 %v5930
      %6466 = vmatprep.subr.bf16.mxu0 %v5947
      %6467 = vmatpush1.bf16.msra.mxu0 %v5946
      %6468 = vmatprep.subr.bf16.mxu0 %v5963
      %6469 = vmatpush1.bf16.msra.mxu0 %v5962
      %6470 = vmatprep.subr.bf16.mxu0 0
      %6471 = vmatpush1.bf16.msra.mxu0 0
      %6472 = vmatprep.subr.bf16.mxu0 0
      %6473 = vmatpush1.bf16.msra.mxu0 0
      %6474 = vmatprep.subr.bf16.mxu0 0
      %6475 = vmatpush1.bf16.msra.mxu0 0
      %6476 = vmatprep.subr.bf16.mxu0 0
      %6477 = vmatpush1.bf16.msra.mxu0 0
      %6478 = vmatprep.subr.bf16.mxu0 0
      %6479 = vmatpush1.bf16.msra.mxu0 0
      %6480 = vmatprep.subr.bf16.mxu0 0
      %6481 = vmatpush1.bf16.msra.mxu0 0
      %6482 = vmatprep.subr.bf16.mxu0 0
      %6483 = vmatpush1.bf16.msra.mxu0 0
      %6484 = vmatprep.subr.bf16.mxu0 0
      %6485 = vmatpush1.bf16.msra.mxu0 0
      %6486 = vmatprep.subr.bf16.mxu0 0
      %6487 = vmatpush1.bf16.msra.mxu0 0
      %6488 = vmatprep.subr.bf16.mxu0 0
      %6489 = vmatpush1.bf16.msra.mxu0 0
      %6490 = vmatprep.subr.bf16.mxu0 0
      %6491 = vmatpush1.bf16.msra.mxu0 0
      %6492 = vmatprep.subr.bf16.mxu0 0
      %6493 = vmatpush1.bf16.msra.mxu0 0
      %6494 = vmatprep.mubr.bf16.mxu0 0
      %6495 = vmatmul.mubr.bf16.gmra.mrb[0].mxu0 %v6033
      %v6496 = vpop.f32.mrb[0].mxu0
      %v6497 = vadd.f32 %v5675, %v6496
      %v6498 = vpop.f32.mrb[0].mxu0
      %v6499 = vadd.f32 %v5679, %v6498
      %v6500 = vpop.f32.mrb[0].mxu0
      %v6501 = vadd.f32 %v5675, %v6500
      %v6502 = vpop.f32.mrb[0].mxu0
      %v6503 = vadd.f32 %v5679, %v6502
      %6504 = vmatprep.mubr.bf16.mxu0 0
      %6505 = vmatmul.mubr.bf16.gmra.mrb[0].mxu0 %v6036
      %v6506 = vpop.f32.mrb[0].mxu0
      %v6507 = vadd.f32 %v5675, %v6506
      %v6508 = vpop.f32.mrb[0].mxu0
      %v6509 = vadd.f32 %v5679, %v6508
      %v6510 = vpop.f32.mrb[0].mxu0
      %v6511 = vadd.f32 %v5675, %v6510
      %v6512 = vpop.f32.mrb[0].mxu0
      %v6513 = vadd.f32 %v5679, %v6512
      %6514 = vmatprep.mubr.bf16.mxu0 0
      %6515 = vmatmul.mubr.bf16.gmra.mrb[0].mxu0 %v6039
      %v6516 = vpop.f32.mrb[0].mxu0
      %v6517 = vadd.f32 %v5675, %v6516
      %v6518 = vpop.f32.mrb[0].mxu0
      %v6519 = vadd.f32 %v5679, %v6518
      %v6520 = vpop.f32.mrb[0].mxu0
      %v6521 = vadd.f32 %v5675, %v6520
      %v6522 = vpop.f32.mrb[0].mxu0
      %v6523 = vadd.f32 %v5679, %v6522
      %6524 = vmatprep.mubr.bf16.mxu0 0
      %6525 = vmatmul.mubr.bf16.gmra.mrb[0].mxu0 %v6042
      %v6526 = vpop.f32.mrb[0].mxu0
      %v6527 = vadd.f32 %v5675, %v6526
      %v6528 = vpop.f32.mrb[0].mxu0
      %v6529 = vadd.f32 %v5679, %v6528
      %v6530 = vpop.f32.mrb[0].mxu0
      %v6531 = vadd.f32 %v5675, %v6530
      %v6532 = vpop.f32.mrb[0].mxu0
      %v6533 = vadd.f32 %v5679, %v6532
      %6534 = vmatprep.mubr.bf16.mxu0 0
      %6535 = vmatmul.mubr.bf16.gmra.mrb[0].mxu0 %v6045
      %v6536 = vpop.f32.mrb[0].mxu0
      %v6537 = vadd.f32 %v5675, %v6536
      %v6538 = vpop.f32.mrb[0].mxu0
      %v6539 = vadd.f32 %v5679, %v6538
      %v6540 = vpop.f32.mrb[0].mxu0
      %v6541 = vadd.f32 %v5675, %v6540
      %v6542 = vpop.f32.mrb[0].mxu0
      %v6543 = vadd.f32 %v5679, %v6542
      %6544 = vdwg.mxu0
      %6545 = vmatprep.subr.bf16.mxu0 %v5917
      %6546 = vmatpush1.bf16.msra.mxu0 %v5916
      %6547 = vmatprep.subr.bf16.mxu0 %v5933
      %6548 = vmatpush1.bf16.msra.mxu0 %v5932
      %6549 = vmatprep.subr.bf16.mxu0 %v5949
      %6550 = vmatpush1.bf16.msra.mxu0 %v5948
      %6551 = vmatprep.subr.bf16.mxu0 %v5965
      %6552 = vmatpush1.bf16.msra.mxu0 %v5964
      %6553 = vmatprep.subr.bf16.mxu0 0
      %6554 = vmatpush1.bf16.msra.mxu0 0
      %6555 = vmatprep.subr.bf16.mxu0 0
      %6556 = vmatpush1.bf16.msra.mxu0 0
      %6557 = vmatprep.subr.bf16.mxu0 0
      %6558 = vmatpush1.bf16.msra.mxu0 0
      %6559 = vmatprep.subr.bf16.mxu0 0
      %6560 = vmatpush1.bf16.msra.mxu0 0
      %6561 = vmatprep.subr.bf16.mxu0 0
      %6562 = vmatpush1.bf16.msra.mxu0 0
      %6563 = vmatprep.subr.bf16.mxu0 0
      %6564 = vmatpush1.bf16.msra.mxu0 0
      %6565 = vmatprep.subr.bf16.mxu0 0
      %6566 = vmatpush1.bf16.msra.mxu0 0
      %6567 = vmatprep.subr.bf16.mxu0 0
      %6568 = vmatpush1.bf16.msra.mxu0 0
      %6569 = vmatprep.subr.bf16.mxu0 0
      %6570 = vmatpush1.bf16.msra.mxu0 0
      %6571 = vmatprep.subr.bf16.mxu0 0
      %6572 = vmatpush1.bf16.msra.mxu0 0
      %6573 = vmatprep.subr.bf16.mxu0 0
      %6574 = vmatpush1.bf16.msra.mxu0 0
      %6575 = vmatprep.subr.bf16.mxu0 0
      %6576 = vmatpush1.bf16.msra.mxu0 0
      %6577 = vmatprep.mubr.bf16.mxu0 0
      %6578 = vmatmul.mubr.bf16.gmra.mrb[0].mxu0 %v6033
      %v6579 = vpop.f32.mrb[0].mxu0
      %v6580 = vadd.f32 %v5683, %v6579
      %v6581 = vpop.f32.mrb[0].mxu0
      %v6582 = vadd.f32 %v5687, %v6581
      %v6583 = vpop.f32.mrb[0].mxu0
      %v6584 = vadd.f32 %v5683, %v6583
      %v6585 = vpop.f32.mrb[0].mxu0
      %v6586 = vadd.f32 %v5687, %v6585
      %6587 = vmatprep.mubr.bf16.mxu0 0
      %6588 = vmatmul.mubr.bf16.gmra.mrb[0].mxu0 %v6036
      %v6589 = vpop.f32.mrb[0].mxu0
      %v6590 = vadd.f32 %v5683, %v6589
      %v6591 = vpop.f32.mrb[0].mxu0
      %v6592 = vadd.f32 %v5687, %v6591
      %v6593 = vpop.f32.mrb[0].mxu0
      %v6594 = vadd.f32 %v5683, %v6593
      %v6595 = vpop.f32.mrb[0].mxu0
      %v6596 = vadd.f32 %v5687, %v6595
      %6597 = vmatprep.mubr.bf16.mxu0 0
      %6598 = vmatmul.mubr.bf16.gmra.mrb[0].mxu0 %v6039
      %v6599 = vpop.f32.mrb[0].mxu0
      %v6600 = vadd.f32 %v5683, %v6599
      %v6601 = vpop.f32.mrb[0].mxu0
      %v6602 = vadd.f32 %v5687, %v6601
      %v6603 = vpop.f32.mrb[0].mxu0
      %v6604 = vadd.f32 %v5683, %v6603
      %v6605 = vpop.f32.mrb[0].mxu0
      %v6606 = vadd.f32 %v5687, %v6605
      %6607 = vmatprep.mubr.bf16.mxu0 0
      %6608 = vmatmul.mubr.bf16.gmra.mrb[0].mxu0 %v6042
      %v6609 = vpop.f32.mrb[0].mxu0
      %v6610 = vadd.f32 %v5683, %v6609
      %v6611 = vpop.f32.mrb[0].mxu0
      %v6612 = vadd.f32 %v5687, %v6611
      %v6613 = vpop.f32.mrb[0].mxu0
      %v6614 = vadd.f32 %v5683, %v6613
      %v6615 = vpop.f32.mrb[0].mxu0
      %v6616 = vadd.f32 %v5687, %v6615
      %6617 = vmatprep.mubr.bf16.mxu0 0
      %6618 = vmatmul.mubr.bf16.gmra.mrb[0].mxu0 %v6045
      %v6619 = vpop.f32.mrb[0].mxu0
      %v6620 = vadd.f32 %v5683, %v6619
      %v6621 = vpop.f32.mrb[0].mxu0
      %v6622 = vadd.f32 %v5687, %v6621
      %v6623 = vpop.f32.mrb[0].mxu0
      %v6624 = vadd.f32 %v5683, %v6623
      %v6625 = vpop.f32.mrb[0].mxu0
      %v6626 = vadd.f32 %v5687, %v6625
      %6627 = vdwg.mxu0
      %6628 = vmatprep.subr.bf16.mxu0 %v5919
      %6629 = vmatpush1.bf16.msra.mxu0 %v5918
      %6630 = vmatprep.subr.bf16.mxu0 %v5935
      %6631 = vmatpush1.bf16.msra.mxu0 %v5934
      %6632 = vmatprep.subr.bf16.mxu0 %v5951
      %6633 = vmatpush1.bf16.msra.mxu0 %v5950
      %6634 = vmatprep.subr.bf16.mxu0 %v5967
      %6635 = vmatpush1.bf16.msra.mxu0 %v5966
      %6636 = vmatprep.subr.bf16.mxu0 0
      %6637 = vmatpush1.bf16.msra.mxu0 0
      %6638 = vmatprep.subr.bf16.mxu0 0
      %6639 = vmatpush1.bf16.msra.mxu0 0
      %6640 = vmatprep.subr.bf16.mxu0 0
      %6641 = vmatpush1.bf16.msra.mxu0 0
      %6642 = vmatprep.subr.bf16.mxu0 0
      %6643 = vmatpush1.bf16.msra.mxu0 0
      %6644 = vmatprep.subr.bf16.mxu0 0
      %6645 = vmatpush1.bf16.msra.mxu0 0
      %6646 = vmatprep.subr.bf16.mxu0 0
      %6647 = vmatpush1.bf16.msra.mxu0 0
      %6648 = vmatprep.subr.bf16.mxu0 0
      %6649 = vmatpush1.bf16.msra.mxu0 0
      %6650 = vmatprep.subr.bf16.mxu0 0
      %6651 = vmatpush1.bf16.msra.mxu0 0
      %6652 = vmatprep.subr.bf16.mxu0 0
      %6653 = vmatpush1.bf16.msra.mxu0 0
      %6654 = vmatprep.subr.bf16.mxu0 0
      %6655 = vmatpush1.bf16.msra.mxu0 0
      %6656 = vmatprep.subr.bf16.mxu0 0
      %6657 = vmatpush1.bf16.msra.mxu0 0
      %6658 = vmatprep.subr.bf16.mxu0 0
      %6659 = vmatpush1.bf16.msra.mxu0 0
      %6660 = vmatprep.mubr.bf16.mxu0 0
      %6661 = vmatmul.mubr.bf16.gmra.mrb[0].mxu0 %v6033
      %v6662 = vpop.f32.mrb[0].mxu0
      %v6663 = vadd.f32 %v5691, %v6662
      %v6664 = vpop.f32.mrb[0].mxu0
      %v6665 = vadd.f32 %v5695, %v6664
      %v6666 = vpop.f32.mrb[0].mxu0
      %v6667 = vadd.f32 %v5691, %v6666
      %v6668 = vpop.f32.mrb[0].mxu0
      %v6669 = vadd.f32 %v5695, %v6668
      %6670 = vmatprep.mubr.bf16.mxu0 0
      %6671 = vmatmul.mubr.bf16.gmra.mrb[0].mxu0 %v6036
      %v6672 = vpop.f32.mrb[0].mxu0
      %v6673 = vadd.f32 %v5691, %v6672
      %v6674 = vpop.f32.mrb[0].mxu0
      %v6675 = vadd.f32 %v5695, %v6674
      %v6676 = vpop.f32.mrb[0].mxu0
      %v6677 = vadd.f32 %v5691, %v6676
      %v6678 = vpop.f32.mrb[0].mxu0
      %v6679 = vadd.f32 %v5695, %v6678
      %6680 = vmatprep.mubr.bf16.mxu0 0
      %6681 = vmatmul.mubr.bf16.gmra.mrb[0].mxu0 %v6039
      %v6682 = vpop.f32.mrb[0].mxu0
      %v6683 = vadd.f32 %v5691, %v6682
      %v6684 = vpop.f32.mrb[0].mxu0
      %v6685 = vadd.f32 %v5695, %v6684
      %v6686 = vpop.f32.mrb[0].mxu0
      %v6687 = vadd.f32 %v5691, %v6686
      %v6688 = vpop.f32.mrb[0].mxu0
      %v6689 = vadd.f32 %v5695, %v6688
      %6690 = vmatprep.mubr.bf16.mxu0 0
      %6691 = vmatmul.mubr.bf16.gmra.mrb[0].mxu0 %v6042
      %v6692 = vpop.f32.mrb[0].mxu0
      %v6693 = vadd.f32 %v5691, %v6692
      %v6694 = vpop.f32.mrb[0].mxu0
      %v6695 = vadd.f32 %v5695, %v6694
      %v6696 = vpop.f32.mrb[0].mxu0
      %v6697 = vadd.f32 %v5691, %v6696
      %v6698 = vpop.f32.mrb[0].mxu0
      %v6699 = vadd.f32 %v5695, %v6698
      %6700 = vmatprep.mubr.bf16.mxu0 0
      %6701 = vmatmul.mubr.bf16.gmra.mrb[0].mxu0 %v6045
      %v6702 = vpop.f32.mrb[0].mxu0
      %v6703 = vadd.f32 %v5691, %v6702
      %v6704 = vpop.f32.mrb[0].mxu0
      %v6705 = vadd.f32 %v5695, %v6704
      %v6706 = vpop.f32.mrb[0].mxu0
      %v6707 = vadd.f32 %v5691, %v6706
      %v6708 = vpop.f32.mrb[0].mxu0
      %v6709 = vadd.f32 %v5695, %v6708
      %6710 = vdwg.mxu0
      %v6711 = vmax.f32 %v6082, 0.0
      %v6712 = vmax.f32 %v6084, 0.0
      %v6713 = vmax.f32 %v6165, 0.0
      %v6714 = vmax.f32 %v6167, 0.0
      %v6715 = vmax.f32 %v6248, 0.0
      %v6716 = vmax.f32 %v6250, 0.0
      %v6717 = vmax.f32 %v6331, 0.0
      %v6718 = vmax.f32 %v6333, 0.0
      %v6719 = vmax.f32 %v6414, 0.0
      %v6720 = vmax.f32 %v6416, 0.0
      %v6721 = vmax.f32 %v6497, 0.0
      %v6722 = vmax.f32 %v6499, 0.0
      %v6723 = vmax.f32 %v6580, 0.0
      %v6724 = vmax.f32 %v6582, 0.0
      %v6725 = vmax.f32 %v6663, 0.0
      %v6726 = vmax.f32 %v6665, 0.0
      %v6727 = vmax.f32 %v6086, 0.0
      %v6728 = vmax.f32 %v6088, 0.0
      %v6729 = vmax.f32 %v6169, 0.0
      %v6730 = vmax.f32 %v6171, 0.0
      %v6731 = vmax.f32 %v6252, 0.0
      %v6732 = vmax.f32 %v6254, 0.0
      %v6733 = vmax.f32 %v6335, 0.0
      %v6734 = vmax.f32 %v6337, 0.0
      %v6735 = vmax.f32 %v6418, 0.0
      %v6736 = vmax.f32 %v6420, 0.0
      %v6737 = vmax.f32 %v6501, 0.0
      %v6738 = vmax.f32 %v6503, 0.0
      %v6739 = vmax.f32 %v6584, 0.0
      %v6740 = vmax.f32 %v6586, 0.0
      %v6741 = vmax.f32 %v6667, 0.0
      %v6742 = vmax.f32 %v6669, 0.0
      %v6743 = vmax.f32 %v6092, 0.0
      %v6744 = vmax.f32 %v6094, 0.0
      %v6745 = vmax.f32 %v6175, 0.0
      %v6746 = vmax.f32 %v6177, 0.0
      %v6747 = vmax.f32 %v6258, 0.0
      %v6748 = vmax.f32 %v6260, 0.0
      %v6749 = vmax.f32 %v6341, 0.0
      %v6750 = vmax.f32 %v6343, 0.0
      %v6751 = vmax.f32 %v6424, 0.0
      %v6752 = vmax.f32 %v6426, 0.0
      %v6753 = vmax.f32 %v6507, 0.0
      %v6754 = vmax.f32 %v6509, 0.0
      %v6755 = vmax.f32 %v6590, 0.0
      %v6756 = vmax.f32 %v6592, 0.0
      %v6757 = vmax.f32 %v6673, 0.0
      %v6758 = vmax.f32 %v6675, 0.0
      %v6759 = vmax.f32 %v6096, 0.0
      %v6760 = vmax.f32 %v6098, 0.0
      %v6761 = vmax.f32 %v6179, 0.0
      %v6762 = vmax.f32 %v6181, 0.0
      %v6763 = vmax.f32 %v6262, 0.0
      %v6764 = vmax.f32 %v6264, 0.0
      %v6765 = vmax.f32 %v6345, 0.0
      %v6766 = vmax.f32 %v6347, 0.0
      %v6767 = vmax.f32 %v6428, 0.0
      %v6768 = vmax.f32 %v6430, 0.0
      %v6769 = vmax.f32 %v6511, 0.0
      %v6770 = vmax.f32 %v6513, 0.0
      %v6771 = vmax.f32 %v6594, 0.0
      %v6772 = vmax.f32 %v6596, 0.0
      %v6773 = vmax.f32 %v6677, 0.0
      %v6774 = vmax.f32 %v6679, 0.0
      %v6775 = vmax.f32 %v6102, 0.0
      %v6776 = vmax.f32 %v6104, 0.0
      %v6777 = vmax.f32 %v6185, 0.0
      %v6778 = vmax.f32 %v6187, 0.0
      %v6779 = vmax.f32 %v6268, 0.0
      %v6780 = vmax.f32 %v6270, 0.0
      %v6781 = vmax.f32 %v6351, 0.0
      %v6782 = vmax.f32 %v6353, 0.0
      %v6783 = vmax.f32 %v6434, 0.0
      %v6784 = vmax.f32 %v6436, 0.0
      %v6785 = vmax.f32 %v6517, 0.0
      %v6786 = vmax.f32 %v6519, 0.0
      %v6787 = vmax.f32 %v6600, 0.0
      %v6788 = vmax.f32 %v6602, 0.0
      %v6789 = vmax.f32 %v6683, 0.0
      %v6790 = vmax.f32 %v6685, 0.0
      %v6791 = vmax.f32 %v6106, 0.0
      %v6792 = vmax.f32 %v6108, 0.0
      %v6793 = vmax.f32 %v6189, 0.0
      %v6794 = vmax.f32 %v6191, 0.0
      %v6795 = vmax.f32 %v6272, 0.0
      %v6796 = vmax.f32 %v6274, 0.0
      %v6797 = vmax.f32 %v6355, 0.0
      %v6798 = vmax.f32 %v6357, 0.0
      %v6799 = vmax.f32 %v6438, 0.0
      %v6800 = vmax.f32 %v6440, 0.0
      %v6801 = vmax.f32 %v6521, 0.0
      %v6802 = vmax.f32 %v6523, 0.0
      %v6803 = vmax.f32 %v6604, 0.0
      %v6804 = vmax.f32 %v6606, 0.0
      %v6805 = vmax.f32 %v6687, 0.0
      %v6806 = vmax.f32 %v6689, 0.0
      %v6807 = vmax.f32 %v6112, 0.0
      %v6808 = vmax.f32 %v6114, 0.0
      %v6809 = vmax.f32 %v6195, 0.0
      %v6810 = vmax.f32 %v6197, 0.0
      %v6811 = vmax.f32 %v6278, 0.0
      %v6812 = vmax.f32 %v6280, 0.0
      %v6813 = vmax.f32 %v6361, 0.0
      %v6814 = vmax.f32 %v6363, 0.0
      %v6815 = vmax.f32 %v6444, 0.0
      %v6816 = vmax.f32 %v6446, 0.0
      %v6817 = vmax.f32 %v6527, 0.0
      %v6818 = vmax.f32 %v6529, 0.0
      %v6819 = vmax.f32 %v6610, 0.0
      %v6820 = vmax.f32 %v6612, 0.0
      %v6821 = vmax.f32 %v6693, 0.0
      %v6822 = vmax.f32 %v6695, 0.0
      %v6823 = vmax.f32 %v6116, 0.0
      %v6824 = vmax.f32 %v6118, 0.0
      %v6825 = vmax.f32 %v6199, 0.0
      %v6826 = vmax.f32 %v6201, 0.0
      %v6827 = vmax.f32 %v6282, 0.0
      %v6828 = vmax.f32 %v6284, 0.0
      %v6829 = vmax.f32 %v6365, 0.0
      %v6830 = vmax.f32 %v6367, 0.0
      %v6831 = vmax.f32 %v6448, 0.0
      %v6832 = vmax.f32 %v6450, 0.0
      %v6833 = vmax.f32 %v6531, 0.0
      %v6834 = vmax.f32 %v6533, 0.0
      %v6835 = vmax.f32 %v6614, 0.0
      %v6836 = vmax.f32 %v6616, 0.0
      %v6837 = vmax.f32 %v6697, 0.0
      %v6838 = vmax.f32 %v6699, 0.0
      %v6839 = vmax.f32 %v6122, 0.0
      %v6840 = vmax.f32 %v6124, 0.0
      %v6841 = vmax.f32 %v6205, 0.0
      %v6842 = vmax.f32 %v6207, 0.0
      %v6843 = vmax.f32 %v6288, 0.0
      %v6844 = vmax.f32 %v6290, 0.0
      %v6845 = vmax.f32 %v6371, 0.0
      %v6846 = vmax.f32 %v6373, 0.0
      %v6847 = vmax.f32 %v6454, 0.0
      %v6848 = vmax.f32 %v6456, 0.0
      %v6849 = vmax.f32 %v6537, 0.0
      %v6850 = vmax.f32 %v6539, 0.0
      %v6851 = vmax.f32 %v6620, 0.0
      %v6852 = vmax.f32 %v6622, 0.0
      %v6853 = vmax.f32 %v6703, 0.0
      %v6854 = vmax.f32 %v6705, 0.0
      %v6855 = vmax.f32 %v6126, 0.0
      %v6856 = vmax.f32 %v6128, 0.0
      %v6857 = vmax.f32 %v6209, 0.0
      %v6858 = vmax.f32 %v6211, 0.0
      %v6859 = vmax.f32 %v6292, 0.0
      %v6860 = vmax.f32 %v6294, 0.0
      %v6861 = vmax.f32 %v6375, 0.0
      %v6862 = vmax.f32 %v6377, 0.0
      %v6863 = vmax.f32 %v6458, 0.0
      %v6864 = vmax.f32 %v6460, 0.0
      %v6865 = vmax.f32 %v6541, 0.0
      %v6866 = vmax.f32 %v6543, 0.0
      %v6867 = vmax.f32 %v6624, 0.0
      %v6868 = vmax.f32 %v6626, 0.0
      %v6869 = vmax.f32 %v6707, 0.0
      %v6870 = vmax.f32 %v6709, 0.0
      %v6871 = vpack.c.bf16 %v6727, %v6711
      %v6872 = vpack.c.bf16 %v6728, %v6712
      %v6873 = vpack.c.bf16 %v6729, %v6713
      %v6874 = vpack.c.bf16 %v6730, %v6714
      %v6875 = vpack.c.bf16 %v6731, %v6715
      %v6876 = vpack.c.bf16 %v6732, %v6716
      %v6877 = vpack.c.bf16 %v6733, %v6717
      %v6878 = vpack.c.bf16 %v6734, %v6718
      %v6879 = vpack.c.bf16 %v6735, %v6719
      %v6880 = vpack.c.bf16 %v6736, %v6720
      %v6881 = vpack.c.bf16 %v6737, %v6721
      %v6882 = vpack.c.bf16 %v6738, %v6722
      %v6883 = vpack.c.bf16 %v6739, %v6723
      %v6884 = vpack.c.bf16 %v6740, %v6724
      %v6885 = vpack.c.bf16 %v6741, %v6725
      %v6886 = vpack.c.bf16 %v6742, %v6726
      %v6887 = vpack.c.bf16 %v6759, %v6743
      %v6888 = vpack.c.bf16 %v6760, %v6744
      %v6889 = vpack.c.bf16 %v6761, %v6745
      %v6890 = vpack.c.bf16 %v6762, %v6746
      %v6891 = vpack.c.bf16 %v6763, %v6747
      %v6892 = vpack.c.bf16 %v6764, %v6748
      %v6893 = vpack.c.bf16 %v6765, %v6749
      %v6894 = vpack.c.bf16 %v6766, %v6750
      %v6895 = vpack.c.bf16 %v6767, %v6751
      %v6896 = vpack.c.bf16 %v6768, %v6752
      %v6897 = vpack.c.bf16 %v6769, %v6753
      %v6898 = vpack.c.bf16 %v6770, %v6754
      %v6899 = vpack.c.bf16 %v6771, %v6755
      %v6900 = vpack.c.bf16 %v6772, %v6756
      %v6901 = vpack.c.bf16 %v6773, %v6757
      %v6902 = vpack.c.bf16 %v6774, %v6758
      %v6903 = vpack.c.bf16 %v6791, %v6775
      %v6904 = vpack.c.bf16 %v6792, %v6776
      %v6905 = vpack.c.bf16 %v6793, %v6777
      %v6906 = vpack.c.bf16 %v6794, %v6778
      %v6907 = vpack.c.bf16 %v6795, %v6779
      %v6908 = vpack.c.bf16 %v6796, %v6780
      %v6909 = vpack.c.bf16 %v6797, %v6781
      %v6910 = vpack.c.bf16 %v6798, %v6782
      %v6911 = vpack.c.bf16 %v6799, %v6783
      %v6912 = vpack.c.bf16 %v6800, %v6784
      %v6913 = vpack.c.bf16 %v6801, %v6785
      %v6914 = vpack.c.bf16 %v6802, %v6786
      %v6915 = vpack.c.bf16 %v6803, %v6787
      %v6916 = vpack.c.bf16 %v6804, %v6788
      %v6917 = vpack.c.bf16 %v6805, %v6789
      %v6918 = vpack.c.bf16 %v6806, %v6790
      %v6919 = vpack.c.bf16 %v6823, %v6807
      %v6920 = vpack.c.bf16 %v6824, %v6808
      %v6921 = vpack.c.bf16 %v6825, %v6809
      %v6922 = vpack.c.bf16 %v6826, %v6810
      %v6923 = vpack.c.bf16 %v6827, %v6811
      %v6924 = vpack.c.bf16 %v6828, %v6812
      %v6925 = vpack.c.bf16 %v6829, %v6813
      %v6926 = vpack.c.bf16 %v6830, %v6814
      %v6927 = vpack.c.bf16 %v6831, %v6815
      %v6928 = vpack.c.bf16 %v6832, %v6816
      %v6929 = vpack.c.bf16 %v6833, %v6817
      %v6930 = vpack.c.bf16 %v6834, %v6818
      %v6931 = vpack.c.bf16 %v6835, %v6819
      %v6932 = vpack.c.bf16 %v6836, %v6820
      %v6933 = vpack.c.bf16 %v6837, %v6821
      %v6934 = vpack.c.bf16 %v6838, %v6822
      %v6935 = vpack.c.bf16 %v6855, %v6839
      %v6936 = vpack.c.bf16 %v6856, %v6840
      %v6937 = vpack.c.bf16 %v6857, %v6841
      %v6938 = vpack.c.bf16 %v6858, %v6842
      %v6939 = vpack.c.bf16 %v6859, %v6843
      %v6940 = vpack.c.bf16 %v6860, %v6844
      %v6941 = vpack.c.bf16 %v6861, %v6845
      %v6942 = vpack.c.bf16 %v6862, %v6846
      %v6943 = vpack.c.bf16 %v6863, %v6847
      %v6944 = vpack.c.bf16 %v6864, %v6848
      %v6945 = vpack.c.bf16 %v6865, %v6849
      %v6946 = vpack.c.bf16 %v6866, %v6850
      %v6947 = vpack.c.bf16 %v6867, %v6851
      %v6948 = vpack.c.bf16 %v6868, %v6852
      %v6949 = vpack.c.bf16 %v6869, %v6853
      %v6950 = vpack.c.bf16 %v6870, %v6854
      %v6951 = vld [vmem:[%s910] sm:$0xf]
      %v6952 = vld [vmem:[%s910 + $0x4] sm:$0xf]
      %v6953 = vld [vmem:[%s910 + $0x8] sm:$0xf]
      %v6954 = vld [vmem:[%s910 + $0xc] sm:$0xf]
      %v6955 = vld [vmem:[%s910 + $0x10] sm:$0xf]
      %v6956 = vld [vmem:[%s910 + $0x14] sm:$0xf]
      %v6957 = vld [vmem:[%s910 + $0x18] sm:$0xf]
      %v6958 = vld [vmem:[%s910 + $0x1c] sm:$0xf]
      %v6959 = vld [vmem:[%s910 + $0x20] sm:$0xf]
      %v6960 = vld [vmem:[%s910 + $0x24] sm:$0xf]
      %v6961 = vld [vmem:[%s910 + $0x28] sm:$0xf]
      %v6962 = vld [vmem:[%s910 + $0x2c] sm:$0xf]
      %v6963 = vld [vmem:[%s910 + $0x30] sm:$0xf]
      %v6964 = vld [vmem:[%s910 + $0x34] sm:$0xf]
      %v6965 = vld [vmem:[%s910 + $0x38] sm:$0xf]
      %v6966 = vld [vmem:[%s910 + $0x3c] sm:$0xf]
      %v6967 = vld [vmem:[%s910 + $0x40] sm:$0xf]
      %v6968 = vld [vmem:[%s910 + $0x44] sm:$0xf]
      %v6969 = vld [vmem:[%s910 + $0x48] sm:$0xf]
      %v6970 = vld [vmem:[%s910 + $0x4c] sm:$0xf]
      %v6971 = vld [vmem:[%s910 + $0x50] sm:$0xf]
      %v6972 = vld [vmem:[%s910 + $0x54] sm:$0xf]
      %v6973 = vld [vmem:[%s910 + $0x58] sm:$0xf]
      %v6974 = vld [vmem:[%s910 + $0x5c] sm:$0xf]
      %v6975 = vld [vmem:[%s910 + $0x60] sm:$0xf]
      %v6976 = vld [vmem:[%s910 + $0x64] sm:$0xf]
      %v6977 = vld [vmem:[%s910 + $0x68] sm:$0xf]
      %v6978 = vld [vmem:[%s910 + $0x6c] sm:$0xf]
      %v6979 = vld [vmem:[%s910 + $0x70] sm:$0xf]
      %v6980 = vld [vmem:[%s910 + $0x74] sm:$0xf]
      %v6981 = vld [vmem:[%s910 + $0x78] sm:$0xf]
      %v6982 = vld [vmem:[%s910 + $0x7c] sm:$0xf]
      %v6983 = vld [vmem:[%s910 + $0x80] sm:$0xf]
      %v6984 = vld [vmem:[%s910 + $0x84] sm:$0xf]
      %v6985 = vld [vmem:[%s910 + $0x88] sm:$0xf]
      %v6986 = vld [vmem:[%s910 + $0x8c] sm:$0xf]
      %v6987 = vld [vmem:[%s910 + $0x90] sm:$0xf]
      %v6988 = vld [vmem:[%s910 + $0x94] sm:$0xf]
      %v6989 = vld [vmem:[%s910 + $0x98] sm:$0xf]
      %v6990 = vld [vmem:[%s910 + $0x9c] sm:$0xf]
      %v6991 = vld [vmem:[%s910 + $0xa0] sm:$0xf]
      %v6992 = vld [vmem:[%s910 + $0xa4] sm:$0xf]
      %v6993 = vld [vmem:[%s910 + $0xa8] sm:$0xf]
      %v6994 = vld [vmem:[%s910 + $0xac] sm:$0xf]
      %v6995 = vld [vmem:[%s910 + $0xb0] sm:$0xf]
      %v6996 = vld [vmem:[%s910 + $0xb4] sm:$0xf]
      %v6997 = vld [vmem:[%s910 + $0xb8] sm:$0xf]
      %v6998 = vld [vmem:[%s910 + $0xbc] sm:$0xf]
      %v6999 = vld [vmem:[%s910 + $0xc0] sm:$0xf]
      %v7000 = vld [vmem:[%s910 + $0xc4] sm:$0xf]
      %v7001 = vld [vmem:[%s910 + $0xc8] sm:$0xf]
      %v7002 = vld [vmem:[%s910 + $0xcc] sm:$0xf]
      %v7003 = vld [vmem:[%s910 + $0xd0] sm:$0xf]
      %v7004 = vld [vmem:[%s910 + $0xd4] sm:$0xf]
      %v7005 = vld [vmem:[%s910 + $0xd8] sm:$0xf]
      %v7006 = vld [vmem:[%s910 + $0xdc] sm:$0xf]
      %v7007 = vld [vmem:[%s910 + $0xe0] sm:$0xf]
      %v7008 = vld [vmem:[%s910 + $0xe4] sm:$0xf]
      %v7009 = vld [vmem:[%s910 + $0xe8] sm:$0xf]
      %v7010 = vld [vmem:[%s910 + $0xec] sm:$0xf]
      %v7011 = vld [vmem:[%s910 + $0xf0] sm:$0xf]
      %v7012 = vld [vmem:[%s910 + $0xf4] sm:$0xf]
      %v7013 = vld [vmem:[%s910 + $0xf8] sm:$0xf]
      %v7014 = vld [vmem:[%s910 + $0xfc] sm:$0xf]
      %v7015 = vld [vmem:[%s910 + $0x100] sm:$0xf]
      %v7016 = vld [vmem:[%s910 + $0x104] sm:$0xf]
      %v7017 = vld [vmem:[%s910 + $0x108] sm:$0xf]
      %v7018 = vld [vmem:[%s910 + $0x10c] sm:$0xf]
      %v7019 = vld [vmem:[%s910 + $0x110] sm:$0xf]
      %v7020 = vld [vmem:[%s910 + $0x114] sm:$0xf]
      %v7021 = vld [vmem:[%s910 + $0x118] sm:$0xf]
      %v7022 = vld [vmem:[%s910 + $0x11c] sm:$0xf]
      %v7023 = vld [vmem:[%s910 + $0x120] sm:$0xf]
      %v7024 = vld [vmem:[%s910 + $0x124] sm:$0xf]
      %v7025 = vld [vmem:[%s910 + $0x128] sm:$0xf]
      %v7026 = vld [vmem:[%s910 + $0x12c] sm:$0xf]
      %v7027 = vld [vmem:[%s910 + $0x130] sm:$0xf]
      %v7028 = vld [vmem:[%s910 + $0x134] sm:$0xf]
      %v7029 = vld [vmem:[%s910 + $0x138] sm:$0xf]
      %v7030 = vld [vmem:[%s910 + $0x13c] sm:$0xf]
      %v7031 = vld [vmem:[%s910 + $0x140] sm:$0xf]
      %v7032 = vld [vmem:[%s910 + $0x144] sm:$0xf]
      %v7033 = vld [vmem:[%s910 + $0x148] sm:$0xf]
      %v7034 = vld [vmem:[%s910 + $0x14c] sm:$0xf]
      %v7035 = vld [vmem:[%s910 + $0x150] sm:$0xf]
      %v7036 = vld [vmem:[%s910 + $0x154] sm:$0xf]
      %v7037 = vld [vmem:[%s910 + $0x158] sm:$0xf]
      %v7038 = vld [vmem:[%s910 + $0x15c] sm:$0xf]
      %v7039 = vld [vmem:[%s910 + $0x160] sm:$0xf]
      %v7040 = vld [vmem:[%s910 + $0x164] sm:$0xf]
      %v7041 = vld [vmem:[%s910 + $0x168] sm:$0xf]
      %v7042 = vld [vmem:[%s910 + $0x16c] sm:$0xf]
      %v7043 = vld [vmem:[%s910 + $0x170] sm:$0xf]
      %v7044 = vld [vmem:[%s910 + $0x174] sm:$0xf]
      %v7045 = vld [vmem:[%s910 + $0x178] sm:$0xf]
      %v7046 = vld [vmem:[%s910 + $0x17c] sm:$0xf]
      %v7047 = vld [vmem:[%s910 + $0x180] sm:$0xf]
      %v7048 = vld [vmem:[%s910 + $0x184] sm:$0xf]
      %v7049 = vld [vmem:[%s910 + $0x188] sm:$0xf]
      %v7050 = vld [vmem:[%s910 + $0x18c] sm:$0xf]
      %v7051 = vld [vmem:[%s910 + $0x190] sm:$0xf]
      %v7052 = vld [vmem:[%s910 + $0x194] sm:$0xf]
      %v7053 = vld [vmem:[%s910 + $0x198] sm:$0xf]
      %v7054 = vld [vmem:[%s910 + $0x19c] sm:$0xf]
      %v7055 = vld [vmem:[%s910 + $0x1a0] sm:$0xf]
      %v7056 = vld [vmem:[%s910 + $0x1a4] sm:$0xf]
      %v7057 = vld [vmem:[%s910 + $0x1a8] sm:$0xf]
      %v7058 = vld [vmem:[%s910 + $0x1ac] sm:$0xf]
      %v7059 = vld [vmem:[%s910 + $0x1b0] sm:$0xf]
      %v7060 = vld [vmem:[%s910 + $0x1b4] sm:$0xf]
      %v7061 = vld [vmem:[%s910 + $0x1b8] sm:$0xf]
      %v7062 = vld [vmem:[%s910 + $0x1bc] sm:$0xf]
      %v7063 = vld [vmem:[%s910 + $0x1c0] sm:$0xf]
      %v7064 = vld [vmem:[%s910 + $0x1c4] sm:$0xf]
      %v7065 = vld [vmem:[%s910 + $0x1c8] sm:$0xf]
      %v7066 = vld [vmem:[%s910 + $0x1cc] sm:$0xf]
      %v7067 = vld [vmem:[%s910 + $0x1d0] sm:$0xf]
      %v7068 = vld [vmem:[%s910 + $0x1d4] sm:$0xf]
      %v7069 = vld [vmem:[%s910 + $0x1d8] sm:$0xf]
      %v7070 = vld [vmem:[%s910 + $0x1dc] sm:$0xf]
      %v7071 = vld [vmem:[%s910 + $0x1e0] sm:$0xf]
      %v7072 = vld [vmem:[%s910 + $0x1e4] sm:$0xf]
      %v7073 = vld [vmem:[%s910 + $0x1e8] sm:$0xf]
      %v7074 = vld [vmem:[%s910 + $0x1ec] sm:$0xf]
      %v7075 = vld [vmem:[%s910 + $0x1f0] sm:$0xf]
      %v7076 = vld [vmem:[%s910 + $0x1f4] sm:$0xf]
      %v7077 = vld [vmem:[%s910 + $0x1f8] sm:$0xf]
      %v7078 = vld [vmem:[%s910 + $0x1fc] sm:$0xf]
      %v7079 = vld [vmem:[%s910 + $0x200] sm:$0xf]
      %v7080 = vld [vmem:[%s910 + $0x204] sm:$0xf]
      %v7081 = vld [vmem:[%s910 + $0x208] sm:$0xf]
      %v7082 = vld [vmem:[%s910 + $0x20c] sm:$0xf]
      %v7083 = vld [vmem:[%s910 + $0x210] sm:$0xf]
      %v7084 = vld [vmem:[%s910 + $0x214] sm:$0xf]
      %v7085 = vld [vmem:[%s910 + $0x218] sm:$0xf]
      %v7086 = vld [vmem:[%s910 + $0x21c] sm:$0xf]
      %v7087 = vld [vmem:[%s910 + $0x220] sm:$0xf]
      %v7088 = vld [vmem:[%s910 + $0x224] sm:$0xf]
      %v7089 = vld [vmem:[%s910 + $0x228] sm:$0xf]
      %v7090 = vld [vmem:[%s910 + $0x22c] sm:$0xf]
      %v7091 = vld [vmem:[%s910 + $0x230] sm:$0xf]
      %v7092 = vld [vmem:[%s910 + $0x234] sm:$0xf]
      %v7093 = vld [vmem:[%s910 + $0x238] sm:$0xf]
      %v7094 = vld [vmem:[%s910 + $0x23c] sm:$0xf]
      %v7095 = vld [vmem:[%s910 + $0x240] sm:$0xf]
      %v7096 = vld [vmem:[%s910 + $0x244] sm:$0xf]
      %v7097 = vld [vmem:[%s910 + $0x248] sm:$0xf]
      %v7098 = vld [vmem:[%s910 + $0x24c] sm:$0xf]
      %v7099 = vld [vmem:[%s910 + $0x250] sm:$0xf]
      %v7100 = vld [vmem:[%s910 + $0x254] sm:$0xf]
      %v7101 = vld [vmem:[%s910 + $0x258] sm:$0xf]
      %v7102 = vld [vmem:[%s910 + $0x25c] sm:$0xf]
      %v7103 = vld [vmem:[%s910 + $0x260] sm:$0xf]
      %v7104 = vld [vmem:[%s910 + $0x264] sm:$0xf]
      %v7105 = vld [vmem:[%s910 + $0x268] sm:$0xf]
      %v7106 = vld [vmem:[%s910 + $0x26c] sm:$0xf]
      %v7107 = vld [vmem:[%s910 + $0x270] sm:$0xf]
      %v7108 = vld [vmem:[%s910 + $0x274] sm:$0xf]
      %v7109 = vld [vmem:[%s910 + $0x278] sm:$0xf]
      %v7110 = vld [vmem:[%s910 + $0x27c] sm:$0xf]
      %v7111 = vld [vmem:[%s910 + $0x280] sm:$0xf]
      %v7112 = vld [vmem:[%s910 + $0x284] sm:$0xf]
      %v7113 = vld [vmem:[%s910 + $0x288] sm:$0xf]
      %v7114 = vld [vmem:[%s910 + $0x28c] sm:$0xf]
      %v7115 = vld [vmem:[%s910 + $0x290] sm:$0xf]
      %v7116 = vld [vmem:[%s910 + $0x294] sm:$0xf]
      %v7117 = vld [vmem:[%s910 + $0x298] sm:$0xf]
      %v7118 = vld [vmem:[%s910 + $0x29c] sm:$0xf]
      %v7119 = vld [vmem:[%s910 + $0x2a0] sm:$0xf]
      %v7120 = vld [vmem:[%s910 + $0x2a4] sm:$0xf]
      %v7121 = vld [vmem:[%s910 + $0x2a8] sm:$0xf]
      %v7122 = vld [vmem:[%s910 + $0x2ac] sm:$0xf]
      %v7123 = vld [vmem:[%s910 + $0x2b0] sm:$0xf]
      %v7124 = vld [vmem:[%s910 + $0x2b4] sm:$0xf]
      %v7125 = vld [vmem:[%s910 + $0x2b8] sm:$0xf]
      %v7126 = vld [vmem:[%s910 + $0x2bc] sm:$0xf]
      %v7127 = vld [vmem:[%s910 + $0x2c0] sm:$0xf]
      %v7128 = vld [vmem:[%s910 + $0x2c4] sm:$0xf]
      %v7129 = vld [vmem:[%s910 + $0x2c8] sm:$0xf]
      %v7130 = vld [vmem:[%s910 + $0x2cc] sm:$0xf]
      %v7131 = vld [vmem:[%s910 + $0x2d0] sm:$0xf]
      %v7132 = vld [vmem:[%s910 + $0x2d4] sm:$0xf]
      %v7133 = vld [vmem:[%s910 + $0x2d8] sm:$0xf]
      %v7134 = vld [vmem:[%s910 + $0x2dc] sm:$0xf]
      %v7135 = vld [vmem:[%s910 + $0x2e0] sm:$0xf]
      %v7136 = vld [vmem:[%s910 + $0x2e4] sm:$0xf]
      %v7137 = vld [vmem:[%s910 + $0x2e8] sm:$0xf]
      %v7138 = vld [vmem:[%s910 + $0x2ec] sm:$0xf]
      %v7139 = vld [vmem:[%s910 + $0x2f0] sm:$0xf]
      %v7140 = vld [vmem:[%s910 + $0x2f4] sm:$0xf]
      %v7141 = vld [vmem:[%s910 + $0x2f8] sm:$0xf]
      %v7142 = vld [vmem:[%s910 + $0x2fc] sm:$0xf]
      %v7143 = vld [vmem:[%s910 + $0x300] sm:$0xf]
      %v7144 = vld [vmem:[%s910 + $0x304] sm:$0xf]
      %v7145 = vld [vmem:[%s910 + $0x308] sm:$0xf]
      %v7146 = vld [vmem:[%s910 + $0x30c] sm:$0xf]
      %v7147 = vld [vmem:[%s910 + $0x310] sm:$0xf]
      %v7148 = vld [vmem:[%s910 + $0x314] sm:$0xf]
      %v7149 = vld [vmem:[%s910 + $0x318] sm:$0xf]
      %v7150 = vld [vmem:[%s910 + $0x31c] sm:$0xf]
      %v7151 = vld [vmem:[%s910 + $0x320] sm:$0xf]
      %v7152 = vld [vmem:[%s910 + $0x324] sm:$0xf]
      %v7153 = vld [vmem:[%s910 + $0x328] sm:$0xf]
      %v7154 = vld [vmem:[%s910 + $0x32c] sm:$0xf]
      %v7155 = vld [vmem:[%s910 + $0x330] sm:$0xf]
      %v7156 = vld [vmem:[%s910 + $0x334] sm:$0xf]
      %v7157 = vld [vmem:[%s910 + $0x338] sm:$0xf]
      %v7158 = vld [vmem:[%s910 + $0x33c] sm:$0xf]
      %v7159 = vld [vmem:[%s910 + $0x340] sm:$0xf]
      %v7160 = vld [vmem:[%s910 + $0x344] sm:$0xf]
      %v7161 = vld [vmem:[%s910 + $0x348] sm:$0xf]
      %v7162 = vld [vmem:[%s910 + $0x34c] sm:$0xf]
      %v7163 = vld [vmem:[%s910 + $0x350] sm:$0xf]
      %v7164 = vld [vmem:[%s910 + $0x354] sm:$0xf]
      %v7165 = vld [vmem:[%s910 + $0x358] sm:$0xf]
      %v7166 = vld [vmem:[%s910 + $0x35c] sm:$0xf]
      %v7167 = vld [vmem:[%s910 + $0x360] sm:$0xf]
      %v7168 = vld [vmem:[%s910 + $0x364] sm:$0xf]
      %v7169 = vld [vmem:[%s910 + $0x368] sm:$0xf]
      %v7170 = vld [vmem:[%s910 + $0x36c] sm:$0xf]
      %v7171 = vld [vmem:[%s910 + $0x370] sm:$0xf]
      %v7172 = vld [vmem:[%s910 + $0x374] sm:$0xf]
      %v7173 = vld [vmem:[%s910 + $0x378] sm:$0xf]
      %v7174 = vld [vmem:[%s910 + $0x37c] sm:$0xf]
      %v7175 = vld [vmem:[%s910 + $0x380] sm:$0xf]
      %v7176 = vld [vmem:[%s910 + $0x384] sm:$0xf]
      %v7177 = vld [vmem:[%s910 + $0x388] sm:$0xf]
      %v7178 = vld [vmem:[%s910 + $0x38c] sm:$0xf]
      %v7179 = vld [vmem:[%s910 + $0x390] sm:$0xf]
      %v7180 = vld [vmem:[%s910 + $0x394] sm:$0xf]
      %v7181 = vld [vmem:[%s910 + $0x398] sm:$0xf]
      %v7182 = vld [vmem:[%s910 + $0x39c] sm:$0xf]
      %v7183 = vld [vmem:[%s910 + $0x3a0] sm:$0xf]
      %v7184 = vld [vmem:[%s910 + $0x3a4] sm:$0xf]
      %v7185 = vld [vmem:[%s910 + $0x3a8] sm:$0xf]
      %v7186 = vld [vmem:[%s910 + $0x3ac] sm:$0xf]
      %v7187 = vld [vmem:[%s910 + $0x3b0] sm:$0xf]
      %v7188 = vld [vmem:[%s910 + $0x3b4] sm:$0xf]
      %v7189 = vld [vmem:[%s910 + $0x3b8] sm:$0xf]
      %v7190 = vld [vmem:[%s910 + $0x3bc] sm:$0xf]
      %v7191 = vld [vmem:[%s910 + $0x3c0] sm:$0xf]
      %v7192 = vld [vmem:[%s910 + $0x3c4] sm:$0xf]
      %v7193 = vld [vmem:[%s910 + $0x3c8] sm:$0xf]
      %v7194 = vld [vmem:[%s910 + $0x3cc] sm:$0xf]
      %v7195 = vld [vmem:[%s910 + $0x3d0] sm:$0xf]
      %v7196 = vld [vmem:[%s910 + $0x3d4] sm:$0xf]
      %v7197 = vld [vmem:[%s910 + $0x3d8] sm:$0xf]
      %v7198 = vld [vmem:[%s910 + $0x3dc] sm:$0xf]
      %v7199 = vld [vmem:[%s910 + $0x3e0] sm:$0xf]
      %v7200 = vld [vmem:[%s910 + $0x3e4] sm:$0xf]
      %v7201 = vld [vmem:[%s910 + $0x3e8] sm:$0xf]
      %v7202 = vld [vmem:[%s910 + $0x3ec] sm:$0xf]
      %v7203 = vld [vmem:[%s910 + $0x3f0] sm:$0xf]
      %v7204 = vld [vmem:[%s910 + $0x3f4] sm:$0xf]
      %v7205 = vld [vmem:[%s910 + $0x3f8] sm:$0xf]
      %v7206 = vld [vmem:[%s910 + $0x3fc] sm:$0xf]
      %v7207 = vld [vmem:[%s917] sm:$0x1]
      %v7209 = vlaneseq
      %v7210 = vshrl.u32 %v7209, 7
      %v7211 = vsub.s32 0, %v7210
      %v7212 = vrot.slane %v7207, %v7211
      %v7470 = vunpack.c.l.b16 %v6951
      %v7471 = vunpack.c.l.b16 %v6952
      %v7472 = vunpack.c.l.b16 %v6953
      %v7473 = vunpack.c.l.b16 %v6954
      %v7474 = vunpack.c.l.b16 %v6955
      %v7475 = vunpack.c.l.b16 %v6956
      %v7476 = vunpack.c.l.b16 %v6957
      %v7477 = vunpack.c.l.b16 %v6958
      %v7478 = vunpack.c.l.b16 %v6959
      %v7479 = vunpack.c.l.b16 %v6960
      %v7480 = vunpack.c.l.b16 %v6961
      %v7481 = vunpack.c.l.b16 %v6962
      %v7482 = vunpack.c.l.b16 %v6963
      %v7483 = vunpack.c.l.b16 %v6964
      %v7484 = vunpack.c.l.b16 %v6965
      %v7485 = vunpack.c.l.b16 %v6966
      %v7486 = vunpack.c.l.b16 %v6967
      %v7487 = vunpack.c.l.b16 %v6968
      %v7488 = vunpack.c.l.b16 %v6969
      %v7489 = vunpack.c.l.b16 %v6970
      %v7490 = vunpack.c.l.b16 %v6971
      %v7491 = vunpack.c.l.b16 %v6972
      %v7492 = vunpack.c.l.b16 %v6973
      %v7493 = vunpack.c.l.b16 %v6974
      %v7494 = vunpack.c.l.b16 %v6975
      %v7495 = vunpack.c.l.b16 %v6976
      %v7496 = vunpack.c.l.b16 %v6977
      %v7497 = vunpack.c.l.b16 %v6978
      %v7498 = vunpack.c.l.b16 %v6979
      %v7499 = vunpack.c.l.b16 %v6980
      %v7500 = vunpack.c.l.b16 %v6981
      %v7501 = vunpack.c.l.b16 %v6982
      %v7502 = vunpack.c.l.b16 %v6983
      %v7503 = vunpack.c.l.b16 %v6984
      %v7504 = vunpack.c.l.b16 %v6985
      %v7505 = vunpack.c.l.b16 %v6986
      %v7506 = vunpack.c.l.b16 %v6987
      %v7507 = vunpack.c.l.b16 %v6988
      %v7508 = vunpack.c.l.b16 %v6989
      %v7509 = vunpack.c.l.b16 %v6990
      %v7510 = vunpack.c.l.b16 %v6991
      %v7511 = vunpack.c.l.b16 %v6992
      %v7512 = vunpack.c.l.b16 %v6993
      %v7513 = vunpack.c.l.b16 %v6994
      %v7514 = vunpack.c.l.b16 %v6995
      %v7515 = vunpack.c.l.b16 %v6996
      %v7516 = vunpack.c.l.b16 %v6997
      %v7517 = vunpack.c.l.b16 %v6998
      %v7518 = vunpack.c.l.b16 %v6999
      %v7519 = vunpack.c.l.b16 %v7000
      %v7520 = vunpack.c.l.b16 %v7001
      %v7521 = vunpack.c.l.b16 %v7002
      %v7522 = vunpack.c.l.b16 %v7003
      %v7523 = vunpack.c.l.b16 %v7004
      %v7524 = vunpack.c.l.b16 %v7005
      %v7525 = vunpack.c.l.b16 %v7006
      %v7526 = vunpack.c.l.b16 %v7007
      %v7527 = vunpack.c.l.b16 %v7008
      %v7528 = vunpack.c.l.b16 %v7009
      %v7529 = vunpack.c.l.b16 %v7010
      %v7530 = vunpack.c.l.b16 %v7011
      %v7531 = vunpack.c.l.b16 %v7012
      %v7532 = vunpack.c.l.b16 %v7013
      %v7533 = vunpack.c.l.b16 %v7014
      %v7534 = vunpack.c.l.b16 %v7015
      %v7535 = vunpack.c.l.b16 %v7016
      %v7536 = vunpack.c.l.b16 %v7017
      %v7537 = vunpack.c.l.b16 %v7018
      %v7538 = vunpack.c.l.b16 %v7019
      %v7539 = vunpack.c.l.b16 %v7020
      %v7540 = vunpack.c.l.b16 %v7021
      %v7541 = vunpack.c.l.b16 %v7022
      %v7542 = vunpack.c.l.b16 %v7023
      %v7543 = vunpack.c.l.b16 %v7024
      %v7544 = vunpack.c.l.b16 %v7025
      %v7545 = vunpack.c.l.b16 %v7026
      %v7546 = vunpack.c.l.b16 %v7027
      %v7547 = vunpack.c.l.b16 %v7028
      %v7548 = vunpack.c.l.b16 %v7029
      %v7549 = vunpack.c.l.b16 %v7030
      %v7550 = vunpack.c.l.b16 %v7031
      %v7551 = vunpack.c.l.b16 %v7032
      %v7552 = vunpack.c.l.b16 %v7033
      %v7553 = vunpack.c.l.b16 %v7034
      %v7554 = vunpack.c.l.b16 %v7035
      %v7555 = vunpack.c.l.b16 %v7036
      %v7556 = vunpack.c.l.b16 %v7037
      %v7557 = vunpack.c.l.b16 %v7038
      %v7558 = vunpack.c.l.b16 %v7039
      %v7559 = vunpack.c.l.b16 %v7040
      %v7560 = vunpack.c.l.b16 %v7041
      %v7561 = vunpack.c.l.b16 %v7042
      %v7562 = vunpack.c.l.b16 %v7043
      %v7563 = vunpack.c.l.b16 %v7044
      %v7564 = vunpack.c.l.b16 %v7045
      %v7565 = vunpack.c.l.b16 %v7046
      %v7566 = vunpack.c.l.b16 %v7047
      %v7567 = vunpack.c.l.b16 %v7048
      %v7568 = vunpack.c.l.b16 %v7049
      %v7569 = vunpack.c.l.b16 %v7050
      %v7570 = vunpack.c.l.b16 %v7051
      %v7571 = vunpack.c.l.b16 %v7052
      %v7572 = vunpack.c.l.b16 %v7053
      %v7573 = vunpack.c.l.b16 %v7054
      %v7574 = vunpack.c.l.b16 %v7055
      %v7575 = vunpack.c.l.b16 %v7056
      %v7576 = vunpack.c.l.b16 %v7057
      %v7577 = vunpack.c.l.b16 %v7058
      %v7578 = vunpack.c.l.b16 %v7059
      %v7579 = vunpack.c.l.b16 %v7060
      %v7580 = vunpack.c.l.b16 %v7061
      %v7581 = vunpack.c.l.b16 %v7062
      %v7582 = vunpack.c.l.b16 %v7063
      %v7583 = vunpack.c.l.b16 %v7064
      %v7584 = vunpack.c.l.b16 %v7065
      %v7585 = vunpack.c.l.b16 %v7066
      %v7586 = vunpack.c.l.b16 %v7067
      %v7587 = vunpack.c.l.b16 %v7068
      %v7588 = vunpack.c.l.b16 %v7069
      %v7589 = vunpack.c.l.b16 %v7070
      %v7590 = vunpack.c.l.b16 %v7071
      %v7591 = vunpack.c.l.b16 %v7072
      %v7592 = vunpack.c.l.b16 %v7073
      %v7593 = vunpack.c.l.b16 %v7074
      %v7594 = vunpack.c.l.b16 %v7075
      %v7595 = vunpack.c.l.b16 %v7076
      %v7596 = vunpack.c.l.b16 %v7077
      %v7597 = vunpack.c.l.b16 %v7078
      %v7598 = vunpack.c.l.b16 %v7079
      %v7599 = vunpack.c.l.b16 %v7080
      %v7600 = vunpack.c.l.b16 %v7081
      %v7601 = vunpack.c.l.b16 %v7082
      %v7602 = vunpack.c.l.b16 %v7083
      %v7603 = vunpack.c.l.b16 %v7084
      %v7604 = vunpack.c.l.b16 %v7085
      %v7605 = vunpack.c.l.b16 %v7086
      %v7606 = vunpack.c.l.b16 %v7087
      %v7607 = vunpack.c.l.b16 %v7088
      %v7608 = vunpack.c.l.b16 %v7089
      %v7609 = vunpack.c.l.b16 %v7090
      %v7610 = vunpack.c.l.b16 %v7091
      %v7611 = vunpack.c.l.b16 %v7092
      %v7612 = vunpack.c.l.b16 %v7093
      %v7613 = vunpack.c.l.b16 %v7094
      %v7614 = vunpack.c.l.b16 %v7095
      %v7615 = vunpack.c.l.b16 %v7096
      %v7616 = vunpack.c.l.b16 %v7097
      %v7617 = vunpack.c.l.b16 %v7098
      %v7618 = vunpack.c.l.b16 %v7099
      %v7619 = vunpack.c.l.b16 %v7100
      %v7620 = vunpack.c.l.b16 %v7101
      %v7621 = vunpack.c.l.b16 %v7102
      %v7622 = vunpack.c.l.b16 %v7103
      %v7623 = vunpack.c.l.b16 %v7104
      %v7624 = vunpack.c.l.b16 %v7105
      %v7625 = vunpack.c.l.b16 %v7106
      %v7626 = vunpack.c.l.b16 %v7107
      %v7627 = vunpack.c.l.b16 %v7108
      %v7628 = vunpack.c.l.b16 %v7109
      %v7629 = vunpack.c.l.b16 %v7110
      %v7630 = vunpack.c.l.b16 %v7111
      %v7631 = vunpack.c.l.b16 %v7112
      %v7632 = vunpack.c.l.b16 %v7113
      %v7633 = vunpack.c.l.b16 %v7114
      %v7634 = vunpack.c.l.b16 %v7115
      %v7635 = vunpack.c.l.b16 %v7116
      %v7636 = vunpack.c.l.b16 %v7117
      %v7637 = vunpack.c.l.b16 %v7118
      %v7638 = vunpack.c.l.b16 %v7119
      %v7639 = vunpack.c.l.b16 %v7120
      %v7640 = vunpack.c.l.b16 %v7121
      %v7641 = vunpack.c.l.b16 %v7122
      %v7642 = vunpack.c.l.b16 %v7123
      %v7643 = vunpack.c.l.b16 %v7124
      %v7644 = vunpack.c.l.b16 %v7125
      %v7645 = vunpack.c.l.b16 %v7126
      %v7646 = vunpack.c.l.b16 %v7127
      %v7647 = vunpack.c.l.b16 %v7128
      %v7648 = vunpack.c.l.b16 %v7129
      %v7649 = vunpack.c.l.b16 %v7130
      %v7650 = vunpack.c.l.b16 %v7131
      %v7651 = vunpack.c.l.b16 %v7132
      %v7652 = vunpack.c.l.b16 %v7133
      %v7653 = vunpack.c.l.b16 %v7134
      %v7654 = vunpack.c.l.b16 %v7135
      %v7655 = vunpack.c.l.b16 %v7136
      %v7656 = vunpack.c.l.b16 %v7137
      %v7657 = vunpack.c.l.b16 %v7138
      %v7658 = vunpack.c.l.b16 %v7139
      %v7659 = vunpack.c.l.b16 %v7140
      %v7660 = vunpack.c.l.b16 %v7141
      %v7661 = vunpack.c.l.b16 %v7142
      %v7662 = vunpack.c.l.b16 %v7143
      %v7663 = vunpack.c.l.b16 %v7144
      %v7664 = vunpack.c.l.b16 %v7145
      %v7665 = vunpack.c.l.b16 %v7146
      %v7666 = vunpack.c.l.b16 %v7147
      %v7667 = vunpack.c.l.b16 %v7148
      %v7668 = vunpack.c.l.b16 %v7149
      %v7669 = vunpack.c.l.b16 %v7150
      %v7670 = vunpack.c.l.b16 %v7151
      %v7671 = vunpack.c.l.b16 %v7152
      %v7672 = vunpack.c.l.b16 %v7153
      %v7673 = vunpack.c.l.b16 %v7154
      %v7674 = vunpack.c.l.b16 %v7155
      %v7675 = vunpack.c.l.b16 %v7156
      %v7676 = vunpack.c.l.b16 %v7157
      %v7677 = vunpack.c.l.b16 %v7158
      %v7678 = vunpack.c.l.b16 %v7159
      %v7679 = vunpack.c.l.b16 %v7160
      %v7680 = vunpack.c.l.b16 %v7161
      %v7681 = vunpack.c.l.b16 %v7162
      %v7682 = vunpack.c.l.b16 %v7163
      %v7683 = vunpack.c.l.b16 %v7164
      %v7684 = vunpack.c.l.b16 %v7165
      %v7685 = vunpack.c.l.b16 %v7166
      %v7686 = vunpack.c.l.b16 %v7167
      %v7687 = vunpack.c.l.b16 %v7168
      %v7688 = vunpack.c.l.b16 %v7169
      %v7689 = vunpack.c.l.b16 %v7170
      %v7690 = vunpack.c.l.b16 %v7171
      %v7691 = vunpack.c.l.b16 %v7172
      %v7692 = vunpack.c.l.b16 %v7173
      %v7693 = vunpack.c.l.b16 %v7174
      %v7694 = vunpack.c.l.b16 %v7175
      %v7695 = vunpack.c.l.b16 %v7176
      %v7696 = vunpack.c.l.b16 %v7177
      %v7697 = vunpack.c.l.b16 %v7178
      %v7698 = vunpack.c.l.b16 %v7179
      %v7699 = vunpack.c.l.b16 %v7180
      %v7700 = vunpack.c.l.b16 %v7181
      %v7701 = vunpack.c.l.b16 %v7182
      %v7702 = vunpack.c.l.b16 %v7183
      %v7703 = vunpack.c.l.b16 %v7184
      %v7704 = vunpack.c.l.b16 %v7185
      %v7705 = vunpack.c.l.b16 %v7186
      %v7706 = vunpack.c.l.b16 %v7187
      %v7707 = vunpack.c.l.b16 %v7188
      %v7708 = vunpack.c.l.b16 %v7189
      %v7709 = vunpack.c.l.b16 %v7190
      %v7710 = vunpack.c.l.b16 %v7191
      %v7711 = vunpack.c.l.b16 %v7192
      %v7712 = vunpack.c.l.b16 %v7193
      %v7713 = vunpack.c.l.b16 %v7194
      %v7714 = vunpack.c.l.b16 %v7195
      %v7715 = vunpack.c.l.b16 %v7196
      %v7716 = vunpack.c.l.b16 %v7197
      %v7717 = vunpack.c.l.b16 %v7198
      %v7718 = vunpack.c.l.b16 %v7199
      %v7719 = vunpack.c.l.b16 %v7200
      %v7720 = vunpack.c.l.b16 %v7201
      %v7721 = vunpack.c.l.b16 %v7202
      %v7722 = vunpack.c.l.b16 %v7203
      %v7723 = vunpack.c.l.b16 %v7204
      %v7724 = vunpack.c.l.b16 %v7205
      %v7725 = vunpack.c.l.b16 %v7206
      %v7726 = vpack.c.b16 %v7471, %v7470
      %v7727 = vpack.c.b16 %v7473, %v7472
      %v7728 = vpack.c.b16 %v7475, %v7474
      %v7729 = vpack.c.b16 %v7477, %v7476
      %v7730 = vpack.c.b16 %v7479, %v7478
      %v7731 = vpack.c.b16 %v7481, %v7480
      %v7732 = vpack.c.b16 %v7483, %v7482
      %v7733 = vpack.c.b16 %v7485, %v7484
      %v7734 = vpack.c.b16 %v7487, %v7486
      %v7735 = vpack.c.b16 %v7489, %v7488
      %v7736 = vpack.c.b16 %v7491, %v7490
      %v7737 = vpack.c.b16 %v7493, %v7492
      %v7738 = vpack.c.b16 %v7495, %v7494
      %v7739 = vpack.c.b16 %v7497, %v7496
      %v7740 = vpack.c.b16 %v7499, %v7498
      %v7741 = vpack.c.b16 %v7501, %v7500
      %v7742 = vpack.c.b16 %v7503, %v7502
      %v7743 = vpack.c.b16 %v7505, %v7504
      %v7744 = vpack.c.b16 %v7507, %v7506
      %v7745 = vpack.c.b16 %v7509, %v7508
      %v7746 = vpack.c.b16 %v7511, %v7510
      %v7747 = vpack.c.b16 %v7513, %v7512
      %v7748 = vpack.c.b16 %v7515, %v7514
      %v7749 = vpack.c.b16 %v7517, %v7516
      %v7750 = vpack.c.b16 %v7519, %v7518
      %v7751 = vpack.c.b16 %v7521, %v7520
      %v7752 = vpack.c.b16 %v7523, %v7522
      %v7753 = vpack.c.b16 %v7525, %v7524
      %v7754 = vpack.c.b16 %v7527, %v7526
      %v7755 = vpack.c.b16 %v7529, %v7528
      %v7756 = vpack.c.b16 %v7531, %v7530
      %v7757 = vpack.c.b16 %v7533, %v7532
      %v7758 = vpack.c.b16 %v7535, %v7534
      %v7759 = vpack.c.b16 %v7537, %v7536
      %v7760 = vpack.c.b16 %v7539, %v7538
      %v7761 = vpack.c.b16 %v7541, %v7540
      %v7762 = vpack.c.b16 %v7543, %v7542
      %v7763 = vpack.c.b16 %v7545, %v7544
      %v7764 = vpack.c.b16 %v7547, %v7546
      %v7765 = vpack.c.b16 %v7549, %v7548
      %v7766 = vpack.c.b16 %v7551, %v7550
      %v7767 = vpack.c.b16 %v7553, %v7552
      %v7768 = vpack.c.b16 %v7555, %v7554
      %v7769 = vpack.c.b16 %v7557, %v7556
      %v7770 = vpack.c.b16 %v7559, %v7558
      %v7771 = vpack.c.b16 %v7561, %v7560
      %v7772 = vpack.c.b16 %v7563, %v7562
      %v7773 = vpack.c.b16 %v7565, %v7564
      %v7774 = vpack.c.b16 %v7567, %v7566
      %v7775 = vpack.c.b16 %v7569, %v7568
      %v7776 = vpack.c.b16 %v7571, %v7570
      %v7777 = vpack.c.b16 %v7573, %v7572
      %v7778 = vpack.c.b16 %v7575, %v7574
      %v7779 = vpack.c.b16 %v7577, %v7576
      %v7780 = vpack.c.b16 %v7579, %v7578
      %v7781 = vpack.c.b16 %v7581, %v7580
      %v7782 = vpack.c.b16 %v7583, %v7582
      %v7783 = vpack.c.b16 %v7585, %v7584
      %v7784 = vpack.c.b16 %v7587, %v7586
      %v7785 = vpack.c.b16 %v7589, %v7588
      %v7786 = vpack.c.b16 %v7591, %v7590
      %v7787 = vpack.c.b16 %v7593, %v7592
      %v7788 = vpack.c.b16 %v7595, %v7594
      %v7789 = vpack.c.b16 %v7597, %v7596
      %v7790 = vpack.c.b16 %v7599, %v7598
      %v7791 = vpack.c.b16 %v7601, %v7600
      %v7792 = vpack.c.b16 %v7603, %v7602
      %v7793 = vpack.c.b16 %v7605, %v7604
      %v7794 = vpack.c.b16 %v7607, %v7606
      %v7795 = vpack.c.b16 %v7609, %v7608
      %v7796 = vpack.c.b16 %v7611, %v7610
      %v7797 = vpack.c.b16 %v7613, %v7612
      %v7798 = vpack.c.b16 %v7615, %v7614
      %v7799 = vpack.c.b16 %v7617, %v7616
      %v7800 = vpack.c.b16 %v7619, %v7618
      %v7801 = vpack.c.b16 %v7621, %v7620
      %v7802 = vpack.c.b16 %v7623, %v7622
      %v7803 = vpack.c.b16 %v7625, %v7624
      %v7804 = vpack.c.b16 %v7627, %v7626
      %v7805 = vpack.c.b16 %v7629, %v7628
      %v7806 = vpack.c.b16 %v7631, %v7630
      %v7807 = vpack.c.b16 %v7633, %v7632
      %v7808 = vpack.c.b16 %v7635, %v7634
      %v7809 = vpack.c.b16 %v7637, %v7636
      %v7810 = vpack.c.b16 %v7639, %v7638
      %v7811 = vpack.c.b16 %v7641, %v7640
      %v7812 = vpack.c.b16 %v7643, %v7642
      %v7813 = vpack.c.b16 %v7645, %v7644
      %v7814 = vpack.c.b16 %v7647, %v7646
      %v7815 = vpack.c.b16 %v7649, %v7648
      %v7816 = vpack.c.b16 %v7651, %v7650
      %v7817 = vpack.c.b16 %v7653, %v7652
      %v7818 = vpack.c.b16 %v7655, %v7654
      %v7819 = vpack.c.b16 %v7657, %v7656
      %v7820 = vpack.c.b16 %v7659, %v7658
      %v7821 = vpack.c.b16 %v7661, %v7660
      %v7822 = vpack.c.b16 %v7663, %v7662
      %v7823 = vpack.c.b16 %v7665, %v7664
      %v7824 = vpack.c.b16 %v7667, %v7666
      %v7825 = vpack.c.b16 %v7669, %v7668
      %v7826 = vpack.c.b16 %v7671, %v7670
      %v7827 = vpack.c.b16 %v7673, %v7672
      %v7828 = vpack.c.b16 %v7675, %v7674
      %v7829 = vpack.c.b16 %v7677, %v7676
      %v7830 = vpack.c.b16 %v7679, %v7678
      %v7831 = vpack.c.b16 %v7681, %v7680
      %v7832 = vpack.c.b16 %v7683, %v7682
      %v7833 = vpack.c.b16 %v7685, %v7684
      %v7834 = vpack.c.b16 %v7687, %v7686
      %v7835 = vpack.c.b16 %v7689, %v7688
      %v7836 = vpack.c.b16 %v7691, %v7690
      %v7837 = vpack.c.b16 %v7693, %v7692
      %v7838 = vpack.c.b16 %v7695, %v7694
      %v7839 = vpack.c.b16 %v7697, %v7696
      %v7840 = vpack.c.b16 %v7699, %v7698
      %v7841 = vpack.c.b16 %v7701, %v7700
      %v7842 = vpack.c.b16 %v7703, %v7702
      %v7843 = vpack.c.b16 %v7705, %v7704
      %v7844 = vpack.c.b16 %v7707, %v7706
      %v7845 = vpack.c.b16 %v7709, %v7708
      %v7846 = vpack.c.b16 %v7711, %v7710
      %v7847 = vpack.c.b16 %v7713, %v7712
      %v7848 = vpack.c.b16 %v7715, %v7714
      %v7849 = vpack.c.b16 %v7717, %v7716
      %v7850 = vpack.c.b16 %v7719, %v7718
      %v7851 = vpack.c.b16 %v7721, %v7720
      %v7852 = vpack.c.b16 %v7723, %v7722
      %v7853 = vpack.c.b16 %v7725, %v7724
      %7982 = vmatprep.subr.bf16.mxu0 0
      %7983 = vmatpush1.bf16.msra.mxu0 %v7726
      %7984 = vmatprep.subr.bf16.mxu0 0
      %7985 = vmatpush1.bf16.msra.mxu0 %v7727
      %7986 = vmatprep.subr.bf16.mxu0 0
      %7987 = vmatpush1.bf16.msra.mxu0 %v7728
      %7988 = vmatprep.subr.bf16.mxu0 0
      %7989 = vmatpush1.bf16.msra.mxu0 %v7729
      %7990 = vmatprep.subr.bf16.mxu0 0
      %7991 = vmatpush1.bf16.msra.mxu0 %v7730
      %7992 = vmatprep.subr.bf16.mxu0 0
      %7993 = vmatpush1.bf16.msra.mxu0 %v7731
      %7994 = vmatprep.subr.bf16.mxu0 0
      %7995 = vmatpush1.bf16.msra.mxu0 %v7732
      %7996 = vmatprep.subr.bf16.mxu0 0
      %7997 = vmatpush1.bf16.msra.mxu0 %v7733
      %7998 = vmatprep.subr.bf16.mxu0 0
      %7999 = vmatpush1.bf16.msra.mxu0 %v7734
      %8000 = vmatprep.subr.bf16.mxu0 0
      %8001 = vmatpush1.bf16.msra.mxu0 %v7735
      %8002 = vmatprep.subr.bf16.mxu0 0
      %8003 = vmatpush1.bf16.msra.mxu0 %v7736
      %8004 = vmatprep.subr.bf16.mxu0 0
      %8005 = vmatpush1.bf16.msra.mxu0 %v7737
      %8006 = vmatprep.subr.bf16.mxu0 0
      %8007 = vmatpush1.bf16.msra.mxu0 %v7738
      %8008 = vmatprep.subr.bf16.mxu0 0
      %8009 = vmatpush1.bf16.msra.mxu0 %v7739
      %8010 = vmatprep.subr.bf16.mxu0 0
      %8011 = vmatpush1.bf16.msra.mxu0 %v7740
      %8012 = vmatprep.subr.bf16.mxu0 0
      %8013 = vmatpush1.bf16.msra.mxu0 %v7741
      %8014 = vmatprep.mubr.bf16.mxu0 %v6872
      %8015 = vmatmul.mubr.bf16.gmra.mrb[0].mxu0 %v6871
      %v8016 = vpop.f32.mrb[0].mxu0
      %v8017 = vadd.f32 %v7212, %v8016
      %v8018 = vpop.f32.mrb[0].mxu0
      %v8019 = vpop.f32.mrb[0].mxu0
      %v8020 = vadd.f32 %v7212, %v8019
      %v8021 = vpop.f32.mrb[0].mxu0
      %8022 = vmatprep.mubr.bf16.mxu0 %v6888
      %8023 = vmatmul.mubr.bf16.gmra.mrb[0].mxu0 %v6887
      %v8024 = vpop.f32.mrb[0].mxu0
      %v8025 = vadd.f32 %v7212, %v8024
      %v8026 = vpop.f32.mrb[0].mxu0
      %v8027 = vpop.f32.mrb[0].mxu0
      %v8028 = vadd.f32 %v7212, %v8027
      %v8029 = vpop.f32.mrb[0].mxu0
      %8030 = vmatprep.mubr.bf16.mxu0 %v6904
      %8031 = vmatmul.mubr.bf16.gmra.mrb[0].mxu0 %v6903
      %v8032 = vpop.f32.mrb[0].mxu0
      %v8033 = vadd.f32 %v7212, %v8032
      %v8034 = vpop.f32.mrb[0].mxu0
      %v8035 = vpop.f32.mrb[0].mxu0
      %v8036 = vadd.f32 %v7212, %v8035
      %v8037 = vpop.f32.mrb[0].mxu0
      %8038 = vmatprep.mubr.bf16.mxu0 %v6920
      %8039 = vmatmul.mubr.bf16.gmra.mrb[0].mxu0 %v6919
      %v8040 = vpop.f32.mrb[0].mxu0
      %v8041 = vadd.f32 %v7212, %v8040
      %v8042 = vpop.f32.mrb[0].mxu0
      %v8043 = vpop.f32.mrb[0].mxu0
      %v8044 = vadd.f32 %v7212, %v8043
      %v8045 = vpop.f32.mrb[0].mxu0
      %8046 = vmatprep.mubr.bf16.mxu0 %v6936
      %8047 = vmatmul.mubr.bf16.gmra.mrb[0].mxu0 %v6935
      %v8048 = vpop.f32.mrb[0].mxu0
      %v8049 = vadd.f32 %v7212, %v8048
      %v8050 = vpop.f32.mrb[0].mxu0
      %v8051 = vpop.f32.mrb[0].mxu0
      %v8052 = vadd.f32 %v7212, %v8051
      %v8053 = vpop.f32.mrb[0].mxu0
      %8054 = vdwg.mxu0
      %8055 = vmatprep.subr.bf16.mxu0 0
      %8056 = vmatpush1.bf16.msra.mxu0 %v7742
      %8057 = vmatprep.subr.bf16.mxu0 0
      %8058 = vmatpush1.bf16.msra.mxu0 %v7743
      %8059 = vmatprep.subr.bf16.mxu0 0
      %8060 = vmatpush1.bf16.msra.mxu0 %v7744
      %8061 = vmatprep.subr.bf16.mxu0 0
      %8062 = vmatpush1.bf16.msra.mxu0 %v7745
      %8063 = vmatprep.subr.bf16.mxu0 0
      %8064 = vmatpush1.bf16.msra.mxu0 %v7746
      %8065 = vmatprep.subr.bf16.mxu0 0
      %8066 = vmatpush1.bf16.msra.mxu0 %v7747
      %8067 = vmatprep.subr.bf16.mxu0 0
      %8068 = vmatpush1.bf16.msra.mxu0 %v7748
      %8069 = vmatprep.subr.bf16.mxu0 0
      %8070 = vmatpush1.bf16.msra.mxu0 %v7749
      %8071 = vmatprep.subr.bf16.mxu0 0
      %8072 = vmatpush1.bf16.msra.mxu0 %v7750
      %8073 = vmatprep.subr.bf16.mxu0 0
      %8074 = vmatpush1.bf16.msra.mxu0 %v7751
      %8075 = vmatprep.subr.bf16.mxu0 0
      %8076 = vmatpush1.bf16.msra.mxu0 %v7752
      %8077 = vmatprep.subr.bf16.mxu0 0
      %8078 = vmatpush1.bf16.msra.mxu0 %v7753
      %8079 = vmatprep.subr.bf16.mxu0 0
      %8080 = vmatpush1.bf16.msra.mxu0 %v7754
      %8081 = vmatprep.subr.bf16.mxu0 0
      %8082 = vmatpush1.bf16.msra.mxu0 %v7755
      %8083 = vmatprep.subr.bf16.mxu0 0
      %8084 = vmatpush1.bf16.msra.mxu0 %v7756
      %8085 = vmatprep.subr.bf16.mxu0 0
      %8086 = vmatpush1.bf16.msra.mxu0 %v7757
      %8087 = vmatprep.mubr.bf16.mxu0 %v6874
      %8088 = vmatmul.mubr.bf16.gmra.mrb[0].mxu0 %v6873
      %v8089 = vpop.f32.mrb[0].mxu0
      %v8090 = vadd.f32 %v8017, %v8089
      %v8091 = vpop.f32.mrb[0].mxu0
      %v8092 = vpop.f32.mrb[0].mxu0
      %v8093 = vadd.f32 %v8020, %v8092
      %v8094 = vpop.f32.mrb[0].mxu0
      %8095 = vmatprep.mubr.bf16.mxu0 %v6890
      %8096 = vmatmul.mubr.bf16.gmra.mrb[0].mxu0 %v6889
      %v8097 = vpop.f32.mrb[0].mxu0
      %v8098 = vadd.f32 %v8025, %v8097
      %v8099 = vpop.f32.mrb[0].mxu0
      %v8100 = vpop.f32.mrb[0].mxu0
      %v8101 = vadd.f32 %v8028, %v8100
      %v8102 = vpop.f32.mrb[0].mxu0
      %8103 = vmatprep.mubr.bf16.mxu0 %v6906
      %8104 = vmatmul.mubr.bf16.gmra.mrb[0].mxu0 %v6905
      %v8105 = vpop.f32.mrb[0].mxu0
      %v8106 = vadd.f32 %v8033, %v8105
      %v8107 = vpop.f32.mrb[0].mxu0
      %v8108 = vpop.f32.mrb[0].mxu0
      %v8109 = vadd.f32 %v8036, %v8108
      %v8110 = vpop.f32.mrb[0].mxu0
      %8111 = vmatprep.mubr.bf16.mxu0 %v6922
      %8112 = vmatmul.mubr.bf16.gmra.mrb[0].mxu0 %v6921
      %v8113 = vpop.f32.mrb[0].mxu0
      %v8114 = vadd.f32 %v8041, %v8113
      %v8115 = vpop.f32.mrb[0].mxu0
      %v8116 = vpop.f32.mrb[0].mxu0
      %v8117 = vadd.f32 %v8044, %v8116
      %v8118 = vpop.f32.mrb[0].mxu0
      %8119 = vmatprep.mubr.bf16.mxu0 %v6938
      %8120 = vmatmul.mubr.bf16.gmra.mrb[0].mxu0 %v6937
      %v8121 = vpop.f32.mrb[0].mxu0
      %v8122 = vadd.f32 %v8049, %v8121
      %v8123 = vpop.f32.mrb[0].mxu0
      %v8124 = vpop.f32.mrb[0].mxu0
      %v8125 = vadd.f32 %v8052, %v8124
      %v8126 = vpop.f32.mrb[0].mxu0
      %8127 = vdwg.mxu0
      %8128 = vmatprep.subr.bf16.mxu0 0
      %8129 = vmatpush1.bf16.msra.mxu0 %v7758
      %8130 = vmatprep.subr.bf16.mxu0 0
      %8131 = vmatpush1.bf16.msra.mxu0 %v7759
      %8132 = vmatprep.subr.bf16.mxu0 0
      %8133 = vmatpush1.bf16.msra.mxu0 %v7760
      %8134 = vmatprep.subr.bf16.mxu0 0
      %8135 = vmatpush1.bf16.msra.mxu0 %v7761
      %8136 = vmatprep.subr.bf16.mxu0 0
      %8137 = vmatpush1.bf16.msra.mxu0 %v7762
      %8138 = vmatprep.subr.bf16.mxu0 0
      %8139 = vmatpush1.bf16.msra.mxu0 %v7763
      %8140 = vmatprep.subr.bf16.mxu0 0
      %8141 = vmatpush1.bf16.msra.mxu0 %v7764
      %8142 = vmatprep.subr.bf16.mxu0 0
      %8143 = vmatpush1.bf16.msra.mxu0 %v7765
      %8144 = vmatprep.subr.bf16.mxu0 0
      %8145 = vmatpush1.bf16.msra.mxu0 %v7766
      %8146 = vmatprep.subr.bf16.mxu0 0
      %8147 = vmatpush1.bf16.msra.mxu0 %v7767
      %8148 = vmatprep.subr.bf16.mxu0 0
      %8149 = vmatpush1.bf16.msra.mxu0 %v7768
      %8150 = vmatprep.subr.bf16.mxu0 0
      %8151 = vmatpush1.bf16.msra.mxu0 %v7769
      %8152 = vmatprep.subr.bf16.mxu0 0
      %8153 = vmatpush1.bf16.msra.mxu0 %v7770
      %8154 = vmatprep.subr.bf16.mxu0 0
      %8155 = vmatpush1.bf16.msra.mxu0 %v7771
      %8156 = vmatprep.subr.bf16.mxu0 0
      %8157 = vmatpush1.bf16.msra.mxu0 %v7772
      %8158 = vmatprep.subr.bf16.mxu0 0
      %8159 = vmatpush1.bf16.msra.mxu0 %v7773
      %8160 = vmatprep.mubr.bf16.mxu0 %v6876
      %8161 = vmatmul.mubr.bf16.gmra.mrb[0].mxu0 %v6875
      %v8162 = vpop.f32.mrb[0].mxu0
      %v8163 = vadd.f32 %v8090, %v8162
      %v8164 = vpop.f32.mrb[0].mxu0
      %v8165 = vpop.f32.mrb[0].mxu0
      %v8166 = vadd.f32 %v8093, %v8165
      %v8167 = vpop.f32.mrb[0].mxu0
      %8168 = vmatprep.mubr.bf16.mxu0 %v6892
      %8169 = vmatmul.mubr.bf16.gmra.mrb[0].mxu0 %v6891
      %v8170 = vpop.f32.mrb[0].mxu0
      %v8171 = vadd.f32 %v8098, %v8170
      %v8172 = vpop.f32.mrb[0].mxu0
      %v8173 = vpop.f32.mrb[0].mxu0
      %v8174 = vadd.f32 %v8101, %v8173
      %v8175 = vpop.f32.mrb[0].mxu0
      %8176 = vmatprep.mubr.bf16.mxu0 %v6908
      %8177 = vmatmul.mubr.bf16.gmra.mrb[0].mxu0 %v6907
      %v8178 = vpop.f32.mrb[0].mxu0
      %v8179 = vadd.f32 %v8106, %v8178
      %v8180 = vpop.f32.mrb[0].mxu0
      %v8181 = vpop.f32.mrb[0].mxu0
      %v8182 = vadd.f32 %v8109, %v8181
      %v8183 = vpop.f32.mrb[0].mxu0
      %8184 = vmatprep.mubr.bf16.mxu0 %v6924
      %8185 = vmatmul.mubr.bf16.gmra.mrb[0].mxu0 %v6923
      %v8186 = vpop.f32.mrb[0].mxu0
      %v8187 = vadd.f32 %v8114, %v8186
      %v8188 = vpop.f32.mrb[0].mxu0
      %v8189 = vpop.f32.mrb[0].mxu0
      %v8190 = vadd.f32 %v8117, %v8189
      %v8191 = vpop.f32.mrb[0].mxu0
      %8192 = vmatprep.mubr.bf16.mxu0 %v6940
      %8193 = vmatmul.mubr.bf16.gmra.mrb[0].mxu0 %v6939
      %v8194 = vpop.f32.mrb[0].mxu0
      %v8195 = vadd.f32 %v8122, %v8194
      %v8196 = vpop.f32.mrb[0].mxu0
      %v8197 = vpop.f32.mrb[0].mxu0
      %v8198 = vadd.f32 %v8125, %v8197
      %v8199 = vpop.f32.mrb[0].mxu0
      %8200 = vdwg.mxu0
      %8201 = vmatprep.subr.bf16.mxu0 0
      %8202 = vmatpush1.bf16.msra.mxu0 %v7774
      %8203 = vmatprep.subr.bf16.mxu0 0
      %8204 = vmatpush1.bf16.msra.mxu0 %v7775
      %8205 = vmatprep.subr.bf16.mxu0 0
      %8206 = vmatpush1.bf16.msra.mxu0 %v7776
      %8207 = vmatprep.subr.bf16.mxu0 0
      %8208 = vmatpush1.bf16.msra.mxu0 %v7777
      %8209 = vmatprep.subr.bf16.mxu0 0
      %8210 = vmatpush1.bf16.msra.mxu0 %v7778
      %8211 = vmatprep.subr.bf16.mxu0 0
      %8212 = vmatpush1.bf16.msra.mxu0 %v7779
      %8213 = vmatprep.subr.bf16.mxu0 0
      %8214 = vmatpush1.bf16.msra.mxu0 %v7780
      %8215 = vmatprep.subr.bf16.mxu0 0
      %8216 = vmatpush1.bf16.msra.mxu0 %v7781
      %8217 = vmatprep.subr.bf16.mxu0 0
      %8218 = vmatpush1.bf16.msra.mxu0 %v7782
      %8219 = vmatprep.subr.bf16.mxu0 0
      %8220 = vmatpush1.bf16.msra.mxu0 %v7783
      %8221 = vmatprep.subr.bf16.mxu0 0
      %8222 = vmatpush1.bf16.msra.mxu0 %v7784
      %8223 = vmatprep.subr.bf16.mxu0 0
      %8224 = vmatpush1.bf16.msra.mxu0 %v7785
      %8225 = vmatprep.subr.bf16.mxu0 0
      %8226 = vmatpush1.bf16.msra.mxu0 %v7786
      %8227 = vmatprep.subr.bf16.mxu0 0
      %8228 = vmatpush1.bf16.msra.mxu0 %v7787
      %8229 = vmatprep.subr.bf16.mxu0 0
      %8230 = vmatpush1.bf16.msra.mxu0 %v7788
      %8231 = vmatprep.subr.bf16.mxu0 0
      %8232 = vmatpush1.bf16.msra.mxu0 %v7789
      %8233 = vmatprep.mubr.bf16.mxu0 %v6878
      %8234 = vmatmul.mubr.bf16.gmra.mrb[0].mxu0 %v6877
      %v8235 = vpop.f32.mrb[0].mxu0
      %v8236 = vadd.f32 %v8163, %v8235
      %v8237 = vpop.f32.mrb[0].mxu0
      %v8238 = vpop.f32.mrb[0].mxu0
      %v8239 = vadd.f32 %v8166, %v8238
      %v8240 = vpop.f32.mrb[0].mxu0
      %8241 = vmatprep.mubr.bf16.mxu0 %v6894
      %8242 = vmatmul.mubr.bf16.gmra.mrb[0].mxu0 %v6893
      %v8243 = vpop.f32.mrb[0].mxu0
      %v8244 = vadd.f32 %v8171, %v8243
      %v8245 = vpop.f32.mrb[0].mxu0
      %v8246 = vpop.f32.mrb[0].mxu0
      %v8247 = vadd.f32 %v8174, %v8246
      %v8248 = vpop.f32.mrb[0].mxu0
      %8249 = vmatprep.mubr.bf16.mxu0 %v6910
      %8250 = vmatmul.mubr.bf16.gmra.mrb[0].mxu0 %v6909
      %v8251 = vpop.f32.mrb[0].mxu0
      %v8252 = vadd.f32 %v8179, %v8251
      %v8253 = vpop.f32.mrb[0].mxu0
      %v8254 = vpop.f32.mrb[0].mxu0
      %v8255 = vadd.f32 %v8182, %v8254
      %v8256 = vpop.f32.mrb[0].mxu0
      %8257 = vmatprep.mubr.bf16.mxu0 %v6926
      %8258 = vmatmul.mubr.bf16.gmra.mrb[0].mxu0 %v6925
      %v8259 = vpop.f32.mrb[0].mxu0
      %v8260 = vadd.f32 %v8187, %v8259
      %v8261 = vpop.f32.mrb[0].mxu0
      %v8262 = vpop.f32.mrb[0].mxu0
      %v8263 = vadd.f32 %v8190, %v8262
      %v8264 = vpop.f32.mrb[0].mxu0
      %8265 = vmatprep.mubr.bf16.mxu0 %v6942
      %8266 = vmatmul.mubr.bf16.gmra.mrb[0].mxu0 %v6941
      %v8267 = vpop.f32.mrb[0].mxu0
      %v8268 = vadd.f32 %v8195, %v8267
      %v8269 = vpop.f32.mrb[0].mxu0
      %v8270 = vpop.f32.mrb[0].mxu0
      %v8271 = vadd.f32 %v8198, %v8270
      %v8272 = vpop.f32.mrb[0].mxu0
      %8273 = vdwg.mxu0
      %8274 = vmatprep.subr.bf16.mxu0 0
      %8275 = vmatpush1.bf16.msra.mxu0 %v7790
      %8276 = vmatprep.subr.bf16.mxu0 0
      %8277 = vmatpush1.bf16.msra.mxu0 %v7791
      %8278 = vmatprep.subr.bf16.mxu0 0
      %8279 = vmatpush1.bf16.msra.mxu0 %v7792
      %8280 = vmatprep.subr.bf16.mxu0 0
      %8281 = vmatpush1.bf16.msra.mxu0 %v7793
      %8282 = vmatprep.subr.bf16.mxu0 0
      %8283 = vmatpush1.bf16.msra.mxu0 %v7794
      %8284 = vmatprep.subr.bf16.mxu0 0
      %8285 = vmatpush1.bf16.msra.mxu0 %v7795
      %8286 = vmatprep.subr.bf16.mxu0 0
      %8287 = vmatpush1.bf16.msra.mxu0 %v7796
      %8288 = vmatprep.subr.bf16.mxu0 0
      %8289 = vmatpush1.bf16.msra.mxu0 %v7797
      %8290 = vmatprep.subr.bf16.mxu0 0
      %8291 = vmatpush1.bf16.msra.mxu0 %v7798
      %8292 = vmatprep.subr.bf16.mxu0 0
      %8293 = vmatpush1.bf16.msra.mxu0 %v7799
      %8294 = vmatprep.subr.bf16.mxu0 0
      %8295 = vmatpush1.bf16.msra.mxu0 %v7800
      %8296 = vmatprep.subr.bf16.mxu0 0
      %8297 = vmatpush1.bf16.msra.mxu0 %v7801
      %8298 = vmatprep.subr.bf16.mxu0 0
      %8299 = vmatpush1.bf16.msra.mxu0 %v7802
      %8300 = vmatprep.subr.bf16.mxu0 0
      %8301 = vmatpush1.bf16.msra.mxu0 %v7803
      %8302 = vmatprep.subr.bf16.mxu0 0
      %8303 = vmatpush1.bf16.msra.mxu0 %v7804
      %8304 = vmatprep.subr.bf16.mxu0 0
      %8305 = vmatpush1.bf16.msra.mxu0 %v7805
      %8306 = vmatprep.mubr.bf16.mxu0 %v6880
      %8307 = vmatmul.mubr.bf16.gmra.mrb[0].mxu0 %v6879
      %v8308 = vpop.f32.mrb[0].mxu0
      %v8309 = vadd.f32 %v8236, %v8308
      %v8310 = vpop.f32.mrb[0].mxu0
      %v8311 = vpop.f32.mrb[0].mxu0
      %v8312 = vadd.f32 %v8239, %v8311
      %v8313 = vpop.f32.mrb[0].mxu0
      %8314 = vmatprep.mubr.bf16.mxu0 %v6896
      %8315 = vmatmul.mubr.bf16.gmra.mrb[0].mxu0 %v6895
      %v8316 = vpop.f32.mrb[0].mxu0
      %v8317 = vadd.f32 %v8244, %v8316
      %v8318 = vpop.f32.mrb[0].mxu0
      %v8319 = vpop.f32.mrb[0].mxu0
      %v8320 = vadd.f32 %v8247, %v8319
      %v8321 = vpop.f32.mrb[0].mxu0
      %8322 = vmatprep.mubr.bf16.mxu0 %v6912
      %8323 = vmatmul.mubr.bf16.gmra.mrb[0].mxu0 %v6911
      %v8324 = vpop.f32.mrb[0].mxu0
      %v8325 = vadd.f32 %v8252, %v8324
      %v8326 = vpop.f32.mrb[0].mxu0
      %v8327 = vpop.f32.mrb[0].mxu0
      %v8328 = vadd.f32 %v8255, %v8327
      %v8329 = vpop.f32.mrb[0].mxu0
      %8330 = vmatprep.mubr.bf16.mxu0 %v6928
      %8331 = vmatmul.mubr.bf16.gmra.mrb[0].mxu0 %v6927
      %v8332 = vpop.f32.mrb[0].mxu0
      %v8333 = vadd.f32 %v8260, %v8332
      %v8334 = vpop.f32.mrb[0].mxu0
      %v8335 = vpop.f32.mrb[0].mxu0
      %v8336 = vadd.f32 %v8263, %v8335
      %v8337 = vpop.f32.mrb[0].mxu0
      %8338 = vmatprep.mubr.bf16.mxu0 %v6944
      %8339 = vmatmul.mubr.bf16.gmra.mrb[0].mxu0 %v6943
      %v8340 = vpop.f32.mrb[0].mxu0
      %v8341 = vadd.f32 %v8268, %v8340
      %v8342 = vpop.f32.mrb[0].mxu0
      %v8343 = vpop.f32.mrb[0].mxu0
      %v8344 = vadd.f32 %v8271, %v8343
      %v8345 = vpop.f32.mrb[0].mxu0
      %8346 = vdwg.mxu0
      %8347 = vmatprep.subr.bf16.mxu0 0
      %8348 = vmatpush1.bf16.msra.mxu0 %v7806
      %8349 = vmatprep.subr.bf16.mxu0 0
      %8350 = vmatpush1.bf16.msra.mxu0 %v7807
      %8351 = vmatprep.subr.bf16.mxu0 0
      %8352 = vmatpush1.bf16.msra.mxu0 %v7808
      %8353 = vmatprep.subr.bf16.mxu0 0
      %8354 = vmatpush1.bf16.msra.mxu0 %v7809
      %8355 = vmatprep.subr.bf16.mxu0 0
      %8356 = vmatpush1.bf16.msra.mxu0 %v7810
      %8357 = vmatprep.subr.bf16.mxu0 0
      %8358 = vmatpush1.bf16.msra.mxu0 %v7811
      %8359 = vmatprep.subr.bf16.mxu0 0
      %8360 = vmatpush1.bf16.msra.mxu0 %v7812
      %8361 = vmatprep.subr.bf16.mxu0 0
      %8362 = vmatpush1.bf16.msra.mxu0 %v7813
      %8363 = vmatprep.subr.bf16.mxu0 0
      %8364 = vmatpush1.bf16.msra.mxu0 %v7814
      %8365 = vmatprep.subr.bf16.mxu0 0
      %8366 = vmatpush1.bf16.msra.mxu0 %v7815
      %8367 = vmatprep.subr.bf16.mxu0 0
      %8368 = vmatpush1.bf16.msra.mxu0 %v7816
      %8369 = vmatprep.subr.bf16.mxu0 0
      %8370 = vmatpush1.bf16.msra.mxu0 %v7817
      %8371 = vmatprep.subr.bf16.mxu0 0
      %8372 = vmatpush1.bf16.msra.mxu0 %v7818
      %8373 = vmatprep.subr.bf16.mxu0 0
      %8374 = vmatpush1.bf16.msra.mxu0 %v7819
      %8375 = vmatprep.subr.bf16.mxu0 0
      %8376 = vmatpush1.bf16.msra.mxu0 %v7820
      %8377 = vmatprep.subr.bf16.mxu0 0
      %8378 = vmatpush1.bf16.msra.mxu0 %v7821
      %8379 = vmatprep.mubr.bf16.mxu0 %v6882
      %8380 = vmatmul.mubr.bf16.gmra.mrb[0].mxu0 %v6881
      %v8381 = vpop.f32.mrb[0].mxu0
      %v8382 = vadd.f32 %v8309, %v8381
      %v8383 = vpop.f32.mrb[0].mxu0
      %v8384 = vpop.f32.mrb[0].mxu0
      %v8385 = vadd.f32 %v8312, %v8384
      %v8386 = vpop.f32.mrb[0].mxu0
      %8387 = vmatprep.mubr.bf16.mxu0 %v6898
      %8388 = vmatmul.mubr.bf16.gmra.mrb[0].mxu0 %v6897
      %v8389 = vpop.f32.mrb[0].mxu0
      %v8390 = vadd.f32 %v8317, %v8389
      %v8391 = vpop.f32.mrb[0].mxu0
      %v8392 = vpop.f32.mrb[0].mxu0
      %v8393 = vadd.f32 %v8320, %v8392
      %v8394 = vpop.f32.mrb[0].mxu0
      %8395 = vmatprep.mubr.bf16.mxu0 %v6914
      %8396 = vmatmul.mubr.bf16.gmra.mrb[0].mxu0 %v6913
      %v8397 = vpop.f32.mrb[0].mxu0
      %v8398 = vadd.f32 %v8325, %v8397
      %v8399 = vpop.f32.mrb[0].mxu0
      %v8400 = vpop.f32.mrb[0].mxu0
      %v8401 = vadd.f32 %v8328, %v8400
      %v8402 = vpop.f32.mrb[0].mxu0
      %8403 = vmatprep.mubr.bf16.mxu0 %v6930
      %8404 = vmatmul.mubr.bf16.gmra.mrb[0].mxu0 %v6929
      %v8405 = vpop.f32.mrb[0].mxu0
      %v8406 = vadd.f32 %v8333, %v8405
      %v8407 = vpop.f32.mrb[0].mxu0
      %v8408 = vpop.f32.mrb[0].mxu0
      %v8409 = vadd.f32 %v8336, %v8408
      %v8410 = vpop.f32.mrb[0].mxu0
      %8411 = vmatprep.mubr.bf16.mxu0 %v6946
      %8412 = vmatmul.mubr.bf16.gmra.mrb[0].mxu0 %v6945
      %v8413 = vpop.f32.mrb[0].mxu0
      %v8414 = vadd.f32 %v8341, %v8413
      %v8415 = vpop.f32.mrb[0].mxu0
      %v8416 = vpop.f32.mrb[0].mxu0
      %v8417 = vadd.f32 %v8344, %v8416
      %v8418 = vpop.f32.mrb[0].mxu0
      %8419 = vdwg.mxu0
      %8420 = vmatprep.subr.bf16.mxu0 0
      %8421 = vmatpush1.bf16.msra.mxu0 %v7822
      %8422 = vmatprep.subr.bf16.mxu0 0
      %8423 = vmatpush1.bf16.msra.mxu0 %v7823
      %8424 = vmatprep.subr.bf16.mxu0 0
      %8425 = vmatpush1.bf16.msra.mxu0 %v7824
      %8426 = vmatprep.subr.bf16.mxu0 0
      %8427 = vmatpush1.bf16.msra.mxu0 %v7825
      %8428 = vmatprep.subr.bf16.mxu0 0
      %8429 = vmatpush1.bf16.msra.mxu0 %v7826
      %8430 = vmatprep.subr.bf16.mxu0 0
      %8431 = vmatpush1.bf16.msra.mxu0 %v7827
      %8432 = vmatprep.subr.bf16.mxu0 0
      %8433 = vmatpush1.bf16.msra.mxu0 %v7828
      %8434 = vmatprep.subr.bf16.mxu0 0
      %8435 = vmatpush1.bf16.msra.mxu0 %v7829
      %8436 = vmatprep.subr.bf16.mxu0 0
      %8437 = vmatpush1.bf16.msra.mxu0 %v7830
      %8438 = vmatprep.subr.bf16.mxu0 0
      %8439 = vmatpush1.bf16.msra.mxu0 %v7831
      %8440 = vmatprep.subr.bf16.mxu0 0
      %8441 = vmatpush1.bf16.msra.mxu0 %v7832
      %8442 = vmatprep.subr.bf16.mxu0 0
      %8443 = vmatpush1.bf16.msra.mxu0 %v7833
      %8444 = vmatprep.subr.bf16.mxu0 0
      %8445 = vmatpush1.bf16.msra.mxu0 %v7834
      %8446 = vmatprep.subr.bf16.mxu0 0
      %8447 = vmatpush1.bf16.msra.mxu0 %v7835
      %8448 = vmatprep.subr.bf16.mxu0 0
      %8449 = vmatpush1.bf16.msra.mxu0 %v7836
      %8450 = vmatprep.subr.bf16.mxu0 0
      %8451 = vmatpush1.bf16.msra.mxu0 %v7837
      %8452 = vmatprep.mubr.bf16.mxu0 %v6884
      %8453 = vmatmul.mubr.bf16.gmra.mrb[0].mxu0 %v6883
      %v8454 = vpop.f32.mrb[0].mxu0
      %v8455 = vadd.f32 %v8382, %v8454
      %v8456 = vpop.f32.mrb[0].mxu0
      %v8457 = vpop.f32.mrb[0].mxu0
      %v8458 = vadd.f32 %v8385, %v8457
      %v8459 = vpop.f32.mrb[0].mxu0
      %8460 = vmatprep.mubr.bf16.mxu0 %v6900
      %8461 = vmatmul.mubr.bf16.gmra.mrb[0].mxu0 %v6899
      %v8462 = vpop.f32.mrb[0].mxu0
      %v8463 = vadd.f32 %v8390, %v8462
      %v8464 = vpop.f32.mrb[0].mxu0
      %v8465 = vpop.f32.mrb[0].mxu0
      %v8466 = vadd.f32 %v8393, %v8465
      %v8467 = vpop.f32.mrb[0].mxu0
      %8468 = vmatprep.mubr.bf16.mxu0 %v6916
      %8469 = vmatmul.mubr.bf16.gmra.mrb[0].mxu0 %v6915
      %v8470 = vpop.f32.mrb[0].mxu0
      %v8471 = vadd.f32 %v8398, %v8470
      %v8472 = vpop.f32.mrb[0].mxu0
      %v8473 = vpop.f32.mrb[0].mxu0
      %v8474 = vadd.f32 %v8401, %v8473
      %v8475 = vpop.f32.mrb[0].mxu0
      %8476 = vmatprep.mubr.bf16.mxu0 %v6932
      %8477 = vmatmul.mubr.bf16.gmra.mrb[0].mxu0 %v6931
      %v8478 = vpop.f32.mrb[0].mxu0
      %v8479 = vadd.f32 %v8406, %v8478
      %v8480 = vpop.f32.mrb[0].mxu0
      %v8481 = vpop.f32.mrb[0].mxu0
      %v8482 = vadd.f32 %v8409, %v8481
      %v8483 = vpop.f32.mrb[0].mxu0
      %8484 = vmatprep.mubr.bf16.mxu0 %v6948
      %8485 = vmatmul.mubr.bf16.gmra.mrb[0].mxu0 %v6947
      %v8486 = vpop.f32.mrb[0].mxu0
      %v8487 = vadd.f32 %v8414, %v8486
      %v8488 = vpop.f32.mrb[0].mxu0
      %v8489 = vpop.f32.mrb[0].mxu0
      %v8490 = vadd.f32 %v8417, %v8489
      %v8491 = vpop.f32.mrb[0].mxu0
      %8492 = vdwg.mxu0
      %8493 = vmatprep.subr.bf16.mxu0 0
      %8494 = vmatpush1.bf16.msra.mxu0 %v7838
      %8495 = vmatprep.subr.bf16.mxu0 0
      %8496 = vmatpush1.bf16.msra.mxu0 %v7839
      %8497 = vmatprep.subr.bf16.mxu0 0
      %8498 = vmatpush1.bf16.msra.mxu0 %v7840
      %8499 = vmatprep.subr.bf16.mxu0 0
      %8500 = vmatpush1.bf16.msra.mxu0 %v7841
      %8501 = vmatprep.subr.bf16.mxu0 0
      %8502 = vmatpush1.bf16.msra.mxu0 %v7842
      %8503 = vmatprep.subr.bf16.mxu0 0
      %8504 = vmatpush1.bf16.msra.mxu0 %v7843
      %8505 = vmatprep.subr.bf16.mxu0 0
      %8506 = vmatpush1.bf16.msra.mxu0 %v7844
      %8507 = vmatprep.subr.bf16.mxu0 0
      %8508 = vmatpush1.bf16.msra.mxu0 %v7845
      %8509 = vmatprep.subr.bf16.mxu0 0
      %8510 = vmatpush1.bf16.msra.mxu0 %v7846
      %8511 = vmatprep.subr.bf16.mxu0 0
      %8512 = vmatpush1.bf16.msra.mxu0 %v7847
      %8513 = vmatprep.subr.bf16.mxu0 0
      %8514 = vmatpush1.bf16.msra.mxu0 %v7848
      %8515 = vmatprep.subr.bf16.mxu0 0
      %8516 = vmatpush1.bf16.msra.mxu0 %v7849
      %8517 = vmatprep.subr.bf16.mxu0 0
      %8518 = vmatpush1.bf16.msra.mxu0 %v7850
      %8519 = vmatprep.subr.bf16.mxu0 0
      %8520 = vmatpush1.bf16.msra.mxu0 %v7851
      %8521 = vmatprep.subr.bf16.mxu0 0
      %8522 = vmatpush1.bf16.msra.mxu0 %v7852
      %8523 = vmatprep.subr.bf16.mxu0 0
      %8524 = vmatpush1.bf16.msra.mxu0 %v7853
      %8525 = vmatprep.mubr.bf16.mxu0 %v6886
      %8526 = vmatmul.mubr.bf16.gmra.mrb[0].mxu0 %v6885
      %v8527 = vpop.f32.mrb[0].mxu0
      %v8528 = vadd.f32 %v8455, %v8527
      %v8529 = vpop.f32.mrb[0].mxu0
      %v8530 = vpop.f32.mrb[0].mxu0
      %v8531 = vadd.f32 %v8458, %v8530
      %v8532 = vpop.f32.mrb[0].mxu0
      %8533 = vmatprep.mubr.bf16.mxu0 %v6902
      %8534 = vmatmul.mubr.bf16.gmra.mrb[0].mxu0 %v6901
      %v8535 = vpop.f32.mrb[0].mxu0
      %v8536 = vadd.f32 %v8463, %v8535
      %v8537 = vpop.f32.mrb[0].mxu0
      %v8538 = vpop.f32.mrb[0].mxu0
      %v8539 = vadd.f32 %v8466, %v8538
      %v8540 = vpop.f32.mrb[0].mxu0
      %8541 = vmatprep.mubr.bf16.mxu0 %v6918
      %8542 = vmatmul.mubr.bf16.gmra.mrb[0].mxu0 %v6917
      %v8543 = vpop.f32.mrb[0].mxu0
      %v8544 = vadd.f32 %v8471, %v8543
      %v8545 = vpop.f32.mrb[0].mxu0
      %v8546 = vpop.f32.mrb[0].mxu0
      %v8547 = vadd.f32 %v8474, %v8546
      %v8548 = vpop.f32.mrb[0].mxu0
      %8549 = vmatprep.mubr.bf16.mxu0 %v6934
      %8550 = vmatmul.mubr.bf16.gmra.mrb[0].mxu0 %v6933
      %v8551 = vpop.f32.mrb[0].mxu0
      %v8552 = vadd.f32 %v8479, %v8551
      %v8553 = vpop.f32.mrb[0].mxu0
      %v8554 = vpop.f32.mrb[0].mxu0
      %v8555 = vadd.f32 %v8482, %v8554
      %v8556 = vpop.f32.mrb[0].mxu0
      %8557 = vmatprep.mubr.bf16.mxu0 %v6950
      %8558 = vmatmul.mubr.bf16.gmra.mrb[0].mxu0 %v6949
      %v8559 = vpop.f32.mrb[0].mxu0
      %v8560 = vadd.f32 %v8487, %v8559
      %v8561 = vpop.f32.mrb[0].mxu0
      %v8562 = vpop.f32.mrb[0].mxu0
      %v8563 = vadd.f32 %v8490, %v8562
      %v8564 = vpop.f32.mrb[0].mxu0
      %8565 = vdwg.mxu0
      %v8566 = vadd.f32 %v5549, %v8528
      %v8567 = vadd.f32 %v5550, %v8531
      %v8568 = vadd.f32 %v5551, %v8536
      %v8569 = vadd.f32 %v5552, %v8539
      %v8570 = vadd.f32 %v5553, %v8544
      %v8571 = vadd.f32 %v5554, %v8547
      %v8572 = vadd.f32 %v5555, %v8552
      %v8573 = vadd.f32 %v5556, %v8555
      %v8574 = vadd.f32 %v5557, %v8560
      %v8575 = vadd.f32 %v5558, %v8563
      %v8576 = vsel %vm1208, %v8566, 0.0
      %8577 = vadd.xlane.f32.xlu0 %v8576
      %v8578 = vpop.xlane.xlu0 %8577
      %v8579 = vsel %vm1208, %v8567, 0.0
      %8580 = vadd.xlane.f32.xlu0 %v8579
      %v8581 = vpop.xlane.xlu0 %8580
      %v8582 = vsel %vm1208, %v8568, 0.0
      %8583 = vadd.xlane.f32.xlu0 %v8582
      %v8584 = vpop.xlane.xlu0 %8583
      %v8585 = vsel %vm1208, %v8569, 0.0
      %8586 = vadd.xlane.f32.xlu0 %v8585
      %v8587 = vpop.xlane.xlu0 %8586
      %v8588 = vsel %vm1208, %v8570, 0.0
      %8589 = vadd.xlane.f32.xlu0 %v8588
      %v8590 = vpop.xlane.xlu0 %8589
      %v8591 = vsel %vm1208, %v8571, 0.0
      %8592 = vadd.xlane.f32.xlu0 %v8591
      %v8593 = vpop.xlane.xlu0 %8592
      %v8594 = vsel %vm1208, %v8572, 0.0
      %8595 = vadd.xlane.f32.xlu0 %v8594
      %v8596 = vpop.xlane.xlu0 %8595
      %v8597 = vsel %vm1208, %v8573, 0.0
      %8598 = vadd.xlane.f32.xlu0 %v8597
      %v8599 = vpop.xlane.xlu0 %8598
      %v8600 = vsel %vm1208, %v8574, 0.0
      %8601 = vadd.xlane.f32.xlu0 %v8600
      %v8602 = vpop.xlane.xlu0 %8601
      %v8603 = vsel %vm1208, %v8575, 0.0
      %8604 = vadd.xlane.f32.xlu0 %v8603
      %v8605 = vpop.xlane.xlu0 %8604
      %v8606 = vmul.f32 %v8578, %v5424
      %v8607 = vmul.f32 %v8581, %v5424
      %v8608 = vmul.f32 %v8584, %v5424
      %v8609 = vmul.f32 %v8587, %v5424
      %v8610 = vmul.f32 %v8590, %v5424
      %v8611 = vmul.f32 %v8593, %v5424
      %v8612 = vmul.f32 %v8596, %v5424
      %v8613 = vmul.f32 %v8599, %v5424
      %v8614 = vmul.f32 %v8602, %v5424
      %v8615 = vmul.f32 %v8605, %v5424
      %v8616 = vsub.f32 %v8566, %v8606
      %v8617 = vsub.f32 %v8567, %v8607
      %v8618 = vsub.f32 %v8568, %v8608
      %v8619 = vsub.f32 %v8569, %v8609
      %v8620 = vsub.f32 %v8570, %v8610
      %v8621 = vsub.f32 %v8571, %v8611
      %v8622 = vsub.f32 %v8572, %v8612
      %v8623 = vsub.f32 %v8573, %v8613
      %v8624 = vsub.f32 %v8574, %v8614
      %v8625 = vsub.f32 %v8575, %v8615
      %v8626 = vmul.f32 %v8616, %v8616
      %v8627 = vmul.f32 %v8617, %v8617
      %v8628 = vmul.f32 %v8618, %v8618
      %v8629 = vmul.f32 %v8619, %v8619
      %v8630 = vmul.f32 %v8620, %v8620
      %v8631 = vmul.f32 %v8621, %v8621
      %v8632 = vmul.f32 %v8622, %v8622
      %v8633 = vmul.f32 %v8623, %v8623
      %v8634 = vmul.f32 %v8624, %v8624
      %v8635 = vmul.f32 %v8625, %v8625
      %v8636 = vsel %vm1208, %v8626, 0.0
      %8637 = vadd.xlane.f32.xlu0 %v8636
      %v8638 = vpop.xlane.xlu0 %8637
      %v8639 = vsel %vm1208, %v8627, 0.0
      %8640 = vadd.xlane.f32.xlu0 %v8639
      %v8641 = vpop.xlane.xlu0 %8640
      %v8642 = vsel %vm1208, %v8628, 0.0
      %8643 = vadd.xlane.f32.xlu0 %v8642
      %v8644 = vpop.xlane.xlu0 %8643
      %v8645 = vsel %vm1208, %v8629, 0.0
      %8646 = vadd.xlane.f32.xlu0 %v8645
      %v8647 = vpop.xlane.xlu0 %8646
      %v8648 = vsel %vm1208, %v8630, 0.0
      %8649 = vadd.xlane.f32.xlu0 %v8648
      %v8650 = vpop.xlane.xlu0 %8649
      %v8651 = vsel %vm1208, %v8631, 0.0
      %8652 = vadd.xlane.f32.xlu0 %v8651
      %v8653 = vpop.xlane.xlu0 %8652
      %v8654 = vsel %vm1208, %v8632, 0.0
      %8655 = vadd.xlane.f32.xlu0 %v8654
      %v8656 = vpop.xlane.xlu0 %8655
      %v8657 = vsel %vm1208, %v8633, 0.0
      %8658 = vadd.xlane.f32.xlu0 %v8657
      %v8659 = vpop.xlane.xlu0 %8658
      %v8660 = vsel %vm1208, %v8634, 0.0
      %8661 = vadd.xlane.f32.xlu0 %v8660
      %v8662 = vpop.xlane.xlu0 %8661
      %v8663 = vsel %vm1208, %v8635, 0.0
      %8664 = vadd.xlane.f32.xlu0 %v8663
      %v8665 = vpop.xlane.xlu0 %8664
      %v8666 = vmul.f32 %v8638, %v5424
      %v8667 = vmul.f32 %v8641, %v5424
      %v8668 = vmul.f32 %v8644, %v5424
      %v8669 = vmul.f32 %v8647, %v5424
      %v8670 = vmul.f32 %v8650, %v5424
      %v8671 = vmul.f32 %v8653, %v5424
      %v8672 = vmul.f32 %v8656, %v5424
      %v8673 = vmul.f32 %v8659, %v5424
      %v8674 = vmul.f32 %v8662, %v5424
      %v8675 = vmul.f32 %v8665, %v5424
      %v8676 = vadd.f32 %v8666, 1e-05
      %v8677 = vadd.f32 %v8667, 1e-05
      %v8678 = vadd.f32 %v8668, 1e-05
      %v8679 = vadd.f32 %v8669, 1e-05
      %v8680 = vadd.f32 %v8670, 1e-05
      %v8681 = vadd.f32 %v8671, 1e-05
      %v8682 = vadd.f32 %v8672, 1e-05
      %v8683 = vadd.f32 %v8673, 1e-05
      %v8684 = vadd.f32 %v8674, 1e-05
      %v8685 = vadd.f32 %v8675, 1e-05
      %v8686 = vrsqrt.pop %v8676
      %v8687 = vrsqrt.pop %v8677
      %v8688 = vrsqrt.pop %v8678
      %v8689 = vrsqrt.pop %v8679
      %v8690 = vrsqrt.pop %v8680
      %v8691 = vrsqrt.pop %v8681
      %v8692 = vrsqrt.pop %v8682
      %v8693 = vrsqrt.pop %v8683
      %v8694 = vrsqrt.pop %v8684
      %v8695 = vrsqrt.pop %v8685
      %v8696 = vmul.f32 %v8616, %v8686
      %v8697 = vmul.f32 %v8617, %v8687
      %v8698 = vmul.f32 %v8618, %v8688
      %v8699 = vmul.f32 %v8619, %v8689
      %v8700 = vmul.f32 %v8620, %v8690
      %v8701 = vmul.f32 %v8621, %v8691
      %v8702 = vmul.f32 %v8622, %v8692
      %v8703 = vmul.f32 %v8623, %v8693
      %v8704 = vmul.f32 %v8624, %v8694
      %v8705 = vmul.f32 %v8625, %v8695
      %v8706 = vld [vmem:[%s938] sm:$0x1]
      %v8708 = vlaneseq
      %v8709 = vshrl.u32 %v8708, 7
      %v8710 = vsub.s32 0, %v8709
      %v8711 = vrot.slane %v8706, %v8710
      %v8713 = vmul.f32 %v8696, %v8711
      %v8714 = vmul.f32 %v8697, %v8711
      %v8715 = vmul.f32 %v8698, %v8711
      %v8716 = vmul.f32 %v8699, %v8711
      %v8717 = vmul.f32 %v8700, %v8711
      %v8718 = vmul.f32 %v8701, %v8711
      %v8719 = vmul.f32 %v8702, %v8711
      %v8720 = vmul.f32 %v8703, %v8711
      %v8721 = vmul.f32 %v8704, %v8711
      %v8722 = vmul.f32 %v8705, %v8711
      %v8723 = vld [vmem:[%s945] sm:$0x1]
      %v8725 = vlaneseq
      %v8726 = vshrl.u32 %v8725, 7
      %v8727 = vsub.s32 0, %v8726
      %v8728 = vrot.slane %v8723, %v8727
      %v8730 = vadd.f32 %v8713, %v8728
      %v8731 = vadd.f32 %v8714, %v8728
      %v8732 = vadd.f32 %v8715, %v8728
      %v8733 = vadd.f32 %v8716, %v8728
      %v8734 = vadd.f32 %v8717, %v8728
      %v8735 = vadd.f32 %v8718, %v8728
      %v8736 = vadd.f32 %v8719, %v8728
      %v8737 = vadd.f32 %v8720, %v8728
      %v8738 = vadd.f32 %v8721, %v8728
      %v8739 = vadd.f32 %v8722, %v8728
      %8740 = vst.msk [vmem:[#allocation2] sm:$0xff] %vm1208, %v8730
      %8741 = vst.msk [vmem:[#allocation2 + $0x8] sm:$0xff] %vm1208, %v8731
      %8742 = vst.msk [vmem:[#allocation2 + $0x10] sm:$0xff] %vm1208, %v8732
      %8743 = vst.msk [vmem:[#allocation2 + $0x18] sm:$0xff] %vm1208, %v8733
      %8744 = vst.msk [vmem:[#allocation2 + $0x20] sm:$0xff] %vm1208, %v8734
      %8745 = vst.msk [vmem:[#allocation2 + $0x28] sm:$0xff] %vm1208, %v8735
      %8746 = vst.msk [vmem:[#allocation2 + $0x30] sm:$0xff] %vm1208, %v8736
      %8747 = vst.msk [vmem:[#allocation2 + $0x38] sm:$0xff] %vm1208, %v8737
      %8748 = vst.msk [vmem:[#allocation2 + $0x40] sm:$0xff] %vm1208, %v8738
      %8749 = vst.msk [vmem:[#allocation2 + $0x48] sm:$0xff] %vm1208, %v8739
      %p8750 = scmp.eq.s32.totalorder %s32, 5
      // Predicated region
      $region89: #{trajectory_model_forward.2} parent=83 // pred_check
        %p8751 = pneg %p8750
      $region90: #{trajectory_model_forward.2} parent=83 // pred_check_branch
        %8753 = sbr.rel (%p8751) target = $region92
      $region91: #{trajectory_model_forward.2} parent=83 // pred_region
        %v8754 = vld [vmem:[#allocation2] sm:$0xff]
        %v8755 = vld [vmem:[#allocation2 + $0x8] sm:$0xff]
        %v8756 = vld [vmem:[#allocation2 + $0x10] sm:$0xff]
        %v8757 = vld [vmem:[#allocation2 + $0x18] sm:$0xff]
        %v8758 = vld [vmem:[#allocation2 + $0x20] sm:$0xff]
        %v8759 = vld [vmem:[#allocation2 + $0x28] sm:$0xff]
        %v8760 = vld [vmem:[#allocation2 + $0x30] sm:$0xff]
        %v8761 = vld [vmem:[#allocation2 + $0x38] sm:$0xff]
        %v8762 = vld [vmem:[#allocation2 + $0x40] sm:$0xff]
        %v8763 = vld [vmem:[#allocation2 + $0x48] sm:$0xff]
        %8764 = vst.msk [vmem:[%s950] sm:$0xff] %vm1208, %v8754
        %8765 = vst.msk [vmem:[%s950 + $0x8] sm:$0xff] %vm1208, %v8755
        %8766 = vst.msk [vmem:[%s950 + $0x10] sm:$0xff] %vm1208, %v8756
        %8767 = vst.msk [vmem:[%s950 + $0x18] sm:$0xff] %vm1208, %v8757
        %8768 = vst.msk [vmem:[%s950 + $0x20] sm:$0xff] %vm1208, %v8758
        %8769 = vst.msk [vmem:[%s950 + $0x28] sm:$0xff] %vm1208, %v8759
        %8770 = vst.msk [vmem:[%s950 + $0x30] sm:$0xff] %vm1208, %v8760
        %8771 = vst.msk [vmem:[%s950 + $0x38] sm:$0xff] %vm1208, %v8761
        %8772 = vst.msk [vmem:[%s950 + $0x40] sm:$0xff] %vm1208, %v8762
        %8773 = vst.msk [vmem:[%s950 + $0x48] sm:$0xff] %vm1208, %v8763
      $region92: #{trajectory_model_forward.2} parent=83 // pred_fallthru
        _
      %p8774 = scmp.lt.s32.totalorder %s31, 2
      %s8775 = scalar_select %p8774, %s31, 2
      %s8776 = smul.addr %s8775, 10
      %s8777 = smul.addr %s8776, 8
      %s8778 = scalar_lea.vmem %s16, %s8777
      // Predicated region
      $region93: #{trajectory_model_forward.2} parent=83 // pred_check
        %p8779 = pneg %p497
      $region94: #{trajectory_model_forward.2} parent=83 // pred_check_branch
        %8781 = sbr.rel (%p8779) target = $region96
      $region95: #{trajectory_model_forward.2} parent=83 // pred_region
        _
      $region96: #{trajectory_model_forward.2} parent=83 // pred_fallthru
        _
    $region84: #{trajectory_model_forward.2} parent=5 // pred_fallthru
      _
    %p8782 = scmp.le.s32.totalorder 2, %s22
    // Predicated region
    $region97: #{trajectory_model_forward.2} parent=5 // pred_check
      %p8783 = pneg %p8782
    $region98: #{trajectory_model_forward.2} parent=5 // pred_check_branch
      %8785 = sbr.rel (%p8783) target = $region100
    $region99: #{trajectory_model_forward.2} parent=5 // pred_region
      %s8786 = ssub.s32 %s22, 2
      // Predicated region
      $region101: #{trajectory_model_forward.2} parent=99 // pred_check
        %p8787 = pneg %p503
      $region102: #{trajectory_model_forward.2} parent=99 // pred_check_branch
        %8789 = sbr.rel (%p8787) target = $region104
      $region103: #{trajectory_model_forward.2} parent=99 // pred_region
        %p8790 = scmp.lt.s32.totalorder %s33, 2
        %s8791 = scalar_select %p8790, %s33, 2
        %s8792 = smul.addr %s8791, 10
        %s8793 = smul.addr %s8792, 8
        %s8794 = scalar_lea.vmem %s16, %s8793
      $region104: #{trajectory_model_forward.2} parent=99 // pred_fallthru
        _
    $region100: #{trajectory_model_forward.2} parent=5 // pred_fallthru
      _
  $region6: #{trajectory_model_forward.2} parent=0 // loop_footer
    %s26 = sadd.s32 1, %s22
  $region7: #{trajectory_model_forward.2} parent=0 // loop_footer_branch
    %21 = sbr.rel target = $region3
  $region8: #{trajectory_model_forward.2} parent=0 // loop_exit
    _

</llo_original>
